<compile_context>
chip_gen: v7x
topology: tpu7x:2x2x1
jax: 0.10.0
libtpu: 0.0.40
codegen_flags: <defaults>
</compile_context>

<pallas_src>
import numpy as np
import jax
import jax.numpy as jnp
from jax.experimental import pallas as pl
from jax.experimental.pallas import tpu as pltpu


# ---------------------------------------------------------------------------
# Fused conv3x3 + BN(eval) + ReLU + Linear kernel
# ---------------------------------------------------------------------------
def _make_fused_call(n, c_in, h, w, c_mid, c_pad, o_pad):
    r = h * w                    # output pixels per image
    g = (h + 2) * w + 2          # H-padded, row-flattened, +2 guard rows

    def kernel(xg_ref, mask_ref, wtap_ref, shift_ref, wlin_ref, blin_ref,
               out_ref, acc_ref):
        # ---- 3x3 conv (stride 1, pad 1) as 9 accumulated MXU dots ----------
        acc_ref[...] = jnp.zeros_like(acc_ref)
        for di in range(3):
            for dj in range(3):
                # rows [start, start + r) of the padded flat image hold the
                # (h+di-1, w+dj-1) tap for every output pixel (row-shift trick)
                start = di * w + dj
                x_tap = xg_ref[0, start:start + r, :]          # [r, c_in] bf16
                if dj == 0:                                    # left image edge
                    x_tap = x_tap * mask_ref[0]
                elif dj == 2:                                  # right image edge
                    x_tap = x_tap * mask_ref[1]
                acc_ref[...] += jnp.dot(
                    x_tap, wtap_ref[di * 3 + dj],
                    preferred_element_type=jnp.float32)        # [r, c_pad] f32

        # ---- folded BatchNorm shift (scale already in weights) + ReLU ------
        a = jnp.maximum(acc_ref[...] + shift_ref[...], 0.0)    # [r, c_pad] f32

        # ---- Linear head fused as epilogue ---------------------------------
        # PyTorch flattens the conv output channel-major: row cm of a.T is the
        # (cm, h, w) slab, contracted against lin_w.T[cm*r:(cm+1)*r, :].
        at = a.T.astype(jnp.bfloat16)                          # [c_pad, r]
        o = blin_ref[...]                                      # [1, o_pad] f32
        for cm in range(c_mid):                                # real channels only
            o = o + jnp.dot(at[cm:cm + 1, :], wlin_ref[cm],
                            preferred_element_type=jnp.float32)
        out_ref[0] = o.astype(out_ref.dtype)                   # lane-dense store

    grid_spec = pltpu.PrefetchScalarGridSpec(
        num_scalar_prefetch=0,
        grid=(n,),
        in_specs=[
            pl.BlockSpec((1, g, c_in), lambda i: (i, 0, 0)),        # activation
            pl.BlockSpec((2, r, c_in), lambda i: (0, 0, 0)),        # edge masks
            pl.BlockSpec((9, c_in, c_pad), lambda i: (0, 0, 0)),    # conv taps
            pl.BlockSpec((1, c_pad), lambda i: (0, 0)),             # BN shift
            pl.BlockSpec((c_mid, r, o_pad), lambda i: (0, 0, 0)),   # linear W
            pl.BlockSpec((1, o_pad), lambda i: (0, 0)),             # linear b
        ],
        out_specs=pl.BlockSpec((1, 1, o_pad), lambda i: (i, 0, 0)),
        scratch_shapes=[pltpu.VMEM((r, c_pad), jnp.float32)],       # conv acc
    )
    return pl.pallas_call(
        kernel,
        out_shape=jax.ShapeDtypeStruct((n, 1, o_pad), jnp.float32),
        grid_spec=grid_spec,
        compiler_params=pltpu.CompilerParams(
            dimension_semantics=("parallel",),      # 2 TCs on v7x; no-op v5e/v6e
            vmem_limit_bytes=32 * 1024 * 1024,
        ),
    )


# ---------------------------------------------------------------------------
# One-time parameter preparation (BN fold, padding, layout) — host side
# ---------------------------------------------------------------------------
def prepare_params(p, h, w, c_pad=128, o_pad=128):
    conv_w = p['conv_w']                       # [c_mid, c_in, 3, 3]
    c_mid, c_in = conv_w.shape[0], conv_w.shape[1]
    out_dim = p['lin_w'].shape[0]
    r = h * w

    inv_std = 1.0 / jnp.sqrt(p['bn_var'] + p['bn_eps'])
    scale = p['bn_gamma'] * inv_std                                  # [c_mid]

    # Fold BN scale into the conv weight; lay out as 9 taps of [c_in, c_pad]
    # (zero-padded output channels -> padded lanes stay exactly 0 after ReLU).
    w_f = conv_w * scale[:, None, None, None]
    w_taps = jnp.transpose(w_f, (2, 3, 1, 0)).reshape(9, c_in, c_mid)
    w_taps = jnp.pad(w_taps, ((0, 0), (0, 0), (0, c_pad - c_mid)))
    w_taps = w_taps.astype(jnp.bfloat16)

    shift = (p['conv_b'] - p['bn_mean']) * scale + p['bn_beta']      # [c_mid]
    shift = jnp.pad(shift, (0, c_pad - c_mid)).reshape(1, c_pad)
    shift = shift.astype(jnp.float32)

    # Linear weight in PyTorch channel-major flatten order, one [r, o_pad]
    # slab per real conv channel, zero-padded on the output axis.
    w_lin = p['lin_w'].T.reshape(c_mid, r, out_dim)
    w_lin = jnp.pad(w_lin, ((0, 0), (0, 0), (0, o_pad - out_dim)))
    w_lin = w_lin.astype(jnp.bfloat16)
    b_lin = jnp.pad(p['lin_b'], (0, o_pad - out_dim)).reshape(1, o_pad)
    b_lin = b_lin.astype(jnp.float32)

    # Left / right image-edge masks for the dj=0 / dj=2 conv taps (padding=1).
    col = np.arange(r) % w
    mask = np.stack([(col != 0), (col != w - 1)], axis=0).astype(np.float32)
    edge_mask = jnp.asarray(np.broadcast_to(mask[:, :, None], (2, r, c_in)),
                            dtype=jnp.bfloat16)

    return dict(w_taps=w_taps, shift=shift, w_lin=w_lin, b_lin=b_lin,
                edge_mask=edge_mask, c_mid=c_mid, c_pad=c_pad,
                o_pad=o_pad, out_dim=out_dim)


# ---------------------------------------------------------------------------
# Forward pass (BaseNet.forward(x) == self.model(x)), public input is NCHW
# ---------------------------------------------------------------------------
def basenet_forward(x, prep):
    n, c_in, h, w = x.shape
    # Layout plumbing only (no 9x expansion): NCHW -> NHWC, pad H by 1, flatten
    # rows, add 1 guard row at each end so every tap slice stays in range.
    xh = jnp.transpose(x, (0, 2, 3, 1))                       # [n, h, w, c]
    xh = jnp.pad(xh, ((0, 0), (1, 1), (0, 0), (0, 0)))        # pad H only
    xg = xh.reshape(n, (h + 2) * w, c_in)
    xg = jnp.pad(xg, ((0, 0), (1, 1), (0, 0))).astype(jnp.bfloat16)

    call = _make_fused_call(n, c_in, h, w, prep['c_mid'], prep['c_pad'],
                            prep['o_pad'])
    out = call(xg, prep['edge_mask'], prep['w_taps'], prep['shift'],
               prep['w_lin'], prep['b_lin'])                  # [n, 1, o_pad]
    return out[:, 0, :prep['out_dim']]


# ---------------------------------------------------------------------------
# Deterministic parameter initialisation (mirrors BaseNet._init_params)
# ---------------------------------------------------------------------------
def init_params(key, c_in, c_mid, h, w, out_dim):
    k_conv_w, k_conv_b, k_lin_w = jax.random.split(key, 3)

    # Conv2d: kaiming_normal_(weight) (fan_in, gain=sqrt(2))
    fan_in_conv = c_in * 3 * 3
    conv_w = jax.random.normal(k_conv_w, (c_mid, c_in, 3, 3), jnp.float32) \
        * np.sqrt(2.0 / fan_in_conv)
    bnd = 1.0 / np.sqrt(fan_in_conv)
    conv_b = jax.random.uniform(k_conv_b, (c_mid,), jnp.float32, -bnd, bnd)

    # BatchNorm2d (reset_parameters + eval mode)
    bn_gamma = jnp.ones((c_mid,), jnp.float32)
    bn_beta = jnp.zeros((c_mid,), jnp.float32)
    bn_mean = jnp.zeros((c_mid,), jnp.float32)
    bn_var = jnp.ones((c_mid,), jnp.float32)
    bn_eps = 1e-5

    # Linear: xavier_uniform_(weight), bias = 0
    feat = c_mid * h * w
    bound = np.sqrt(6.0 / (feat + out_dim))
    lin_w = jax.random.uniform(k_lin_w, (out_dim, feat), jnp.float32,
                               -bound, bound)
    lin_b = jnp.zeros((out_dim,), jnp.float32)

    return dict(conv_w=conv_w, conv_b=conv_b,
                bn_gamma=bn_gamma, bn_beta=bn_beta,
                bn_mean=bn_mean, bn_var=bn_var, bn_eps=bn_eps,
                lin_w=lin_w, lin_b=lin_b)


# ---------------------------------------------------------------------------
# Pure-JAX f32 reference (for correctness check only)
# ---------------------------------------------------------------------------
def reference_forward(x, p):
    y = jax.lax.conv_general_dilated(
        x, p['conv_w'], window_strides=(1, 1), padding=((1, 1), (1, 1)),
        dimension_numbers=('NCHW', 'OIHW', 'NCHW'))
    y = y + p['conv_b'][None, :, None, None]
    inv_std = 1.0 / jnp.sqrt(p['bn_var'] + p['bn_eps'])
    y = (y - p['bn_mean'][None, :, None, None]) \
        * (p['bn_gamma'] * inv_std)[None, :, None, None] \
        + p['bn_beta'][None, :, None, None]
    y = jnp.maximum(y, 0.0)
    flat = y.reshape(x.shape[0], -1)
    return flat @ p['lin_w'].T + p['lin_b']


if __name__ == "__main__":
    key = jax.random.PRNGKey(0)
    k_x, k_p = jax.random.split(key)

    N, C, H, W = 2, 4, 16, 16
    C_MID, OUT_DIM = 8, 10

    x = jax.random.normal(k_x, (N, C, H, W), jnp.float32)
    params = init_params(k_p, C, C_MID, H, W, OUT_DIM)
    prep = prepare_params(params, H, W)

    y = basenet_forward(x, prep)
    jax.block_until_ready(y)

    ref = reference_forward(x, params)
    np.testing.assert_allclose(np.asarray(y), np.asarray(ref),
                               rtol=1e-1, atol=1e-1)

    assert y.shape == (N, OUT_DIM) and y.dtype == jnp.float32
    print("KERNEL_OK")
</pallas_src>

<mosaic_0001>
module attributes {stable_mosaic.version = 11 : i64} {
  func.func @kernel(%arg0: i32, %arg1: memref<1x290x4xbf16, #tpu.memory_space<vmem>>, %arg2: memref<2x256x4xbf16, #tpu.memory_space<vmem>>, %arg3: memref<9x4x128xbf16, #tpu.memory_space<vmem>>, %arg4: memref<1x128xf32, #tpu.memory_space<vmem>>, %arg5: memref<8x256x128xbf16, #tpu.memory_space<vmem>>, %arg6: memref<1x128xf32, #tpu.memory_space<vmem>>, %arg7: memref<1x1x128xf32, #tpu.memory_space<vmem>>, %arg8: memref<256x128xf32, #tpu.memory_space<vmem>>) attributes {dimension_semantics = [#tpu.dimension_semantics<parallel>], iteration_bounds = array<i64: 2>, scalar_prefetch = 0 : i64, scratch_operands = 1 : i64, tpu.core_type = #tpu.core_type<tc>, window_params = [{transform_indices = @transform_0, window_bounds = array<i64: 1, 290, 4>}, {pipeline_mode = #tpu.pipeline_mode<synchronous>, transform_indices = @transform_1, window_bounds = array<i64: 2, 256, 4>}, {pipeline_mode = #tpu.pipeline_mode<synchronous>, transform_indices = @transform_2, window_bounds = array<i64: 9, 4, 128>}, {pipeline_mode = #tpu.pipeline_mode<synchronous>, transform_indices = @transform_3, window_bounds = array<i64: 1, 128>}, {pipeline_mode = #tpu.pipeline_mode<synchronous>, transform_indices = @transform_4, window_bounds = array<i64: 8, 256, 128>}, {pipeline_mode = #tpu.pipeline_mode<synchronous>, transform_indices = @transform_5, window_bounds = array<i64: 1, 128>}, {transform_indices = @transform_6, window_bounds = array<i64: 1, 1, 128>}]} {
    %cst = arith.constant 0.000000e+00 : f32
    %0 = vector.broadcast %cst : f32 to vector<256x128xf32>
    %c0 = arith.constant 0 : index
    %c0_0 = arith.constant 0 : index
    %1 = vector.load %arg8[%c0, %c0_0] : memref<256x128xf32, #tpu.memory_space<vmem>>, vector<256x128xf32>
    tpu.vector_store %arg8[%c0, %c0_0], %0 {strides = array<i32>} : memref<256x128xf32, #tpu.memory_space<vmem>>, vector<256x128xf32>,
    %c0_1 = arith.constant 0 : index
    %c0_2 = arith.constant 0 : index
    %c0_3 = arith.constant 0 : index
    %2 = vector.load %arg1[%c0_1, %c0_2, %c0_3] : memref<1x290x4xbf16, #tpu.memory_space<vmem>>, vector<1x256x4xbf16>
    %3 = vector.shape_cast %2 : vector<1x256x4xbf16> to vector<256x4xbf16>
    %c0_4 = arith.constant 0 : index
    %c0_5 = arith.constant 0 : index
    %c0_6 = arith.constant 0 : index
    %4 = vector.load %arg2[%c0_4, %c0_5, %c0_6] : memref<2x256x4xbf16, #tpu.memory_space<vmem>>, vector<1x256x4xbf16>
    %5 = vector.shape_cast %4 : vector<1x256x4xbf16> to vector<256x4xbf16>
    %6 = arith.mulf %3, %5 : vector<256x4xbf16>
    %c0_7 = arith.constant 0 : index
    %c0_8 = arith.constant 0 : index
    %7 = vector.load %arg8[%c0_7, %c0_8] : memref<256x128xf32, #tpu.memory_space<vmem>>, vector<256x128xf32>
    %c0_9 = arith.constant 0 : index
    %c0_10 = arith.constant 0 : index
    %c0_11 = arith.constant 0 : index
    %8 = vector.load %arg3[%c0_9, %c0_10, %c0_11] : memref<9x4x128xbf16, #tpu.memory_space<vmem>>, vector<1x4x128xbf16>
    %9 = vector.shape_cast %8 : vector<1x4x128xbf16> to vector<4x128xbf16>
    %cst_12 = arith.constant dense<0.000000e+00> : vector<256x128xf32>
    %10 = tpu.matmul %6, %9, %cst_12 {dimension_numbers = #tpu.dot_dimension_numbers<[1], [0], [0], [1], [0, 0, 1, 1], [], []>} : vector<256x4xbf16>, vector<4x128xbf16>, vector<256x128xf32> -> vector<256x128xf32>
    %11 = arith.addf %7, %10 : vector<256x128xf32>
    %c0_13 = arith.constant 0 : index
    %c0_14 = arith.constant 0 : index
    %12 = vector.load %arg8[%c0_13, %c0_14] : memref<256x128xf32, #tpu.memory_space<vmem>>, vector<256x128xf32>
    tpu.vector_store %arg8[%c0_13, %c0_14], %11 {strides = array<i32>} : memref<256x128xf32, #tpu.memory_space<vmem>>, vector<256x128xf32>,
    %c0_15 = arith.constant 0 : index
    %c1 = arith.constant 1 : index
    %c0_16 = arith.constant 0 : index
    %13 = vector.load %arg1[%c0_15, %c1, %c0_16] : memref<1x290x4xbf16, #tpu.memory_space<vmem>>, vector<1x256x4xbf16>
    %14 = vector.shape_cast %13 : vector<1x256x4xbf16> to vector<256x4xbf16>
    %c0_17 = arith.constant 0 : index
    %c0_18 = arith.constant 0 : index
    %15 = vector.load %arg8[%c0_17, %c0_18] : memref<256x128xf32, #tpu.memory_space<vmem>>, vector<256x128xf32>
    %c1_19 = arith.constant 1 : index
    %c0_20 = arith.constant 0 : index
    %c0_21 = arith.constant 0 : index
    %16 = vector.load %arg3[%c1_19, %c0_20, %c0_21] : memref<9x4x128xbf16, #tpu.memory_space<vmem>>, vector<1x4x128xbf16>
    %17 = vector.shape_cast %16 : vector<1x4x128xbf16> to vector<4x128xbf16>
    %cst_22 = arith.constant dense<0.000000e+00> : vector<256x128xf32>
    %18 = tpu.matmul %14, %17, %cst_22 {dimension_numbers = #tpu.dot_dimension_numbers<[1], [0], [0], [1], [0, 0, 1, 1], [], []>} : vector<256x4xbf16>, vector<4x128xbf16>, vector<256x128xf32> -> vector<256x128xf32>
    %19 = arith.addf %15, %18 : vector<256x128xf32>
    %c0_23 = arith.constant 0 : index
    %c0_24 = arith.constant 0 : index
    %20 = vector.load %arg8[%c0_23, %c0_24] : memref<256x128xf32, #tpu.memory_space<vmem>>, vector<256x128xf32>
    tpu.vector_store %arg8[%c0_23, %c0_24], %19 {strides = array<i32>} : memref<256x128xf32, #tpu.memory_space<vmem>>, vector<256x128xf32>,
    %c0_25 = arith.constant 0 : index
    %c2 = arith.constant 2 : index
    %c0_26 = arith.constant 0 : index
    %21 = vector.load %arg1[%c0_25, %c2, %c0_26] : memref<1x290x4xbf16, #tpu.memory_space<vmem>>, vector<1x256x4xbf16>
    %22 = vector.shape_cast %21 : vector<1x256x4xbf16> to vector<256x4xbf16>
    %c1_27 = arith.constant 1 : index
    %c0_28 = arith.constant 0 : index
    %c0_29 = arith.constant 0 : index
    %23 = vector.load %arg2[%c1_27, %c0_28, %c0_29] : memref<2x256x4xbf16, #tpu.memory_space<vmem>>, vector<1x256x4xbf16>
    %24 = vector.shape_cast %23 : vector<1x256x4xbf16> to vector<256x4xbf16>
    %25 = arith.mulf %22, %24 : vector<256x4xbf16>
    %c0_30 = arith.constant 0 : index
    %c0_31 = arith.constant 0 : index
    %26 = vector.load %arg8[%c0_30, %c0_31] : memref<256x128xf32, #tpu.memory_space<vmem>>, vector<256x128xf32>
    %c2_32 = arith.constant 2 : index
    %c0_33 = arith.constant 0 : index
    %c0_34 = arith.constant 0 : index
    %27 = vector.load %arg3[%c2_32, %c0_33, %c0_34] : memref<9x4x128xbf16, #tpu.memory_space<vmem>>, vector<1x4x128xbf16>
    %28 = vector.shape_cast %27 : vector<1x4x128xbf16> to vector<4x128xbf16>
    %cst_35 = arith.constant dense<0.000000e+00> : vector<256x128xf32>
    %29 = tpu.matmul %25, %28, %cst_35 {dimension_numbers = #tpu.dot_dimension_numbers<[1], [0], [0], [1], [0, 0, 1, 1], [], []>} : vector<256x4xbf16>, vector<4x128xbf16>, vector<256x128xf32> -> vector<256x128xf32>
    %30 = arith.addf %26, %29 : vector<256x128xf32>
    %c0_36 = arith.constant 0 : index
    %c0_37 = arith.constant 0 : index
    %31 = vector.load %arg8[%c0_36, %c0_37] : memref<256x128xf32, #tpu.memory_space<vmem>>, vector<256x128xf32>
    tpu.vector_store %arg8[%c0_36, %c0_37], %30 {strides = array<i32>} : memref<256x128xf32, #tpu.memory_space<vmem>>, vector<256x128xf32>,
    %c0_38 = arith.constant 0 : index
    %c16 = arith.constant 16 : index
    %c0_39 = arith.constant 0 : index
    %32 = vector.load %arg1[%c0_38, %c16, %c0_39] : memref<1x290x4xbf16, #tpu.memory_space<vmem>>, vector<1x256x4xbf16>
    %33 = vector.shape_cast %32 : vector<1x256x4xbf16> to vector<256x4xbf16>
    %c0_40 = arith.constant 0 : index
    %c0_41 = arith.constant 0 : index
    %c0_42 = arith.constant 0 : index
    %34 = vector.load %arg2[%c0_40, %c0_41, %c0_42] : memref<2x256x4xbf16, #tpu.memory_space<vmem>>, vector<1x256x4xbf16>
    %35 = vector.shape_cast %34 : vector<1x256x4xbf16> to vector<256x4xbf16>
    %36 = arith.mulf %33, %35 : vector<256x4xbf16>
    %c0_43 = arith.constant 0 : index
    %c0_44 = arith.constant 0 : index
    %37 = vector.load %arg8[%c0_43, %c0_44] : memref<256x128xf32, #tpu.memory_space<vmem>>, vector<256x128xf32>
    %c3 = arith.constant 3 : index
    %c0_45 = arith.constant 0 : index
    %c0_46 = arith.constant 0 : index
    %38 = vector.load %arg3[%c3, %c0_45, %c0_46] : memref<9x4x128xbf16, #tpu.memory_space<vmem>>, vector<1x4x128xbf16>
    %39 = vector.shape_cast %38 : vector<1x4x128xbf16> to vector<4x128xbf16>
    %cst_47 = arith.constant dense<0.000000e+00> : vector<256x128xf32>
    %40 = tpu.matmul %36, %39, %cst_47 {dimension_numbers = #tpu.dot_dimension_numbers<[1], [0], [0], [1], [0, 0, 1, 1], [], []>} : vector<256x4xbf16>, vector<4x128xbf16>, vector<256x128xf32> -> vector<256x128xf32>
    %41 = arith.addf %37, %40 : vector<256x128xf32>
    %c0_48 = arith.constant 0 : index
    %c0_49 = arith.constant 0 : index
    %42 = vector.load %arg8[%c0_48, %c0_49] : memref<256x128xf32, #tpu.memory_space<vmem>>, vector<256x128xf32>
    tpu.vector_store %arg8[%c0_48, %c0_49], %41 {strides = array<i32>} : memref<256x128xf32, #tpu.memory_space<vmem>>, vector<256x128xf32>,
    %c0_50 = arith.constant 0 : index
    %c17 = arith.constant 17 : index
    %c0_51 = arith.constant 0 : index
    %43 = vector.load %arg1[%c0_50, %c17, %c0_51] : memref<1x290x4xbf16, #tpu.memory_space<vmem>>, vector<1x256x4xbf16>
    %44 = vector.shape_cast %43 : vector<1x256x4xbf16> to vector<256x4xbf16>
    %c0_52 = arith.constant 0 : index
    %c0_53 = arith.constant 0 : index
    %45 = vector.load %arg8[%c0_52, %c0_53] : memref<256x128xf32, #tpu.memory_space<vmem>>, vector<256x128xf32>
    %c4 = arith.constant 4 : index
    %c0_54 = arith.constant 0 : index
    %c0_55 = arith.constant 0 : index
    %46 = vector.load %arg3[%c4, %c0_54, %c0_55] : memref<9x4x128xbf16, #tpu.memory_space<vmem>>, vector<1x4x128xbf16>
    %47 = vector.shape_cast %46 : vector<1x4x128xbf16> to vector<4x128xbf16>
    %cst_56 = arith.constant dense<0.000000e+00> : vector<256x128xf32>
    %48 = tpu.matmul %44, %47, %cst_56 {dimension_numbers = #tpu.dot_dimension_numbers<[1], [0], [0], [1], [0, 0, 1, 1], [], []>} : vector<256x4xbf16>, vector<4x128xbf16>, vector<256x128xf32> -> vector<256x128xf32>
    %49 = arith.addf %45, %48 : vector<256x128xf32>
    %c0_57 = arith.constant 0 : index
    %c0_58 = arith.constant 0 : index
    %50 = vector.load %arg8[%c0_57, %c0_58] : memref<256x128xf32, #tpu.memory_space<vmem>>, vector<256x128xf32>
    tpu.vector_store %arg8[%c0_57, %c0_58], %49 {strides = array<i32>} : memref<256x128xf32, #tpu.memory_space<vmem>>, vector<256x128xf32>,
    %c0_59 = arith.constant 0 : index
    %c18 = arith.constant 18 : index
    %c0_60 = arith.constant 0 : index
    %51 = vector.load %arg1[%c0_59, %c18, %c0_60] : memref<1x290x4xbf16, #tpu.memory_space<vmem>>, vector<1x256x4xbf16>
    %52 = vector.shape_cast %51 : vector<1x256x4xbf16> to vector<256x4xbf16>
    %c1_61 = arith.constant 1 : index
    %c0_62 = arith.constant 0 : index
    %c0_63 = arith.constant 0 : index
    %53 = vector.load %arg2[%c1_61, %c0_62, %c0_63] : memref<2x256x4xbf16, #tpu.memory_space<vmem>>, vector<1x256x4xbf16>
    %54 = vector.shape_cast %53 : vector<1x256x4xbf16> to vector<256x4xbf16>
    %55 = arith.mulf %52, %54 : vector<256x4xbf16>
    %c0_64 = arith.constant 0 : index
    %c0_65 = arith.constant 0 : index
    %56 = vector.load %arg8[%c0_64, %c0_65] : memref<256x128xf32, #tpu.memory_space<vmem>>, vector<256x128xf32>
    %c5 = arith.constant 5 : index
    %c0_66 = arith.constant 0 : index
    %c0_67 = arith.constant 0 : index
    %57 = vector.load %arg3[%c5, %c0_66, %c0_67] : memref<9x4x128xbf16, #tpu.memory_space<vmem>>, vector<1x4x128xbf16>
    %58 = vector.shape_cast %57 : vector<1x4x128xbf16> to vector<4x128xbf16>
    %cst_68 = arith.constant dense<0.000000e+00> : vector<256x128xf32>
    %59 = tpu.matmul %55, %58, %cst_68 {dimension_numbers = #tpu.dot_dimension_numbers<[1], [0], [0], [1], [0, 0, 1, 1], [], []>} : vector<256x4xbf16>, vector<4x128xbf16>, vector<256x128xf32> -> vector<256x128xf32>
    %60 = arith.addf %56, %59 : vector<256x128xf32>
    %c0_69 = arith.constant 0 : index
    %c0_70 = arith.constant 0 : index
    %61 = vector.load %arg8[%c0_69, %c0_70] : memref<256x128xf32, #tpu.memory_space<vmem>>, vector<256x128xf32>
    tpu.vector_store %arg8[%c0_69, %c0_70], %60 {strides = array<i32>} : memref<256x128xf32, #tpu.memory_space<vmem>>, vector<256x128xf32>,
    %c0_71 = arith.constant 0 : index
    %c32 = arith.constant 32 : index
    %c0_72 = arith.constant 0 : index
    %62 = vector.load %arg1[%c0_71, %c32, %c0_72] : memref<1x290x4xbf16, #tpu.memory_space<vmem>>, vector<1x256x4xbf16>
    %63 = vector.shape_cast %62 : vector<1x256x4xbf16> to vector<256x4xbf16>
    %c0_73 = arith.constant 0 : index
    %c0_74 = arith.constant 0 : index
    %c0_75 = arith.constant 0 : index
    %64 = vector.load %arg2[%c0_73, %c0_74, %c0_75] : memref<2x256x4xbf16, #tpu.memory_space<vmem>>, vector<1x256x4xbf16>
    %65 = vector.shape_cast %64 : vector<1x256x4xbf16> to vector<256x4xbf16>
    %66 = arith.mulf %63, %65 : vector<256x4xbf16>
    %c0_76 = arith.constant 0 : index
    %c0_77 = arith.constant 0 : index
    %67 = vector.load %arg8[%c0_76, %c0_77] : memref<256x128xf32, #tpu.memory_space<vmem>>, vector<256x128xf32>
    %c6 = arith.constant 6 : index
    %c0_78 = arith.constant 0 : index
    %c0_79 = arith.constant 0 : index
    %68 = vector.load %arg3[%c6, %c0_78, %c0_79] : memref<9x4x128xbf16, #tpu.memory_space<vmem>>, vector<1x4x128xbf16>
    %69 = vector.shape_cast %68 : vector<1x4x128xbf16> to vector<4x128xbf16>
    %cst_80 = arith.constant dense<0.000000e+00> : vector<256x128xf32>
    %70 = tpu.matmul %66, %69, %cst_80 {dimension_numbers = #tpu.dot_dimension_numbers<[1], [0], [0], [1], [0, 0, 1, 1], [], []>} : vector<256x4xbf16>, vector<4x128xbf16>, vector<256x128xf32> -> vector<256x128xf32>
    %71 = arith.addf %67, %70 : vector<256x128xf32>
    %c0_81 = arith.constant 0 : index
    %c0_82 = arith.constant 0 : index
    %72 = vector.load %arg8[%c0_81, %c0_82] : memref<256x128xf32, #tpu.memory_space<vmem>>, vector<256x128xf32>
    tpu.vector_store %arg8[%c0_81, %c0_82], %71 {strides = array<i32>} : memref<256x128xf32, #tpu.memory_space<vmem>>, vector<256x128xf32>,
    %c0_83 = arith.constant 0 : index
    %c33 = arith.constant 33 : index
    %c0_84 = arith.constant 0 : index
    %73 = vector.load %arg1[%c0_83, %c33, %c0_84] : memref<1x290x4xbf16, #tpu.memory_space<vmem>>, vector<1x256x4xbf16>
    %74 = vector.shape_cast %73 : vector<1x256x4xbf16> to vector<256x4xbf16>
    %c0_85 = arith.constant 0 : index
    %c0_86 = arith.constant 0 : index
    %75 = vector.load %arg8[%c0_85, %c0_86] : memref<256x128xf32, #tpu.memory_space<vmem>>, vector<256x128xf32>
    %c7 = arith.constant 7 : index
    %c0_87 = arith.constant 0 : index
    %c0_88 = arith.constant 0 : index
    %76 = vector.load %arg3[%c7, %c0_87, %c0_88] : memref<9x4x128xbf16, #tpu.memory_space<vmem>>, vector<1x4x128xbf16>
    %77 = vector.shape_cast %76 : vector<1x4x128xbf16> to vector<4x128xbf16>
    %cst_89 = arith.constant dense<0.000000e+00> : vector<256x128xf32>
    %78 = tpu.matmul %74, %77, %cst_89 {dimension_numbers = #tpu.dot_dimension_numbers<[1], [0], [0], [1], [0, 0, 1, 1], [], []>} : vector<256x4xbf16>, vector<4x128xbf16>, vector<256x128xf32> -> vector<256x128xf32>
    %79 = arith.addf %75, %78 : vector<256x128xf32>
    %c0_90 = arith.constant 0 : index
    %c0_91 = arith.constant 0 : index
    %80 = vector.load %arg8[%c0_90, %c0_91] : memref<256x128xf32, #tpu.memory_space<vmem>>, vector<256x128xf32>
    tpu.vector_store %arg8[%c0_90, %c0_91], %79 {strides = array<i32>} : memref<256x128xf32, #tpu.memory_space<vmem>>, vector<256x128xf32>,
    %c0_92 = arith.constant 0 : index
    %c34 = arith.constant 34 : index
    %c0_93 = arith.constant 0 : index
    %81 = vector.load %arg1[%c0_92, %c34, %c0_93] : memref<1x290x4xbf16, #tpu.memory_space<vmem>>, vector<1x256x4xbf16>
    %82 = vector.shape_cast %81 : vector<1x256x4xbf16> to vector<256x4xbf16>
    %c1_94 = arith.constant 1 : index
    %c0_95 = arith.constant 0 : index
    %c0_96 = arith.constant 0 : index
    %83 = vector.load %arg2[%c1_94, %c0_95, %c0_96] : memref<2x256x4xbf16, #tpu.memory_space<vmem>>, vector<1x256x4xbf16>
    %84 = vector.shape_cast %83 : vector<1x256x4xbf16> to vector<256x4xbf16>
    %85 = arith.mulf %82, %84 : vector<256x4xbf16>
    %c0_97 = arith.constant 0 : index
    %c0_98 = arith.constant 0 : index
    %86 = vector.load %arg8[%c0_97, %c0_98] : memref<256x128xf32, #tpu.memory_space<vmem>>, vector<256x128xf32>
    %c8 = arith.constant 8 : index
    %c0_99 = arith.constant 0 : index
    %c0_100 = arith.constant 0 : index
    %87 = vector.load %arg3[%c8, %c0_99, %c0_100] : memref<9x4x128xbf16, #tpu.memory_space<vmem>>, vector<1x4x128xbf16>
    %88 = vector.shape_cast %87 : vector<1x4x128xbf16> to vector<4x128xbf16>
    %cst_101 = arith.constant dense<0.000000e+00> : vector<256x128xf32>
    %89 = tpu.matmul %85, %88, %cst_101 {dimension_numbers = #tpu.dot_dimension_numbers<[1], [0], [0], [1], [0, 0, 1, 1], [], []>} : vector<256x4xbf16>, vector<4x128xbf16>, vector<256x128xf32> -> vector<256x128xf32>
    %90 = arith.addf %86, %89 : vector<256x128xf32>
    %c0_102 = arith.constant 0 : index
    %c0_103 = arith.constant 0 : index
    %91 = vector.load %arg8[%c0_102, %c0_103] : memref<256x128xf32, #tpu.memory_space<vmem>>, vector<256x128xf32>
    tpu.vector_store %arg8[%c0_102, %c0_103], %90 {strides = array<i32>} : memref<256x128xf32, #tpu.memory_space<vmem>>, vector<256x128xf32>,
    %c0_104 = arith.constant 0 : index
    %c0_105 = arith.constant 0 : index
    %92 = vector.load %arg8[%c0_104, %c0_105] : memref<256x128xf32, #tpu.memory_space<vmem>>, vector<256x128xf32>
    %c0_106 = arith.constant 0 : index
    %c0_107 = arith.constant 0 : index
    %93 = vector.load %arg4[%c0_106, %c0_107] : memref<1x128xf32, #tpu.memory_space<vmem>>, vector<1x128xf32>
    %94 = vector.broadcast %93 : vector<1x128xf32> to vector<256x128xf32>
    %95 = arith.addf %92, %94 : vector<256x128xf32>
    %cst_108 = arith.constant 0.000000e+00 : f32
    %96 = vector.broadcast %cst_108 : f32 to vector<256x128xf32>
    %97 = arith.maximumf %95, %96 : vector<256x128xf32>
    %98 = tpu.transpose %97, [1, 0] : vector<256x128xf32> -> vector<128x256xf32>
    %99 = arith.truncf %98 : vector<128x256xf32> to vector<128x256xbf16>
    %c0_109 = arith.constant 0 : index
    %c0_110 = arith.constant 0 : index
    %100 = vector.load %arg6[%c0_109, %c0_110] : memref<1x128xf32, #tpu.memory_space<vmem>>, vector<1x128xf32>
    %101 = vector.extract_strided_slice %99 {offsets = [0, 0], sizes = [1, 256], strides = [1, 1]} : vector<128x256xbf16> to vector<1x256xbf16>
    %c0_111 = arith.constant 0 : index
    %c0_112 = arith.constant 0 : index
    %c0_113 = arith.constant 0 : index
    %102 = vector.load %arg5[%c0_111, %c0_112, %c0_113] : memref<8x256x128xbf16, #tpu.memory_space<vmem>>, vector<1x256x128xbf16>
    %103 = vector.shape_cast %102 : vector<1x256x128xbf16> to vector<256x128xbf16>
    %cst_114 = arith.constant dense<0.000000e+00> : vector<1x128xf32>
    %104 = tpu.matmul %101, %103, %cst_114 {dimension_numbers = #tpu.dot_dimension_numbers<[1], [0], [0], [1], [0, 0, 1, 1], [], []>} : vector<1x256xbf16>, vector<256x128xbf16>, vector<1x128xf32> -> vector<1x128xf32>
    %105 = arith.addf %100, %104 : vector<1x128xf32>
    %106 = vector.extract_strided_slice %99 {offsets = [1, 0], sizes = [1, 256], strides = [1, 1]} : vector<128x256xbf16> to vector<1x256xbf16>
    %c1_115 = arith.constant 1 : index
    %c0_116 = arith.constant 0 : index
    %c0_117 = arith.constant 0 : index
    %107 = vector.load %arg5[%c1_115, %c0_116, %c0_117] : memref<8x256x128xbf16, #tpu.memory_space<vmem>>, vector<1x256x128xbf16>
    %108 = vector.shape_cast %107 : vector<1x256x128xbf16> to vector<256x128xbf16>
    %cst_118 = arith.constant dense<0.000000e+00> : vector<1x128xf32>
    %109 = tpu.matmul %106, %108, %cst_118 {dimension_numbers = #tpu.dot_dimension_numbers<[1], [0], [0], [1], [0, 0, 1, 1], [], []>} : vector<1x256xbf16>, vector<256x128xbf16>, vector<1x128xf32> -> vector<1x128xf32>
    %110 = arith.addf %105, %109 : vector<1x128xf32>
    %111 = vector.extract_strided_slice %99 {offsets = [2, 0], sizes = [1, 256], strides = [1, 1]} : vector<128x256xbf16> to vector<1x256xbf16>
    %c2_119 = arith.constant 2 : index
    %c0_120 = arith.constant 0 : index
    %c0_121 = arith.constant 0 : index
    %112 = vector.load %arg5[%c2_119, %c0_120, %c0_121] : memref<8x256x128xbf16, #tpu.memory_space<vmem>>, vector<1x256x128xbf16>
    %113 = vector.shape_cast %112 : vector<1x256x128xbf16> to vector<256x128xbf16>
    %cst_122 = arith.constant dense<0.000000e+00> : vector<1x128xf32>
    %114 = tpu.matmul %111, %113, %cst_122 {dimension_numbers = #tpu.dot_dimension_numbers<[1], [0], [0], [1], [0, 0, 1, 1], [], []>} : vector<1x256xbf16>, vector<256x128xbf16>, vector<1x128xf32> -> vector<1x128xf32>
    %115 = arith.addf %110, %114 : vector<1x128xf32>
    %116 = vector.extract_strided_slice %99 {offsets = [3, 0], sizes = [1, 256], strides = [1, 1]} : vector<128x256xbf16> to vector<1x256xbf16>
    %c3_123 = arith.constant 3 : index
    %c0_124 = arith.constant 0 : index
    %c0_125 = arith.constant 0 : index
    %117 = vector.load %arg5[%c3_123, %c0_124, %c0_125] : memref<8x256x128xbf16, #tpu.memory_space<vmem>>, vector<1x256x128xbf16>
    %118 = vector.shape_cast %117 : vector<1x256x128xbf16> to vector<256x128xbf16>
    %cst_126 = arith.constant dense<0.000000e+00> : vector<1x128xf32>
    %119 = tpu.matmul %116, %118, %cst_126 {dimension_numbers = #tpu.dot_dimension_numbers<[1], [0], [0], [1], [0, 0, 1, 1], [], []>} : vector<1x256xbf16>, vector<256x128xbf16>, vector<1x128xf32> -> vector<1x128xf32>
    %120 = arith.addf %115, %119 : vector<1x128xf32>
    %121 = vector.extract_strided_slice %99 {offsets = [4, 0], sizes = [1, 256], strides = [1, 1]} : vector<128x256xbf16> to vector<1x256xbf16>
    %c4_127 = arith.constant 4 : index
    %c0_128 = arith.constant 0 : index
    %c0_129 = arith.constant 0 : index
    %122 = vector.load %arg5[%c4_127, %c0_128, %c0_129] : memref<8x256x128xbf16, #tpu.memory_space<vmem>>, vector<1x256x128xbf16>
    %123 = vector.shape_cast %122 : vector<1x256x128xbf16> to vector<256x128xbf16>
    %cst_130 = arith.constant dense<0.000000e+00> : vector<1x128xf32>
    %124 = tpu.matmul %121, %123, %cst_130 {dimension_numbers = #tpu.dot_dimension_numbers<[1], [0], [0], [1], [0, 0, 1, 1], [], []>} : vector<1x256xbf16>, vector<256x128xbf16>, vector<1x128xf32> -> vector<1x128xf32>
    %125 = arith.addf %120, %124 : vector<1x128xf32>
    %126 = vector.extract_strided_slice %99 {offsets = [5, 0], sizes = [1, 256], strides = [1, 1]} : vector<128x256xbf16> to vector<1x256xbf16>
    %c5_131 = arith.constant 5 : index
    %c0_132 = arith.constant 0 : index
    %c0_133 = arith.constant 0 : index
    %127 = vector.load %arg5[%c5_131, %c0_132, %c0_133] : memref<8x256x128xbf16, #tpu.memory_space<vmem>>, vector<1x256x128xbf16>
    %128 = vector.shape_cast %127 : vector<1x256x128xbf16> to vector<256x128xbf16>
    %cst_134 = arith.constant dense<0.000000e+00> : vector<1x128xf32>
    %129 = tpu.matmul %126, %128, %cst_134 {dimension_numbers = #tpu.dot_dimension_numbers<[1], [0], [0], [1], [0, 0, 1, 1], [], []>} : vector<1x256xbf16>, vector<256x128xbf16>, vector<1x128xf32> -> vector<1x128xf32>
    %130 = arith.addf %125, %129 : vector<1x128xf32>
    %131 = vector.extract_strided_slice %99 {offsets = [6, 0], sizes = [1, 256], strides = [1, 1]} : vector<128x256xbf16> to vector<1x256xbf16>
    %c6_135 = arith.constant 6 : index
    %c0_136 = arith.constant 0 : index
    %c0_137 = arith.constant 0 : index
    %132 = vector.load %arg5[%c6_135, %c0_136, %c0_137] : memref<8x256x128xbf16, #tpu.memory_space<vmem>>, vector<1x256x128xbf16>
    %133 = vector.shape_cast %132 : vector<1x256x128xbf16> to vector<256x128xbf16>
    %cst_138 = arith.constant dense<0.000000e+00> : vector<1x128xf32>
    %134 = tpu.matmul %131, %133, %cst_138 {dimension_numbers = #tpu.dot_dimension_numbers<[1], [0], [0], [1], [0, 0, 1, 1], [], []>} : vector<1x256xbf16>, vector<256x128xbf16>, vector<1x128xf32> -> vector<1x128xf32>
    %135 = arith.addf %130, %134 : vector<1x128xf32>
    %136 = vector.extract_strided_slice %99 {offsets = [7, 0], sizes = [1, 256], strides = [1, 1]} : vector<128x256xbf16> to vector<1x256xbf16>
    %c7_139 = arith.constant 7 : index
    %c0_140 = arith.constant 0 : index
    %c0_141 = arith.constant 0 : index
    %137 = vector.load %arg5[%c7_139, %c0_140, %c0_141] : memref<8x256x128xbf16, #tpu.memory_space<vmem>>, vector<1x256x128xbf16>
    %138 = vector.shape_cast %137 : vector<1x256x128xbf16> to vector<256x128xbf16>
    %cst_142 = arith.constant dense<0.000000e+00> : vector<1x128xf32>
    %139 = tpu.matmul %136, %138, %cst_142 {dimension_numbers = #tpu.dot_dimension_numbers<[1], [0], [0], [1], [0, 0, 1, 1], [], []>} : vector<1x256xbf16>, vector<256x128xbf16>, vector<1x128xf32> -> vector<1x128xf32>
    %140 = arith.addf %135, %139 : vector<1x128xf32>
    %c0_143 = arith.constant 0 : index
    %c0_144 = arith.constant 0 : index
    %c0_145 = arith.constant 0 : index
    %141 = vector.load %arg7[%c0_143, %c0_144, %c0_145] : memref<1x1x128xf32, #tpu.memory_space<vmem>>, vector<1x1x128xf32>
    %142 = vector.shape_cast %141 : vector<1x1x128xf32> to vector<1x128xf32>
    %143 = vector.shape_cast %140 : vector<1x128xf32> to vector<1x1x128xf32>
    tpu.vector_store %arg7[%c0_143, %c0_144, %c0_145], %143 {strides = array<i32>} : memref<1x1x128xf32, #tpu.memory_space<vmem>>, vector<1x1x128xf32>,
    return
  }
  func.func @transform_0(%arg0: i32) -> (i32, i32, i32) {
    %c0_i32 = arith.constant 0 : i32
    %c0_i32_0 = arith.constant 0 : i32
    %c0_i32_1 = arith.constant 0 : i32
    return %arg0, %c0_i32, %c0_i32_0 : i32, i32, i32
  }
  func.func @transform_1(%arg0: i32) -> (i32, i32, i32) {
    %c0_i32 = arith.constant 0 : i32
    %c0_i32_0 = arith.constant 0 : i32
    %c0_i32_1 = arith.constant 0 : i32
    %c0_i32_2 = arith.constant 0 : i32
    return %c0_i32, %c0_i32_0, %c0_i32_1 : i32, i32, i32
  }
  func.func @transform_2(%arg0: i32) -> (i32, i32, i32) {
    %c0_i32 = arith.constant 0 : i32
    %c0_i32_0 = arith.constant 0 : i32
    %c0_i32_1 = arith.constant 0 : i32
    %c0_i32_2 = arith.constant 0 : i32
    return %c0_i32, %c0_i32_0, %c0_i32_1 : i32, i32, i32
  }
  func.func @transform_3(%arg0: i32) -> (i32, i32) {
    %c0_i32 = arith.constant 0 : i32
    %c0_i32_0 = arith.constant 0 : i32
    %c0_i32_1 = arith.constant 0 : i32
    return %c0_i32, %c0_i32_0 : i32, i32
  }
  func.func @transform_4(%arg0: i32) -> (i32, i32, i32) {
    %c0_i32 = arith.constant 0 : i32
    %c0_i32_0 = arith.constant 0 : i32
    %c0_i32_1 = arith.constant 0 : i32
    %c0_i32_2 = arith.constant 0 : i32
    return %c0_i32, %c0_i32_0, %c0_i32_1 : i32, i32, i32
  }
  func.func @transform_5(%arg0: i32) -> (i32, i32) {
    %c0_i32 = arith.constant 0 : i32
    %c0_i32_0 = arith.constant 0 : i32
    %c0_i32_1 = arith.constant 0 : i32
    return %c0_i32, %c0_i32_0 : i32, i32
  }
  func.func @transform_6(%arg0: i32) -> (i32, i32, i32) {
    %c0_i32 = arith.constant 0 : i32
    %c0_i32_0 = arith.constant 0 : i32
    %c0_i32_1 = arith.constant 0 : i32
    return %arg0, %c0_i32, %c0_i32_0 : i32, i32, i32
  }
}

</mosaic_0001>

<llo_original>
// kernel: tpu_custom_call.1
$region0: #{tpu_custom_call.1}
  #allocation0 [shape = 'u32[]', space=smem, size = 0x4, offset = 0x4, fixed_abs, tag = 'smem constant byte address 0x4 - core index']
  #allocation1 [shape = 'u32[144,128]{1,0:T(1,128)}', space=vmem, size = 0x12000, scoped, tag = 'internal scratch']
  #allocation2 [shape = 'f32[256,128]{1,0:T(8,128)}', space=vmem, size = 0x20000, scoped, tag = 'scratch operand']
  %s0 = inlined_call_operand.vmem [shape: bf16[2,290,4], index: 0, kind: input, shape index: {}]
  %s1 = inlined_call_operand.vmem [shape: bf16[2,256,4], index: 1, kind: input, shape index: {}]
  %s2 = inlined_call_operand.vmem [shape: bf16[9,4,128], index: 2, kind: input, shape index: {}]
  %s3 = inlined_call_operand.vmem [shape: f32[1,128], index: 3, kind: input, shape index: {}]
  %s4 = inlined_call_operand.hbm [shape: bf16[8,256,128], index: 4, kind: input, shape index: {}]
  %s5 = inlined_call_operand.vmem [shape: f32[1,128], index: 5, kind: input, shape index: {}]
  %s6 = inlined_call_operand.hbm [shape: f32[2,1,128], index: 6, kind: output, shape index: {}]
  %s7 = sld [smem:[#allocation0]]
  $region61: #{tpu_custom_call.1} parent=0
    _
  %s9 = ssub.s32 1, %s7
  %s10 = scalar_select 0, %s9, %s7
  $region1: #{tpu_custom_call.1} parent=0
    #allocation3 [shape = 'u8[524288]{0}', space=vmem, size = 0x80000, scoped, tag = 'input window, operand 4, single buffered']
    #allocation4 [shape = 's32[2]{0}', space=sflag, size = 0x8, scoped, tag = 'scoped memory for tpu_custom_call.1']
    #allocation5 [shape = 's32[2]{0}', space=sflag, size = 0x8, scoped, tag = 'scoped memory for tpu_custom_call.1']
    #allocation6 [shape = 'u8[1024]{0}', space=vmem, size = 0x400, scoped, tag = 'output window, operand 0']
    %11 = vsyncpa [#allocation4], 0
    %12 = vsyncpa [#allocation5], 0
    %s13 = scalar_lea.sflag [#allocation5], 1
    %14 = vsyncpa %s13, 0
    loop: start=0, step=1, limit=4
    $region2: #{tpu_custom_call.1} parent=1 // loop_pre_header
      _
    $region3: #{tpu_custom_call.1} parent=1 // loop_header
      %s16 = sphi 0, %s20
      %p17 = scmp.ge.s32.totalorder %s16, 4
      %s26 = sphi 0, %s28
      %s29 = sphi 0, %s26
      %s30 = sphi 0, %s29
      %s46 = sphi 0, %s30
      %s50 = sphi 0, %s50
      %s52 = sphi 0, %s50
      %s53 = sphi 0, %s52
      %s67 = sphi 0, %s53
      %s71 = sphi 0, %s71
      %s73 = sphi 0, %s71
      %s74 = sphi 0, %s73
      %s88 = sphi 0, %s74
      %s92 = sphi 0, %s92
      %s94 = sphi 0, %s92
      %s95 = sphi 0, %s94
      %s109 = sphi 0, %s95
      %s113 = sphi 0, %s113
      %s115 = sphi 0, %s113
      %s116 = sphi 0, %s115
      %s130 = sphi 0, %s116
      %s134 = sphi 0, %s134
      %s136 = sphi 0, %s134
      %s137 = sphi 0, %s136
      %s151 = sphi 0, %s137
      %s157 = sphi 0, %s159
      %s160 = sphi 0, %s157
      %s161 = sphi 0, %s160
      %s177 = sphi 0, %s161
    $region4: #{tpu_custom_call.1} parent=1 // loop_header_branch
      %19 = sbr.rel (%p17) target = $region8
    $region5: #{tpu_custom_call.1} parent=1 // loop_body
      %s21 = ssub.s32 %s16, 1
      %s22 = ssub.s32 %s16, 2
      %s23 = sadd.s32 %s16, 1
      %s24 = ssub.s32 %s16, %s23
      %p25 = scmp.eq.s32.totalorder %s24, 0
      %s27 = sadd.s32 %s26, 1
      %s28 = scalar_select %p25, %s26, %s27
      %p31 = pneg %p25
      %p32 = scmp.eq.s32.totalorder %s16, 1
      %p33 = por %p31, %p32
      %p34 = scmp.ne.s32.totalorder %s26, %s29
      %p35 = scmp.eq.s32.totalorder %s16, 0
      %p36 = por %p34, %p35
      %p37 = scmp.ne.s32.totalorder %s26, %s29
      %p38 = scmp.eq.s32.totalorder %s21, 1
      %p39 = por %p37, %p38
      %p40 = scmp.ne.s32.totalorder %s29, %s30
      %p41 = scmp.eq.s32.totalorder %s21, 0
      %p42 = por %p40, %p41
      %p43 = scmp.ne.s32.totalorder %s29, %s30
      %p44 = scmp.eq.s32.totalorder %s22, 1
      %p45 = por %p43, %p44
      %p47 = scmp.ne.s32.totalorder %s30, %s46
      %p48 = scmp.eq.s32.totalorder %s22, 0
      %p49 = por %p47, %p48
      %s51 = sadd.s32 %s50, 1
      %p54 = scmp.eq.s32.totalorder %s16, 1
      %p55 = scmp.ne.s32.totalorder %s50, %s52
      %p56 = scmp.eq.s32.totalorder %s16, 0
      %p57 = por %p55, %p56
      %p58 = scmp.ne.s32.totalorder %s50, %s52
      %p59 = scmp.eq.s32.totalorder %s21, 1
      %p60 = por %p58, %p59
      %p61 = scmp.ne.s32.totalorder %s52, %s53
      %p62 = scmp.eq.s32.totalorder %s21, 0
      %p63 = por %p61, %p62
      %p64 = scmp.ne.s32.totalorder %s52, %s53
      %p65 = scmp.eq.s32.totalorder %s22, 1
      %p66 = por %p64, %p65
      %p68 = scmp.ne.s32.totalorder %s53, %s67
      %p69 = scmp.eq.s32.totalorder %s22, 0
      %p70 = por %p68, %p69
      %s72 = sadd.s32 %s71, 1
      %p75 = scmp.eq.s32.totalorder %s16, 1
      %p76 = scmp.ne.s32.totalorder %s71, %s73
      %p77 = scmp.eq.s32.totalorder %s16, 0
      %p78 = por %p76, %p77
      %p79 = scmp.ne.s32.totalorder %s71, %s73
      %p80 = scmp.eq.s32.totalorder %s21, 1
      %p81 = por %p79, %p80
      %p82 = scmp.ne.s32.totalorder %s73, %s74
      %p83 = scmp.eq.s32.totalorder %s21, 0
      %p84 = por %p82, %p83
      %p85 = scmp.ne.s32.totalorder %s73, %s74
      %p86 = scmp.eq.s32.totalorder %s22, 1
      %p87 = por %p85, %p86
      %p89 = scmp.ne.s32.totalorder %s74, %s88
      %p90 = scmp.eq.s32.totalorder %s22, 0
      %p91 = por %p89, %p90
      %s93 = sadd.s32 %s92, 1
      %p96 = scmp.eq.s32.totalorder %s16, 1
      %p97 = scmp.ne.s32.totalorder %s92, %s94
      %p98 = scmp.eq.s32.totalorder %s16, 0
      %p99 = por %p97, %p98
      %p100 = scmp.ne.s32.totalorder %s92, %s94
      %p101 = scmp.eq.s32.totalorder %s21, 1
      %p102 = por %p100, %p101
      %p103 = scmp.ne.s32.totalorder %s94, %s95
      %p104 = scmp.eq.s32.totalorder %s21, 0
      %p105 = por %p103, %p104
      %p106 = scmp.ne.s32.totalorder %s94, %s95
      %p107 = scmp.eq.s32.totalorder %s22, 1
      %p108 = por %p106, %p107
      %p110 = scmp.ne.s32.totalorder %s95, %s109
      %p111 = scmp.eq.s32.totalorder %s22, 0
      %p112 = por %p110, %p111
      %s114 = sadd.s32 %s113, 1
      %p117 = scmp.eq.s32.totalorder %s16, 1
      %p118 = scmp.ne.s32.totalorder %s113, %s115
      %p119 = scmp.eq.s32.totalorder %s16, 0
      %p120 = por %p118, %p119
      %p121 = scmp.ne.s32.totalorder %s113, %s115
      %p122 = scmp.eq.s32.totalorder %s21, 1
      %p123 = por %p121, %p122
      %p124 = scmp.ne.s32.totalorder %s115, %s116
      %p125 = scmp.eq.s32.totalorder %s21, 0
      %p126 = por %p124, %p125
      %p127 = scmp.ne.s32.totalorder %s115, %s116
      %p128 = scmp.eq.s32.totalorder %s22, 1
      %p129 = por %p127, %p128
      %p131 = scmp.ne.s32.totalorder %s116, %s130
      %p132 = scmp.eq.s32.totalorder %s22, 0
      %p133 = por %p131, %p132
      %s135 = sadd.s32 %s134, 1
      %p138 = scmp.eq.s32.totalorder %s16, 1
      %p139 = scmp.ne.s32.totalorder %s134, %s136
      %p140 = scmp.eq.s32.totalorder %s16, 0
      %p141 = por %p139, %p140
      %p142 = scmp.ne.s32.totalorder %s134, %s136
      %p143 = scmp.eq.s32.totalorder %s21, 1
      %p144 = por %p142, %p143
      %p145 = scmp.ne.s32.totalorder %s136, %s137
      %p146 = scmp.eq.s32.totalorder %s21, 0
      %p147 = por %p145, %p146
      %p148 = scmp.ne.s32.totalorder %s136, %s137
      %p149 = scmp.eq.s32.totalorder %s22, 1
      %p150 = por %p148, %p149
      %p152 = scmp.ne.s32.totalorder %s137, %s151
      %p153 = scmp.eq.s32.totalorder %s22, 0
      %p154 = por %p152, %p153
      %s155 = ssub.s32 %s16, %s23
      %p156 = scmp.eq.s32.totalorder %s155, 0
      %s158 = sadd.s32 %s157, 1
      %s159 = scalar_select %p156, %s157, %s158
      %p162 = pneg %p156
      %p163 = scmp.eq.s32.totalorder %s16, 1
      %p164 = por %p162, %p163
      %p165 = scmp.ne.s32.totalorder %s157, %s160
      %p166 = scmp.eq.s32.totalorder %s16, 0
      %p167 = por %p165, %p166
      %p168 = scmp.ne.s32.totalorder %s157, %s160
      %p169 = scmp.eq.s32.totalorder %s21, 1
      %p170 = por %p168, %p169
      %p171 = scmp.ne.s32.totalorder %s160, %s161
      %p172 = scmp.eq.s32.totalorder %s21, 0
      %p173 = por %p171, %p172
      %p174 = scmp.ne.s32.totalorder %s160, %s161
      %p175 = scmp.eq.s32.totalorder %s22, 1
      %p176 = por %p174, %p175
      %p178 = scmp.ne.s32.totalorder %s161, %s177
      %p179 = scmp.eq.s32.totalorder %s22, 0
      %p180 = por %p178, %p179
      %p181 = scmp.le.s32.totalorder 1, %s16
      %p182 = scmp.lt.s32.totalorder %s16, 3
      %p183 = pnand %p181, %p182
      %p184 = pneg %p183
      // Predicated region
      $region9: #{tpu_custom_call.1} parent=5 // pred_check
        _
      $region10: #{tpu_custom_call.1} parent=5 // pred_check_branch
        %186 = sbr.rel (%p183) target = $region12
      $region11: #{tpu_custom_call.1} parent=5 // pred_region
        %s187 = ssub.s32 %s16, 1
        // Predicated region
        $region13: #{tpu_custom_call.1} parent=11 // pred_check
          %p188 = pneg %p63
        $region14: #{tpu_custom_call.1} parent=11 // pred_check_branch
          %190 = sbr.rel (%p188) target = $region16
        $region15: #{tpu_custom_call.1} parent=11 // pred_region
          _
        $region16: #{tpu_custom_call.1} parent=11 // pred_fallthru
          _
        // Predicated region
        $region17: #{tpu_custom_call.1} parent=11 // pred_check
          %p191 = pneg %p84
        $region18: #{tpu_custom_call.1} parent=11 // pred_check_branch
          %193 = sbr.rel (%p191) target = $region20
        $region19: #{tpu_custom_call.1} parent=11 // pred_region
          _
        $region20: #{tpu_custom_call.1} parent=11 // pred_fallthru
          _
        // Predicated region
        $region21: #{tpu_custom_call.1} parent=11 // pred_check
          %p194 = pneg %p105
        $region22: #{tpu_custom_call.1} parent=11 // pred_check_branch
          %196 = sbr.rel (%p194) target = $region24
        $region23: #{tpu_custom_call.1} parent=11 // pred_region
          _
        $region24: #{tpu_custom_call.1} parent=11 // pred_fallthru
          _
        // Predicated region
        $region25: #{tpu_custom_call.1} parent=11 // pred_check
          %p197 = pneg %p126
        $region26: #{tpu_custom_call.1} parent=11 // pred_check_branch
          %199 = sbr.rel (%p197) target = $region28
        $region27: #{tpu_custom_call.1} parent=11 // pred_region
          %s201 = ssub.s32 16384, 16384
          %202 = vsyncadd [#allocation4], %s201
          %s203 = sshll.u32 [#allocation3], 4
          %s204 = int_to_ptr.vmem [resolvable:$true] %s203
          %209 = dma.hbm_to_vmem [thread:$0]  %s4, 16384, %s204, [#allocation4], 64, 64, 4
        $region28: #{tpu_custom_call.1} parent=11 // pred_fallthru
          _
        // Predicated region
        $region29: #{tpu_custom_call.1} parent=11 // pred_check
          %p210 = pneg %p147
        $region30: #{tpu_custom_call.1} parent=11 // pred_check_branch
          %212 = sbr.rel (%p210) target = $region32
        $region31: #{tpu_custom_call.1} parent=11 // pred_region
          _
        $region32: #{tpu_custom_call.1} parent=11 // pred_fallthru
          _
      $region12: #{tpu_custom_call.1} parent=5 // pred_fallthru
        _
      %p213 = scmp.lt.s32.totalorder %s16, 2
      // Predicated region
      $region33: #{tpu_custom_call.1} parent=5 // pred_check
        %p214 = pneg %p213
      $region34: #{tpu_custom_call.1} parent=5 // pred_check_branch
        %216 = sbr.rel (%p214) target = $region36
      $region35: #{tpu_custom_call.1} parent=5 // pred_region
        // Predicated region
        $region37: #{tpu_custom_call.1} parent=35 // pred_check
          %p217 = pneg %p36
        $region38: #{tpu_custom_call.1} parent=35 // pred_check_branch
          %219 = sbr.rel (%p217) target = $region40
        $region39: #{tpu_custom_call.1} parent=35 // pred_region
          %p220 = scmp.lt.s32.totalorder %s16, 1
          %s221 = scalar_select %p220, %s16, 1
          %s222 = smul.addr %s221, 37
          %s223 = smul.addr %s222, 4
          %s224 = scalar_lea.vmem %s0, %s223
        $region40: #{tpu_custom_call.1} parent=35 // pred_fallthru
          _
      $region36: #{tpu_custom_call.1} parent=5 // pred_fallthru
        _
      %p225 = scmp.le.s32.totalorder 1, %s16
      %p226 = scmp.lt.s32.totalorder %s16, 3
      %p227 = pnand %p225, %p226
      %p228 = pneg %p227
      // Predicated region
      $region41: #{tpu_custom_call.1} parent=5 // pred_check
        _
      $region42: #{tpu_custom_call.1} parent=5 // pred_check_branch
        %230 = sbr.rel (%p227) target = $region44
      $region43: #{tpu_custom_call.1} parent=5 // pred_region
        %s231 = ssub.s32 %s16, 1
        // Predicated region
        $region45: #{tpu_custom_call.1} parent=43 // pred_check
          %p232 = pneg %p126
        $region46: #{tpu_custom_call.1} parent=43 // pred_check_branch
          %234 = sbr.rel (%p232) target = $region48
        $region47: #{tpu_custom_call.1} parent=43 // pred_region
          %235 = dma.done [#allocation4], 16384
        $region48: #{tpu_custom_call.1} parent=43 // pred_fallthru
          _
        %p236 = scmp.lt.s32.totalorder %s21, 1
        %s237 = scalar_select %p236, %s21, 1
        %s238 = smul.addr %s237, 37
        %s239 = smul.addr %s238, 4
        %s240 = scalar_lea.vmem %s0, %s239
        %p241 = pneg %p42
        %p242 = pneg %p39
        %p243 = pneg %p63
        %p244 = pneg %p60
        %p245 = pneg %p84
        %p246 = pneg %p81
        %p247 = pneg %p105
        %p248 = pneg %p102
        %p249 = pneg %p126
        %p250 = pneg %p123
        %p251 = pneg %p147
        %p252 = pneg %p144
        %p253 = pneg %p173
        %p254 = pneg %p170
        %s255 = sand.u32 %s160, 1
        %s256 = scalar_lea.sflag [#allocation5], %s255
        %s257 = sand.u32 %s160, 1
        %s258 = scalar_lea.vmem [#allocation6], %s257
        %p259 = scmp.lt.s32.totalorder %s21, 1
        %s260 = scalar_select %p259, %s21, 1
        %s261 = smul.addr %s260, 37
        %s262 = smul.addr %s261, 4
        %s263 = scalar_lea.vmem %s0, %s262
        %265 = vst [vmem:[#allocation2] sm:$0xff] 0.0
        %266 = vst [vmem:[#allocation2 + $0x8] sm:$0xff] 0.0
        %267 = vst [vmem:[#allocation2 + $0x10] sm:$0xff] 0.0
        %268 = vst [vmem:[#allocation2 + $0x18] sm:$0xff] 0.0
        %269 = vst [vmem:[#allocation2 + $0x20] sm:$0xff] 0.0
        %270 = vst [vmem:[#allocation2 + $0x28] sm:$0xff] 0.0
        %271 = vst [vmem:[#allocation2 + $0x30] sm:$0xff] 0.0
        %272 = vst [vmem:[#allocation2 + $0x38] sm:$0xff] 0.0
        %273 = vst [vmem:[#allocation2 + $0x40] sm:$0xff] 0.0
        %274 = vst [vmem:[#allocation2 + $0x48] sm:$0xff] 0.0
        %275 = vst [vmem:[#allocation2 + $0x50] sm:$0xff] 0.0
        %276 = vst [vmem:[#allocation2 + $0x58] sm:$0xff] 0.0
        %277 = vst [vmem:[#allocation2 + $0x60] sm:$0xff] 0.0
        %278 = vst [vmem:[#allocation2 + $0x68] sm:$0xff] 0.0
        %279 = vst [vmem:[#allocation2 + $0x70] sm:$0xff] 0.0
        %280 = vst [vmem:[#allocation2 + $0x78] sm:$0xff] 0.0
        %281 = vst [vmem:[#allocation2 + $0x80] sm:$0xff] 0.0
        %282 = vst [vmem:[#allocation2 + $0x88] sm:$0xff] 0.0
        %283 = vst [vmem:[#allocation2 + $0x90] sm:$0xff] 0.0
        %284 = vst [vmem:[#allocation2 + $0x98] sm:$0xff] 0.0
        %285 = vst [vmem:[#allocation2 + $0xa0] sm:$0xff] 0.0
        %286 = vst [vmem:[#allocation2 + $0xa8] sm:$0xff] 0.0
        %287 = vst [vmem:[#allocation2 + $0xb0] sm:$0xff] 0.0
        %288 = vst [vmem:[#allocation2 + $0xb8] sm:$0xff] 0.0
        %289 = vst [vmem:[#allocation2 + $0xc0] sm:$0xff] 0.0
        %290 = vst [vmem:[#allocation2 + $0xc8] sm:$0xff] 0.0
        %291 = vst [vmem:[#allocation2 + $0xd0] sm:$0xff] 0.0
        %292 = vst [vmem:[#allocation2 + $0xd8] sm:$0xff] 0.0
        %293 = vst [vmem:[#allocation2 + $0xe0] sm:$0xff] 0.0
        %294 = vst [vmem:[#allocation2 + $0xe8] sm:$0xff] 0.0
        %295 = vst [vmem:[#allocation2 + $0xf0] sm:$0xff] 0.0
        %296 = vst [vmem:[#allocation2 + $0xf8] sm:$0xff] 0.0
        %v297 = vld [vmem:[%s263] sm:$0xf]
        %v298 = vld [vmem:[%s263 + $0x4] sm:$0xf]
        %v299 = vld [vmem:[%s263 + $0x8] sm:$0xf]
        %v300 = vld [vmem:[%s263 + $0xc] sm:$0xf]
        %v301 = vld [vmem:[%s263 + $0x10] sm:$0xf]
        %v302 = vld [vmem:[%s263 + $0x14] sm:$0xf]
        %v303 = vld [vmem:[%s263 + $0x18] sm:$0xf]
        %v304 = vld [vmem:[%s263 + $0x1c] sm:$0xf]
        %v305 = vld [vmem:[%s263 + $0x20] sm:$0xf]
        %v306 = vld [vmem:[%s263 + $0x24] sm:$0xf]
        %v307 = vld [vmem:[%s263 + $0x28] sm:$0xf]
        %v308 = vld [vmem:[%s263 + $0x2c] sm:$0xf]
        %v309 = vld [vmem:[%s263 + $0x30] sm:$0xf]
        %v310 = vld [vmem:[%s263 + $0x34] sm:$0xf]
        %v311 = vld [vmem:[%s263 + $0x38] sm:$0xf]
        %v312 = vld [vmem:[%s263 + $0x3c] sm:$0xf]
        %v313 = vld [vmem:[%s263 + $0x40] sm:$0xf]
        %v314 = vld [vmem:[%s263 + $0x44] sm:$0xf]
        %v315 = vld [vmem:[%s263 + $0x48] sm:$0xf]
        %v316 = vld [vmem:[%s263 + $0x4c] sm:$0xf]
        %v317 = vld [vmem:[%s263 + $0x50] sm:$0xf]
        %v318 = vld [vmem:[%s263 + $0x54] sm:$0xf]
        %v319 = vld [vmem:[%s263 + $0x58] sm:$0xf]
        %v320 = vld [vmem:[%s263 + $0x5c] sm:$0xf]
        %v321 = vld [vmem:[%s263 + $0x60] sm:$0xf]
        %v322 = vld [vmem:[%s263 + $0x64] sm:$0xf]
        %v323 = vld [vmem:[%s263 + $0x68] sm:$0xf]
        %v324 = vld [vmem:[%s263 + $0x6c] sm:$0xf]
        %v325 = vld [vmem:[%s263 + $0x70] sm:$0xf]
        %v326 = vld [vmem:[%s263 + $0x74] sm:$0xf]
        %v327 = vld [vmem:[%s263 + $0x78] sm:$0xf]
        %v328 = vld [vmem:[%s263 + $0x7c] sm:$0xf]
        %v329 = vld [vmem:[%s1] sm:$0xf]
        %v330 = vld [vmem:[%s1 + $0x4] sm:$0xf]
        %v331 = vld [vmem:[%s1 + $0x8] sm:$0xf]
        %v332 = vld [vmem:[%s1 + $0xc] sm:$0xf]
        %v333 = vld [vmem:[%s1 + $0x10] sm:$0xf]
        %v334 = vld [vmem:[%s1 + $0x14] sm:$0xf]
        %v335 = vld [vmem:[%s1 + $0x18] sm:$0xf]
        %v336 = vld [vmem:[%s1 + $0x1c] sm:$0xf]
        %v337 = vld [vmem:[%s1 + $0x20] sm:$0xf]
        %v338 = vld [vmem:[%s1 + $0x24] sm:$0xf]
        %v339 = vld [vmem:[%s1 + $0x28] sm:$0xf]
        %v340 = vld [vmem:[%s1 + $0x2c] sm:$0xf]
        %v341 = vld [vmem:[%s1 + $0x30] sm:$0xf]
        %v342 = vld [vmem:[%s1 + $0x34] sm:$0xf]
        %v343 = vld [vmem:[%s1 + $0x38] sm:$0xf]
        %v344 = vld [vmem:[%s1 + $0x3c] sm:$0xf]
        %v345 = vld [vmem:[%s1 + $0x40] sm:$0xf]
        %v346 = vld [vmem:[%s1 + $0x44] sm:$0xf]
        %v347 = vld [vmem:[%s1 + $0x48] sm:$0xf]
        %v348 = vld [vmem:[%s1 + $0x4c] sm:$0xf]
        %v349 = vld [vmem:[%s1 + $0x50] sm:$0xf]
        %v350 = vld [vmem:[%s1 + $0x54] sm:$0xf]
        %v351 = vld [vmem:[%s1 + $0x58] sm:$0xf]
        %v352 = vld [vmem:[%s1 + $0x5c] sm:$0xf]
        %v353 = vld [vmem:[%s1 + $0x60] sm:$0xf]
        %v354 = vld [vmem:[%s1 + $0x64] sm:$0xf]
        %v355 = vld [vmem:[%s1 + $0x68] sm:$0xf]
        %v356 = vld [vmem:[%s1 + $0x6c] sm:$0xf]
        %v357 = vld [vmem:[%s1 + $0x70] sm:$0xf]
        %v358 = vld [vmem:[%s1 + $0x74] sm:$0xf]
        %v359 = vld [vmem:[%s1 + $0x78] sm:$0xf]
        %v360 = vld [vmem:[%s1 + $0x7c] sm:$0xf]
        %v361 = vmul.bf16 %v297, %v329
        %v362 = vmul.bf16 %v298, %v330
        %v363 = vmul.bf16 %v299, %v331
        %v364 = vmul.bf16 %v300, %v332
        %v365 = vmul.bf16 %v301, %v333
        %v366 = vmul.bf16 %v302, %v334
        %v367 = vmul.bf16 %v303, %v335
        %v368 = vmul.bf16 %v304, %v336
        %v369 = vmul.bf16 %v305, %v337
        %v370 = vmul.bf16 %v306, %v338
        %v371 = vmul.bf16 %v307, %v339
        %v372 = vmul.bf16 %v308, %v340
        %v373 = vmul.bf16 %v309, %v341
        %v374 = vmul.bf16 %v310, %v342
        %v375 = vmul.bf16 %v311, %v343
        %v376 = vmul.bf16 %v312, %v344
        %v377 = vmul.bf16 %v313, %v345
        %v378 = vmul.bf16 %v314, %v346
        %v379 = vmul.bf16 %v315, %v347
        %v380 = vmul.bf16 %v316, %v348
        %v381 = vmul.bf16 %v317, %v349
        %v382 = vmul.bf16 %v318, %v350
        %v383 = vmul.bf16 %v319, %v351
        %v384 = vmul.bf16 %v320, %v352
        %v385 = vmul.bf16 %v321, %v353
        %v386 = vmul.bf16 %v322, %v354
        %v387 = vmul.bf16 %v323, %v355
        %v388 = vmul.bf16 %v324, %v356
        %v389 = vmul.bf16 %v325, %v357
        %v390 = vmul.bf16 %v326, %v358
        %v391 = vmul.bf16 %v327, %v359
        %v392 = vmul.bf16 %v328, %v360
        %v393 = vld [vmem:[#allocation2] sm:$0xff]
        %v394 = vld [vmem:[#allocation2 + $0x8] sm:$0xff]
        %v395 = vld [vmem:[#allocation2 + $0x10] sm:$0xff]
        %v396 = vld [vmem:[#allocation2 + $0x18] sm:$0xff]
        %v397 = vld [vmem:[#allocation2 + $0x20] sm:$0xff]
        %v398 = vld [vmem:[#allocation2 + $0x28] sm:$0xff]
        %v399 = vld [vmem:[#allocation2 + $0x30] sm:$0xff]
        %v400 = vld [vmem:[#allocation2 + $0x38] sm:$0xff]
        %v401 = vld [vmem:[#allocation2 + $0x40] sm:$0xff]
        %v402 = vld [vmem:[#allocation2 + $0x48] sm:$0xff]
        %v403 = vld [vmem:[#allocation2 + $0x50] sm:$0xff]
        %v404 = vld [vmem:[#allocation2 + $0x58] sm:$0xff]
        %v405 = vld [vmem:[#allocation2 + $0x60] sm:$0xff]
        %v406 = vld [vmem:[#allocation2 + $0x68] sm:$0xff]
        %v407 = vld [vmem:[#allocation2 + $0x70] sm:$0xff]
        %v408 = vld [vmem:[#allocation2 + $0x78] sm:$0xff]
        %v409 = vld [vmem:[#allocation2 + $0x80] sm:$0xff]
        %v410 = vld [vmem:[#allocation2 + $0x88] sm:$0xff]
        %v411 = vld [vmem:[#allocation2 + $0x90] sm:$0xff]
        %v412 = vld [vmem:[#allocation2 + $0x98] sm:$0xff]
        %v413 = vld [vmem:[#allocation2 + $0xa0] sm:$0xff]
        %v414 = vld [vmem:[#allocation2 + $0xa8] sm:$0xff]
        %v415 = vld [vmem:[#allocation2 + $0xb0] sm:$0xff]
        %v416 = vld [vmem:[#allocation2 + $0xb8] sm:$0xff]
        %v417 = vld [vmem:[#allocation2 + $0xc0] sm:$0xff]
        %v418 = vld [vmem:[#allocation2 + $0xc8] sm:$0xff]
        %v419 = vld [vmem:[#allocation2 + $0xd0] sm:$0xff]
        %v420 = vld [vmem:[#allocation2 + $0xd8] sm:$0xff]
        %v421 = vld [vmem:[#allocation2 + $0xe0] sm:$0xff]
        %v422 = vld [vmem:[#allocation2 + $0xe8] sm:$0xff]
        %v423 = vld [vmem:[#allocation2 + $0xf0] sm:$0xff]
        %v424 = vld [vmem:[#allocation2 + $0xf8] sm:$0xff]
        %v425 = vld [vmem:[%s2] sm:$0x3]
        %v458 = vunpack.c.l.b16 %v361
        %v459 = vunpack.c.l.b16 %v362
        %v460 = vunpack.c.l.b16 %v363
        %v461 = vunpack.c.l.b16 %v364
        %v462 = vunpack.c.l.b16 %v365
        %v463 = vunpack.c.l.b16 %v366
        %v464 = vunpack.c.l.b16 %v367
        %v465 = vunpack.c.l.b16 %v368
        %v466 = vunpack.c.l.b16 %v369
        %v467 = vunpack.c.l.b16 %v370
        %v468 = vunpack.c.l.b16 %v371
        %v469 = vunpack.c.l.b16 %v372
        %v470 = vunpack.c.l.b16 %v373
        %v471 = vunpack.c.l.b16 %v374
        %v472 = vunpack.c.l.b16 %v375
        %v473 = vunpack.c.l.b16 %v376
        %v474 = vunpack.c.l.b16 %v377
        %v475 = vunpack.c.l.b16 %v378
        %v476 = vunpack.c.l.b16 %v379
        %v477 = vunpack.c.l.b16 %v380
        %v478 = vunpack.c.l.b16 %v381
        %v479 = vunpack.c.l.b16 %v382
        %v480 = vunpack.c.l.b16 %v383
        %v481 = vunpack.c.l.b16 %v384
        %v482 = vunpack.c.l.b16 %v385
        %v483 = vunpack.c.l.b16 %v386
        %v484 = vunpack.c.l.b16 %v387
        %v485 = vunpack.c.l.b16 %v388
        %v486 = vunpack.c.l.b16 %v389
        %v487 = vunpack.c.l.b16 %v390
        %v488 = vunpack.c.l.b16 %v391
        %v489 = vunpack.c.l.b16 %v392
        %v490 = vpack.c.b16 %v459, %v458
        %v491 = vpack.c.b16 %v461, %v460
        %v492 = vpack.c.b16 %v463, %v462
        %v493 = vpack.c.b16 %v465, %v464
        %v494 = vpack.c.b16 %v467, %v466
        %v495 = vpack.c.b16 %v469, %v468
        %v496 = vpack.c.b16 %v471, %v470
        %v497 = vpack.c.b16 %v473, %v472
        %v498 = vpack.c.b16 %v475, %v474
        %v499 = vpack.c.b16 %v477, %v476
        %v500 = vpack.c.b16 %v479, %v478
        %v501 = vpack.c.b16 %v481, %v480
        %v502 = vpack.c.b16 %v483, %v482
        %v503 = vpack.c.b16 %v485, %v484
        %v504 = vpack.c.b16 %v487, %v486
        %v505 = vpack.c.b16 %v489, %v488
        %vm506 = vcmask 31744
        %v508 = vsel %vm506, %v490, 0
        %v511 = vsel %vm506, %v491, 0
        %v514 = vsel %vm506, %v492, 0
        %v517 = vsel %vm506, %v493, 0
        %v520 = vsel %vm506, %v494, 0
        %v523 = vsel %vm506, %v495, 0
        %v526 = vsel %vm506, %v496, 0
        %v529 = vsel %vm506, %v497, 0
        %v532 = vsel %vm506, %v498, 0
        %v535 = vsel %vm506, %v499, 0
        %v538 = vsel %vm506, %v500, 0
        %v541 = vsel %vm506, %v501, 0
        %v544 = vsel %vm506, %v502, 0
        %v547 = vsel %vm506, %v503, 0
        %v550 = vsel %vm506, %v504, 0
        %v553 = vsel %vm506, %v505, 0
        %vm555 = vcmask 1041408
        %v557 = vsel %vm555, %v425, 0
        %559 = vmatprep.subr.bf16.mxu0 0
        %560 = vmatpush1.bf16.msra.mxu0 %v557
        %561 = vmatprep.subr.bf16.mxu0 0
        %562 = vmatpush1.bf16.msra.mxu0 0
        %563 = vmatprep.subr.bf16.mxu0 0
        %564 = vmatpush1.bf16.msra.mxu0 0
        %565 = vmatprep.subr.bf16.mxu0 0
        %566 = vmatpush1.bf16.msra.mxu0 0
        %567 = vmatprep.subr.bf16.mxu0 0
        %568 = vmatpush1.bf16.msra.mxu0 0
        %569 = vmatprep.subr.bf16.mxu0 0
        %570 = vmatpush1.bf16.msra.mxu0 0
        %571 = vmatprep.subr.bf16.mxu0 0
        %572 = vmatpush1.bf16.msra.mxu0 0
        %573 = vmatprep.subr.bf16.mxu0 0
        %574 = vmatpush1.bf16.msra.mxu0 0
        %575 = vmatprep.subr.bf16.mxu0 0
        %576 = vmatpush1.bf16.msra.mxu0 0
        %577 = vmatprep.subr.bf16.mxu0 0
        %578 = vmatpush1.bf16.msra.mxu0 0
        %579 = vmatprep.subr.bf16.mxu0 0
        %580 = vmatpush1.bf16.msra.mxu0 0
        %581 = vmatprep.subr.bf16.mxu0 0
        %582 = vmatpush1.bf16.msra.mxu0 0
        %583 = vmatprep.subr.bf16.mxu0 0
        %584 = vmatpush1.bf16.msra.mxu0 0
        %585 = vmatprep.subr.bf16.mxu0 0
        %586 = vmatpush1.bf16.msra.mxu0 0
        %587 = vmatprep.subr.bf16.mxu0 0
        %588 = vmatpush1.bf16.msra.mxu0 0
        %589 = vmatprep.subr.bf16.mxu0 0
        %590 = vmatpush1.bf16.msra.mxu0 0
        %591 = vmatprep.mubr.bf16.mxu0 0
        %592 = vmatmul.mubr.bf16.gmra.mrb[0].mxu0 %v508
        %v593 = vpop.f32.mrb[0].mxu0
        %v594 = vadd.f32 0.0, %v593
        %v595 = vpop.f32.mrb[0].mxu0
        %v596 = vpop.f32.mrb[0].mxu0
        %v597 = vadd.f32 0.0, %v596
        %v598 = vpop.f32.mrb[0].mxu0
        %599 = vmatprep.mubr.bf16.mxu0 0
        %600 = vmatmul.mubr.bf16.gmra.mrb[0].mxu0 %v511
        %v601 = vpop.f32.mrb[0].mxu0
        %v602 = vadd.f32 0.0, %v601
        %v603 = vpop.f32.mrb[0].mxu0
        %v604 = vpop.f32.mrb[0].mxu0
        %v605 = vadd.f32 0.0, %v604
        %v606 = vpop.f32.mrb[0].mxu0
        %607 = vmatprep.mubr.bf16.mxu0 0
        %608 = vmatmul.mubr.bf16.gmra.mrb[0].mxu0 %v514
        %v609 = vpop.f32.mrb[0].mxu0
        %v610 = vadd.f32 0.0, %v609
        %v611 = vpop.f32.mrb[0].mxu0
        %v612 = vpop.f32.mrb[0].mxu0
        %v613 = vadd.f32 0.0, %v612
        %v614 = vpop.f32.mrb[0].mxu0
        %615 = vmatprep.mubr.bf16.mxu0 0
        %616 = vmatmul.mubr.bf16.gmra.mrb[0].mxu0 %v517
        %v617 = vpop.f32.mrb[0].mxu0
        %v618 = vadd.f32 0.0, %v617
        %v619 = vpop.f32.mrb[0].mxu0
        %v620 = vpop.f32.mrb[0].mxu0
        %v621 = vadd.f32 0.0, %v620
        %v622 = vpop.f32.mrb[0].mxu0
        %623 = vmatprep.mubr.bf16.mxu0 0
        %624 = vmatmul.mubr.bf16.gmra.mrb[0].mxu0 %v520
        %v625 = vpop.f32.mrb[0].mxu0
        %v626 = vadd.f32 0.0, %v625
        %v627 = vpop.f32.mrb[0].mxu0
        %v628 = vpop.f32.mrb[0].mxu0
        %v629 = vadd.f32 0.0, %v628
        %v630 = vpop.f32.mrb[0].mxu0
        %631 = vmatprep.mubr.bf16.mxu0 0
        %632 = vmatmul.mubr.bf16.gmra.mrb[0].mxu0 %v523
        %v633 = vpop.f32.mrb[0].mxu0
        %v634 = vadd.f32 0.0, %v633
        %v635 = vpop.f32.mrb[0].mxu0
        %v636 = vpop.f32.mrb[0].mxu0
        %v637 = vadd.f32 0.0, %v636
        %v638 = vpop.f32.mrb[0].mxu0
        %639 = vmatprep.mubr.bf16.mxu0 0
        %640 = vmatmul.mubr.bf16.gmra.mrb[0].mxu0 %v526
        %v641 = vpop.f32.mrb[0].mxu0
        %v642 = vadd.f32 0.0, %v641
        %v643 = vpop.f32.mrb[0].mxu0
        %v644 = vpop.f32.mrb[0].mxu0
        %v645 = vadd.f32 0.0, %v644
        %v646 = vpop.f32.mrb[0].mxu0
        %647 = vmatprep.mubr.bf16.mxu0 0
        %648 = vmatmul.mubr.bf16.gmra.mrb[0].mxu0 %v529
        %v649 = vpop.f32.mrb[0].mxu0
        %v650 = vadd.f32 0.0, %v649
        %v651 = vpop.f32.mrb[0].mxu0
        %v652 = vpop.f32.mrb[0].mxu0
        %v653 = vadd.f32 0.0, %v652
        %v654 = vpop.f32.mrb[0].mxu0
        %655 = vmatprep.mubr.bf16.mxu0 0
        %656 = vmatmul.mubr.bf16.gmra.mrb[0].mxu0 %v532
        %v657 = vpop.f32.mrb[0].mxu0
        %v658 = vadd.f32 0.0, %v657
        %v659 = vpop.f32.mrb[0].mxu0
        %v660 = vpop.f32.mrb[0].mxu0
        %v661 = vadd.f32 0.0, %v660
        %v662 = vpop.f32.mrb[0].mxu0
        %663 = vmatprep.mubr.bf16.mxu0 0
        %664 = vmatmul.mubr.bf16.gmra.mrb[0].mxu0 %v535
        %v665 = vpop.f32.mrb[0].mxu0
        %v666 = vadd.f32 0.0, %v665
        %v667 = vpop.f32.mrb[0].mxu0
        %v668 = vpop.f32.mrb[0].mxu0
        %v669 = vadd.f32 0.0, %v668
        %v670 = vpop.f32.mrb[0].mxu0
        %671 = vmatprep.mubr.bf16.mxu0 0
        %672 = vmatmul.mubr.bf16.gmra.mrb[0].mxu0 %v538
        %v673 = vpop.f32.mrb[0].mxu0
        %v674 = vadd.f32 0.0, %v673
        %v675 = vpop.f32.mrb[0].mxu0
        %v676 = vpop.f32.mrb[0].mxu0
        %v677 = vadd.f32 0.0, %v676
        %v678 = vpop.f32.mrb[0].mxu0
        %679 = vmatprep.mubr.bf16.mxu0 0
        %680 = vmatmul.mubr.bf16.gmra.mrb[0].mxu0 %v541
        %v681 = vpop.f32.mrb[0].mxu0
        %v682 = vadd.f32 0.0, %v681
        %v683 = vpop.f32.mrb[0].mxu0
        %v684 = vpop.f32.mrb[0].mxu0
        %v685 = vadd.f32 0.0, %v684
        %v686 = vpop.f32.mrb[0].mxu0
        %687 = vmatprep.mubr.bf16.mxu0 0
        %688 = vmatmul.mubr.bf16.gmra.mrb[0].mxu0 %v544
        %v689 = vpop.f32.mrb[0].mxu0
        %v690 = vadd.f32 0.0, %v689
        %v691 = vpop.f32.mrb[0].mxu0
        %v692 = vpop.f32.mrb[0].mxu0
        %v693 = vadd.f32 0.0, %v692
        %v694 = vpop.f32.mrb[0].mxu0
        %695 = vmatprep.mubr.bf16.mxu0 0
        %696 = vmatmul.mubr.bf16.gmra.mrb[0].mxu0 %v547
        %v697 = vpop.f32.mrb[0].mxu0
        %v698 = vadd.f32 0.0, %v697
        %v699 = vpop.f32.mrb[0].mxu0
        %v700 = vpop.f32.mrb[0].mxu0
        %v701 = vadd.f32 0.0, %v700
        %v702 = vpop.f32.mrb[0].mxu0
        %703 = vmatprep.mubr.bf16.mxu0 0
        %704 = vmatmul.mubr.bf16.gmra.mrb[0].mxu0 %v550
        %v705 = vpop.f32.mrb[0].mxu0
        %v706 = vadd.f32 0.0, %v705
        %v707 = vpop.f32.mrb[0].mxu0
        %v708 = vpop.f32.mrb[0].mxu0
        %v709 = vadd.f32 0.0, %v708
        %v710 = vpop.f32.mrb[0].mxu0
        %711 = vmatprep.mubr.bf16.mxu0 0
        %712 = vmatmul.mubr.bf16.gmra.mrb[0].mxu0 %v553
        %v713 = vpop.f32.mrb[0].mxu0
        %v714 = vadd.f32 0.0, %v713
        %v715 = vpop.f32.mrb[0].mxu0
        %v716 = vpop.f32.mrb[0].mxu0
        %v717 = vadd.f32 0.0, %v716
        %v718 = vpop.f32.mrb[0].mxu0
        %719 = vdwg.mxu0
        %v720 = vadd.f32 %v393, %v594
        %v721 = vadd.f32 %v394, %v597
        %v722 = vadd.f32 %v395, %v602
        %v723 = vadd.f32 %v396, %v605
        %v724 = vadd.f32 %v397, %v610
        %v725 = vadd.f32 %v398, %v613
        %v726 = vadd.f32 %v399, %v618
        %v727 = vadd.f32 %v400, %v621
        %v728 = vadd.f32 %v401, %v626
        %v729 = vadd.f32 %v402, %v629
        %v730 = vadd.f32 %v403, %v634
        %v731 = vadd.f32 %v404, %v637
        %v732 = vadd.f32 %v405, %v642
        %v733 = vadd.f32 %v406, %v645
        %v734 = vadd.f32 %v407, %v650
        %v735 = vadd.f32 %v408, %v653
        %v736 = vadd.f32 %v409, %v658
        %v737 = vadd.f32 %v410, %v661
        %v738 = vadd.f32 %v411, %v666
        %v739 = vadd.f32 %v412, %v669
        %v740 = vadd.f32 %v413, %v674
        %v741 = vadd.f32 %v414, %v677
        %v742 = vadd.f32 %v415, %v682
        %v743 = vadd.f32 %v416, %v685
        %v744 = vadd.f32 %v417, %v690
        %v745 = vadd.f32 %v418, %v693
        %v746 = vadd.f32 %v419, %v698
        %v747 = vadd.f32 %v420, %v701
        %v748 = vadd.f32 %v421, %v706
        %v749 = vadd.f32 %v422, %v709
        %v750 = vadd.f32 %v423, %v714
        %v751 = vadd.f32 %v424, %v717
        %752 = vst [vmem:[#allocation2] sm:$0xff] %v720
        %753 = vst [vmem:[#allocation2 + $0x8] sm:$0xff] %v721
        %754 = vst [vmem:[#allocation2 + $0x10] sm:$0xff] %v722
        %755 = vst [vmem:[#allocation2 + $0x18] sm:$0xff] %v723
        %756 = vst [vmem:[#allocation2 + $0x20] sm:$0xff] %v724
        %757 = vst [vmem:[#allocation2 + $0x28] sm:$0xff] %v725
        %758 = vst [vmem:[#allocation2 + $0x30] sm:$0xff] %v726
        %759 = vst [vmem:[#allocation2 + $0x38] sm:$0xff] %v727
        %760 = vst [vmem:[#allocation2 + $0x40] sm:$0xff] %v728
        %761 = vst [vmem:[#allocation2 + $0x48] sm:$0xff] %v729
        %762 = vst [vmem:[#allocation2 + $0x50] sm:$0xff] %v730
        %763 = vst [vmem:[#allocation2 + $0x58] sm:$0xff] %v731
        %764 = vst [vmem:[#allocation2 + $0x60] sm:$0xff] %v732
        %765 = vst [vmem:[#allocation2 + $0x68] sm:$0xff] %v733
        %766 = vst [vmem:[#allocation2 + $0x70] sm:$0xff] %v734
        %767 = vst [vmem:[#allocation2 + $0x78] sm:$0xff] %v735
        %768 = vst [vmem:[#allocation2 + $0x80] sm:$0xff] %v736
        %769 = vst [vmem:[#allocation2 + $0x88] sm:$0xff] %v737
        %770 = vst [vmem:[#allocation2 + $0x90] sm:$0xff] %v738
        %771 = vst [vmem:[#allocation2 + $0x98] sm:$0xff] %v739
        %772 = vst [vmem:[#allocation2 + $0xa0] sm:$0xff] %v740
        %773 = vst [vmem:[#allocation2 + $0xa8] sm:$0xff] %v741
        %774 = vst [vmem:[#allocation2 + $0xb0] sm:$0xff] %v742
        %775 = vst [vmem:[#allocation2 + $0xb8] sm:$0xff] %v743
        %776 = vst [vmem:[#allocation2 + $0xc0] sm:$0xff] %v744
        %777 = vst [vmem:[#allocation2 + $0xc8] sm:$0xff] %v745
        %778 = vst [vmem:[#allocation2 + $0xd0] sm:$0xff] %v746
        %779 = vst [vmem:[#allocation2 + $0xd8] sm:$0xff] %v747
        %780 = vst [vmem:[#allocation2 + $0xe0] sm:$0xff] %v748
        %781 = vst [vmem:[#allocation2 + $0xe8] sm:$0xff] %v749
        %782 = vst [vmem:[#allocation2 + $0xf0] sm:$0xff] %v750
        %783 = vst [vmem:[#allocation2 + $0xf8] sm:$0xff] %v751
        %v784 = vld [vmem:[%s263] sm:$0xf]
        %v785 = vld [vmem:[%s263 + $0x4] sm:$0xf]
        %v786 = vld [vmem:[%s263 + $0x8] sm:$0xf]
        %v787 = vld [vmem:[%s263 + $0xc] sm:$0xf]
        %v788 = vld [vmem:[%s263 + $0x10] sm:$0xf]
        %v789 = vld [vmem:[%s263 + $0x14] sm:$0xf]
        %v790 = vld [vmem:[%s263 + $0x18] sm:$0xf]
        %v791 = vld [vmem:[%s263 + $0x1c] sm:$0xf]
        %v792 = vld [vmem:[%s263 + $0x20] sm:$0xf]
        %v793 = vld [vmem:[%s263 + $0x24] sm:$0xf]
        %v794 = vld [vmem:[%s263 + $0x28] sm:$0xf]
        %v795 = vld [vmem:[%s263 + $0x2c] sm:$0xf]
        %v796 = vld [vmem:[%s263 + $0x30] sm:$0xf]
        %v797 = vld [vmem:[%s263 + $0x34] sm:$0xf]
        %v798 = vld [vmem:[%s263 + $0x38] sm:$0xf]
        %v799 = vld [vmem:[%s263 + $0x3c] sm:$0xf]
        %v800 = vld [vmem:[%s263 + $0x40] sm:$0xf]
        %v801 = vld [vmem:[%s263 + $0x44] sm:$0xf]
        %v802 = vld [vmem:[%s263 + $0x48] sm:$0xf]
        %v803 = vld [vmem:[%s263 + $0x4c] sm:$0xf]
        %v804 = vld [vmem:[%s263 + $0x50] sm:$0xf]
        %v805 = vld [vmem:[%s263 + $0x54] sm:$0xf]
        %v806 = vld [vmem:[%s263 + $0x58] sm:$0xf]
        %v807 = vld [vmem:[%s263 + $0x5c] sm:$0xf]
        %v808 = vld [vmem:[%s263 + $0x60] sm:$0xf]
        %v809 = vld [vmem:[%s263 + $0x64] sm:$0xf]
        %v810 = vld [vmem:[%s263 + $0x68] sm:$0xf]
        %v811 = vld [vmem:[%s263 + $0x6c] sm:$0xf]
        %v812 = vld [vmem:[%s263 + $0x70] sm:$0xf]
        %v813 = vld [vmem:[%s263 + $0x74] sm:$0xf]
        %v814 = vld [vmem:[%s263 + $0x78] sm:$0xf]
        %v815 = vld [vmem:[%s263 + $0x7c] sm:$0xf]
        %v816 = vld [vmem:[%s263 + $0x80] sm:$0x1]
        %v817 = vld [vmem:[#allocation2] sm:$0xff]
        %v818 = vld [vmem:[#allocation2 + $0x8] sm:$0xff]
        %v819 = vld [vmem:[#allocation2 + $0x10] sm:$0xff]
        %v820 = vld [vmem:[#allocation2 + $0x18] sm:$0xff]
        %v821 = vld [vmem:[#allocation2 + $0x20] sm:$0xff]
        %v822 = vld [vmem:[#allocation2 + $0x28] sm:$0xff]
        %v823 = vld [vmem:[#allocation2 + $0x30] sm:$0xff]
        %v824 = vld [vmem:[#allocation2 + $0x38] sm:$0xff]
        %v825 = vld [vmem:[#allocation2 + $0x40] sm:$0xff]
        %v826 = vld [vmem:[#allocation2 + $0x48] sm:$0xff]
        %v827 = vld [vmem:[#allocation2 + $0x50] sm:$0xff]
        %v828 = vld [vmem:[#allocation2 + $0x58] sm:$0xff]
        %v829 = vld [vmem:[#allocation2 + $0x60] sm:$0xff]
        %v830 = vld [vmem:[#allocation2 + $0x68] sm:$0xff]
        %v831 = vld [vmem:[#allocation2 + $0x70] sm:$0xff]
        %v832 = vld [vmem:[#allocation2 + $0x78] sm:$0xff]
        %v833 = vld [vmem:[#allocation2 + $0x80] sm:$0xff]
        %v834 = vld [vmem:[#allocation2 + $0x88] sm:$0xff]
        %v835 = vld [vmem:[#allocation2 + $0x90] sm:$0xff]
        %v836 = vld [vmem:[#allocation2 + $0x98] sm:$0xff]
        %v837 = vld [vmem:[#allocation2 + $0xa0] sm:$0xff]
        %v838 = vld [vmem:[#allocation2 + $0xa8] sm:$0xff]
        %v839 = vld [vmem:[#allocation2 + $0xb0] sm:$0xff]
        %v840 = vld [vmem:[#allocation2 + $0xb8] sm:$0xff]
        %v841 = vld [vmem:[#allocation2 + $0xc0] sm:$0xff]
        %v842 = vld [vmem:[#allocation2 + $0xc8] sm:$0xff]
        %v843 = vld [vmem:[#allocation2 + $0xd0] sm:$0xff]
        %v844 = vld [vmem:[#allocation2 + $0xd8] sm:$0xff]
        %v845 = vld [vmem:[#allocation2 + $0xe0] sm:$0xff]
        %v846 = vld [vmem:[#allocation2 + $0xe8] sm:$0xff]
        %v847 = vld [vmem:[#allocation2 + $0xf0] sm:$0xff]
        %v848 = vld [vmem:[#allocation2 + $0xf8] sm:$0xff]
        %s849 = scalar_lea.vmem %s2, 2
        %v850 = vld [vmem:[%s849] sm:$0x3]
        %v884 = vunpack.c.l.b16 %v784
        %v885 = vunpack.c.l.b16 %v785
        %v886 = vunpack.c.l.b16 %v786
        %v887 = vunpack.c.l.b16 %v787
        %v888 = vunpack.c.l.b16 %v788
        %v889 = vunpack.c.l.b16 %v789
        %v890 = vunpack.c.l.b16 %v790
        %v891 = vunpack.c.l.b16 %v791
        %v892 = vunpack.c.l.b16 %v792
        %v893 = vunpack.c.l.b16 %v793
        %v894 = vunpack.c.l.b16 %v794
        %v895 = vunpack.c.l.b16 %v795
        %v896 = vunpack.c.l.b16 %v796
        %v897 = vunpack.c.l.b16 %v797
        %v898 = vunpack.c.l.b16 %v798
        %v899 = vunpack.c.l.b16 %v799
        %v900 = vunpack.c.l.b16 %v800
        %v901 = vunpack.c.l.b16 %v801
        %v902 = vunpack.c.l.b16 %v802
        %v903 = vunpack.c.l.b16 %v803
        %v904 = vunpack.c.l.b16 %v804
        %v905 = vunpack.c.l.b16 %v805
        %v906 = vunpack.c.l.b16 %v806
        %v907 = vunpack.c.l.b16 %v807
        %v908 = vunpack.c.l.b16 %v808
        %v909 = vunpack.c.l.b16 %v809
        %v910 = vunpack.c.l.b16 %v810
        %v911 = vunpack.c.l.b16 %v811
        %v912 = vunpack.c.l.b16 %v812
        %v913 = vunpack.c.l.b16 %v813
        %v914 = vunpack.c.l.b16 %v814
        %v915 = vunpack.c.l.b16 %v815
        %v916 = vunpack.c.l.b16 %v816
        %v917 = vpack.c.b16 %v885, %v884
        %v918 = vpack.c.b16 %v887, %v886
        %v919 = vpack.c.b16 %v889, %v888
        %v920 = vpack.c.b16 %v891, %v890
        %v921 = vpack.c.b16 %v893, %v892
        %v922 = vpack.c.b16 %v895, %v894
        %v923 = vpack.c.b16 %v897, %v896
        %v924 = vpack.c.b16 %v899, %v898
        %v925 = vpack.c.b16 %v901, %v900
        %v926 = vpack.c.b16 %v903, %v902
        %v927 = vpack.c.b16 %v905, %v904
        %v928 = vpack.c.b16 %v907, %v906
        %v929 = vpack.c.b16 %v909, %v908
        %v930 = vpack.c.b16 %v911, %v910
        %v931 = vpack.c.b16 %v913, %v912
        %v932 = vpack.c.b16 %v915, %v914
        %v933 = vpack.c.b16 %v916, %v916
        %vm934 = vsmask.f32 7424
        %v936 = vshrl.u32 %v917, 16
        %v938 = vshll.u32 %v917, 16
        %v940 = vrot.slane %v938, 1
        %v941 = vor.u32 %v936, %v940
        %v943 = vshll.u32 %v918, 16
        %v945 = vrot.slane %v943, 1
        %v946 = vsel %vm934, %v941, %v945
        %v947 = vshrl.u32 %v918, 16
        %v949 = vor.u32 %v947, %v945
        %v951 = vshll.u32 %v919, 16
        %v953 = vrot.slane %v951, 1
        %v954 = vsel %vm934, %v949, %v953
        %v955 = vshrl.u32 %v919, 16
        %v957 = vor.u32 %v955, %v953
        %v959 = vshll.u32 %v920, 16
        %v961 = vrot.slane %v959, 1
        %v962 = vsel %vm934, %v957, %v961
        %v963 = vshrl.u32 %v920, 16
        %v965 = vor.u32 %v963, %v961
        %v967 = vshll.u32 %v921, 16
        %v969 = vrot.slane %v967, 1
        %v970 = vsel %vm934, %v965, %v969
        %v971 = vshrl.u32 %v921, 16
        %v973 = vor.u32 %v971, %v969
        %v975 = vshll.u32 %v922, 16
        %v977 = vrot.slane %v975, 1
        %v978 = vsel %vm934, %v973, %v977
        %v979 = vshrl.u32 %v922, 16
        %v981 = vor.u32 %v979, %v977
        %v983 = vshll.u32 %v923, 16
        %v985 = vrot.slane %v983, 1
        %v986 = vsel %vm934, %v981, %v985
        %v987 = vshrl.u32 %v923, 16
        %v989 = vor.u32 %v987, %v985
        %v991 = vshll.u32 %v924, 16
        %v993 = vrot.slane %v991, 1
        %v994 = vsel %vm934, %v989, %v993
        %v995 = vshrl.u32 %v924, 16
        %v997 = vor.u32 %v995, %v993
        %v999 = vshll.u32 %v925, 16
        %v1001 = vrot.slane %v999, 1
        %v1002 = vsel %vm934, %v997, %v1001
        %v1003 = vshrl.u32 %v925, 16
        %v1005 = vor.u32 %v1003, %v1001
        %v1007 = vshll.u32 %v926, 16
        %v1009 = vrot.slane %v1007, 1
        %v1010 = vsel %vm934, %v1005, %v1009
        %v1011 = vshrl.u32 %v926, 16
        %v1013 = vor.u32 %v1011, %v1009
        %v1015 = vshll.u32 %v927, 16
        %v1017 = vrot.slane %v1015, 1
        %v1018 = vsel %vm934, %v1013, %v1017
        %v1019 = vshrl.u32 %v927, 16
        %v1021 = vor.u32 %v1019, %v1017
        %v1023 = vshll.u32 %v928, 16
        %v1025 = vrot.slane %v1023, 1
        %v1026 = vsel %vm934, %v1021, %v1025
        %v1027 = vshrl.u32 %v928, 16
        %v1029 = vor.u32 %v1027, %v1025
        %v1031 = vshll.u32 %v929, 16
        %v1033 = vrot.slane %v1031, 1
        %v1034 = vsel %vm934, %v1029, %v1033
        %v1035 = vshrl.u32 %v929, 16
        %v1037 = vor.u32 %v1035, %v1033
        %v1039 = vshll.u32 %v930, 16
        %v1041 = vrot.slane %v1039, 1
        %v1042 = vsel %vm934, %v1037, %v1041
        %v1043 = vshrl.u32 %v930, 16
        %v1045 = vor.u32 %v1043, %v1041
        %v1047 = vshll.u32 %v931, 16
        %v1049 = vrot.slane %v1047, 1
        %v1050 = vsel %vm934, %v1045, %v1049
        %v1051 = vshrl.u32 %v931, 16
        %v1053 = vor.u32 %v1051, %v1049
        %v1055 = vshll.u32 %v932, 16
        %v1057 = vrot.slane %v1055, 1
        %v1058 = vsel %vm934, %v1053, %v1057
        %v1059 = vshrl.u32 %v932, 16
        %v1061 = vor.u32 %v1059, %v1057
        %v1063 = vshll.u32 %v933, 16
        %v1065 = vrot.slane %v1063, 1
        %v1066 = vsel %vm934, %v1061, %v1065
        %v1068 = vsel %vm506, %v946, 0
        %v1071 = vsel %vm506, %v954, 0
        %v1074 = vsel %vm506, %v962, 0
        %v1077 = vsel %vm506, %v970, 0
        %v1080 = vsel %vm506, %v978, 0
        %v1083 = vsel %vm506, %v986, 0
        %v1086 = vsel %vm506, %v994, 0
        %v1089 = vsel %vm506, %v1002, 0
        %v1092 = vsel %vm506, %v1010, 0
        %v1095 = vsel %vm506, %v1018, 0
        %v1098 = vsel %vm506, %v1026, 0
        %v1101 = vsel %vm506, %v1034, 0
        %v1104 = vsel %vm506, %v1042, 0
        %v1107 = vsel %vm506, %v1050, 0
        %v1110 = vsel %vm506, %v1058, 0
        %v1113 = vsel %vm506, %v1066, 0
        %v1116 = vsel %vm555, %v850, 0
        %1118 = vmatprep.subr.bf16.mxu0 0
        %1119 = vmatpush1.bf16.msra.mxu0 %v1116
        %1120 = vmatprep.subr.bf16.mxu0 0
        %1121 = vmatpush1.bf16.msra.mxu0 0
        %1122 = vmatprep.subr.bf16.mxu0 0
        %1123 = vmatpush1.bf16.msra.mxu0 0
        %1124 = vmatprep.subr.bf16.mxu0 0
        %1125 = vmatpush1.bf16.msra.mxu0 0
        %1126 = vmatprep.subr.bf16.mxu0 0
        %1127 = vmatpush1.bf16.msra.mxu0 0
        %1128 = vmatprep.subr.bf16.mxu0 0
        %1129 = vmatpush1.bf16.msra.mxu0 0
        %1130 = vmatprep.subr.bf16.mxu0 0
        %1131 = vmatpush1.bf16.msra.mxu0 0
        %1132 = vmatprep.subr.bf16.mxu0 0
        %1133 = vmatpush1.bf16.msra.mxu0 0
        %1134 = vmatprep.subr.bf16.mxu0 0
        %1135 = vmatpush1.bf16.msra.mxu0 0
        %1136 = vmatprep.subr.bf16.mxu0 0
        %1137 = vmatpush1.bf16.msra.mxu0 0
        %1138 = vmatprep.subr.bf16.mxu0 0
        %1139 = vmatpush1.bf16.msra.mxu0 0
        %1140 = vmatprep.subr.bf16.mxu0 0
        %1141 = vmatpush1.bf16.msra.mxu0 0
        %1142 = vmatprep.subr.bf16.mxu0 0
        %1143 = vmatpush1.bf16.msra.mxu0 0
        %1144 = vmatprep.subr.bf16.mxu0 0
        %1145 = vmatpush1.bf16.msra.mxu0 0
        %1146 = vmatprep.subr.bf16.mxu0 0
        %1147 = vmatpush1.bf16.msra.mxu0 0
        %1148 = vmatprep.subr.bf16.mxu0 0
        %1149 = vmatpush1.bf16.msra.mxu0 0
        %1150 = vmatprep.mubr.bf16.mxu0 0
        %1151 = vmatmul.mubr.bf16.gmra.mrb[0].mxu0 %v1068
        %v1152 = vpop.f32.mrb[0].mxu0
        %v1153 = vadd.f32 0.0, %v1152
        %v1154 = vpop.f32.mrb[0].mxu0
        %v1155 = vpop.f32.mrb[0].mxu0
        %v1156 = vadd.f32 0.0, %v1155
        %v1157 = vpop.f32.mrb[0].mxu0
        %1158 = vmatprep.mubr.bf16.mxu0 0
        %1159 = vmatmul.mubr.bf16.gmra.mrb[0].mxu0 %v1071
        %v1160 = vpop.f32.mrb[0].mxu0
        %v1161 = vadd.f32 0.0, %v1160
        %v1162 = vpop.f32.mrb[0].mxu0
        %v1163 = vpop.f32.mrb[0].mxu0
        %v1164 = vadd.f32 0.0, %v1163
        %v1165 = vpop.f32.mrb[0].mxu0
        %1166 = vmatprep.mubr.bf16.mxu0 0
        %1167 = vmatmul.mubr.bf16.gmra.mrb[0].mxu0 %v1074
        %v1168 = vpop.f32.mrb[0].mxu0
        %v1169 = vadd.f32 0.0, %v1168
        %v1170 = vpop.f32.mrb[0].mxu0
        %v1171 = vpop.f32.mrb[0].mxu0
        %v1172 = vadd.f32 0.0, %v1171
        %v1173 = vpop.f32.mrb[0].mxu0
        %1174 = vmatprep.mubr.bf16.mxu0 0
        %1175 = vmatmul.mubr.bf16.gmra.mrb[0].mxu0 %v1077
        %v1176 = vpop.f32.mrb[0].mxu0
        %v1177 = vadd.f32 0.0, %v1176
        %v1178 = vpop.f32.mrb[0].mxu0
        %v1179 = vpop.f32.mrb[0].mxu0
        %v1180 = vadd.f32 0.0, %v1179
        %v1181 = vpop.f32.mrb[0].mxu0
        %1182 = vmatprep.mubr.bf16.mxu0 0
        %1183 = vmatmul.mubr.bf16.gmra.mrb[0].mxu0 %v1080
        %v1184 = vpop.f32.mrb[0].mxu0
        %v1185 = vadd.f32 0.0, %v1184
        %v1186 = vpop.f32.mrb[0].mxu0
        %v1187 = vpop.f32.mrb[0].mxu0
        %v1188 = vadd.f32 0.0, %v1187
        %v1189 = vpop.f32.mrb[0].mxu0
        %1190 = vmatprep.mubr.bf16.mxu0 0
        %1191 = vmatmul.mubr.bf16.gmra.mrb[0].mxu0 %v1083
        %v1192 = vpop.f32.mrb[0].mxu0
        %v1193 = vadd.f32 0.0, %v1192
        %v1194 = vpop.f32.mrb[0].mxu0
        %v1195 = vpop.f32.mrb[0].mxu0
        %v1196 = vadd.f32 0.0, %v1195
        %v1197 = vpop.f32.mrb[0].mxu0
        %1198 = vmatprep.mubr.bf16.mxu0 0
        %1199 = vmatmul.mubr.bf16.gmra.mrb[0].mxu0 %v1086
        %v1200 = vpop.f32.mrb[0].mxu0
        %v1201 = vadd.f32 0.0, %v1200
        %v1202 = vpop.f32.mrb[0].mxu0
        %v1203 = vpop.f32.mrb[0].mxu0
        %v1204 = vadd.f32 0.0, %v1203
        %v1205 = vpop.f32.mrb[0].mxu0
        %1206 = vmatprep.mubr.bf16.mxu0 0
        %1207 = vmatmul.mubr.bf16.gmra.mrb[0].mxu0 %v1089
        %v1208 = vpop.f32.mrb[0].mxu0
        %v1209 = vadd.f32 0.0, %v1208
        %v1210 = vpop.f32.mrb[0].mxu0
        %v1211 = vpop.f32.mrb[0].mxu0
        %v1212 = vadd.f32 0.0, %v1211
        %v1213 = vpop.f32.mrb[0].mxu0
        %1214 = vmatprep.mubr.bf16.mxu0 0
        %1215 = vmatmul.mubr.bf16.gmra.mrb[0].mxu0 %v1092
        %v1216 = vpop.f32.mrb[0].mxu0
        %v1217 = vadd.f32 0.0, %v1216
        %v1218 = vpop.f32.mrb[0].mxu0
        %v1219 = vpop.f32.mrb[0].mxu0
        %v1220 = vadd.f32 0.0, %v1219
        %v1221 = vpop.f32.mrb[0].mxu0
        %1222 = vmatprep.mubr.bf16.mxu0 0
        %1223 = vmatmul.mubr.bf16.gmra.mrb[0].mxu0 %v1095
        %v1224 = vpop.f32.mrb[0].mxu0
        %v1225 = vadd.f32 0.0, %v1224
        %v1226 = vpop.f32.mrb[0].mxu0
        %v1227 = vpop.f32.mrb[0].mxu0
        %v1228 = vadd.f32 0.0, %v1227
        %v1229 = vpop.f32.mrb[0].mxu0
        %1230 = vmatprep.mubr.bf16.mxu0 0
        %1231 = vmatmul.mubr.bf16.gmra.mrb[0].mxu0 %v1098
        %v1232 = vpop.f32.mrb[0].mxu0
        %v1233 = vadd.f32 0.0, %v1232
        %v1234 = vpop.f32.mrb[0].mxu0
        %v1235 = vpop.f32.mrb[0].mxu0
        %v1236 = vadd.f32 0.0, %v1235
        %v1237 = vpop.f32.mrb[0].mxu0
        %1238 = vmatprep.mubr.bf16.mxu0 0
        %1239 = vmatmul.mubr.bf16.gmra.mrb[0].mxu0 %v1101
        %v1240 = vpop.f32.mrb[0].mxu0
        %v1241 = vadd.f32 0.0, %v1240
        %v1242 = vpop.f32.mrb[0].mxu0
        %v1243 = vpop.f32.mrb[0].mxu0
        %v1244 = vadd.f32 0.0, %v1243
        %v1245 = vpop.f32.mrb[0].mxu0
        %1246 = vmatprep.mubr.bf16.mxu0 0
        %1247 = vmatmul.mubr.bf16.gmra.mrb[0].mxu0 %v1104
        %v1248 = vpop.f32.mrb[0].mxu0
        %v1249 = vadd.f32 0.0, %v1248
        %v1250 = vpop.f32.mrb[0].mxu0
        %v1251 = vpop.f32.mrb[0].mxu0
        %v1252 = vadd.f32 0.0, %v1251
        %v1253 = vpop.f32.mrb[0].mxu0
        %1254 = vmatprep.mubr.bf16.mxu0 0
        %1255 = vmatmul.mubr.bf16.gmra.mrb[0].mxu0 %v1107
        %v1256 = vpop.f32.mrb[0].mxu0
        %v1257 = vadd.f32 0.0, %v1256
        %v1258 = vpop.f32.mrb[0].mxu0
        %v1259 = vpop.f32.mrb[0].mxu0
        %v1260 = vadd.f32 0.0, %v1259
        %v1261 = vpop.f32.mrb[0].mxu0
        %1262 = vmatprep.mubr.bf16.mxu0 0
        %1263 = vmatmul.mubr.bf16.gmra.mrb[0].mxu0 %v1110
        %v1264 = vpop.f32.mrb[0].mxu0
        %v1265 = vadd.f32 0.0, %v1264
        %v1266 = vpop.f32.mrb[0].mxu0
        %v1267 = vpop.f32.mrb[0].mxu0
        %v1268 = vadd.f32 0.0, %v1267
        %v1269 = vpop.f32.mrb[0].mxu0
        %1270 = vmatprep.mubr.bf16.mxu0 0
        %1271 = vmatmul.mubr.bf16.gmra.mrb[0].mxu0 %v1113
        %v1272 = vpop.f32.mrb[0].mxu0
        %v1273 = vadd.f32 0.0, %v1272
        %v1274 = vpop.f32.mrb[0].mxu0
        %v1275 = vpop.f32.mrb[0].mxu0
        %v1276 = vadd.f32 0.0, %v1275
        %v1277 = vpop.f32.mrb[0].mxu0
        %1278 = vdwg.mxu0
        %v1279 = vadd.f32 %v817, %v1153
        %v1280 = vadd.f32 %v818, %v1156
        %v1281 = vadd.f32 %v819, %v1161
        %v1282 = vadd.f32 %v820, %v1164
        %v1283 = vadd.f32 %v821, %v1169
        %v1284 = vadd.f32 %v822, %v1172
        %v1285 = vadd.f32 %v823, %v1177
        %v1286 = vadd.f32 %v824, %v1180
        %v1287 = vadd.f32 %v825, %v1185
        %v1288 = vadd.f32 %v826, %v1188
        %v1289 = vadd.f32 %v827, %v1193
        %v1290 = vadd.f32 %v828, %v1196
        %v1291 = vadd.f32 %v829, %v1201
        %v1292 = vadd.f32 %v830, %v1204
        %v1293 = vadd.f32 %v831, %v1209
        %v1294 = vadd.f32 %v832, %v1212
        %v1295 = vadd.f32 %v833, %v1217
        %v1296 = vadd.f32 %v834, %v1220
        %v1297 = vadd.f32 %v835, %v1225
        %v1298 = vadd.f32 %v836, %v1228
        %v1299 = vadd.f32 %v837, %v1233
        %v1300 = vadd.f32 %v838, %v1236
        %v1301 = vadd.f32 %v839, %v1241
        %v1302 = vadd.f32 %v840, %v1244
        %v1303 = vadd.f32 %v841, %v1249
        %v1304 = vadd.f32 %v842, %v1252
        %v1305 = vadd.f32 %v843, %v1257
        %v1306 = vadd.f32 %v844, %v1260
        %v1307 = vadd.f32 %v845, %v1265
        %v1308 = vadd.f32 %v846, %v1268
        %v1309 = vadd.f32 %v847, %v1273
        %v1310 = vadd.f32 %v848, %v1276
        %1311 = vst [vmem:[#allocation2] sm:$0xff] %v1279
        %1312 = vst [vmem:[#allocation2 + $0x8] sm:$0xff] %v1280
        %1313 = vst [vmem:[#allocation2 + $0x10] sm:$0xff] %v1281
        %1314 = vst [vmem:[#allocation2 + $0x18] sm:$0xff] %v1282
        %1315 = vst [vmem:[#allocation2 + $0x20] sm:$0xff] %v1283
        %1316 = vst [vmem:[#allocation2 + $0x28] sm:$0xff] %v1284
        %1317 = vst [vmem:[#allocation2 + $0x30] sm:$0xff] %v1285
        %1318 = vst [vmem:[#allocation2 + $0x38] sm:$0xff] %v1286
        %1319 = vst [vmem:[#allocation2 + $0x40] sm:$0xff] %v1287
        %1320 = vst [vmem:[#allocation2 + $0x48] sm:$0xff] %v1288
        %1321 = vst [vmem:[#allocation2 + $0x50] sm:$0xff] %v1289
        %1322 = vst [vmem:[#allocation2 + $0x58] sm:$0xff] %v1290
        %1323 = vst [vmem:[#allocation2 + $0x60] sm:$0xff] %v1291
        %1324 = vst [vmem:[#allocation2 + $0x68] sm:$0xff] %v1292
        %1325 = vst [vmem:[#allocation2 + $0x70] sm:$0xff] %v1293
        %1326 = vst [vmem:[#allocation2 + $0x78] sm:$0xff] %v1294
        %1327 = vst [vmem:[#allocation2 + $0x80] sm:$0xff] %v1295
        %1328 = vst [vmem:[#allocation2 + $0x88] sm:$0xff] %v1296
        %1329 = vst [vmem:[#allocation2 + $0x90] sm:$0xff] %v1297
        %1330 = vst [vmem:[#allocation2 + $0x98] sm:$0xff] %v1298
        %1331 = vst [vmem:[#allocation2 + $0xa0] sm:$0xff] %v1299
        %1332 = vst [vmem:[#allocation2 + $0xa8] sm:$0xff] %v1300
        %1333 = vst [vmem:[#allocation2 + $0xb0] sm:$0xff] %v1301
        %1334 = vst [vmem:[#allocation2 + $0xb8] sm:$0xff] %v1302
        %1335 = vst [vmem:[#allocation2 + $0xc0] sm:$0xff] %v1303
        %1336 = vst [vmem:[#allocation2 + $0xc8] sm:$0xff] %v1304
        %1337 = vst [vmem:[#allocation2 + $0xd0] sm:$0xff] %v1305
        %1338 = vst [vmem:[#allocation2 + $0xd8] sm:$0xff] %v1306
        %1339 = vst [vmem:[#allocation2 + $0xe0] sm:$0xff] %v1307
        %1340 = vst [vmem:[#allocation2 + $0xe8] sm:$0xff] %v1308
        %1341 = vst [vmem:[#allocation2 + $0xf0] sm:$0xff] %v1309
        %1342 = vst [vmem:[#allocation2 + $0xf8] sm:$0xff] %v1310
        %v1343 = vld [vmem:[%s263] sm:$0xe]
        %v1344 = vld [vmem:[%s263 + $0x4] sm:$0xf]
        %v1345 = vld [vmem:[%s263 + $0x8] sm:$0xf]
        %v1346 = vld [vmem:[%s263 + $0xc] sm:$0xf]
        %v1347 = vld [vmem:[%s263 + $0x10] sm:$0xf]
        %v1348 = vld [vmem:[%s263 + $0x14] sm:$0xf]
        %v1349 = vld [vmem:[%s263 + $0x18] sm:$0xf]
        %v1350 = vld [vmem:[%s263 + $0x1c] sm:$0xf]
        %v1351 = vld [vmem:[%s263 + $0x20] sm:$0xf]
        %v1352 = vld [vmem:[%s263 + $0x24] sm:$0xf]
        %v1353 = vld [vmem:[%s263 + $0x28] sm:$0xf]
        %v1354 = vld [vmem:[%s263 + $0x2c] sm:$0xf]
        %v1355 = vld [vmem:[%s263 + $0x30] sm:$0xf]
        %v1356 = vld [vmem:[%s263 + $0x34] sm:$0xf]
        %v1357 = vld [vmem:[%s263 + $0x38] sm:$0xf]
        %v1358 = vld [vmem:[%s263 + $0x3c] sm:$0xf]
        %v1359 = vld [vmem:[%s263 + $0x40] sm:$0xf]
        %v1360 = vld [vmem:[%s263 + $0x44] sm:$0xf]
        %v1361 = vld [vmem:[%s263 + $0x48] sm:$0xf]
        %v1362 = vld [vmem:[%s263 + $0x4c] sm:$0xf]
        %v1363 = vld [vmem:[%s263 + $0x50] sm:$0xf]
        %v1364 = vld [vmem:[%s263 + $0x54] sm:$0xf]
        %v1365 = vld [vmem:[%s263 + $0x58] sm:$0xf]
        %v1366 = vld [vmem:[%s263 + $0x5c] sm:$0xf]
        %v1367 = vld [vmem:[%s263 + $0x60] sm:$0xf]
        %v1368 = vld [vmem:[%s263 + $0x64] sm:$0xf]
        %v1369 = vld [vmem:[%s263 + $0x68] sm:$0xf]
        %v1370 = vld [vmem:[%s263 + $0x6c] sm:$0xf]
        %v1371 = vld [vmem:[%s263 + $0x70] sm:$0xf]
        %v1372 = vld [vmem:[%s263 + $0x74] sm:$0xf]
        %v1373 = vld [vmem:[%s263 + $0x78] sm:$0xf]
        %v1374 = vld [vmem:[%s263 + $0x7c] sm:$0xf]
        %v1375 = vld [vmem:[%s263 + $0x80] sm:$0x1]
        %s1376 = scalar_lea.vmem %s1, 128
        %v1377 = vld [vmem:[%s1376] sm:$0xf]
        %v1378 = vld [vmem:[%s1376 + $0x4] sm:$0xf]
        %v1379 = vld [vmem:[%s1376 + $0x8] sm:$0xf]
        %v1380 = vld [vmem:[%s1376 + $0xc] sm:$0xf]
        %v1381 = vld [vmem:[%s1376 + $0x10] sm:$0xf]
        %v1382 = vld [vmem:[%s1376 + $0x14] sm:$0xf]
        %v1383 = vld [vmem:[%s1376 + $0x18] sm:$0xf]
        %v1384 = vld [vmem:[%s1376 + $0x1c] sm:$0xf]
        %v1385 = vld [vmem:[%s1376 + $0x20] sm:$0xf]
        %v1386 = vld [vmem:[%s1376 + $0x24] sm:$0xf]
        %v1387 = vld [vmem:[%s1376 + $0x28] sm:$0xf]
        %v1388 = vld [vmem:[%s1376 + $0x2c] sm:$0xf]
        %v1389 = vld [vmem:[%s1376 + $0x30] sm:$0xf]
        %v1390 = vld [vmem:[%s1376 + $0x34] sm:$0xf]
        %v1391 = vld [vmem:[%s1376 + $0x38] sm:$0xf]
        %v1392 = vld [vmem:[%s1376 + $0x3c] sm:$0xf]
        %v1393 = vld [vmem:[%s1376 + $0x40] sm:$0xf]
        %v1394 = vld [vmem:[%s1376 + $0x44] sm:$0xf]
        %v1395 = vld [vmem:[%s1376 + $0x48] sm:$0xf]
        %v1396 = vld [vmem:[%s1376 + $0x4c] sm:$0xf]
        %v1397 = vld [vmem:[%s1376 + $0x50] sm:$0xf]
        %v1398 = vld [vmem:[%s1376 + $0x54] sm:$0xf]
        %v1399 = vld [vmem:[%s1376 + $0x58] sm:$0xf]
        %v1400 = vld [vmem:[%s1376 + $0x5c] sm:$0xf]
        %v1401 = vld [vmem:[%s1376 + $0x60] sm:$0xf]
        %v1402 = vld [vmem:[%s1376 + $0x64] sm:$0xf]
        %v1403 = vld [vmem:[%s1376 + $0x68] sm:$0xf]
        %v1404 = vld [vmem:[%s1376 + $0x6c] sm:$0xf]
        %v1405 = vld [vmem:[%s1376 + $0x70] sm:$0xf]
        %v1406 = vld [vmem:[%s1376 + $0x74] sm:$0xf]
        %v1407 = vld [vmem:[%s1376 + $0x78] sm:$0xf]
        %v1408 = vld [vmem:[%s1376 + $0x7c] sm:$0xf]
        %vm1441 = vcmask 1040384
        %vm1442 = vcmask 1044484
        %vm1443 = vmor %vm1441, %vm1442
        %v1444 = vrot.slane %v1377, 7
        %v1445 = vrot.slane %v1444, 4
        %v1446 = vrot.slane %v1378, 7
        %v1447 = vsel %vm1443, %v1445, %v1446
        %v1448 = vrot.slane %v1446, 4
        %v1449 = vrot.slane %v1379, 7
        %v1450 = vsel %vm1443, %v1448, %v1449
        %v1451 = vrot.slane %v1449, 4
        %v1452 = vrot.slane %v1380, 7
        %v1453 = vsel %vm1443, %v1451, %v1452
        %v1454 = vrot.slane %v1452, 4
        %v1455 = vrot.slane %v1381, 7
        %v1456 = vsel %vm1443, %v1454, %v1455
        %v1457 = vrot.slane %v1455, 4
        %v1458 = vrot.slane %v1382, 7
        %v1459 = vsel %vm1443, %v1457, %v1458
        %v1460 = vrot.slane %v1458, 4
        %v1461 = vrot.slane %v1383, 7
        %v1462 = vsel %vm1443, %v1460, %v1461
        %v1463 = vrot.slane %v1461, 4
        %v1464 = vrot.slane %v1384, 7
        %v1465 = vsel %vm1443, %v1463, %v1464
        %v1466 = vrot.slane %v1464, 4
        %v1467 = vrot.slane %v1385, 7
        %v1468 = vsel %vm1443, %v1466, %v1467
        %v1469 = vrot.slane %v1467, 4
        %v1470 = vrot.slane %v1386, 7
        %v1471 = vsel %vm1443, %v1469, %v1470
        %v1472 = vrot.slane %v1470, 4
        %v1473 = vrot.slane %v1387, 7
        %v1474 = vsel %vm1443, %v1472, %v1473
        %v1475 = vrot.slane %v1473, 4
        %v1476 = vrot.slane %v1388, 7
        %v1477 = vsel %vm1443, %v1475, %v1476
        %v1478 = vrot.slane %v1476, 4
        %v1479 = vrot.slane %v1389, 7
        %v1480 = vsel %vm1443, %v1478, %v1479
        %v1481 = vrot.slane %v1479, 4
        %v1482 = vrot.slane %v1390, 7
        %v1483 = vsel %vm1443, %v1481, %v1482
        %v1484 = vrot.slane %v1482, 4
        %v1485 = vrot.slane %v1391, 7
        %v1486 = vsel %vm1443, %v1484, %v1485
        %v1487 = vrot.slane %v1485, 4
        %v1488 = vrot.slane %v1392, 7
        %v1489 = vsel %vm1443, %v1487, %v1488
        %v1490 = vrot.slane %v1488, 4
        %v1491 = vrot.slane %v1393, 7
        %v1492 = vsel %vm1443, %v1490, %v1491
        %v1493 = vrot.slane %v1491, 4
        %v1494 = vrot.slane %v1394, 7
        %v1495 = vsel %vm1443, %v1493, %v1494
        %v1496 = vrot.slane %v1494, 4
        %v1497 = vrot.slane %v1395, 7
        %v1498 = vsel %vm1443, %v1496, %v1497
        %v1499 = vrot.slane %v1497, 4
        %v1500 = vrot.slane %v1396, 7
        %v1501 = vsel %vm1443, %v1499, %v1500
        %v1502 = vrot.slane %v1500, 4
        %v1503 = vrot.slane %v1397, 7
        %v1504 = vsel %vm1443, %v1502, %v1503
        %v1505 = vrot.slane %v1503, 4
        %v1506 = vrot.slane %v1398, 7
        %v1507 = vsel %vm1443, %v1505, %v1506
        %v1508 = vrot.slane %v1506, 4
        %v1509 = vrot.slane %v1399, 7
        %v1510 = vsel %vm1443, %v1508, %v1509
        %v1511 = vrot.slane %v1509, 4
        %v1512 = vrot.slane %v1400, 7
        %v1513 = vsel %vm1443, %v1511, %v1512
        %v1514 = vrot.slane %v1512, 4
        %v1515 = vrot.slane %v1401, 7
        %v1516 = vsel %vm1443, %v1514, %v1515
        %v1517 = vrot.slane %v1515, 4
        %v1518 = vrot.slane %v1402, 7
        %v1519 = vsel %vm1443, %v1517, %v1518
        %v1520 = vrot.slane %v1518, 4
        %v1521 = vrot.slane %v1403, 7
        %v1522 = vsel %vm1443, %v1520, %v1521
        %v1523 = vrot.slane %v1521, 4
        %v1524 = vrot.slane %v1404, 7
        %v1525 = vsel %vm1443, %v1523, %v1524
        %v1526 = vrot.slane %v1524, 4
        %v1527 = vrot.slane %v1405, 7
        %v1528 = vsel %vm1443, %v1526, %v1527
        %v1529 = vrot.slane %v1527, 4
        %v1530 = vrot.slane %v1406, 7
        %v1531 = vsel %vm1443, %v1529, %v1530
        %v1532 = vrot.slane %v1530, 4
        %v1533 = vrot.slane %v1407, 7
        %v1534 = vsel %vm1443, %v1532, %v1533
        %v1535 = vrot.slane %v1533, 4
        %v1536 = vrot.slane %v1408, 7
        %v1537 = vsel %vm1443, %v1535, %v1536
        %v1538 = vrot.slane %v1536, 4
        %v1572 = vmul.bf16 %v1343, %v1444
        %v1573 = vmul.bf16 %v1344, %v1447
        %v1574 = vmul.bf16 %v1345, %v1450
        %v1575 = vmul.bf16 %v1346, %v1453
        %v1576 = vmul.bf16 %v1347, %v1456
        %v1577 = vmul.bf16 %v1348, %v1459
        %v1578 = vmul.bf16 %v1349, %v1462
        %v1579 = vmul.bf16 %v1350, %v1465
        %v1580 = vmul.bf16 %v1351, %v1468
        %v1581 = vmul.bf16 %v1352, %v1471
        %v1582 = vmul.bf16 %v1353, %v1474
        %v1583 = vmul.bf16 %v1354, %v1477
        %v1584 = vmul.bf16 %v1355, %v1480
        %v1585 = vmul.bf16 %v1356, %v1483
        %v1586 = vmul.bf16 %v1357, %v1486
        %v1587 = vmul.bf16 %v1358, %v1489
        %v1588 = vmul.bf16 %v1359, %v1492
        %v1589 = vmul.bf16 %v1360, %v1495
        %v1590 = vmul.bf16 %v1361, %v1498
        %v1591 = vmul.bf16 %v1362, %v1501
        %v1592 = vmul.bf16 %v1363, %v1504
        %v1593 = vmul.bf16 %v1364, %v1507
        %v1594 = vmul.bf16 %v1365, %v1510
        %v1595 = vmul.bf16 %v1366, %v1513
        %v1596 = vmul.bf16 %v1367, %v1516
        %v1597 = vmul.bf16 %v1368, %v1519
        %v1598 = vmul.bf16 %v1369, %v1522
        %v1599 = vmul.bf16 %v1370, %v1525
        %v1600 = vmul.bf16 %v1371, %v1528
        %v1601 = vmul.bf16 %v1372, %v1531
        %v1602 = vmul.bf16 %v1373, %v1534
        %v1603 = vmul.bf16 %v1374, %v1537
        %v1604 = vmul.bf16 %v1375, %v1538
        %v1605 = vld [vmem:[#allocation2] sm:$0xff]
        %v1606 = vld [vmem:[#allocation2 + $0x8] sm:$0xff]
        %v1607 = vld [vmem:[#allocation2 + $0x10] sm:$0xff]
        %v1608 = vld [vmem:[#allocation2 + $0x18] sm:$0xff]
        %v1609 = vld [vmem:[#allocation2 + $0x20] sm:$0xff]
        %v1610 = vld [vmem:[#allocation2 + $0x28] sm:$0xff]
        %v1611 = vld [vmem:[#allocation2 + $0x30] sm:$0xff]
        %v1612 = vld [vmem:[#allocation2 + $0x38] sm:$0xff]
        %v1613 = vld [vmem:[#allocation2 + $0x40] sm:$0xff]
        %v1614 = vld [vmem:[#allocation2 + $0x48] sm:$0xff]
        %v1615 = vld [vmem:[#allocation2 + $0x50] sm:$0xff]
        %v1616 = vld [vmem:[#allocation2 + $0x58] sm:$0xff]
        %v1617 = vld [vmem:[#allocation2 + $0x60] sm:$0xff]
        %v1618 = vld [vmem:[#allocation2 + $0x68] sm:$0xff]
        %v1619 = vld [vmem:[#allocation2 + $0x70] sm:$0xff]
        %v1620 = vld [vmem:[#allocation2 + $0x78] sm:$0xff]
        %v1621 = vld [vmem:[#allocation2 + $0x80] sm:$0xff]
        %v1622 = vld [vmem:[#allocation2 + $0x88] sm:$0xff]
        %v1623 = vld [vmem:[#allocation2 + $0x90] sm:$0xff]
        %v1624 = vld [vmem:[#allocation2 + $0x98] sm:$0xff]
        %v1625 = vld [vmem:[#allocation2 + $0xa0] sm:$0xff]
        %v1626 = vld [vmem:[#allocation2 + $0xa8] sm:$0xff]
        %v1627 = vld [vmem:[#allocation2 + $0xb0] sm:$0xff]
        %v1628 = vld [vmem:[#allocation2 + $0xb8] sm:$0xff]
        %v1629 = vld [vmem:[#allocation2 + $0xc0] sm:$0xff]
        %v1630 = vld [vmem:[#allocation2 + $0xc8] sm:$0xff]
        %v1631 = vld [vmem:[#allocation2 + $0xd0] sm:$0xff]
        %v1632 = vld [vmem:[#allocation2 + $0xd8] sm:$0xff]
        %v1633 = vld [vmem:[#allocation2 + $0xe0] sm:$0xff]
        %v1634 = vld [vmem:[#allocation2 + $0xe8] sm:$0xff]
        %v1635 = vld [vmem:[#allocation2 + $0xf0] sm:$0xff]
        %v1636 = vld [vmem:[#allocation2 + $0xf8] sm:$0xff]
        %s1637 = scalar_lea.vmem %s2, 4
        %v1638 = vld [vmem:[%s1637] sm:$0x3]
        %v1672 = vunpack.c.l.b16 %v1572
        %v1673 = vunpack.c.l.b16 %v1573
        %v1674 = vunpack.c.l.b16 %v1574
        %v1675 = vunpack.c.l.b16 %v1575
        %v1676 = vunpack.c.l.b16 %v1576
        %v1677 = vunpack.c.l.b16 %v1577
        %v1678 = vunpack.c.l.b16 %v1578
        %v1679 = vunpack.c.l.b16 %v1579
        %v1680 = vunpack.c.l.b16 %v1580
        %v1681 = vunpack.c.l.b16 %v1581
        %v1682 = vunpack.c.l.b16 %v1582
        %v1683 = vunpack.c.l.b16 %v1583
        %v1684 = vunpack.c.l.b16 %v1584
        %v1685 = vunpack.c.l.b16 %v1585
        %v1686 = vunpack.c.l.b16 %v1586
        %v1687 = vunpack.c.l.b16 %v1587
        %v1688 = vunpack.c.l.b16 %v1588
        %v1689 = vunpack.c.l.b16 %v1589
        %v1690 = vunpack.c.l.b16 %v1590
        %v1691 = vunpack.c.l.b16 %v1591
        %v1692 = vunpack.c.l.b16 %v1592
        %v1693 = vunpack.c.l.b16 %v1593
        %v1694 = vunpack.c.l.b16 %v1594
        %v1695 = vunpack.c.l.b16 %v1595
        %v1696 = vunpack.c.l.b16 %v1596
        %v1697 = vunpack.c.l.b16 %v1597
        %v1698 = vunpack.c.l.b16 %v1598
        %v1699 = vunpack.c.l.b16 %v1599
        %v1700 = vunpack.c.l.b16 %v1600
        %v1701 = vunpack.c.l.b16 %v1601
        %v1702 = vunpack.c.l.b16 %v1602
        %v1703 = vunpack.c.l.b16 %v1603
        %v1704 = vunpack.c.l.b16 %v1604
        %v1705 = vpack.c.b16 %v1673, %v1672
        %v1706 = vpack.c.b16 %v1675, %v1674
        %v1707 = vpack.c.b16 %v1677, %v1676
        %v1708 = vpack.c.b16 %v1679, %v1678
        %v1709 = vpack.c.b16 %v1681, %v1680
        %v1710 = vpack.c.b16 %v1683, %v1682
        %v1711 = vpack.c.b16 %v1685, %v1684
        %v1712 = vpack.c.b16 %v1687, %v1686
        %v1713 = vpack.c.b16 %v1689, %v1688
        %v1714 = vpack.c.b16 %v1691, %v1690
        %v1715 = vpack.c.b16 %v1693, %v1692
        %v1716 = vpack.c.b16 %v1695, %v1694
        %v1717 = vpack.c.b16 %v1697, %v1696
        %v1718 = vpack.c.b16 %v1699, %v1698
        %v1719 = vpack.c.b16 %v1701, %v1700
        %v1720 = vpack.c.b16 %v1703, %v1702
        %v1721 = vpack.c.b16 %v1704, %v1704
        %vm1722 = vcmask 1046528
        %v1723 = vrot.slane %v1705, 1
        %v1724 = vrot.slane %v1706, 1
        %v1725 = vsel %vm1722, %v1723, %v1724
        %v1726 = vrot.slane %v1707, 1
        %v1727 = vsel %vm1722, %v1724, %v1726
        %v1728 = vrot.slane %v1708, 1
        %v1729 = vsel %vm1722, %v1726, %v1728
        %v1730 = vrot.slane %v1709, 1
        %v1731 = vsel %vm1722, %v1728, %v1730
        %v1732 = vrot.slane %v1710, 1
        %v1733 = vsel %vm1722, %v1730, %v1732
        %v1734 = vrot.slane %v1711, 1
        %v1735 = vsel %vm1722, %v1732, %v1734
        %v1736 = vrot.slane %v1712, 1
        %v1737 = vsel %vm1722, %v1734, %v1736
        %v1738 = vrot.slane %v1713, 1
        %v1739 = vsel %vm1722, %v1736, %v1738
        %v1740 = vrot.slane %v1714, 1
        %v1741 = vsel %vm1722, %v1738, %v1740
        %v1742 = vrot.slane %v1715, 1
        %v1743 = vsel %vm1722, %v1740, %v1742
        %v1744 = vrot.slane %v1716, 1
        %v1745 = vsel %vm1722, %v1742, %v1744
        %v1746 = vrot.slane %v1717, 1
        %v1747 = vsel %vm1722, %v1744, %v1746
        %v1748 = vrot.slane %v1718, 1
        %v1749 = vsel %vm1722, %v1746, %v1748
        %v1750 = vrot.slane %v1719, 1
        %v1751 = vsel %vm1722, %v1748, %v1750
        %v1752 = vrot.slane %v1720, 1
        %v1753 = vsel %vm1722, %v1750, %v1752
        %v1754 = vrot.slane %v1721, 1
        %v1755 = vsel %vm1722, %v1752, %v1754
        %v1757 = vsel %vm506, %v1725, 0
        %v1760 = vsel %vm506, %v1727, 0
        %v1763 = vsel %vm506, %v1729, 0
        %v1766 = vsel %vm506, %v1731, 0
        %v1769 = vsel %vm506, %v1733, 0
        %v1772 = vsel %vm506, %v1735, 0
        %v1775 = vsel %vm506, %v1737, 0
        %v1778 = vsel %vm506, %v1739, 0
        %v1781 = vsel %vm506, %v1741, 0
        %v1784 = vsel %vm506, %v1743, 0
        %v1787 = vsel %vm506, %v1745, 0
        %v1790 = vsel %vm506, %v1747, 0
        %v1793 = vsel %vm506, %v1749, 0
        %v1796 = vsel %vm506, %v1751, 0
        %v1799 = vsel %vm506, %v1753, 0
        %v1802 = vsel %vm506, %v1755, 0
        %v1805 = vsel %vm555, %v1638, 0
        %1807 = vmatprep.subr.bf16.mxu0 0
        %1808 = vmatpush1.bf16.msra.mxu0 %v1805
        %1809 = vmatprep.subr.bf16.mxu0 0
        %1810 = vmatpush1.bf16.msra.mxu0 0
        %1811 = vmatprep.subr.bf16.mxu0 0
        %1812 = vmatpush1.bf16.msra.mxu0 0
        %1813 = vmatprep.subr.bf16.mxu0 0
        %1814 = vmatpush1.bf16.msra.mxu0 0
        %1815 = vmatprep.subr.bf16.mxu0 0
        %1816 = vmatpush1.bf16.msra.mxu0 0
        %1817 = vmatprep.subr.bf16.mxu0 0
        %1818 = vmatpush1.bf16.msra.mxu0 0
        %1819 = vmatprep.subr.bf16.mxu0 0
        %1820 = vmatpush1.bf16.msra.mxu0 0
        %1821 = vmatprep.subr.bf16.mxu0 0
        %1822 = vmatpush1.bf16.msra.mxu0 0
        %1823 = vmatprep.subr.bf16.mxu0 0
        %1824 = vmatpush1.bf16.msra.mxu0 0
        %1825 = vmatprep.subr.bf16.mxu0 0
        %1826 = vmatpush1.bf16.msra.mxu0 0
        %1827 = vmatprep.subr.bf16.mxu0 0
        %1828 = vmatpush1.bf16.msra.mxu0 0
        %1829 = vmatprep.subr.bf16.mxu0 0
        %1830 = vmatpush1.bf16.msra.mxu0 0
        %1831 = vmatprep.subr.bf16.mxu0 0
        %1832 = vmatpush1.bf16.msra.mxu0 0
        %1833 = vmatprep.subr.bf16.mxu0 0
        %1834 = vmatpush1.bf16.msra.mxu0 0
        %1835 = vmatprep.subr.bf16.mxu0 0
        %1836 = vmatpush1.bf16.msra.mxu0 0
        %1837 = vmatprep.subr.bf16.mxu0 0
        %1838 = vmatpush1.bf16.msra.mxu0 0
        %1839 = vmatprep.mubr.bf16.mxu0 0
        %1840 = vmatmul.mubr.bf16.gmra.mrb[0].mxu0 %v1757
        %v1841 = vpop.f32.mrb[0].mxu0
        %v1842 = vadd.f32 0.0, %v1841
        %v1843 = vpop.f32.mrb[0].mxu0
        %v1844 = vpop.f32.mrb[0].mxu0
        %v1845 = vadd.f32 0.0, %v1844
        %v1846 = vpop.f32.mrb[0].mxu0
        %1847 = vmatprep.mubr.bf16.mxu0 0
        %1848 = vmatmul.mubr.bf16.gmra.mrb[0].mxu0 %v1760
        %v1849 = vpop.f32.mrb[0].mxu0
        %v1850 = vadd.f32 0.0, %v1849
        %v1851 = vpop.f32.mrb[0].mxu0
        %v1852 = vpop.f32.mrb[0].mxu0
        %v1853 = vadd.f32 0.0, %v1852
        %v1854 = vpop.f32.mrb[0].mxu0
        %1855 = vmatprep.mubr.bf16.mxu0 0
        %1856 = vmatmul.mubr.bf16.gmra.mrb[0].mxu0 %v1763
        %v1857 = vpop.f32.mrb[0].mxu0
        %v1858 = vadd.f32 0.0, %v1857
        %v1859 = vpop.f32.mrb[0].mxu0
        %v1860 = vpop.f32.mrb[0].mxu0
        %v1861 = vadd.f32 0.0, %v1860
        %v1862 = vpop.f32.mrb[0].mxu0
        %1863 = vmatprep.mubr.bf16.mxu0 0
        %1864 = vmatmul.mubr.bf16.gmra.mrb[0].mxu0 %v1766
        %v1865 = vpop.f32.mrb[0].mxu0
        %v1866 = vadd.f32 0.0, %v1865
        %v1867 = vpop.f32.mrb[0].mxu0
        %v1868 = vpop.f32.mrb[0].mxu0
        %v1869 = vadd.f32 0.0, %v1868
        %v1870 = vpop.f32.mrb[0].mxu0
        %1871 = vmatprep.mubr.bf16.mxu0 0
        %1872 = vmatmul.mubr.bf16.gmra.mrb[0].mxu0 %v1769
        %v1873 = vpop.f32.mrb[0].mxu0
        %v1874 = vadd.f32 0.0, %v1873
        %v1875 = vpop.f32.mrb[0].mxu0
        %v1876 = vpop.f32.mrb[0].mxu0
        %v1877 = vadd.f32 0.0, %v1876
        %v1878 = vpop.f32.mrb[0].mxu0
        %1879 = vmatprep.mubr.bf16.mxu0 0
        %1880 = vmatmul.mubr.bf16.gmra.mrb[0].mxu0 %v1772
        %v1881 = vpop.f32.mrb[0].mxu0
        %v1882 = vadd.f32 0.0, %v1881
        %v1883 = vpop.f32.mrb[0].mxu0
        %v1884 = vpop.f32.mrb[0].mxu0
        %v1885 = vadd.f32 0.0, %v1884
        %v1886 = vpop.f32.mrb[0].mxu0
        %1887 = vmatprep.mubr.bf16.mxu0 0
        %1888 = vmatmul.mubr.bf16.gmra.mrb[0].mxu0 %v1775
        %v1889 = vpop.f32.mrb[0].mxu0
        %v1890 = vadd.f32 0.0, %v1889
        %v1891 = vpop.f32.mrb[0].mxu0
        %v1892 = vpop.f32.mrb[0].mxu0
        %v1893 = vadd.f32 0.0, %v1892
        %v1894 = vpop.f32.mrb[0].mxu0
        %1895 = vmatprep.mubr.bf16.mxu0 0
        %1896 = vmatmul.mubr.bf16.gmra.mrb[0].mxu0 %v1778
        %v1897 = vpop.f32.mrb[0].mxu0
        %v1898 = vadd.f32 0.0, %v1897
        %v1899 = vpop.f32.mrb[0].mxu0
        %v1900 = vpop.f32.mrb[0].mxu0
        %v1901 = vadd.f32 0.0, %v1900
        %v1902 = vpop.f32.mrb[0].mxu0
        %1903 = vmatprep.mubr.bf16.mxu0 0
        %1904 = vmatmul.mubr.bf16.gmra.mrb[0].mxu0 %v1781
        %v1905 = vpop.f32.mrb[0].mxu0
        %v1906 = vadd.f32 0.0, %v1905
        %v1907 = vpop.f32.mrb[0].mxu0
        %v1908 = vpop.f32.mrb[0].mxu0
        %v1909 = vadd.f32 0.0, %v1908
        %v1910 = vpop.f32.mrb[0].mxu0
        %1911 = vmatprep.mubr.bf16.mxu0 0
        %1912 = vmatmul.mubr.bf16.gmra.mrb[0].mxu0 %v1784
        %v1913 = vpop.f32.mrb[0].mxu0
        %v1914 = vadd.f32 0.0, %v1913
        %v1915 = vpop.f32.mrb[0].mxu0
        %v1916 = vpop.f32.mrb[0].mxu0
        %v1917 = vadd.f32 0.0, %v1916
        %v1918 = vpop.f32.mrb[0].mxu0
        %1919 = vmatprep.mubr.bf16.mxu0 0
        %1920 = vmatmul.mubr.bf16.gmra.mrb[0].mxu0 %v1787
        %v1921 = vpop.f32.mrb[0].mxu0
        %v1922 = vadd.f32 0.0, %v1921
        %v1923 = vpop.f32.mrb[0].mxu0
        %v1924 = vpop.f32.mrb[0].mxu0
        %v1925 = vadd.f32 0.0, %v1924
        %v1926 = vpop.f32.mrb[0].mxu0
        %1927 = vmatprep.mubr.bf16.mxu0 0
        %1928 = vmatmul.mubr.bf16.gmra.mrb[0].mxu0 %v1790
        %v1929 = vpop.f32.mrb[0].mxu0
        %v1930 = vadd.f32 0.0, %v1929
        %v1931 = vpop.f32.mrb[0].mxu0
        %v1932 = vpop.f32.mrb[0].mxu0
        %v1933 = vadd.f32 0.0, %v1932
        %v1934 = vpop.f32.mrb[0].mxu0
        %1935 = vmatprep.mubr.bf16.mxu0 0
        %1936 = vmatmul.mubr.bf16.gmra.mrb[0].mxu0 %v1793
        %v1937 = vpop.f32.mrb[0].mxu0
        %v1938 = vadd.f32 0.0, %v1937
        %v1939 = vpop.f32.mrb[0].mxu0
        %v1940 = vpop.f32.mrb[0].mxu0
        %v1941 = vadd.f32 0.0, %v1940
        %v1942 = vpop.f32.mrb[0].mxu0
        %1943 = vmatprep.mubr.bf16.mxu0 0
        %1944 = vmatmul.mubr.bf16.gmra.mrb[0].mxu0 %v1796
        %v1945 = vpop.f32.mrb[0].mxu0
        %v1946 = vadd.f32 0.0, %v1945
        %v1947 = vpop.f32.mrb[0].mxu0
        %v1948 = vpop.f32.mrb[0].mxu0
        %v1949 = vadd.f32 0.0, %v1948
        %v1950 = vpop.f32.mrb[0].mxu0
        %1951 = vmatprep.mubr.bf16.mxu0 0
        %1952 = vmatmul.mubr.bf16.gmra.mrb[0].mxu0 %v1799
        %v1953 = vpop.f32.mrb[0].mxu0
        %v1954 = vadd.f32 0.0, %v1953
        %v1955 = vpop.f32.mrb[0].mxu0
        %v1956 = vpop.f32.mrb[0].mxu0
        %v1957 = vadd.f32 0.0, %v1956
        %v1958 = vpop.f32.mrb[0].mxu0
        %1959 = vmatprep.mubr.bf16.mxu0 0
        %1960 = vmatmul.mubr.bf16.gmra.mrb[0].mxu0 %v1802
        %v1961 = vpop.f32.mrb[0].mxu0
        %v1962 = vadd.f32 0.0, %v1961
        %v1963 = vpop.f32.mrb[0].mxu0
        %v1964 = vpop.f32.mrb[0].mxu0
        %v1965 = vadd.f32 0.0, %v1964
        %v1966 = vpop.f32.mrb[0].mxu0
        %1967 = vdwg.mxu0
        %v1968 = vadd.f32 %v1605, %v1842
        %v1969 = vadd.f32 %v1606, %v1845
        %v1970 = vadd.f32 %v1607, %v1850
        %v1971 = vadd.f32 %v1608, %v1853
        %v1972 = vadd.f32 %v1609, %v1858
        %v1973 = vadd.f32 %v1610, %v1861
        %v1974 = vadd.f32 %v1611, %v1866
        %v1975 = vadd.f32 %v1612, %v1869
        %v1976 = vadd.f32 %v1613, %v1874
        %v1977 = vadd.f32 %v1614, %v1877
        %v1978 = vadd.f32 %v1615, %v1882
        %v1979 = vadd.f32 %v1616, %v1885
        %v1980 = vadd.f32 %v1617, %v1890
        %v1981 = vadd.f32 %v1618, %v1893
        %v1982 = vadd.f32 %v1619, %v1898
        %v1983 = vadd.f32 %v1620, %v1901
        %v1984 = vadd.f32 %v1621, %v1906
        %v1985 = vadd.f32 %v1622, %v1909
        %v1986 = vadd.f32 %v1623, %v1914
        %v1987 = vadd.f32 %v1624, %v1917
        %v1988 = vadd.f32 %v1625, %v1922
        %v1989 = vadd.f32 %v1626, %v1925
        %v1990 = vadd.f32 %v1627, %v1930
        %v1991 = vadd.f32 %v1628, %v1933
        %v1992 = vadd.f32 %v1629, %v1938
        %v1993 = vadd.f32 %v1630, %v1941
        %v1994 = vadd.f32 %v1631, %v1946
        %v1995 = vadd.f32 %v1632, %v1949
        %v1996 = vadd.f32 %v1633, %v1954
        %v1997 = vadd.f32 %v1634, %v1957
        %v1998 = vadd.f32 %v1635, %v1962
        %v1999 = vadd.f32 %v1636, %v1965
        %2000 = vst [vmem:[#allocation2] sm:$0xff] %v1968
        %2001 = vst [vmem:[#allocation2 + $0x8] sm:$0xff] %v1969
        %2002 = vst [vmem:[#allocation2 + $0x10] sm:$0xff] %v1970
        %2003 = vst [vmem:[#allocation2 + $0x18] sm:$0xff] %v1971
        %2004 = vst [vmem:[#allocation2 + $0x20] sm:$0xff] %v1972
        %2005 = vst [vmem:[#allocation2 + $0x28] sm:$0xff] %v1973
        %2006 = vst [vmem:[#allocation2 + $0x30] sm:$0xff] %v1974
        %2007 = vst [vmem:[#allocation2 + $0x38] sm:$0xff] %v1975
        %2008 = vst [vmem:[#allocation2 + $0x40] sm:$0xff] %v1976
        %2009 = vst [vmem:[#allocation2 + $0x48] sm:$0xff] %v1977
        %2010 = vst [vmem:[#allocation2 + $0x50] sm:$0xff] %v1978
        %2011 = vst [vmem:[#allocation2 + $0x58] sm:$0xff] %v1979
        %2012 = vst [vmem:[#allocation2 + $0x60] sm:$0xff] %v1980
        %2013 = vst [vmem:[#allocation2 + $0x68] sm:$0xff] %v1981
        %2014 = vst [vmem:[#allocation2 + $0x70] sm:$0xff] %v1982
        %2015 = vst [vmem:[#allocation2 + $0x78] sm:$0xff] %v1983
        %2016 = vst [vmem:[#allocation2 + $0x80] sm:$0xff] %v1984
        %2017 = vst [vmem:[#allocation2 + $0x88] sm:$0xff] %v1985
        %2018 = vst [vmem:[#allocation2 + $0x90] sm:$0xff] %v1986
        %2019 = vst [vmem:[#allocation2 + $0x98] sm:$0xff] %v1987
        %2020 = vst [vmem:[#allocation2 + $0xa0] sm:$0xff] %v1988
        %2021 = vst [vmem:[#allocation2 + $0xa8] sm:$0xff] %v1989
        %2022 = vst [vmem:[#allocation2 + $0xb0] sm:$0xff] %v1990
        %2023 = vst [vmem:[#allocation2 + $0xb8] sm:$0xff] %v1991
        %2024 = vst [vmem:[#allocation2 + $0xc0] sm:$0xff] %v1992
        %2025 = vst [vmem:[#allocation2 + $0xc8] sm:$0xff] %v1993
        %2026 = vst [vmem:[#allocation2 + $0xd0] sm:$0xff] %v1994
        %2027 = vst [vmem:[#allocation2 + $0xd8] sm:$0xff] %v1995
        %2028 = vst [vmem:[#allocation2 + $0xe0] sm:$0xff] %v1996
        %2029 = vst [vmem:[#allocation2 + $0xe8] sm:$0xff] %v1997
        %2030 = vst [vmem:[#allocation2 + $0xf0] sm:$0xff] %v1998
        %2031 = vst [vmem:[#allocation2 + $0xf8] sm:$0xff] %v1999
        %v2032 = vld [vmem:[%s263 + $0x8] sm:$0xf]
        %v2033 = vld [vmem:[%s263 + $0xc] sm:$0xf]
        %v2034 = vld [vmem:[%s263 + $0x10] sm:$0xf]
        %v2035 = vld [vmem:[%s263 + $0x14] sm:$0xf]
        %v2036 = vld [vmem:[%s263 + $0x18] sm:$0xf]
        %v2037 = vld [vmem:[%s263 + $0x1c] sm:$0xf]
        %v2038 = vld [vmem:[%s263 + $0x20] sm:$0xf]
        %v2039 = vld [vmem:[%s263 + $0x24] sm:$0xf]
        %v2040 = vld [vmem:[%s263 + $0x28] sm:$0xf]
        %v2041 = vld [vmem:[%s263 + $0x2c] sm:$0xf]
        %v2042 = vld [vmem:[%s263 + $0x30] sm:$0xf]
        %v2043 = vld [vmem:[%s263 + $0x34] sm:$0xf]
        %v2044 = vld [vmem:[%s263 + $0x38] sm:$0xf]
        %v2045 = vld [vmem:[%s263 + $0x3c] sm:$0xf]
        %v2046 = vld [vmem:[%s263 + $0x40] sm:$0xf]
        %v2047 = vld [vmem:[%s263 + $0x44] sm:$0xf]
        %v2048 = vld [vmem:[%s263 + $0x48] sm:$0xf]
        %v2049 = vld [vmem:[%s263 + $0x4c] sm:$0xf]
        %v2050 = vld [vmem:[%s263 + $0x50] sm:$0xf]
        %v2051 = vld [vmem:[%s263 + $0x54] sm:$0xf]
        %v2052 = vld [vmem:[%s263 + $0x58] sm:$0xf]
        %v2053 = vld [vmem:[%s263 + $0x5c] sm:$0xf]
        %v2054 = vld [vmem:[%s263 + $0x60] sm:$0xf]
        %v2055 = vld [vmem:[%s263 + $0x64] sm:$0xf]
        %v2056 = vld [vmem:[%s263 + $0x68] sm:$0xf]
        %v2057 = vld [vmem:[%s263 + $0x6c] sm:$0xf]
        %v2058 = vld [vmem:[%s263 + $0x70] sm:$0xf]
        %v2059 = vld [vmem:[%s263 + $0x74] sm:$0xf]
        %v2060 = vld [vmem:[%s263 + $0x78] sm:$0xf]
        %v2061 = vld [vmem:[%s263 + $0x7c] sm:$0xf]
        %v2062 = vld [vmem:[%s263 + $0x80] sm:$0xf]
        %v2063 = vld [vmem:[%s263 + $0x84] sm:$0xf]
        %v2064 = vld [vmem:[%s1] sm:$0xf]
        %v2065 = vld [vmem:[%s1 + $0x4] sm:$0xf]
        %v2066 = vld [vmem:[%s1 + $0x8] sm:$0xf]
        %v2067 = vld [vmem:[%s1 + $0xc] sm:$0xf]
        %v2068 = vld [vmem:[%s1 + $0x10] sm:$0xf]
        %v2069 = vld [vmem:[%s1 + $0x14] sm:$0xf]
        %v2070 = vld [vmem:[%s1 + $0x18] sm:$0xf]
        %v2071 = vld [vmem:[%s1 + $0x1c] sm:$0xf]
        %v2072 = vld [vmem:[%s1 + $0x20] sm:$0xf]
        %v2073 = vld [vmem:[%s1 + $0x24] sm:$0xf]
        %v2074 = vld [vmem:[%s1 + $0x28] sm:$0xf]
        %v2075 = vld [vmem:[%s1 + $0x2c] sm:$0xf]
        %v2076 = vld [vmem:[%s1 + $0x30] sm:$0xf]
        %v2077 = vld [vmem:[%s1 + $0x34] sm:$0xf]
        %v2078 = vld [vmem:[%s1 + $0x38] sm:$0xf]
        %v2079 = vld [vmem:[%s1 + $0x3c] sm:$0xf]
        %v2080 = vld [vmem:[%s1 + $0x40] sm:$0xf]
        %v2081 = vld [vmem:[%s1 + $0x44] sm:$0xf]
        %v2082 = vld [vmem:[%s1 + $0x48] sm:$0xf]
        %v2083 = vld [vmem:[%s1 + $0x4c] sm:$0xf]
        %v2084 = vld [vmem:[%s1 + $0x50] sm:$0xf]
        %v2085 = vld [vmem:[%s1 + $0x54] sm:$0xf]
        %v2086 = vld [vmem:[%s1 + $0x58] sm:$0xf]
        %v2087 = vld [vmem:[%s1 + $0x5c] sm:$0xf]
        %v2088 = vld [vmem:[%s1 + $0x60] sm:$0xf]
        %v2089 = vld [vmem:[%s1 + $0x64] sm:$0xf]
        %v2090 = vld [vmem:[%s1 + $0x68] sm:$0xf]
        %v2091 = vld [vmem:[%s1 + $0x6c] sm:$0xf]
        %v2092 = vld [vmem:[%s1 + $0x70] sm:$0xf]
        %v2093 = vld [vmem:[%s1 + $0x74] sm:$0xf]
        %v2094 = vld [vmem:[%s1 + $0x78] sm:$0xf]
        %v2095 = vld [vmem:[%s1 + $0x7c] sm:$0xf]
        %v2096 = vmul.bf16 %v2032, %v2064
        %v2097 = vmul.bf16 %v2033, %v2065
        %v2098 = vmul.bf16 %v2034, %v2066
        %v2099 = vmul.bf16 %v2035, %v2067
        %v2100 = vmul.bf16 %v2036, %v2068
        %v2101 = vmul.bf16 %v2037, %v2069
        %v2102 = vmul.bf16 %v2038, %v2070
        %v2103 = vmul.bf16 %v2039, %v2071
        %v2104 = vmul.bf16 %v2040, %v2072
        %v2105 = vmul.bf16 %v2041, %v2073
        %v2106 = vmul.bf16 %v2042, %v2074
        %v2107 = vmul.bf16 %v2043, %v2075
        %v2108 = vmul.bf16 %v2044, %v2076
        %v2109 = vmul.bf16 %v2045, %v2077
        %v2110 = vmul.bf16 %v2046, %v2078
        %v2111 = vmul.bf16 %v2047, %v2079
        %v2112 = vmul.bf16 %v2048, %v2080
        %v2113 = vmul.bf16 %v2049, %v2081
        %v2114 = vmul.bf16 %v2050, %v2082
        %v2115 = vmul.bf16 %v2051, %v2083
        %v2116 = vmul.bf16 %v2052, %v2084
        %v2117 = vmul.bf16 %v2053, %v2085
        %v2118 = vmul.bf16 %v2054, %v2086
        %v2119 = vmul.bf16 %v2055, %v2087
        %v2120 = vmul.bf16 %v2056, %v2088
        %v2121 = vmul.bf16 %v2057, %v2089
        %v2122 = vmul.bf16 %v2058, %v2090
        %v2123 = vmul.bf16 %v2059, %v2091
        %v2124 = vmul.bf16 %v2060, %v2092
        %v2125 = vmul.bf16 %v2061, %v2093
        %v2126 = vmul.bf16 %v2062, %v2094
        %v2127 = vmul.bf16 %v2063, %v2095
        %v2128 = vld [vmem:[#allocation2] sm:$0xff]
        %v2129 = vld [vmem:[#allocation2 + $0x8] sm:$0xff]
        %v2130 = vld [vmem:[#allocation2 + $0x10] sm:$0xff]
        %v2131 = vld [vmem:[#allocation2 + $0x18] sm:$0xff]
        %v2132 = vld [vmem:[#allocation2 + $0x20] sm:$0xff]
        %v2133 = vld [vmem:[#allocation2 + $0x28] sm:$0xff]
        %v2134 = vld [vmem:[#allocation2 + $0x30] sm:$0xff]
        %v2135 = vld [vmem:[#allocation2 + $0x38] sm:$0xff]
        %v2136 = vld [vmem:[#allocation2 + $0x40] sm:$0xff]
        %v2137 = vld [vmem:[#allocation2 + $0x48] sm:$0xff]
        %v2138 = vld [vmem:[#allocation2 + $0x50] sm:$0xff]
        %v2139 = vld [vmem:[#allocation2 + $0x58] sm:$0xff]
        %v2140 = vld [vmem:[#allocation2 + $0x60] sm:$0xff]
        %v2141 = vld [vmem:[#allocation2 + $0x68] sm:$0xff]
        %v2142 = vld [vmem:[#allocation2 + $0x70] sm:$0xff]
        %v2143 = vld [vmem:[#allocation2 + $0x78] sm:$0xff]
        %v2144 = vld [vmem:[#allocation2 + $0x80] sm:$0xff]
        %v2145 = vld [vmem:[#allocation2 + $0x88] sm:$0xff]
        %v2146 = vld [vmem:[#allocation2 + $0x90] sm:$0xff]
        %v2147 = vld [vmem:[#allocation2 + $0x98] sm:$0xff]
        %v2148 = vld [vmem:[#allocation2 + $0xa0] sm:$0xff]
        %v2149 = vld [vmem:[#allocation2 + $0xa8] sm:$0xff]
        %v2150 = vld [vmem:[#allocation2 + $0xb0] sm:$0xff]
        %v2151 = vld [vmem:[#allocation2 + $0xb8] sm:$0xff]
        %v2152 = vld [vmem:[#allocation2 + $0xc0] sm:$0xff]
        %v2153 = vld [vmem:[#allocation2 + $0xc8] sm:$0xff]
        %v2154 = vld [vmem:[#allocation2 + $0xd0] sm:$0xff]
        %v2155 = vld [vmem:[#allocation2 + $0xd8] sm:$0xff]
        %v2156 = vld [vmem:[#allocation2 + $0xe0] sm:$0xff]
        %v2157 = vld [vmem:[#allocation2 + $0xe8] sm:$0xff]
        %v2158 = vld [vmem:[#allocation2 + $0xf0] sm:$0xff]
        %v2159 = vld [vmem:[#allocation2 + $0xf8] sm:$0xff]
        %s2160 = scalar_lea.vmem %s2, 6
        %v2161 = vld [vmem:[%s2160] sm:$0x3]
        %v2194 = vunpack.c.l.b16 %v2096
        %v2195 = vunpack.c.l.b16 %v2097
        %v2196 = vunpack.c.l.b16 %v2098
        %v2197 = vunpack.c.l.b16 %v2099
        %v2198 = vunpack.c.l.b16 %v2100
        %v2199 = vunpack.c.l.b16 %v2101
        %v2200 = vunpack.c.l.b16 %v2102
        %v2201 = vunpack.c.l.b16 %v2103
        %v2202 = vunpack.c.l.b16 %v2104
        %v2203 = vunpack.c.l.b16 %v2105
        %v2204 = vunpack.c.l.b16 %v2106
        %v2205 = vunpack.c.l.b16 %v2107
        %v2206 = vunpack.c.l.b16 %v2108
        %v2207 = vunpack.c.l.b16 %v2109
        %v2208 = vunpack.c.l.b16 %v2110
        %v2209 = vunpack.c.l.b16 %v2111
        %v2210 = vunpack.c.l.b16 %v2112
        %v2211 = vunpack.c.l.b16 %v2113
        %v2212 = vunpack.c.l.b16 %v2114
        %v2213 = vunpack.c.l.b16 %v2115
        %v2214 = vunpack.c.l.b16 %v2116
        %v2215 = vunpack.c.l.b16 %v2117
        %v2216 = vunpack.c.l.b16 %v2118
        %v2217 = vunpack.c.l.b16 %v2119
        %v2218 = vunpack.c.l.b16 %v2120
        %v2219 = vunpack.c.l.b16 %v2121
        %v2220 = vunpack.c.l.b16 %v2122
        %v2221 = vunpack.c.l.b16 %v2123
        %v2222 = vunpack.c.l.b16 %v2124
        %v2223 = vunpack.c.l.b16 %v2125
        %v2224 = vunpack.c.l.b16 %v2126
        %v2225 = vunpack.c.l.b16 %v2127
        %v2226 = vpack.c.b16 %v2195, %v2194
        %v2227 = vpack.c.b16 %v2197, %v2196
        %v2228 = vpack.c.b16 %v2199, %v2198
        %v2229 = vpack.c.b16 %v2201, %v2200
        %v2230 = vpack.c.b16 %v2203, %v2202
        %v2231 = vpack.c.b16 %v2205, %v2204
        %v2232 = vpack.c.b16 %v2207, %v2206
        %v2233 = vpack.c.b16 %v2209, %v2208
        %v2234 = vpack.c.b16 %v2211, %v2210
        %v2235 = vpack.c.b16 %v2213, %v2212
        %v2236 = vpack.c.b16 %v2215, %v2214
        %v2237 = vpack.c.b16 %v2217, %v2216
        %v2238 = vpack.c.b16 %v2219, %v2218
        %v2239 = vpack.c.b16 %v2221, %v2220
        %v2240 = vpack.c.b16 %v2223, %v2222
        %v2241 = vpack.c.b16 %v2225, %v2224
        %v2243 = vsel %vm506, %v2226, 0
        %v2246 = vsel %vm506, %v2227, 0
        %v2249 = vsel %vm506, %v2228, 0
        %v2252 = vsel %vm506, %v2229, 0
        %v2255 = vsel %vm506, %v2230, 0
        %v2258 = vsel %vm506, %v2231, 0
        %v2261 = vsel %vm506, %v2232, 0
        %v2264 = vsel %vm506, %v2233, 0
        %v2267 = vsel %vm506, %v2234, 0
        %v2270 = vsel %vm506, %v2235, 0
        %v2273 = vsel %vm506, %v2236, 0
        %v2276 = vsel %vm506, %v2237, 0
        %v2279 = vsel %vm506, %v2238, 0
        %v2282 = vsel %vm506, %v2239, 0
        %v2285 = vsel %vm506, %v2240, 0
        %v2288 = vsel %vm506, %v2241, 0
        %v2291 = vsel %vm555, %v2161, 0
        %2293 = vmatprep.subr.bf16.mxu0 0
        %2294 = vmatpush1.bf16.msra.mxu0 %v2291
        %2295 = vmatprep.subr.bf16.mxu0 0
        %2296 = vmatpush1.bf16.msra.mxu0 0
        %2297 = vmatprep.subr.bf16.mxu0 0
        %2298 = vmatpush1.bf16.msra.mxu0 0
        %2299 = vmatprep.subr.bf16.mxu0 0
        %2300 = vmatpush1.bf16.msra.mxu0 0
        %2301 = vmatprep.subr.bf16.mxu0 0
        %2302 = vmatpush1.bf16.msra.mxu0 0
        %2303 = vmatprep.subr.bf16.mxu0 0
        %2304 = vmatpush1.bf16.msra.mxu0 0
        %2305 = vmatprep.subr.bf16.mxu0 0
        %2306 = vmatpush1.bf16.msra.mxu0 0
        %2307 = vmatprep.subr.bf16.mxu0 0
        %2308 = vmatpush1.bf16.msra.mxu0 0
        %2309 = vmatprep.subr.bf16.mxu0 0
        %2310 = vmatpush1.bf16.msra.mxu0 0
        %2311 = vmatprep.subr.bf16.mxu0 0
        %2312 = vmatpush1.bf16.msra.mxu0 0
        %2313 = vmatprep.subr.bf16.mxu0 0
        %2314 = vmatpush1.bf16.msra.mxu0 0
        %2315 = vmatprep.subr.bf16.mxu0 0
        %2316 = vmatpush1.bf16.msra.mxu0 0
        %2317 = vmatprep.subr.bf16.mxu0 0
        %2318 = vmatpush1.bf16.msra.mxu0 0
        %2319 = vmatprep.subr.bf16.mxu0 0
        %2320 = vmatpush1.bf16.msra.mxu0 0
        %2321 = vmatprep.subr.bf16.mxu0 0
        %2322 = vmatpush1.bf16.msra.mxu0 0
        %2323 = vmatprep.subr.bf16.mxu0 0
        %2324 = vmatpush1.bf16.msra.mxu0 0
        %2325 = vmatprep.mubr.bf16.mxu0 0
        %2326 = vmatmul.mubr.bf16.gmra.mrb[0].mxu0 %v2243
        %v2327 = vpop.f32.mrb[0].mxu0
        %v2328 = vadd.f32 0.0, %v2327
        %v2329 = vpop.f32.mrb[0].mxu0
        %v2330 = vpop.f32.mrb[0].mxu0
        %v2331 = vadd.f32 0.0, %v2330
        %v2332 = vpop.f32.mrb[0].mxu0
        %2333 = vmatprep.mubr.bf16.mxu0 0
        %2334 = vmatmul.mubr.bf16.gmra.mrb[0].mxu0 %v2246
        %v2335 = vpop.f32.mrb[0].mxu0
        %v2336 = vadd.f32 0.0, %v2335
        %v2337 = vpop.f32.mrb[0].mxu0
        %v2338 = vpop.f32.mrb[0].mxu0
        %v2339 = vadd.f32 0.0, %v2338
        %v2340 = vpop.f32.mrb[0].mxu0
        %2341 = vmatprep.mubr.bf16.mxu0 0
        %2342 = vmatmul.mubr.bf16.gmra.mrb[0].mxu0 %v2249
        %v2343 = vpop.f32.mrb[0].mxu0
        %v2344 = vadd.f32 0.0, %v2343
        %v2345 = vpop.f32.mrb[0].mxu0
        %v2346 = vpop.f32.mrb[0].mxu0
        %v2347 = vadd.f32 0.0, %v2346
        %v2348 = vpop.f32.mrb[0].mxu0
        %2349 = vmatprep.mubr.bf16.mxu0 0
        %2350 = vmatmul.mubr.bf16.gmra.mrb[0].mxu0 %v2252
        %v2351 = vpop.f32.mrb[0].mxu0
        %v2352 = vadd.f32 0.0, %v2351
        %v2353 = vpop.f32.mrb[0].mxu0
        %v2354 = vpop.f32.mrb[0].mxu0
        %v2355 = vadd.f32 0.0, %v2354
        %v2356 = vpop.f32.mrb[0].mxu0
        %2357 = vmatprep.mubr.bf16.mxu0 0
        %2358 = vmatmul.mubr.bf16.gmra.mrb[0].mxu0 %v2255
        %v2359 = vpop.f32.mrb[0].mxu0
        %v2360 = vadd.f32 0.0, %v2359
        %v2361 = vpop.f32.mrb[0].mxu0
        %v2362 = vpop.f32.mrb[0].mxu0
        %v2363 = vadd.f32 0.0, %v2362
        %v2364 = vpop.f32.mrb[0].mxu0
        %2365 = vmatprep.mubr.bf16.mxu0 0
        %2366 = vmatmul.mubr.bf16.gmra.mrb[0].mxu0 %v2258
        %v2367 = vpop.f32.mrb[0].mxu0
        %v2368 = vadd.f32 0.0, %v2367
        %v2369 = vpop.f32.mrb[0].mxu0
        %v2370 = vpop.f32.mrb[0].mxu0
        %v2371 = vadd.f32 0.0, %v2370
        %v2372 = vpop.f32.mrb[0].mxu0
        %2373 = vmatprep.mubr.bf16.mxu0 0
        %2374 = vmatmul.mubr.bf16.gmra.mrb[0].mxu0 %v2261
        %v2375 = vpop.f32.mrb[0].mxu0
        %v2376 = vadd.f32 0.0, %v2375
        %v2377 = vpop.f32.mrb[0].mxu0
        %v2378 = vpop.f32.mrb[0].mxu0
        %v2379 = vadd.f32 0.0, %v2378
        %v2380 = vpop.f32.mrb[0].mxu0
        %2381 = vmatprep.mubr.bf16.mxu0 0
        %2382 = vmatmul.mubr.bf16.gmra.mrb[0].mxu0 %v2264
        %v2383 = vpop.f32.mrb[0].mxu0
        %v2384 = vadd.f32 0.0, %v2383
        %v2385 = vpop.f32.mrb[0].mxu0
        %v2386 = vpop.f32.mrb[0].mxu0
        %v2387 = vadd.f32 0.0, %v2386
        %v2388 = vpop.f32.mrb[0].mxu0
        %2389 = vmatprep.mubr.bf16.mxu0 0
        %2390 = vmatmul.mubr.bf16.gmra.mrb[0].mxu0 %v2267
        %v2391 = vpop.f32.mrb[0].mxu0
        %v2392 = vadd.f32 0.0, %v2391
        %v2393 = vpop.f32.mrb[0].mxu0
        %v2394 = vpop.f32.mrb[0].mxu0
        %v2395 = vadd.f32 0.0, %v2394
        %v2396 = vpop.f32.mrb[0].mxu0
        %2397 = vmatprep.mubr.bf16.mxu0 0
        %2398 = vmatmul.mubr.bf16.gmra.mrb[0].mxu0 %v2270
        %v2399 = vpop.f32.mrb[0].mxu0
        %v2400 = vadd.f32 0.0, %v2399
        %v2401 = vpop.f32.mrb[0].mxu0
        %v2402 = vpop.f32.mrb[0].mxu0
        %v2403 = vadd.f32 0.0, %v2402
        %v2404 = vpop.f32.mrb[0].mxu0
        %2405 = vmatprep.mubr.bf16.mxu0 0
        %2406 = vmatmul.mubr.bf16.gmra.mrb[0].mxu0 %v2273
        %v2407 = vpop.f32.mrb[0].mxu0
        %v2408 = vadd.f32 0.0, %v2407
        %v2409 = vpop.f32.mrb[0].mxu0
        %v2410 = vpop.f32.mrb[0].mxu0
        %v2411 = vadd.f32 0.0, %v2410
        %v2412 = vpop.f32.mrb[0].mxu0
        %2413 = vmatprep.mubr.bf16.mxu0 0
        %2414 = vmatmul.mubr.bf16.gmra.mrb[0].mxu0 %v2276
        %v2415 = vpop.f32.mrb[0].mxu0
        %v2416 = vadd.f32 0.0, %v2415
        %v2417 = vpop.f32.mrb[0].mxu0
        %v2418 = vpop.f32.mrb[0].mxu0
        %v2419 = vadd.f32 0.0, %v2418
        %v2420 = vpop.f32.mrb[0].mxu0
        %2421 = vmatprep.mubr.bf16.mxu0 0
        %2422 = vmatmul.mubr.bf16.gmra.mrb[0].mxu0 %v2279
        %v2423 = vpop.f32.mrb[0].mxu0
        %v2424 = vadd.f32 0.0, %v2423
        %v2425 = vpop.f32.mrb[0].mxu0
        %v2426 = vpop.f32.mrb[0].mxu0
        %v2427 = vadd.f32 0.0, %v2426
        %v2428 = vpop.f32.mrb[0].mxu0
        %2429 = vmatprep.mubr.bf16.mxu0 0
        %2430 = vmatmul.mubr.bf16.gmra.mrb[0].mxu0 %v2282
        %v2431 = vpop.f32.mrb[0].mxu0
        %v2432 = vadd.f32 0.0, %v2431
        %v2433 = vpop.f32.mrb[0].mxu0
        %v2434 = vpop.f32.mrb[0].mxu0
        %v2435 = vadd.f32 0.0, %v2434
        %v2436 = vpop.f32.mrb[0].mxu0
        %2437 = vmatprep.mubr.bf16.mxu0 0
        %2438 = vmatmul.mubr.bf16.gmra.mrb[0].mxu0 %v2285
        %v2439 = vpop.f32.mrb[0].mxu0
        %v2440 = vadd.f32 0.0, %v2439
        %v2441 = vpop.f32.mrb[0].mxu0
        %v2442 = vpop.f32.mrb[0].mxu0
        %v2443 = vadd.f32 0.0, %v2442
        %v2444 = vpop.f32.mrb[0].mxu0
        %2445 = vmatprep.mubr.bf16.mxu0 0
        %2446 = vmatmul.mubr.bf16.gmra.mrb[0].mxu0 %v2288
        %v2447 = vpop.f32.mrb[0].mxu0
        %v2448 = vadd.f32 0.0, %v2447
        %v2449 = vpop.f32.mrb[0].mxu0
        %v2450 = vpop.f32.mrb[0].mxu0
        %v2451 = vadd.f32 0.0, %v2450
        %v2452 = vpop.f32.mrb[0].mxu0
        %2453 = vdwg.mxu0
        %v2454 = vadd.f32 %v2128, %v2328
        %v2455 = vadd.f32 %v2129, %v2331
        %v2456 = vadd.f32 %v2130, %v2336
        %v2457 = vadd.f32 %v2131, %v2339
        %v2458 = vadd.f32 %v2132, %v2344
        %v2459 = vadd.f32 %v2133, %v2347
        %v2460 = vadd.f32 %v2134, %v2352
        %v2461 = vadd.f32 %v2135, %v2355
        %v2462 = vadd.f32 %v2136, %v2360
        %v2463 = vadd.f32 %v2137, %v2363
        %v2464 = vadd.f32 %v2138, %v2368
        %v2465 = vadd.f32 %v2139, %v2371
        %v2466 = vadd.f32 %v2140, %v2376
        %v2467 = vadd.f32 %v2141, %v2379
        %v2468 = vadd.f32 %v2142, %v2384
        %v2469 = vadd.f32 %v2143, %v2387
        %v2470 = vadd.f32 %v2144, %v2392
        %v2471 = vadd.f32 %v2145, %v2395
        %v2472 = vadd.f32 %v2146, %v2400
        %v2473 = vadd.f32 %v2147, %v2403
        %v2474 = vadd.f32 %v2148, %v2408
        %v2475 = vadd.f32 %v2149, %v2411
        %v2476 = vadd.f32 %v2150, %v2416
        %v2477 = vadd.f32 %v2151, %v2419
        %v2478 = vadd.f32 %v2152, %v2424
        %v2479 = vadd.f32 %v2153, %v2427
        %v2480 = vadd.f32 %v2154, %v2432
        %v2481 = vadd.f32 %v2155, %v2435
        %v2482 = vadd.f32 %v2156, %v2440
        %v2483 = vadd.f32 %v2157, %v2443
        %v2484 = vadd.f32 %v2158, %v2448
        %v2485 = vadd.f32 %v2159, %v2451
        %2486 = vst [vmem:[#allocation2] sm:$0xff] %v2454
        %2487 = vst [vmem:[#allocation2 + $0x8] sm:$0xff] %v2455
        %2488 = vst [vmem:[#allocation2 + $0x10] sm:$0xff] %v2456
        %2489 = vst [vmem:[#allocation2 + $0x18] sm:$0xff] %v2457
        %2490 = vst [vmem:[#allocation2 + $0x20] sm:$0xff] %v2458
        %2491 = vst [vmem:[#allocation2 + $0x28] sm:$0xff] %v2459
        %2492 = vst [vmem:[#allocation2 + $0x30] sm:$0xff] %v2460
        %2493 = vst [vmem:[#allocation2 + $0x38] sm:$0xff] %v2461
        %2494 = vst [vmem:[#allocation2 + $0x40] sm:$0xff] %v2462
        %2495 = vst [vmem:[#allocation2 + $0x48] sm:$0xff] %v2463
        %2496 = vst [vmem:[#allocation2 + $0x50] sm:$0xff] %v2464
        %2497 = vst [vmem:[#allocation2 + $0x58] sm:$0xff] %v2465
        %2498 = vst [vmem:[#allocation2 + $0x60] sm:$0xff] %v2466
        %2499 = vst [vmem:[#allocation2 + $0x68] sm:$0xff] %v2467
        %2500 = vst [vmem:[#allocation2 + $0x70] sm:$0xff] %v2468
        %2501 = vst [vmem:[#allocation2 + $0x78] sm:$0xff] %v2469
        %2502 = vst [vmem:[#allocation2 + $0x80] sm:$0xff] %v2470
        %2503 = vst [vmem:[#allocation2 + $0x88] sm:$0xff] %v2471
        %2504 = vst [vmem:[#allocation2 + $0x90] sm:$0xff] %v2472
        %2505 = vst [vmem:[#allocation2 + $0x98] sm:$0xff] %v2473
        %2506 = vst [vmem:[#allocation2 + $0xa0] sm:$0xff] %v2474
        %2507 = vst [vmem:[#allocation2 + $0xa8] sm:$0xff] %v2475
        %2508 = vst [vmem:[#allocation2 + $0xb0] sm:$0xff] %v2476
        %2509 = vst [vmem:[#allocation2 + $0xb8] sm:$0xff] %v2477
        %2510 = vst [vmem:[#allocation2 + $0xc0] sm:$0xff] %v2478
        %2511 = vst [vmem:[#allocation2 + $0xc8] sm:$0xff] %v2479
        %2512 = vst [vmem:[#allocation2 + $0xd0] sm:$0xff] %v2480
        %2513 = vst [vmem:[#allocation2 + $0xd8] sm:$0xff] %v2481
        %2514 = vst [vmem:[#allocation2 + $0xe0] sm:$0xff] %v2482
        %2515 = vst [vmem:[#allocation2 + $0xe8] sm:$0xff] %v2483
        %2516 = vst [vmem:[#allocation2 + $0xf0] sm:$0xff] %v2484
        %2517 = vst [vmem:[#allocation2 + $0xf8] sm:$0xff] %v2485
        %v2518 = vld [vmem:[%s263 + $0x8] sm:$0xf]
        %v2519 = vld [vmem:[%s263 + $0xc] sm:$0xf]
        %v2520 = vld [vmem:[%s263 + $0x10] sm:$0xf]
        %v2521 = vld [vmem:[%s263 + $0x14] sm:$0xf]
        %v2522 = vld [vmem:[%s263 + $0x18] sm:$0xf]
        %v2523 = vld [vmem:[%s263 + $0x1c] sm:$0xf]
        %v2524 = vld [vmem:[%s263 + $0x20] sm:$0xf]
        %v2525 = vld [vmem:[%s263 + $0x24] sm:$0xf]
        %v2526 = vld [vmem:[%s263 + $0x28] sm:$0xf]
        %v2527 = vld [vmem:[%s263 + $0x2c] sm:$0xf]
        %v2528 = vld [vmem:[%s263 + $0x30] sm:$0xf]
        %v2529 = vld [vmem:[%s263 + $0x34] sm:$0xf]
        %v2530 = vld [vmem:[%s263 + $0x38] sm:$0xf]
        %v2531 = vld [vmem:[%s263 + $0x3c] sm:$0xf]
        %v2532 = vld [vmem:[%s263 + $0x40] sm:$0xf]
        %v2533 = vld [vmem:[%s263 + $0x44] sm:$0xf]
        %v2534 = vld [vmem:[%s263 + $0x48] sm:$0xf]
        %v2535 = vld [vmem:[%s263 + $0x4c] sm:$0xf]
        %v2536 = vld [vmem:[%s263 + $0x50] sm:$0xf]
        %v2537 = vld [vmem:[%s263 + $0x54] sm:$0xf]
        %v2538 = vld [vmem:[%s263 + $0x58] sm:$0xf]
        %v2539 = vld [vmem:[%s263 + $0x5c] sm:$0xf]
        %v2540 = vld [vmem:[%s263 + $0x60] sm:$0xf]
        %v2541 = vld [vmem:[%s263 + $0x64] sm:$0xf]
        %v2542 = vld [vmem:[%s263 + $0x68] sm:$0xf]
        %v2543 = vld [vmem:[%s263 + $0x6c] sm:$0xf]
        %v2544 = vld [vmem:[%s263 + $0x70] sm:$0xf]
        %v2545 = vld [vmem:[%s263 + $0x74] sm:$0xf]
        %v2546 = vld [vmem:[%s263 + $0x78] sm:$0xf]
        %v2547 = vld [vmem:[%s263 + $0x7c] sm:$0xf]
        %v2548 = vld [vmem:[%s263 + $0x80] sm:$0xf]
        %v2549 = vld [vmem:[%s263 + $0x84] sm:$0xf]
        %v2550 = vld [vmem:[%s263 + $0x88] sm:$0x1]
        %v2551 = vld [vmem:[#allocation2] sm:$0xff]
        %v2552 = vld [vmem:[#allocation2 + $0x8] sm:$0xff]
        %v2553 = vld [vmem:[#allocation2 + $0x10] sm:$0xff]
        %v2554 = vld [vmem:[#allocation2 + $0x18] sm:$0xff]
        %v2555 = vld [vmem:[#allocation2 + $0x20] sm:$0xff]
        %v2556 = vld [vmem:[#allocation2 + $0x28] sm:$0xff]
        %v2557 = vld [vmem:[#allocation2 + $0x30] sm:$0xff]
        %v2558 = vld [vmem:[#allocation2 + $0x38] sm:$0xff]
        %v2559 = vld [vmem:[#allocation2 + $0x40] sm:$0xff]
        %v2560 = vld [vmem:[#allocation2 + $0x48] sm:$0xff]
        %v2561 = vld [vmem:[#allocation2 + $0x50] sm:$0xff]
        %v2562 = vld [vmem:[#allocation2 + $0x58] sm:$0xff]
        %v2563 = vld [vmem:[#allocation2 + $0x60] sm:$0xff]
        %v2564 = vld [vmem:[#allocation2 + $0x68] sm:$0xff]
        %v2565 = vld [vmem:[#allocation2 + $0x70] sm:$0xff]
        %v2566 = vld [vmem:[#allocation2 + $0x78] sm:$0xff]
        %v2567 = vld [vmem:[#allocation2 + $0x80] sm:$0xff]
        %v2568 = vld [vmem:[#allocation2 + $0x88] sm:$0xff]
        %v2569 = vld [vmem:[#allocation2 + $0x90] sm:$0xff]
        %v2570 = vld [vmem:[#allocation2 + $0x98] sm:$0xff]
        %v2571 = vld [vmem:[#allocation2 + $0xa0] sm:$0xff]
        %v2572 = vld [vmem:[#allocation2 + $0xa8] sm:$0xff]
        %v2573 = vld [vmem:[#allocation2 + $0xb0] sm:$0xff]
        %v2574 = vld [vmem:[#allocation2 + $0xb8] sm:$0xff]
        %v2575 = vld [vmem:[#allocation2 + $0xc0] sm:$0xff]
        %v2576 = vld [vmem:[#allocation2 + $0xc8] sm:$0xff]
        %v2577 = vld [vmem:[#allocation2 + $0xd0] sm:$0xff]
        %v2578 = vld [vmem:[#allocation2 + $0xd8] sm:$0xff]
        %v2579 = vld [vmem:[#allocation2 + $0xe0] sm:$0xff]
        %v2580 = vld [vmem:[#allocation2 + $0xe8] sm:$0xff]
        %v2581 = vld [vmem:[#allocation2 + $0xf0] sm:$0xff]
        %v2582 = vld [vmem:[#allocation2 + $0xf8] sm:$0xff]
        %s2583 = scalar_lea.vmem %s2, 8
        %v2584 = vld [vmem:[%s2583] sm:$0x3]
        %v2618 = vunpack.c.l.b16 %v2518
        %v2619 = vunpack.c.l.b16 %v2519
        %v2620 = vunpack.c.l.b16 %v2520
        %v2621 = vunpack.c.l.b16 %v2521
        %v2622 = vunpack.c.l.b16 %v2522
        %v2623 = vunpack.c.l.b16 %v2523
        %v2624 = vunpack.c.l.b16 %v2524
        %v2625 = vunpack.c.l.b16 %v2525
        %v2626 = vunpack.c.l.b16 %v2526
        %v2627 = vunpack.c.l.b16 %v2527
        %v2628 = vunpack.c.l.b16 %v2528
        %v2629 = vunpack.c.l.b16 %v2529
        %v2630 = vunpack.c.l.b16 %v2530
        %v2631 = vunpack.c.l.b16 %v2531
        %v2632 = vunpack.c.l.b16 %v2532
        %v2633 = vunpack.c.l.b16 %v2533
        %v2634 = vunpack.c.l.b16 %v2534
        %v2635 = vunpack.c.l.b16 %v2535
        %v2636 = vunpack.c.l.b16 %v2536
        %v2637 = vunpack.c.l.b16 %v2537
        %v2638 = vunpack.c.l.b16 %v2538
        %v2639 = vunpack.c.l.b16 %v2539
        %v2640 = vunpack.c.l.b16 %v2540
        %v2641 = vunpack.c.l.b16 %v2541
        %v2642 = vunpack.c.l.b16 %v2542
        %v2643 = vunpack.c.l.b16 %v2543
        %v2644 = vunpack.c.l.b16 %v2544
        %v2645 = vunpack.c.l.b16 %v2545
        %v2646 = vunpack.c.l.b16 %v2546
        %v2647 = vunpack.c.l.b16 %v2547
        %v2648 = vunpack.c.l.b16 %v2548
        %v2649 = vunpack.c.l.b16 %v2549
        %v2650 = vunpack.c.l.b16 %v2550
        %v2651 = vpack.c.b16 %v2619, %v2618
        %v2652 = vpack.c.b16 %v2621, %v2620
        %v2653 = vpack.c.b16 %v2623, %v2622
        %v2654 = vpack.c.b16 %v2625, %v2624
        %v2655 = vpack.c.b16 %v2627, %v2626
        %v2656 = vpack.c.b16 %v2629, %v2628
        %v2657 = vpack.c.b16 %v2631, %v2630
        %v2658 = vpack.c.b16 %v2633, %v2632
        %v2659 = vpack.c.b16 %v2635, %v2634
        %v2660 = vpack.c.b16 %v2637, %v2636
        %v2661 = vpack.c.b16 %v2639, %v2638
        %v2662 = vpack.c.b16 %v2641, %v2640
        %v2663 = vpack.c.b16 %v2643, %v2642
        %v2664 = vpack.c.b16 %v2645, %v2644
        %v2665 = vpack.c.b16 %v2647, %v2646
        %v2666 = vpack.c.b16 %v2649, %v2648
        %v2667 = vpack.c.b16 %v2650, %v2650
        %v2669 = vshrl.u32 %v2651, 16
        %v2671 = vshll.u32 %v2651, 16
        %v2673 = vrot.slane %v2671, 1
        %v2674 = vor.u32 %v2669, %v2673
        %v2676 = vshll.u32 %v2652, 16
        %v2678 = vrot.slane %v2676, 1
        %v2679 = vsel %vm934, %v2674, %v2678
        %v2680 = vshrl.u32 %v2652, 16
        %v2682 = vor.u32 %v2680, %v2678
        %v2684 = vshll.u32 %v2653, 16
        %v2686 = vrot.slane %v2684, 1
        %v2687 = vsel %vm934, %v2682, %v2686
        %v2688 = vshrl.u32 %v2653, 16
        %v2690 = vor.u32 %v2688, %v2686
        %v2692 = vshll.u32 %v2654, 16
        %v2694 = vrot.slane %v2692, 1
        %v2695 = vsel %vm934, %v2690, %v2694
        %v2696 = vshrl.u32 %v2654, 16
        %v2698 = vor.u32 %v2696, %v2694
        %v2700 = vshll.u32 %v2655, 16
        %v2702 = vrot.slane %v2700, 1
        %v2703 = vsel %vm934, %v2698, %v2702
        %v2704 = vshrl.u32 %v2655, 16
        %v2706 = vor.u32 %v2704, %v2702
        %v2708 = vshll.u32 %v2656, 16
        %v2710 = vrot.slane %v2708, 1
        %v2711 = vsel %vm934, %v2706, %v2710
        %v2712 = vshrl.u32 %v2656, 16
        %v2714 = vor.u32 %v2712, %v2710
        %v2716 = vshll.u32 %v2657, 16
        %v2718 = vrot.slane %v2716, 1
        %v2719 = vsel %vm934, %v2714, %v2718
        %v2720 = vshrl.u32 %v2657, 16
        %v2722 = vor.u32 %v2720, %v2718
        %v2724 = vshll.u32 %v2658, 16
        %v2726 = vrot.slane %v2724, 1
        %v2727 = vsel %vm934, %v2722, %v2726
        %v2728 = vshrl.u32 %v2658, 16
        %v2730 = vor.u32 %v2728, %v2726
        %v2732 = vshll.u32 %v2659, 16
        %v2734 = vrot.slane %v2732, 1
        %v2735 = vsel %vm934, %v2730, %v2734
        %v2736 = vshrl.u32 %v2659, 16
        %v2738 = vor.u32 %v2736, %v2734
        %v2740 = vshll.u32 %v2660, 16
        %v2742 = vrot.slane %v2740, 1
        %v2743 = vsel %vm934, %v2738, %v2742
        %v2744 = vshrl.u32 %v2660, 16
        %v2746 = vor.u32 %v2744, %v2742
        %v2748 = vshll.u32 %v2661, 16
        %v2750 = vrot.slane %v2748, 1
        %v2751 = vsel %vm934, %v2746, %v2750
        %v2752 = vshrl.u32 %v2661, 16
        %v2754 = vor.u32 %v2752, %v2750
        %v2756 = vshll.u32 %v2662, 16
        %v2758 = vrot.slane %v2756, 1
        %v2759 = vsel %vm934, %v2754, %v2758
        %v2760 = vshrl.u32 %v2662, 16
        %v2762 = vor.u32 %v2760, %v2758
        %v2764 = vshll.u32 %v2663, 16
        %v2766 = vrot.slane %v2764, 1
        %v2767 = vsel %vm934, %v2762, %v2766
        %v2768 = vshrl.u32 %v2663, 16
        %v2770 = vor.u32 %v2768, %v2766
        %v2772 = vshll.u32 %v2664, 16
        %v2774 = vrot.slane %v2772, 1
        %v2775 = vsel %vm934, %v2770, %v2774
        %v2776 = vshrl.u32 %v2664, 16
        %v2778 = vor.u32 %v2776, %v2774
        %v2780 = vshll.u32 %v2665, 16
        %v2782 = vrot.slane %v2780, 1
        %v2783 = vsel %vm934, %v2778, %v2782
        %v2784 = vshrl.u32 %v2665, 16
        %v2786 = vor.u32 %v2784, %v2782
        %v2788 = vshll.u32 %v2666, 16
        %v2790 = vrot.slane %v2788, 1
        %v2791 = vsel %vm934, %v2786, %v2790
        %v2792 = vshrl.u32 %v2666, 16
        %v2794 = vor.u32 %v2792, %v2790
        %v2796 = vshll.u32 %v2667, 16
        %v2798 = vrot.slane %v2796, 1
        %v2799 = vsel %vm934, %v2794, %v2798
        %v2801 = vsel %vm506, %v2679, 0
        %v2804 = vsel %vm506, %v2687, 0
        %v2807 = vsel %vm506, %v2695, 0
        %v2810 = vsel %vm506, %v2703, 0
        %v2813 = vsel %vm506, %v2711, 0
        %v2816 = vsel %vm506, %v2719, 0
        %v2819 = vsel %vm506, %v2727, 0
        %v2822 = vsel %vm506, %v2735, 0
        %v2825 = vsel %vm506, %v2743, 0
        %v2828 = vsel %vm506, %v2751, 0
        %v2831 = vsel %vm506, %v2759, 0
        %v2834 = vsel %vm506, %v2767, 0
        %v2837 = vsel %vm506, %v2775, 0
        %v2840 = vsel %vm506, %v2783, 0
        %v2843 = vsel %vm506, %v2791, 0
        %v2846 = vsel %vm506, %v2799, 0
        %v2849 = vsel %vm555, %v2584, 0
        %2851 = vmatprep.subr.bf16.mxu0 0
        %2852 = vmatpush1.bf16.msra.mxu0 %v2849
        %2853 = vmatprep.subr.bf16.mxu0 0
        %2854 = vmatpush1.bf16.msra.mxu0 0
        %2855 = vmatprep.subr.bf16.mxu0 0
        %2856 = vmatpush1.bf16.msra.mxu0 0
        %2857 = vmatprep.subr.bf16.mxu0 0
        %2858 = vmatpush1.bf16.msra.mxu0 0
        %2859 = vmatprep.subr.bf16.mxu0 0
        %2860 = vmatpush1.bf16.msra.mxu0 0
        %2861 = vmatprep.subr.bf16.mxu0 0
        %2862 = vmatpush1.bf16.msra.mxu0 0
        %2863 = vmatprep.subr.bf16.mxu0 0
        %2864 = vmatpush1.bf16.msra.mxu0 0
        %2865 = vmatprep.subr.bf16.mxu0 0
        %2866 = vmatpush1.bf16.msra.mxu0 0
        %2867 = vmatprep.subr.bf16.mxu0 0
        %2868 = vmatpush1.bf16.msra.mxu0 0
        %2869 = vmatprep.subr.bf16.mxu0 0
        %2870 = vmatpush1.bf16.msra.mxu0 0
        %2871 = vmatprep.subr.bf16.mxu0 0
        %2872 = vmatpush1.bf16.msra.mxu0 0
        %2873 = vmatprep.subr.bf16.mxu0 0
        %2874 = vmatpush1.bf16.msra.mxu0 0
        %2875 = vmatprep.subr.bf16.mxu0 0
        %2876 = vmatpush1.bf16.msra.mxu0 0
        %2877 = vmatprep.subr.bf16.mxu0 0
        %2878 = vmatpush1.bf16.msra.mxu0 0
        %2879 = vmatprep.subr.bf16.mxu0 0
        %2880 = vmatpush1.bf16.msra.mxu0 0
        %2881 = vmatprep.subr.bf16.mxu0 0
        %2882 = vmatpush1.bf16.msra.mxu0 0
        %2883 = vmatprep.mubr.bf16.mxu0 0
        %2884 = vmatmul.mubr.bf16.gmra.mrb[0].mxu0 %v2801
        %v2885 = vpop.f32.mrb[0].mxu0
        %v2886 = vadd.f32 0.0, %v2885
        %v2887 = vpop.f32.mrb[0].mxu0
        %v2888 = vpop.f32.mrb[0].mxu0
        %v2889 = vadd.f32 0.0, %v2888
        %v2890 = vpop.f32.mrb[0].mxu0
        %2891 = vmatprep.mubr.bf16.mxu0 0
        %2892 = vmatmul.mubr.bf16.gmra.mrb[0].mxu0 %v2804
        %v2893 = vpop.f32.mrb[0].mxu0
        %v2894 = vadd.f32 0.0, %v2893
        %v2895 = vpop.f32.mrb[0].mxu0
        %v2896 = vpop.f32.mrb[0].mxu0
        %v2897 = vadd.f32 0.0, %v2896
        %v2898 = vpop.f32.mrb[0].mxu0
        %2899 = vmatprep.mubr.bf16.mxu0 0
        %2900 = vmatmul.mubr.bf16.gmra.mrb[0].mxu0 %v2807
        %v2901 = vpop.f32.mrb[0].mxu0
        %v2902 = vadd.f32 0.0, %v2901
        %v2903 = vpop.f32.mrb[0].mxu0
        %v2904 = vpop.f32.mrb[0].mxu0
        %v2905 = vadd.f32 0.0, %v2904
        %v2906 = vpop.f32.mrb[0].mxu0
        %2907 = vmatprep.mubr.bf16.mxu0 0
        %2908 = vmatmul.mubr.bf16.gmra.mrb[0].mxu0 %v2810
        %v2909 = vpop.f32.mrb[0].mxu0
        %v2910 = vadd.f32 0.0, %v2909
        %v2911 = vpop.f32.mrb[0].mxu0
        %v2912 = vpop.f32.mrb[0].mxu0
        %v2913 = vadd.f32 0.0, %v2912
        %v2914 = vpop.f32.mrb[0].mxu0
        %2915 = vmatprep.mubr.bf16.mxu0 0
        %2916 = vmatmul.mubr.bf16.gmra.mrb[0].mxu0 %v2813
        %v2917 = vpop.f32.mrb[0].mxu0
        %v2918 = vadd.f32 0.0, %v2917
        %v2919 = vpop.f32.mrb[0].mxu0
        %v2920 = vpop.f32.mrb[0].mxu0
        %v2921 = vadd.f32 0.0, %v2920
        %v2922 = vpop.f32.mrb[0].mxu0
        %2923 = vmatprep.mubr.bf16.mxu0 0
        %2924 = vmatmul.mubr.bf16.gmra.mrb[0].mxu0 %v2816
        %v2925 = vpop.f32.mrb[0].mxu0
        %v2926 = vadd.f32 0.0, %v2925
        %v2927 = vpop.f32.mrb[0].mxu0
        %v2928 = vpop.f32.mrb[0].mxu0
        %v2929 = vadd.f32 0.0, %v2928
        %v2930 = vpop.f32.mrb[0].mxu0
        %2931 = vmatprep.mubr.bf16.mxu0 0
        %2932 = vmatmul.mubr.bf16.gmra.mrb[0].mxu0 %v2819
        %v2933 = vpop.f32.mrb[0].mxu0
        %v2934 = vadd.f32 0.0, %v2933
        %v2935 = vpop.f32.mrb[0].mxu0
        %v2936 = vpop.f32.mrb[0].mxu0
        %v2937 = vadd.f32 0.0, %v2936
        %v2938 = vpop.f32.mrb[0].mxu0
        %2939 = vmatprep.mubr.bf16.mxu0 0
        %2940 = vmatmul.mubr.bf16.gmra.mrb[0].mxu0 %v2822
        %v2941 = vpop.f32.mrb[0].mxu0
        %v2942 = vadd.f32 0.0, %v2941
        %v2943 = vpop.f32.mrb[0].mxu0
        %v2944 = vpop.f32.mrb[0].mxu0
        %v2945 = vadd.f32 0.0, %v2944
        %v2946 = vpop.f32.mrb[0].mxu0
        %2947 = vmatprep.mubr.bf16.mxu0 0
        %2948 = vmatmul.mubr.bf16.gmra.mrb[0].mxu0 %v2825
        %v2949 = vpop.f32.mrb[0].mxu0
        %v2950 = vadd.f32 0.0, %v2949
        %v2951 = vpop.f32.mrb[0].mxu0
        %v2952 = vpop.f32.mrb[0].mxu0
        %v2953 = vadd.f32 0.0, %v2952
        %v2954 = vpop.f32.mrb[0].mxu0
        %2955 = vmatprep.mubr.bf16.mxu0 0
        %2956 = vmatmul.mubr.bf16.gmra.mrb[0].mxu0 %v2828
        %v2957 = vpop.f32.mrb[0].mxu0
        %v2958 = vadd.f32 0.0, %v2957
        %v2959 = vpop.f32.mrb[0].mxu0
        %v2960 = vpop.f32.mrb[0].mxu0
        %v2961 = vadd.f32 0.0, %v2960
        %v2962 = vpop.f32.mrb[0].mxu0
        %2963 = vmatprep.mubr.bf16.mxu0 0
        %2964 = vmatmul.mubr.bf16.gmra.mrb[0].mxu0 %v2831
        %v2965 = vpop.f32.mrb[0].mxu0
        %v2966 = vadd.f32 0.0, %v2965
        %v2967 = vpop.f32.mrb[0].mxu0
        %v2968 = vpop.f32.mrb[0].mxu0
        %v2969 = vadd.f32 0.0, %v2968
        %v2970 = vpop.f32.mrb[0].mxu0
        %2971 = vmatprep.mubr.bf16.mxu0 0
        %2972 = vmatmul.mubr.bf16.gmra.mrb[0].mxu0 %v2834
        %v2973 = vpop.f32.mrb[0].mxu0
        %v2974 = vadd.f32 0.0, %v2973
        %v2975 = vpop.f32.mrb[0].mxu0
        %v2976 = vpop.f32.mrb[0].mxu0
        %v2977 = vadd.f32 0.0, %v2976
        %v2978 = vpop.f32.mrb[0].mxu0
        %2979 = vmatprep.mubr.bf16.mxu0 0
        %2980 = vmatmul.mubr.bf16.gmra.mrb[0].mxu0 %v2837
        %v2981 = vpop.f32.mrb[0].mxu0
        %v2982 = vadd.f32 0.0, %v2981
        %v2983 = vpop.f32.mrb[0].mxu0
        %v2984 = vpop.f32.mrb[0].mxu0
        %v2985 = vadd.f32 0.0, %v2984
        %v2986 = vpop.f32.mrb[0].mxu0
        %2987 = vmatprep.mubr.bf16.mxu0 0
        %2988 = vmatmul.mubr.bf16.gmra.mrb[0].mxu0 %v2840
        %v2989 = vpop.f32.mrb[0].mxu0
        %v2990 = vadd.f32 0.0, %v2989
        %v2991 = vpop.f32.mrb[0].mxu0
        %v2992 = vpop.f32.mrb[0].mxu0
        %v2993 = vadd.f32 0.0, %v2992
        %v2994 = vpop.f32.mrb[0].mxu0
        %2995 = vmatprep.mubr.bf16.mxu0 0
        %2996 = vmatmul.mubr.bf16.gmra.mrb[0].mxu0 %v2843
        %v2997 = vpop.f32.mrb[0].mxu0
        %v2998 = vadd.f32 0.0, %v2997
        %v2999 = vpop.f32.mrb[0].mxu0
        %v3000 = vpop.f32.mrb[0].mxu0
        %v3001 = vadd.f32 0.0, %v3000
        %v3002 = vpop.f32.mrb[0].mxu0
        %3003 = vmatprep.mubr.bf16.mxu0 0
        %3004 = vmatmul.mubr.bf16.gmra.mrb[0].mxu0 %v2846
        %v3005 = vpop.f32.mrb[0].mxu0
        %v3006 = vadd.f32 0.0, %v3005
        %v3007 = vpop.f32.mrb[0].mxu0
        %v3008 = vpop.f32.mrb[0].mxu0
        %v3009 = vadd.f32 0.0, %v3008
        %v3010 = vpop.f32.mrb[0].mxu0
        %3011 = vdwg.mxu0
        %v3012 = vadd.f32 %v2551, %v2886
        %v3013 = vadd.f32 %v2552, %v2889
        %v3014 = vadd.f32 %v2553, %v2894
        %v3015 = vadd.f32 %v2554, %v2897
        %v3016 = vadd.f32 %v2555, %v2902
        %v3017 = vadd.f32 %v2556, %v2905
        %v3018 = vadd.f32 %v2557, %v2910
        %v3019 = vadd.f32 %v2558, %v2913
        %v3020 = vadd.f32 %v2559, %v2918
        %v3021 = vadd.f32 %v2560, %v2921
        %v3022 = vadd.f32 %v2561, %v2926
        %v3023 = vadd.f32 %v2562, %v2929
        %v3024 = vadd.f32 %v2563, %v2934
        %v3025 = vadd.f32 %v2564, %v2937
        %v3026 = vadd.f32 %v2565, %v2942
        %v3027 = vadd.f32 %v2566, %v2945
        %v3028 = vadd.f32 %v2567, %v2950
        %v3029 = vadd.f32 %v2568, %v2953
        %v3030 = vadd.f32 %v2569, %v2958
        %v3031 = vadd.f32 %v2570, %v2961
        %v3032 = vadd.f32 %v2571, %v2966
        %v3033 = vadd.f32 %v2572, %v2969
        %v3034 = vadd.f32 %v2573, %v2974
        %v3035 = vadd.f32 %v2574, %v2977
        %v3036 = vadd.f32 %v2575, %v2982
        %v3037 = vadd.f32 %v2576, %v2985
        %v3038 = vadd.f32 %v2577, %v2990
        %v3039 = vadd.f32 %v2578, %v2993
        %v3040 = vadd.f32 %v2579, %v2998
        %v3041 = vadd.f32 %v2580, %v3001
        %v3042 = vadd.f32 %v2581, %v3006
        %v3043 = vadd.f32 %v2582, %v3009
        %3044 = vst [vmem:[#allocation2] sm:$0xff] %v3012
        %3045 = vst [vmem:[#allocation2 + $0x8] sm:$0xff] %v3013
        %3046 = vst [vmem:[#allocation2 + $0x10] sm:$0xff] %v3014
        %3047 = vst [vmem:[#allocation2 + $0x18] sm:$0xff] %v3015
        %3048 = vst [vmem:[#allocation2 + $0x20] sm:$0xff] %v3016
        %3049 = vst [vmem:[#allocation2 + $0x28] sm:$0xff] %v3017
        %3050 = vst [vmem:[#allocation2 + $0x30] sm:$0xff] %v3018
        %3051 = vst [vmem:[#allocation2 + $0x38] sm:$0xff] %v3019
        %3052 = vst [vmem:[#allocation2 + $0x40] sm:$0xff] %v3020
        %3053 = vst [vmem:[#allocation2 + $0x48] sm:$0xff] %v3021
        %3054 = vst [vmem:[#allocation2 + $0x50] sm:$0xff] %v3022
        %3055 = vst [vmem:[#allocation2 + $0x58] sm:$0xff] %v3023
        %3056 = vst [vmem:[#allocation2 + $0x60] sm:$0xff] %v3024
        %3057 = vst [vmem:[#allocation2 + $0x68] sm:$0xff] %v3025
        %3058 = vst [vmem:[#allocation2 + $0x70] sm:$0xff] %v3026
        %3059 = vst [vmem:[#allocation2 + $0x78] sm:$0xff] %v3027
        %3060 = vst [vmem:[#allocation2 + $0x80] sm:$0xff] %v3028
        %3061 = vst [vmem:[#allocation2 + $0x88] sm:$0xff] %v3029
        %3062 = vst [vmem:[#allocation2 + $0x90] sm:$0xff] %v3030
        %3063 = vst [vmem:[#allocation2 + $0x98] sm:$0xff] %v3031
        %3064 = vst [vmem:[#allocation2 + $0xa0] sm:$0xff] %v3032
        %3065 = vst [vmem:[#allocation2 + $0xa8] sm:$0xff] %v3033
        %3066 = vst [vmem:[#allocation2 + $0xb0] sm:$0xff] %v3034
        %3067 = vst [vmem:[#allocation2 + $0xb8] sm:$0xff] %v3035
        %3068 = vst [vmem:[#allocation2 + $0xc0] sm:$0xff] %v3036
        %3069 = vst [vmem:[#allocation2 + $0xc8] sm:$0xff] %v3037
        %3070 = vst [vmem:[#allocation2 + $0xd0] sm:$0xff] %v3038
        %3071 = vst [vmem:[#allocation2 + $0xd8] sm:$0xff] %v3039
        %3072 = vst [vmem:[#allocation2 + $0xe0] sm:$0xff] %v3040
        %3073 = vst [vmem:[#allocation2 + $0xe8] sm:$0xff] %v3041
        %3074 = vst [vmem:[#allocation2 + $0xf0] sm:$0xff] %v3042
        %3075 = vst [vmem:[#allocation2 + $0xf8] sm:$0xff] %v3043
        %v3076 = vld [vmem:[%s263 + $0x8] sm:$0xe]
        %v3077 = vld [vmem:[%s263 + $0xc] sm:$0xf]
        %v3078 = vld [vmem:[%s263 + $0x10] sm:$0xf]
        %v3079 = vld [vmem:[%s263 + $0x14] sm:$0xf]
        %v3080 = vld [vmem:[%s263 + $0x18] sm:$0xf]
        %v3081 = vld [vmem:[%s263 + $0x1c] sm:$0xf]
        %v3082 = vld [vmem:[%s263 + $0x20] sm:$0xf]
        %v3083 = vld [vmem:[%s263 + $0x24] sm:$0xf]
        %v3084 = vld [vmem:[%s263 + $0x28] sm:$0xf]
        %v3085 = vld [vmem:[%s263 + $0x2c] sm:$0xf]
        %v3086 = vld [vmem:[%s263 + $0x30] sm:$0xf]
        %v3087 = vld [vmem:[%s263 + $0x34] sm:$0xf]
        %v3088 = vld [vmem:[%s263 + $0x38] sm:$0xf]
        %v3089 = vld [vmem:[%s263 + $0x3c] sm:$0xf]
        %v3090 = vld [vmem:[%s263 + $0x40] sm:$0xf]
        %v3091 = vld [vmem:[%s263 + $0x44] sm:$0xf]
        %v3092 = vld [vmem:[%s263 + $0x48] sm:$0xf]
        %v3093 = vld [vmem:[%s263 + $0x4c] sm:$0xf]
        %v3094 = vld [vmem:[%s263 + $0x50] sm:$0xf]
        %v3095 = vld [vmem:[%s263 + $0x54] sm:$0xf]
        %v3096 = vld [vmem:[%s263 + $0x58] sm:$0xf]
        %v3097 = vld [vmem:[%s263 + $0x5c] sm:$0xf]
        %v3098 = vld [vmem:[%s263 + $0x60] sm:$0xf]
        %v3099 = vld [vmem:[%s263 + $0x64] sm:$0xf]
        %v3100 = vld [vmem:[%s263 + $0x68] sm:$0xf]
        %v3101 = vld [vmem:[%s263 + $0x6c] sm:$0xf]
        %v3102 = vld [vmem:[%s263 + $0x70] sm:$0xf]
        %v3103 = vld [vmem:[%s263 + $0x74] sm:$0xf]
        %v3104 = vld [vmem:[%s263 + $0x78] sm:$0xf]
        %v3105 = vld [vmem:[%s263 + $0x7c] sm:$0xf]
        %v3106 = vld [vmem:[%s263 + $0x80] sm:$0xf]
        %v3107 = vld [vmem:[%s263 + $0x84] sm:$0xf]
        %v3108 = vld [vmem:[%s263 + $0x88] sm:$0x1]
        %v3109 = vld [vmem:[%s1376] sm:$0xf]
        %v3110 = vld [vmem:[%s1376 + $0x4] sm:$0xf]
        %v3111 = vld [vmem:[%s1376 + $0x8] sm:$0xf]
        %v3112 = vld [vmem:[%s1376 + $0xc] sm:$0xf]
        %v3113 = vld [vmem:[%s1376 + $0x10] sm:$0xf]
        %v3114 = vld [vmem:[%s1376 + $0x14] sm:$0xf]
        %v3115 = vld [vmem:[%s1376 + $0x18] sm:$0xf]
        %v3116 = vld [vmem:[%s1376 + $0x1c] sm:$0xf]
        %v3117 = vld [vmem:[%s1376 + $0x20] sm:$0xf]
        %v3118 = vld [vmem:[%s1376 + $0x24] sm:$0xf]
        %v3119 = vld [vmem:[%s1376 + $0x28] sm:$0xf]
        %v3120 = vld [vmem:[%s1376 + $0x2c] sm:$0xf]
        %v3121 = vld [vmem:[%s1376 + $0x30] sm:$0xf]
        %v3122 = vld [vmem:[%s1376 + $0x34] sm:$0xf]
        %v3123 = vld [vmem:[%s1376 + $0x38] sm:$0xf]
        %v3124 = vld [vmem:[%s1376 + $0x3c] sm:$0xf]
        %v3125 = vld [vmem:[%s1376 + $0x40] sm:$0xf]
        %v3126 = vld [vmem:[%s1376 + $0x44] sm:$0xf]
        %v3127 = vld [vmem:[%s1376 + $0x48] sm:$0xf]
        %v3128 = vld [vmem:[%s1376 + $0x4c] sm:$0xf]
        %v3129 = vld [vmem:[%s1376 + $0x50] sm:$0xf]
        %v3130 = vld [vmem:[%s1376 + $0x54] sm:$0xf]
        %v3131 = vld [vmem:[%s1376 + $0x58] sm:$0xf]
        %v3132 = vld [vmem:[%s1376 + $0x5c] sm:$0xf]
        %v3133 = vld [vmem:[%s1376 + $0x60] sm:$0xf]
        %v3134 = vld [vmem:[%s1376 + $0x64] sm:$0xf]
        %v3135 = vld [vmem:[%s1376 + $0x68] sm:$0xf]
        %v3136 = vld [vmem:[%s1376 + $0x6c] sm:$0xf]
        %v3137 = vld [vmem:[%s1376 + $0x70] sm:$0xf]
        %v3138 = vld [vmem:[%s1376 + $0x74] sm:$0xf]
        %v3139 = vld [vmem:[%s1376 + $0x78] sm:$0xf]
        %v3140 = vld [vmem:[%s1376 + $0x7c] sm:$0xf]
        %v3173 = vrot.slane %v3109, 7
        %v3174 = vrot.slane %v3173, 4
        %v3175 = vrot.slane %v3110, 7
        %v3176 = vsel %vm1443, %v3174, %v3175
        %v3177 = vrot.slane %v3175, 4
        %v3178 = vrot.slane %v3111, 7
        %v3179 = vsel %vm1443, %v3177, %v3178
        %v3180 = vrot.slane %v3178, 4
        %v3181 = vrot.slane %v3112, 7
        %v3182 = vsel %vm1443, %v3180, %v3181
        %v3183 = vrot.slane %v3181, 4
        %v3184 = vrot.slane %v3113, 7
        %v3185 = vsel %vm1443, %v3183, %v3184
        %v3186 = vrot.slane %v3184, 4
        %v3187 = vrot.slane %v3114, 7
        %v3188 = vsel %vm1443, %v3186, %v3187
        %v3189 = vrot.slane %v3187, 4
        %v3190 = vrot.slane %v3115, 7
        %v3191 = vsel %vm1443, %v3189, %v3190
        %v3192 = vrot.slane %v3190, 4
        %v3193 = vrot.slane %v3116, 7
        %v3194 = vsel %vm1443, %v3192, %v3193
        %v3195 = vrot.slane %v3193, 4
        %v3196 = vrot.slane %v3117, 7
        %v3197 = vsel %vm1443, %v3195, %v3196
        %v3198 = vrot.slane %v3196, 4
        %v3199 = vrot.slane %v3118, 7
        %v3200 = vsel %vm1443, %v3198, %v3199
        %v3201 = vrot.slane %v3199, 4
        %v3202 = vrot.slane %v3119, 7
        %v3203 = vsel %vm1443, %v3201, %v3202
        %v3204 = vrot.slane %v3202, 4
        %v3205 = vrot.slane %v3120, 7
        %v3206 = vsel %vm1443, %v3204, %v3205
        %v3207 = vrot.slane %v3205, 4
        %v3208 = vrot.slane %v3121, 7
        %v3209 = vsel %vm1443, %v3207, %v3208
        %v3210 = vrot.slane %v3208, 4
        %v3211 = vrot.slane %v3122, 7
        %v3212 = vsel %vm1443, %v3210, %v3211
        %v3213 = vrot.slane %v3211, 4
        %v3214 = vrot.slane %v3123, 7
        %v3215 = vsel %vm1443, %v3213, %v3214
        %v3216 = vrot.slane %v3214, 4
        %v3217 = vrot.slane %v3124, 7
        %v3218 = vsel %vm1443, %v3216, %v3217
        %v3219 = vrot.slane %v3217, 4
        %v3220 = vrot.slane %v3125, 7
        %v3221 = vsel %vm1443, %v3219, %v3220
        %v3222 = vrot.slane %v3220, 4
        %v3223 = vrot.slane %v3126, 7
        %v3224 = vsel %vm1443, %v3222, %v3223
        %v3225 = vrot.slane %v3223, 4
        %v3226 = vrot.slane %v3127, 7
        %v3227 = vsel %vm1443, %v3225, %v3226
        %v3228 = vrot.slane %v3226, 4
        %v3229 = vrot.slane %v3128, 7
        %v3230 = vsel %vm1443, %v3228, %v3229
        %v3231 = vrot.slane %v3229, 4
        %v3232 = vrot.slane %v3129, 7
        %v3233 = vsel %vm1443, %v3231, %v3232
        %v3234 = vrot.slane %v3232, 4
        %v3235 = vrot.slane %v3130, 7
        %v3236 = vsel %vm1443, %v3234, %v3235
        %v3237 = vrot.slane %v3235, 4
        %v3238 = vrot.slane %v3131, 7
        %v3239 = vsel %vm1443, %v3237, %v3238
        %v3240 = vrot.slane %v3238, 4
        %v3241 = vrot.slane %v3132, 7
        %v3242 = vsel %vm1443, %v3240, %v3241
        %v3243 = vrot.slane %v3241, 4
        %v3244 = vrot.slane %v3133, 7
        %v3245 = vsel %vm1443, %v3243, %v3244
        %v3246 = vrot.slane %v3244, 4
        %v3247 = vrot.slane %v3134, 7
        %v3248 = vsel %vm1443, %v3246, %v3247
        %v3249 = vrot.slane %v3247, 4
        %v3250 = vrot.slane %v3135, 7
        %v3251 = vsel %vm1443, %v3249, %v3250
        %v3252 = vrot.slane %v3250, 4
        %v3253 = vrot.slane %v3136, 7
        %v3254 = vsel %vm1443, %v3252, %v3253
        %v3255 = vrot.slane %v3253, 4
        %v3256 = vrot.slane %v3137, 7
        %v3257 = vsel %vm1443, %v3255, %v3256
        %v3258 = vrot.slane %v3256, 4
        %v3259 = vrot.slane %v3138, 7
        %v3260 = vsel %vm1443, %v3258, %v3259
        %v3261 = vrot.slane %v3259, 4
        %v3262 = vrot.slane %v3139, 7
        %v3263 = vsel %vm1443, %v3261, %v3262
        %v3264 = vrot.slane %v3262, 4
        %v3265 = vrot.slane %v3140, 7
        %v3266 = vsel %vm1443, %v3264, %v3265
        %v3267 = vrot.slane %v3265, 4
        %v3301 = vmul.bf16 %v3076, %v3173
        %v3302 = vmul.bf16 %v3077, %v3176
        %v3303 = vmul.bf16 %v3078, %v3179
        %v3304 = vmul.bf16 %v3079, %v3182
        %v3305 = vmul.bf16 %v3080, %v3185
        %v3306 = vmul.bf16 %v3081, %v3188
        %v3307 = vmul.bf16 %v3082, %v3191
        %v3308 = vmul.bf16 %v3083, %v3194
        %v3309 = vmul.bf16 %v3084, %v3197
        %v3310 = vmul.bf16 %v3085, %v3200
        %v3311 = vmul.bf16 %v3086, %v3203
        %v3312 = vmul.bf16 %v3087, %v3206
        %v3313 = vmul.bf16 %v3088, %v3209
        %v3314 = vmul.bf16 %v3089, %v3212
        %v3315 = vmul.bf16 %v3090, %v3215
        %v3316 = vmul.bf16 %v3091, %v3218
        %v3317 = vmul.bf16 %v3092, %v3221
        %v3318 = vmul.bf16 %v3093, %v3224
        %v3319 = vmul.bf16 %v3094, %v3227
        %v3320 = vmul.bf16 %v3095, %v3230
        %v3321 = vmul.bf16 %v3096, %v3233
        %v3322 = vmul.bf16 %v3097, %v3236
        %v3323 = vmul.bf16 %v3098, %v3239
        %v3324 = vmul.bf16 %v3099, %v3242
        %v3325 = vmul.bf16 %v3100, %v3245
        %v3326 = vmul.bf16 %v3101, %v3248
        %v3327 = vmul.bf16 %v3102, %v3251
        %v3328 = vmul.bf16 %v3103, %v3254
        %v3329 = vmul.bf16 %v3104, %v3257
        %v3330 = vmul.bf16 %v3105, %v3260
        %v3331 = vmul.bf16 %v3106, %v3263
        %v3332 = vmul.bf16 %v3107, %v3266
        %v3333 = vmul.bf16 %v3108, %v3267
        %v3334 = vld [vmem:[#allocation2] sm:$0xff]
        %v3335 = vld [vmem:[#allocation2 + $0x8] sm:$0xff]
        %v3336 = vld [vmem:[#allocation2 + $0x10] sm:$0xff]
        %v3337 = vld [vmem:[#allocation2 + $0x18] sm:$0xff]
        %v3338 = vld [vmem:[#allocation2 + $0x20] sm:$0xff]
        %v3339 = vld [vmem:[#allocation2 + $0x28] sm:$0xff]
        %v3340 = vld [vmem:[#allocation2 + $0x30] sm:$0xff]
        %v3341 = vld [vmem:[#allocation2 + $0x38] sm:$0xff]
        %v3342 = vld [vmem:[#allocation2 + $0x40] sm:$0xff]
        %v3343 = vld [vmem:[#allocation2 + $0x48] sm:$0xff]
        %v3344 = vld [vmem:[#allocation2 + $0x50] sm:$0xff]
        %v3345 = vld [vmem:[#allocation2 + $0x58] sm:$0xff]
        %v3346 = vld [vmem:[#allocation2 + $0x60] sm:$0xff]
        %v3347 = vld [vmem:[#allocation2 + $0x68] sm:$0xff]
        %v3348 = vld [vmem:[#allocation2 + $0x70] sm:$0xff]
        %v3349 = vld [vmem:[#allocation2 + $0x78] sm:$0xff]
        %v3350 = vld [vmem:[#allocation2 + $0x80] sm:$0xff]
        %v3351 = vld [vmem:[#allocation2 + $0x88] sm:$0xff]
        %v3352 = vld [vmem:[#allocation2 + $0x90] sm:$0xff]
        %v3353 = vld [vmem:[#allocation2 + $0x98] sm:$0xff]
        %v3354 = vld [vmem:[#allocation2 + $0xa0] sm:$0xff]
        %v3355 = vld [vmem:[#allocation2 + $0xa8] sm:$0xff]
        %v3356 = vld [vmem:[#allocation2 + $0xb0] sm:$0xff]
        %v3357 = vld [vmem:[#allocation2 + $0xb8] sm:$0xff]
        %v3358 = vld [vmem:[#allocation2 + $0xc0] sm:$0xff]
        %v3359 = vld [vmem:[#allocation2 + $0xc8] sm:$0xff]
        %v3360 = vld [vmem:[#allocation2 + $0xd0] sm:$0xff]
        %v3361 = vld [vmem:[#allocation2 + $0xd8] sm:$0xff]
        %v3362 = vld [vmem:[#allocation2 + $0xe0] sm:$0xff]
        %v3363 = vld [vmem:[#allocation2 + $0xe8] sm:$0xff]
        %v3364 = vld [vmem:[#allocation2 + $0xf0] sm:$0xff]
        %v3365 = vld [vmem:[#allocation2 + $0xf8] sm:$0xff]
        %s3366 = scalar_lea.vmem %s2, 10
        %v3367 = vld [vmem:[%s3366] sm:$0x3]
        %v3401 = vunpack.c.l.b16 %v3301
        %v3402 = vunpack.c.l.b16 %v3302
        %v3403 = vunpack.c.l.b16 %v3303
        %v3404 = vunpack.c.l.b16 %v3304
        %v3405 = vunpack.c.l.b16 %v3305
        %v3406 = vunpack.c.l.b16 %v3306
        %v3407 = vunpack.c.l.b16 %v3307
        %v3408 = vunpack.c.l.b16 %v3308
        %v3409 = vunpack.c.l.b16 %v3309
        %v3410 = vunpack.c.l.b16 %v3310
        %v3411 = vunpack.c.l.b16 %v3311
        %v3412 = vunpack.c.l.b16 %v3312
        %v3413 = vunpack.c.l.b16 %v3313
        %v3414 = vunpack.c.l.b16 %v3314
        %v3415 = vunpack.c.l.b16 %v3315
        %v3416 = vunpack.c.l.b16 %v3316
        %v3417 = vunpack.c.l.b16 %v3317
        %v3418 = vunpack.c.l.b16 %v3318
        %v3419 = vunpack.c.l.b16 %v3319
        %v3420 = vunpack.c.l.b16 %v3320
        %v3421 = vunpack.c.l.b16 %v3321
        %v3422 = vunpack.c.l.b16 %v3322
        %v3423 = vunpack.c.l.b16 %v3323
        %v3424 = vunpack.c.l.b16 %v3324
        %v3425 = vunpack.c.l.b16 %v3325
        %v3426 = vunpack.c.l.b16 %v3326
        %v3427 = vunpack.c.l.b16 %v3327
        %v3428 = vunpack.c.l.b16 %v3328
        %v3429 = vunpack.c.l.b16 %v3329
        %v3430 = vunpack.c.l.b16 %v3330
        %v3431 = vunpack.c.l.b16 %v3331
        %v3432 = vunpack.c.l.b16 %v3332
        %v3433 = vunpack.c.l.b16 %v3333
        %v3434 = vpack.c.b16 %v3402, %v3401
        %v3435 = vpack.c.b16 %v3404, %v3403
        %v3436 = vpack.c.b16 %v3406, %v3405
        %v3437 = vpack.c.b16 %v3408, %v3407
        %v3438 = vpack.c.b16 %v3410, %v3409
        %v3439 = vpack.c.b16 %v3412, %v3411
        %v3440 = vpack.c.b16 %v3414, %v3413
        %v3441 = vpack.c.b16 %v3416, %v3415
        %v3442 = vpack.c.b16 %v3418, %v3417
        %v3443 = vpack.c.b16 %v3420, %v3419
        %v3444 = vpack.c.b16 %v3422, %v3421
        %v3445 = vpack.c.b16 %v3424, %v3423
        %v3446 = vpack.c.b16 %v3426, %v3425
        %v3447 = vpack.c.b16 %v3428, %v3427
        %v3448 = vpack.c.b16 %v3430, %v3429
        %v3449 = vpack.c.b16 %v3432, %v3431
        %v3450 = vpack.c.b16 %v3433, %v3433
        %v3451 = vrot.slane %v3434, 1
        %v3452 = vrot.slane %v3435, 1
        %v3453 = vsel %vm1722, %v3451, %v3452
        %v3454 = vrot.slane %v3436, 1
        %v3455 = vsel %vm1722, %v3452, %v3454
        %v3456 = vrot.slane %v3437, 1
        %v3457 = vsel %vm1722, %v3454, %v3456
        %v3458 = vrot.slane %v3438, 1
        %v3459 = vsel %vm1722, %v3456, %v3458
        %v3460 = vrot.slane %v3439, 1
        %v3461 = vsel %vm1722, %v3458, %v3460
        %v3462 = vrot.slane %v3440, 1
        %v3463 = vsel %vm1722, %v3460, %v3462
        %v3464 = vrot.slane %v3441, 1
        %v3465 = vsel %vm1722, %v3462, %v3464
        %v3466 = vrot.slane %v3442, 1
        %v3467 = vsel %vm1722, %v3464, %v3466
        %v3468 = vrot.slane %v3443, 1
        %v3469 = vsel %vm1722, %v3466, %v3468
        %v3470 = vrot.slane %v3444, 1
        %v3471 = vsel %vm1722, %v3468, %v3470
        %v3472 = vrot.slane %v3445, 1
        %v3473 = vsel %vm1722, %v3470, %v3472
        %v3474 = vrot.slane %v3446, 1
        %v3475 = vsel %vm1722, %v3472, %v3474
        %v3476 = vrot.slane %v3447, 1
        %v3477 = vsel %vm1722, %v3474, %v3476
        %v3478 = vrot.slane %v3448, 1
        %v3479 = vsel %vm1722, %v3476, %v3478
        %v3480 = vrot.slane %v3449, 1
        %v3481 = vsel %vm1722, %v3478, %v3480
        %v3482 = vrot.slane %v3450, 1
        %v3483 = vsel %vm1722, %v3480, %v3482
        %v3485 = vsel %vm506, %v3453, 0
        %v3488 = vsel %vm506, %v3455, 0
        %v3491 = vsel %vm506, %v3457, 0
        %v3494 = vsel %vm506, %v3459, 0
        %v3497 = vsel %vm506, %v3461, 0
        %v3500 = vsel %vm506, %v3463, 0
        %v3503 = vsel %vm506, %v3465, 0
        %v3506 = vsel %vm506, %v3467, 0
        %v3509 = vsel %vm506, %v3469, 0
        %v3512 = vsel %vm506, %v3471, 0
        %v3515 = vsel %vm506, %v3473, 0
        %v3518 = vsel %vm506, %v3475, 0
        %v3521 = vsel %vm506, %v3477, 0
        %v3524 = vsel %vm506, %v3479, 0
        %v3527 = vsel %vm506, %v3481, 0
        %v3530 = vsel %vm506, %v3483, 0
        %v3533 = vsel %vm555, %v3367, 0
        %3535 = vmatprep.subr.bf16.mxu0 0
        %3536 = vmatpush1.bf16.msra.mxu0 %v3533
        %3537 = vmatprep.subr.bf16.mxu0 0
        %3538 = vmatpush1.bf16.msra.mxu0 0
        %3539 = vmatprep.subr.bf16.mxu0 0
        %3540 = vmatpush1.bf16.msra.mxu0 0
        %3541 = vmatprep.subr.bf16.mxu0 0
        %3542 = vmatpush1.bf16.msra.mxu0 0
        %3543 = vmatprep.subr.bf16.mxu0 0
        %3544 = vmatpush1.bf16.msra.mxu0 0
        %3545 = vmatprep.subr.bf16.mxu0 0
        %3546 = vmatpush1.bf16.msra.mxu0 0
        %3547 = vmatprep.subr.bf16.mxu0 0
        %3548 = vmatpush1.bf16.msra.mxu0 0
        %3549 = vmatprep.subr.bf16.mxu0 0
        %3550 = vmatpush1.bf16.msra.mxu0 0
        %3551 = vmatprep.subr.bf16.mxu0 0
        %3552 = vmatpush1.bf16.msra.mxu0 0
        %3553 = vmatprep.subr.bf16.mxu0 0
        %3554 = vmatpush1.bf16.msra.mxu0 0
        %3555 = vmatprep.subr.bf16.mxu0 0
        %3556 = vmatpush1.bf16.msra.mxu0 0
        %3557 = vmatprep.subr.bf16.mxu0 0
        %3558 = vmatpush1.bf16.msra.mxu0 0
        %3559 = vmatprep.subr.bf16.mxu0 0
        %3560 = vmatpush1.bf16.msra.mxu0 0
        %3561 = vmatprep.subr.bf16.mxu0 0
        %3562 = vmatpush1.bf16.msra.mxu0 0
        %3563 = vmatprep.subr.bf16.mxu0 0
        %3564 = vmatpush1.bf16.msra.mxu0 0
        %3565 = vmatprep.subr.bf16.mxu0 0
        %3566 = vmatpush1.bf16.msra.mxu0 0
        %3567 = vmatprep.mubr.bf16.mxu0 0
        %3568 = vmatmul.mubr.bf16.gmra.mrb[0].mxu0 %v3485
        %v3569 = vpop.f32.mrb[0].mxu0
        %v3570 = vadd.f32 0.0, %v3569
        %v3571 = vpop.f32.mrb[0].mxu0
        %v3572 = vpop.f32.mrb[0].mxu0
        %v3573 = vadd.f32 0.0, %v3572
        %v3574 = vpop.f32.mrb[0].mxu0
        %3575 = vmatprep.mubr.bf16.mxu0 0
        %3576 = vmatmul.mubr.bf16.gmra.mrb[0].mxu0 %v3488
        %v3577 = vpop.f32.mrb[0].mxu0
        %v3578 = vadd.f32 0.0, %v3577
        %v3579 = vpop.f32.mrb[0].mxu0
        %v3580 = vpop.f32.mrb[0].mxu0
        %v3581 = vadd.f32 0.0, %v3580
        %v3582 = vpop.f32.mrb[0].mxu0
        %3583 = vmatprep.mubr.bf16.mxu0 0
        %3584 = vmatmul.mubr.bf16.gmra.mrb[0].mxu0 %v3491
        %v3585 = vpop.f32.mrb[0].mxu0
        %v3586 = vadd.f32 0.0, %v3585
        %v3587 = vpop.f32.mrb[0].mxu0
        %v3588 = vpop.f32.mrb[0].mxu0
        %v3589 = vadd.f32 0.0, %v3588
        %v3590 = vpop.f32.mrb[0].mxu0
        %3591 = vmatprep.mubr.bf16.mxu0 0
        %3592 = vmatmul.mubr.bf16.gmra.mrb[0].mxu0 %v3494
        %v3593 = vpop.f32.mrb[0].mxu0
        %v3594 = vadd.f32 0.0, %v3593
        %v3595 = vpop.f32.mrb[0].mxu0
        %v3596 = vpop.f32.mrb[0].mxu0
        %v3597 = vadd.f32 0.0, %v3596
        %v3598 = vpop.f32.mrb[0].mxu0
        %3599 = vmatprep.mubr.bf16.mxu0 0
        %3600 = vmatmul.mubr.bf16.gmra.mrb[0].mxu0 %v3497
        %v3601 = vpop.f32.mrb[0].mxu0
        %v3602 = vadd.f32 0.0, %v3601
        %v3603 = vpop.f32.mrb[0].mxu0
        %v3604 = vpop.f32.mrb[0].mxu0
        %v3605 = vadd.f32 0.0, %v3604
        %v3606 = vpop.f32.mrb[0].mxu0
        %3607 = vmatprep.mubr.bf16.mxu0 0
        %3608 = vmatmul.mubr.bf16.gmra.mrb[0].mxu0 %v3500
        %v3609 = vpop.f32.mrb[0].mxu0
        %v3610 = vadd.f32 0.0, %v3609
        %v3611 = vpop.f32.mrb[0].mxu0
        %v3612 = vpop.f32.mrb[0].mxu0
        %v3613 = vadd.f32 0.0, %v3612
        %v3614 = vpop.f32.mrb[0].mxu0
        %3615 = vmatprep.mubr.bf16.mxu0 0
        %3616 = vmatmul.mubr.bf16.gmra.mrb[0].mxu0 %v3503
        %v3617 = vpop.f32.mrb[0].mxu0
        %v3618 = vadd.f32 0.0, %v3617
        %v3619 = vpop.f32.mrb[0].mxu0
        %v3620 = vpop.f32.mrb[0].mxu0
        %v3621 = vadd.f32 0.0, %v3620
        %v3622 = vpop.f32.mrb[0].mxu0
        %3623 = vmatprep.mubr.bf16.mxu0 0
        %3624 = vmatmul.mubr.bf16.gmra.mrb[0].mxu0 %v3506
        %v3625 = vpop.f32.mrb[0].mxu0
        %v3626 = vadd.f32 0.0, %v3625
        %v3627 = vpop.f32.mrb[0].mxu0
        %v3628 = vpop.f32.mrb[0].mxu0
        %v3629 = vadd.f32 0.0, %v3628
        %v3630 = vpop.f32.mrb[0].mxu0
        %3631 = vmatprep.mubr.bf16.mxu0 0
        %3632 = vmatmul.mubr.bf16.gmra.mrb[0].mxu0 %v3509
        %v3633 = vpop.f32.mrb[0].mxu0
        %v3634 = vadd.f32 0.0, %v3633
        %v3635 = vpop.f32.mrb[0].mxu0
        %v3636 = vpop.f32.mrb[0].mxu0
        %v3637 = vadd.f32 0.0, %v3636
        %v3638 = vpop.f32.mrb[0].mxu0
        %3639 = vmatprep.mubr.bf16.mxu0 0
        %3640 = vmatmul.mubr.bf16.gmra.mrb[0].mxu0 %v3512
        %v3641 = vpop.f32.mrb[0].mxu0
        %v3642 = vadd.f32 0.0, %v3641
        %v3643 = vpop.f32.mrb[0].mxu0
        %v3644 = vpop.f32.mrb[0].mxu0
        %v3645 = vadd.f32 0.0, %v3644
        %v3646 = vpop.f32.mrb[0].mxu0
        %3647 = vmatprep.mubr.bf16.mxu0 0
        %3648 = vmatmul.mubr.bf16.gmra.mrb[0].mxu0 %v3515
        %v3649 = vpop.f32.mrb[0].mxu0
        %v3650 = vadd.f32 0.0, %v3649
        %v3651 = vpop.f32.mrb[0].mxu0
        %v3652 = vpop.f32.mrb[0].mxu0
        %v3653 = vadd.f32 0.0, %v3652
        %v3654 = vpop.f32.mrb[0].mxu0
        %3655 = vmatprep.mubr.bf16.mxu0 0
        %3656 = vmatmul.mubr.bf16.gmra.mrb[0].mxu0 %v3518
        %v3657 = vpop.f32.mrb[0].mxu0
        %v3658 = vadd.f32 0.0, %v3657
        %v3659 = vpop.f32.mrb[0].mxu0
        %v3660 = vpop.f32.mrb[0].mxu0
        %v3661 = vadd.f32 0.0, %v3660
        %v3662 = vpop.f32.mrb[0].mxu0
        %3663 = vmatprep.mubr.bf16.mxu0 0
        %3664 = vmatmul.mubr.bf16.gmra.mrb[0].mxu0 %v3521
        %v3665 = vpop.f32.mrb[0].mxu0
        %v3666 = vadd.f32 0.0, %v3665
        %v3667 = vpop.f32.mrb[0].mxu0
        %v3668 = vpop.f32.mrb[0].mxu0
        %v3669 = vadd.f32 0.0, %v3668
        %v3670 = vpop.f32.mrb[0].mxu0
        %3671 = vmatprep.mubr.bf16.mxu0 0
        %3672 = vmatmul.mubr.bf16.gmra.mrb[0].mxu0 %v3524
        %v3673 = vpop.f32.mrb[0].mxu0
        %v3674 = vadd.f32 0.0, %v3673
        %v3675 = vpop.f32.mrb[0].mxu0
        %v3676 = vpop.f32.mrb[0].mxu0
        %v3677 = vadd.f32 0.0, %v3676
        %v3678 = vpop.f32.mrb[0].mxu0
        %3679 = vmatprep.mubr.bf16.mxu0 0
        %3680 = vmatmul.mubr.bf16.gmra.mrb[0].mxu0 %v3527
        %v3681 = vpop.f32.mrb[0].mxu0
        %v3682 = vadd.f32 0.0, %v3681
        %v3683 = vpop.f32.mrb[0].mxu0
        %v3684 = vpop.f32.mrb[0].mxu0
        %v3685 = vadd.f32 0.0, %v3684
        %v3686 = vpop.f32.mrb[0].mxu0
        %3687 = vmatprep.mubr.bf16.mxu0 0
        %3688 = vmatmul.mubr.bf16.gmra.mrb[0].mxu0 %v3530
        %v3689 = vpop.f32.mrb[0].mxu0
        %v3690 = vadd.f32 0.0, %v3689
        %v3691 = vpop.f32.mrb[0].mxu0
        %v3692 = vpop.f32.mrb[0].mxu0
        %v3693 = vadd.f32 0.0, %v3692
        %v3694 = vpop.f32.mrb[0].mxu0
        %3695 = vdwg.mxu0
        %v3696 = vadd.f32 %v3334, %v3570
        %v3697 = vadd.f32 %v3335, %v3573
        %v3698 = vadd.f32 %v3336, %v3578
        %v3699 = vadd.f32 %v3337, %v3581
        %v3700 = vadd.f32 %v3338, %v3586
        %v3701 = vadd.f32 %v3339, %v3589
        %v3702 = vadd.f32 %v3340, %v3594
        %v3703 = vadd.f32 %v3341, %v3597
        %v3704 = vadd.f32 %v3342, %v3602
        %v3705 = vadd.f32 %v3343, %v3605
        %v3706 = vadd.f32 %v3344, %v3610
        %v3707 = vadd.f32 %v3345, %v3613
        %v3708 = vadd.f32 %v3346, %v3618
        %v3709 = vadd.f32 %v3347, %v3621
        %v3710 = vadd.f32 %v3348, %v3626
        %v3711 = vadd.f32 %v3349, %v3629
        %v3712 = vadd.f32 %v3350, %v3634
        %v3713 = vadd.f32 %v3351, %v3637
        %v3714 = vadd.f32 %v3352, %v3642
        %v3715 = vadd.f32 %v3353, %v3645
        %v3716 = vadd.f32 %v3354, %v3650
        %v3717 = vadd.f32 %v3355, %v3653
        %v3718 = vadd.f32 %v3356, %v3658
        %v3719 = vadd.f32 %v3357, %v3661
        %v3720 = vadd.f32 %v3358, %v3666
        %v3721 = vadd.f32 %v3359, %v3669
        %v3722 = vadd.f32 %v3360, %v3674
        %v3723 = vadd.f32 %v3361, %v3677
        %v3724 = vadd.f32 %v3362, %v3682
        %v3725 = vadd.f32 %v3363, %v3685
        %v3726 = vadd.f32 %v3364, %v3690
        %v3727 = vadd.f32 %v3365, %v3693
        %3728 = vst [vmem:[#allocation2] sm:$0xff] %v3696
        %3729 = vst [vmem:[#allocation2 + $0x8] sm:$0xff] %v3697
        %3730 = vst [vmem:[#allocation2 + $0x10] sm:$0xff] %v3698
        %3731 = vst [vmem:[#allocation2 + $0x18] sm:$0xff] %v3699
        %3732 = vst [vmem:[#allocation2 + $0x20] sm:$0xff] %v3700
        %3733 = vst [vmem:[#allocation2 + $0x28] sm:$0xff] %v3701
        %3734 = vst [vmem:[#allocation2 + $0x30] sm:$0xff] %v3702
        %3735 = vst [vmem:[#allocation2 + $0x38] sm:$0xff] %v3703
        %3736 = vst [vmem:[#allocation2 + $0x40] sm:$0xff] %v3704
        %3737 = vst [vmem:[#allocation2 + $0x48] sm:$0xff] %v3705
        %3738 = vst [vmem:[#allocation2 + $0x50] sm:$0xff] %v3706
        %3739 = vst [vmem:[#allocation2 + $0x58] sm:$0xff] %v3707
        %3740 = vst [vmem:[#allocation2 + $0x60] sm:$0xff] %v3708
        %3741 = vst [vmem:[#allocation2 + $0x68] sm:$0xff] %v3709
        %3742 = vst [vmem:[#allocation2 + $0x70] sm:$0xff] %v3710
        %3743 = vst [vmem:[#allocation2 + $0x78] sm:$0xff] %v3711
        %3744 = vst [vmem:[#allocation2 + $0x80] sm:$0xff] %v3712
        %3745 = vst [vmem:[#allocation2 + $0x88] sm:$0xff] %v3713
        %3746 = vst [vmem:[#allocation2 + $0x90] sm:$0xff] %v3714
        %3747 = vst [vmem:[#allocation2 + $0x98] sm:$0xff] %v3715
        %3748 = vst [vmem:[#allocation2 + $0xa0] sm:$0xff] %v3716
        %3749 = vst [vmem:[#allocation2 + $0xa8] sm:$0xff] %v3717
        %3750 = vst [vmem:[#allocation2 + $0xb0] sm:$0xff] %v3718
        %3751 = vst [vmem:[#allocation2 + $0xb8] sm:$0xff] %v3719
        %3752 = vst [vmem:[#allocation2 + $0xc0] sm:$0xff] %v3720
        %3753 = vst [vmem:[#allocation2 + $0xc8] sm:$0xff] %v3721
        %3754 = vst [vmem:[#allocation2 + $0xd0] sm:$0xff] %v3722
        %3755 = vst [vmem:[#allocation2 + $0xd8] sm:$0xff] %v3723
        %3756 = vst [vmem:[#allocation2 + $0xe0] sm:$0xff] %v3724
        %3757 = vst [vmem:[#allocation2 + $0xe8] sm:$0xff] %v3725
        %3758 = vst [vmem:[#allocation2 + $0xf0] sm:$0xff] %v3726
        %3759 = vst [vmem:[#allocation2 + $0xf8] sm:$0xff] %v3727
        %v3760 = vld [vmem:[%s263 + $0x10] sm:$0xf]
        %v3761 = vld [vmem:[%s263 + $0x14] sm:$0xf]
        %v3762 = vld [vmem:[%s263 + $0x18] sm:$0xf]
        %v3763 = vld [vmem:[%s263 + $0x1c] sm:$0xf]
        %v3764 = vld [vmem:[%s263 + $0x20] sm:$0xf]
        %v3765 = vld [vmem:[%s263 + $0x24] sm:$0xf]
        %v3766 = vld [vmem:[%s263 + $0x28] sm:$0xf]
        %v3767 = vld [vmem:[%s263 + $0x2c] sm:$0xf]
        %v3768 = vld [vmem:[%s263 + $0x30] sm:$0xf]
        %v3769 = vld [vmem:[%s263 + $0x34] sm:$0xf]
        %v3770 = vld [vmem:[%s263 + $0x38] sm:$0xf]
        %v3771 = vld [vmem:[%s263 + $0x3c] sm:$0xf]
        %v3772 = vld [vmem:[%s263 + $0x40] sm:$0xf]
        %v3773 = vld [vmem:[%s263 + $0x44] sm:$0xf]
        %v3774 = vld [vmem:[%s263 + $0x48] sm:$0xf]
        %v3775 = vld [vmem:[%s263 + $0x4c] sm:$0xf]
        %v3776 = vld [vmem:[%s263 + $0x50] sm:$0xf]
        %v3777 = vld [vmem:[%s263 + $0x54] sm:$0xf]
        %v3778 = vld [vmem:[%s263 + $0x58] sm:$0xf]
        %v3779 = vld [vmem:[%s263 + $0x5c] sm:$0xf]
        %v3780 = vld [vmem:[%s263 + $0x60] sm:$0xf]
        %v3781 = vld [vmem:[%s263 + $0x64] sm:$0xf]
        %v3782 = vld [vmem:[%s263 + $0x68] sm:$0xf]
        %v3783 = vld [vmem:[%s263 + $0x6c] sm:$0xf]
        %v3784 = vld [vmem:[%s263 + $0x70] sm:$0xf]
        %v3785 = vld [vmem:[%s263 + $0x74] sm:$0xf]
        %v3786 = vld [vmem:[%s263 + $0x78] sm:$0xf]
        %v3787 = vld [vmem:[%s263 + $0x7c] sm:$0xf]
        %v3788 = vld [vmem:[%s263 + $0x80] sm:$0xf]
        %v3789 = vld [vmem:[%s263 + $0x84] sm:$0xf]
        %v3790 = vld [vmem:[%s263 + $0x88] sm:$0xf]
        %v3791 = vld [vmem:[%s263 + $0x8c] sm:$0xf]
        %v3792 = vld [vmem:[%s1] sm:$0xf]
        %v3793 = vld [vmem:[%s1 + $0x4] sm:$0xf]
        %v3794 = vld [vmem:[%s1 + $0x8] sm:$0xf]
        %v3795 = vld [vmem:[%s1 + $0xc] sm:$0xf]
        %v3796 = vld [vmem:[%s1 + $0x10] sm:$0xf]
        %v3797 = vld [vmem:[%s1 + $0x14] sm:$0xf]
        %v3798 = vld [vmem:[%s1 + $0x18] sm:$0xf]
        %v3799 = vld [vmem:[%s1 + $0x1c] sm:$0xf]
        %v3800 = vld [vmem:[%s1 + $0x20] sm:$0xf]
        %v3801 = vld [vmem:[%s1 + $0x24] sm:$0xf]
        %v3802 = vld [vmem:[%s1 + $0x28] sm:$0xf]
        %v3803 = vld [vmem:[%s1 + $0x2c] sm:$0xf]
        %v3804 = vld [vmem:[%s1 + $0x30] sm:$0xf]
        %v3805 = vld [vmem:[%s1 + $0x34] sm:$0xf]
        %v3806 = vld [vmem:[%s1 + $0x38] sm:$0xf]
        %v3807 = vld [vmem:[%s1 + $0x3c] sm:$0xf]
        %v3808 = vld [vmem:[%s1 + $0x40] sm:$0xf]
        %v3809 = vld [vmem:[%s1 + $0x44] sm:$0xf]
        %v3810 = vld [vmem:[%s1 + $0x48] sm:$0xf]
        %v3811 = vld [vmem:[%s1 + $0x4c] sm:$0xf]
        %v3812 = vld [vmem:[%s1 + $0x50] sm:$0xf]
        %v3813 = vld [vmem:[%s1 + $0x54] sm:$0xf]
        %v3814 = vld [vmem:[%s1 + $0x58] sm:$0xf]
        %v3815 = vld [vmem:[%s1 + $0x5c] sm:$0xf]
        %v3816 = vld [vmem:[%s1 + $0x60] sm:$0xf]
        %v3817 = vld [vmem:[%s1 + $0x64] sm:$0xf]
        %v3818 = vld [vmem:[%s1 + $0x68] sm:$0xf]
        %v3819 = vld [vmem:[%s1 + $0x6c] sm:$0xf]
        %v3820 = vld [vmem:[%s1 + $0x70] sm:$0xf]
        %v3821 = vld [vmem:[%s1 + $0x74] sm:$0xf]
        %v3822 = vld [vmem:[%s1 + $0x78] sm:$0xf]
        %v3823 = vld [vmem:[%s1 + $0x7c] sm:$0xf]
        %v3824 = vmul.bf16 %v3760, %v3792
        %v3825 = vmul.bf16 %v3761, %v3793
        %v3826 = vmul.bf16 %v3762, %v3794
        %v3827 = vmul.bf16 %v3763, %v3795
        %v3828 = vmul.bf16 %v3764, %v3796
        %v3829 = vmul.bf16 %v3765, %v3797
        %v3830 = vmul.bf16 %v3766, %v3798
        %v3831 = vmul.bf16 %v3767, %v3799
        %v3832 = vmul.bf16 %v3768, %v3800
        %v3833 = vmul.bf16 %v3769, %v3801
        %v3834 = vmul.bf16 %v3770, %v3802
        %v3835 = vmul.bf16 %v3771, %v3803
        %v3836 = vmul.bf16 %v3772, %v3804
        %v3837 = vmul.bf16 %v3773, %v3805
        %v3838 = vmul.bf16 %v3774, %v3806
        %v3839 = vmul.bf16 %v3775, %v3807
        %v3840 = vmul.bf16 %v3776, %v3808
        %v3841 = vmul.bf16 %v3777, %v3809
        %v3842 = vmul.bf16 %v3778, %v3810
        %v3843 = vmul.bf16 %v3779, %v3811
        %v3844 = vmul.bf16 %v3780, %v3812
        %v3845 = vmul.bf16 %v3781, %v3813
        %v3846 = vmul.bf16 %v3782, %v3814
        %v3847 = vmul.bf16 %v3783, %v3815
        %v3848 = vmul.bf16 %v3784, %v3816
        %v3849 = vmul.bf16 %v3785, %v3817
        %v3850 = vmul.bf16 %v3786, %v3818
        %v3851 = vmul.bf16 %v3787, %v3819
        %v3852 = vmul.bf16 %v3788, %v3820
        %v3853 = vmul.bf16 %v3789, %v3821
        %v3854 = vmul.bf16 %v3790, %v3822
        %v3855 = vmul.bf16 %v3791, %v3823
        %v3856 = vld [vmem:[#allocation2] sm:$0xff]
        %v3857 = vld [vmem:[#allocation2 + $0x8] sm:$0xff]
        %v3858 = vld [vmem:[#allocation2 + $0x10] sm:$0xff]
        %v3859 = vld [vmem:[#allocation2 + $0x18] sm:$0xff]
        %v3860 = vld [vmem:[#allocation2 + $0x20] sm:$0xff]
        %v3861 = vld [vmem:[#allocation2 + $0x28] sm:$0xff]
        %v3862 = vld [vmem:[#allocation2 + $0x30] sm:$0xff]
        %v3863 = vld [vmem:[#allocation2 + $0x38] sm:$0xff]
        %v3864 = vld [vmem:[#allocation2 + $0x40] sm:$0xff]
        %v3865 = vld [vmem:[#allocation2 + $0x48] sm:$0xff]
        %v3866 = vld [vmem:[#allocation2 + $0x50] sm:$0xff]
        %v3867 = vld [vmem:[#allocation2 + $0x58] sm:$0xff]
        %v3868 = vld [vmem:[#allocation2 + $0x60] sm:$0xff]
        %v3869 = vld [vmem:[#allocation2 + $0x68] sm:$0xff]
        %v3870 = vld [vmem:[#allocation2 + $0x70] sm:$0xff]
        %v3871 = vld [vmem:[#allocation2 + $0x78] sm:$0xff]
        %v3872 = vld [vmem:[#allocation2 + $0x80] sm:$0xff]
        %v3873 = vld [vmem:[#allocation2 + $0x88] sm:$0xff]
        %v3874 = vld [vmem:[#allocation2 + $0x90] sm:$0xff]
        %v3875 = vld [vmem:[#allocation2 + $0x98] sm:$0xff]
        %v3876 = vld [vmem:[#allocation2 + $0xa0] sm:$0xff]
        %v3877 = vld [vmem:[#allocation2 + $0xa8] sm:$0xff]
        %v3878 = vld [vmem:[#allocation2 + $0xb0] sm:$0xff]
        %v3879 = vld [vmem:[#allocation2 + $0xb8] sm:$0xff]
        %v3880 = vld [vmem:[#allocation2 + $0xc0] sm:$0xff]
        %v3881 = vld [vmem:[#allocation2 + $0xc8] sm:$0xff]
        %v3882 = vld [vmem:[#allocation2 + $0xd0] sm:$0xff]
        %v3883 = vld [vmem:[#allocation2 + $0xd8] sm:$0xff]
        %v3884 = vld [vmem:[#allocation2 + $0xe0] sm:$0xff]
        %v3885 = vld [vmem:[#allocation2 + $0xe8] sm:$0xff]
        %v3886 = vld [vmem:[#allocation2 + $0xf0] sm:$0xff]
        %v3887 = vld [vmem:[#allocation2 + $0xf8] sm:$0xff]
        %s3888 = scalar_lea.vmem %s2, 12
        %v3889 = vld [vmem:[%s3888] sm:$0x3]
        %v3922 = vunpack.c.l.b16 %v3824
        %v3923 = vunpack.c.l.b16 %v3825
        %v3924 = vunpack.c.l.b16 %v3826
        %v3925 = vunpack.c.l.b16 %v3827
        %v3926 = vunpack.c.l.b16 %v3828
        %v3927 = vunpack.c.l.b16 %v3829
        %v3928 = vunpack.c.l.b16 %v3830
        %v3929 = vunpack.c.l.b16 %v3831
        %v3930 = vunpack.c.l.b16 %v3832
        %v3931 = vunpack.c.l.b16 %v3833
        %v3932 = vunpack.c.l.b16 %v3834
        %v3933 = vunpack.c.l.b16 %v3835
        %v3934 = vunpack.c.l.b16 %v3836
        %v3935 = vunpack.c.l.b16 %v3837
        %v3936 = vunpack.c.l.b16 %v3838
        %v3937 = vunpack.c.l.b16 %v3839
        %v3938 = vunpack.c.l.b16 %v3840
        %v3939 = vunpack.c.l.b16 %v3841
        %v3940 = vunpack.c.l.b16 %v3842
        %v3941 = vunpack.c.l.b16 %v3843
        %v3942 = vunpack.c.l.b16 %v3844
        %v3943 = vunpack.c.l.b16 %v3845
        %v3944 = vunpack.c.l.b16 %v3846
        %v3945 = vunpack.c.l.b16 %v3847
        %v3946 = vunpack.c.l.b16 %v3848
        %v3947 = vunpack.c.l.b16 %v3849
        %v3948 = vunpack.c.l.b16 %v3850
        %v3949 = vunpack.c.l.b16 %v3851
        %v3950 = vunpack.c.l.b16 %v3852
        %v3951 = vunpack.c.l.b16 %v3853
        %v3952 = vunpack.c.l.b16 %v3854
        %v3953 = vunpack.c.l.b16 %v3855
        %v3954 = vpack.c.b16 %v3923, %v3922
        %v3955 = vpack.c.b16 %v3925, %v3924
        %v3956 = vpack.c.b16 %v3927, %v3926
        %v3957 = vpack.c.b16 %v3929, %v3928
        %v3958 = vpack.c.b16 %v3931, %v3930
        %v3959 = vpack.c.b16 %v3933, %v3932
        %v3960 = vpack.c.b16 %v3935, %v3934
        %v3961 = vpack.c.b16 %v3937, %v3936
        %v3962 = vpack.c.b16 %v3939, %v3938
        %v3963 = vpack.c.b16 %v3941, %v3940
        %v3964 = vpack.c.b16 %v3943, %v3942
        %v3965 = vpack.c.b16 %v3945, %v3944
        %v3966 = vpack.c.b16 %v3947, %v3946
        %v3967 = vpack.c.b16 %v3949, %v3948
        %v3968 = vpack.c.b16 %v3951, %v3950
        %v3969 = vpack.c.b16 %v3953, %v3952
        %v3971 = vsel %vm506, %v3954, 0
        %v3974 = vsel %vm506, %v3955, 0
        %v3977 = vsel %vm506, %v3956, 0
        %v3980 = vsel %vm506, %v3957, 0
        %v3983 = vsel %vm506, %v3958, 0
        %v3986 = vsel %vm506, %v3959, 0
        %v3989 = vsel %vm506, %v3960, 0
        %v3992 = vsel %vm506, %v3961, 0
        %v3995 = vsel %vm506, %v3962, 0
        %v3998 = vsel %vm506, %v3963, 0
        %v4001 = vsel %vm506, %v3964, 0
        %v4004 = vsel %vm506, %v3965, 0
        %v4007 = vsel %vm506, %v3966, 0
        %v4010 = vsel %vm506, %v3967, 0
        %v4013 = vsel %vm506, %v3968, 0
        %v4016 = vsel %vm506, %v3969, 0
        %v4019 = vsel %vm555, %v3889, 0
        %4021 = vmatprep.subr.bf16.mxu0 0
        %4022 = vmatpush1.bf16.msra.mxu0 %v4019
        %4023 = vmatprep.subr.bf16.mxu0 0
        %4024 = vmatpush1.bf16.msra.mxu0 0
        %4025 = vmatprep.subr.bf16.mxu0 0
        %4026 = vmatpush1.bf16.msra.mxu0 0
        %4027 = vmatprep.subr.bf16.mxu0 0
        %4028 = vmatpush1.bf16.msra.mxu0 0
        %4029 = vmatprep.subr.bf16.mxu0 0
        %4030 = vmatpush1.bf16.msra.mxu0 0
        %4031 = vmatprep.subr.bf16.mxu0 0
        %4032 = vmatpush1.bf16.msra.mxu0 0
        %4033 = vmatprep.subr.bf16.mxu0 0
        %4034 = vmatpush1.bf16.msra.mxu0 0
        %4035 = vmatprep.subr.bf16.mxu0 0
        %4036 = vmatpush1.bf16.msra.mxu0 0
        %4037 = vmatprep.subr.bf16.mxu0 0
        %4038 = vmatpush1.bf16.msra.mxu0 0
        %4039 = vmatprep.subr.bf16.mxu0 0
        %4040 = vmatpush1.bf16.msra.mxu0 0
        %4041 = vmatprep.subr.bf16.mxu0 0
        %4042 = vmatpush1.bf16.msra.mxu0 0
        %4043 = vmatprep.subr.bf16.mxu0 0
        %4044 = vmatpush1.bf16.msra.mxu0 0
        %4045 = vmatprep.subr.bf16.mxu0 0
        %4046 = vmatpush1.bf16.msra.mxu0 0
        %4047 = vmatprep.subr.bf16.mxu0 0
        %4048 = vmatpush1.bf16.msra.mxu0 0
        %4049 = vmatprep.subr.bf16.mxu0 0
        %4050 = vmatpush1.bf16.msra.mxu0 0
        %4051 = vmatprep.subr.bf16.mxu0 0
        %4052 = vmatpush1.bf16.msra.mxu0 0
        %4053 = vmatprep.mubr.bf16.mxu0 0
        %4054 = vmatmul.mubr.bf16.gmra.mrb[0].mxu0 %v3971
        %v4055 = vpop.f32.mrb[0].mxu0
        %v4056 = vadd.f32 0.0, %v4055
        %v4057 = vpop.f32.mrb[0].mxu0
        %v4058 = vpop.f32.mrb[0].mxu0
        %v4059 = vadd.f32 0.0, %v4058
        %v4060 = vpop.f32.mrb[0].mxu0
        %4061 = vmatprep.mubr.bf16.mxu0 0
        %4062 = vmatmul.mubr.bf16.gmra.mrb[0].mxu0 %v3974
        %v4063 = vpop.f32.mrb[0].mxu0
        %v4064 = vadd.f32 0.0, %v4063
        %v4065 = vpop.f32.mrb[0].mxu0
        %v4066 = vpop.f32.mrb[0].mxu0
        %v4067 = vadd.f32 0.0, %v4066
        %v4068 = vpop.f32.mrb[0].mxu0
        %4069 = vmatprep.mubr.bf16.mxu0 0
        %4070 = vmatmul.mubr.bf16.gmra.mrb[0].mxu0 %v3977
        %v4071 = vpop.f32.mrb[0].mxu0
        %v4072 = vadd.f32 0.0, %v4071
        %v4073 = vpop.f32.mrb[0].mxu0
        %v4074 = vpop.f32.mrb[0].mxu0
        %v4075 = vadd.f32 0.0, %v4074
        %v4076 = vpop.f32.mrb[0].mxu0
        %4077 = vmatprep.mubr.bf16.mxu0 0
        %4078 = vmatmul.mubr.bf16.gmra.mrb[0].mxu0 %v3980
        %v4079 = vpop.f32.mrb[0].mxu0
        %v4080 = vadd.f32 0.0, %v4079
        %v4081 = vpop.f32.mrb[0].mxu0
        %v4082 = vpop.f32.mrb[0].mxu0
        %v4083 = vadd.f32 0.0, %v4082
        %v4084 = vpop.f32.mrb[0].mxu0
        %4085 = vmatprep.mubr.bf16.mxu0 0
        %4086 = vmatmul.mubr.bf16.gmra.mrb[0].mxu0 %v3983
        %v4087 = vpop.f32.mrb[0].mxu0
        %v4088 = vadd.f32 0.0, %v4087
        %v4089 = vpop.f32.mrb[0].mxu0
        %v4090 = vpop.f32.mrb[0].mxu0
        %v4091 = vadd.f32 0.0, %v4090
        %v4092 = vpop.f32.mrb[0].mxu0
        %4093 = vmatprep.mubr.bf16.mxu0 0
        %4094 = vmatmul.mubr.bf16.gmra.mrb[0].mxu0 %v3986
        %v4095 = vpop.f32.mrb[0].mxu0
        %v4096 = vadd.f32 0.0, %v4095
        %v4097 = vpop.f32.mrb[0].mxu0
        %v4098 = vpop.f32.mrb[0].mxu0
        %v4099 = vadd.f32 0.0, %v4098
        %v4100 = vpop.f32.mrb[0].mxu0
        %4101 = vmatprep.mubr.bf16.mxu0 0
        %4102 = vmatmul.mubr.bf16.gmra.mrb[0].mxu0 %v3989
        %v4103 = vpop.f32.mrb[0].mxu0
        %v4104 = vadd.f32 0.0, %v4103
        %v4105 = vpop.f32.mrb[0].mxu0
        %v4106 = vpop.f32.mrb[0].mxu0
        %v4107 = vadd.f32 0.0, %v4106
        %v4108 = vpop.f32.mrb[0].mxu0
        %4109 = vmatprep.mubr.bf16.mxu0 0
        %4110 = vmatmul.mubr.bf16.gmra.mrb[0].mxu0 %v3992
        %v4111 = vpop.f32.mrb[0].mxu0
        %v4112 = vadd.f32 0.0, %v4111
        %v4113 = vpop.f32.mrb[0].mxu0
        %v4114 = vpop.f32.mrb[0].mxu0
        %v4115 = vadd.f32 0.0, %v4114
        %v4116 = vpop.f32.mrb[0].mxu0
        %4117 = vmatprep.mubr.bf16.mxu0 0
        %4118 = vmatmul.mubr.bf16.gmra.mrb[0].mxu0 %v3995
        %v4119 = vpop.f32.mrb[0].mxu0
        %v4120 = vadd.f32 0.0, %v4119
        %v4121 = vpop.f32.mrb[0].mxu0
        %v4122 = vpop.f32.mrb[0].mxu0
        %v4123 = vadd.f32 0.0, %v4122
        %v4124 = vpop.f32.mrb[0].mxu0
        %4125 = vmatprep.mubr.bf16.mxu0 0
        %4126 = vmatmul.mubr.bf16.gmra.mrb[0].mxu0 %v3998
        %v4127 = vpop.f32.mrb[0].mxu0
        %v4128 = vadd.f32 0.0, %v4127
        %v4129 = vpop.f32.mrb[0].mxu0
        %v4130 = vpop.f32.mrb[0].mxu0
        %v4131 = vadd.f32 0.0, %v4130
        %v4132 = vpop.f32.mrb[0].mxu0
        %4133 = vmatprep.mubr.bf16.mxu0 0
        %4134 = vmatmul.mubr.bf16.gmra.mrb[0].mxu0 %v4001
        %v4135 = vpop.f32.mrb[0].mxu0
        %v4136 = vadd.f32 0.0, %v4135
        %v4137 = vpop.f32.mrb[0].mxu0
        %v4138 = vpop.f32.mrb[0].mxu0
        %v4139 = vadd.f32 0.0, %v4138
        %v4140 = vpop.f32.mrb[0].mxu0
        %4141 = vmatprep.mubr.bf16.mxu0 0
        %4142 = vmatmul.mubr.bf16.gmra.mrb[0].mxu0 %v4004
        %v4143 = vpop.f32.mrb[0].mxu0
        %v4144 = vadd.f32 0.0, %v4143
        %v4145 = vpop.f32.mrb[0].mxu0
        %v4146 = vpop.f32.mrb[0].mxu0
        %v4147 = vadd.f32 0.0, %v4146
        %v4148 = vpop.f32.mrb[0].mxu0
        %4149 = vmatprep.mubr.bf16.mxu0 0
        %4150 = vmatmul.mubr.bf16.gmra.mrb[0].mxu0 %v4007
        %v4151 = vpop.f32.mrb[0].mxu0
        %v4152 = vadd.f32 0.0, %v4151
        %v4153 = vpop.f32.mrb[0].mxu0
        %v4154 = vpop.f32.mrb[0].mxu0
        %v4155 = vadd.f32 0.0, %v4154
        %v4156 = vpop.f32.mrb[0].mxu0
        %4157 = vmatprep.mubr.bf16.mxu0 0
        %4158 = vmatmul.mubr.bf16.gmra.mrb[0].mxu0 %v4010
        %v4159 = vpop.f32.mrb[0].mxu0
        %v4160 = vadd.f32 0.0, %v4159
        %v4161 = vpop.f32.mrb[0].mxu0
        %v4162 = vpop.f32.mrb[0].mxu0
        %v4163 = vadd.f32 0.0, %v4162
        %v4164 = vpop.f32.mrb[0].mxu0
        %4165 = vmatprep.mubr.bf16.mxu0 0
        %4166 = vmatmul.mubr.bf16.gmra.mrb[0].mxu0 %v4013
        %v4167 = vpop.f32.mrb[0].mxu0
        %v4168 = vadd.f32 0.0, %v4167
        %v4169 = vpop.f32.mrb[0].mxu0
        %v4170 = vpop.f32.mrb[0].mxu0
        %v4171 = vadd.f32 0.0, %v4170
        %v4172 = vpop.f32.mrb[0].mxu0
        %4173 = vmatprep.mubr.bf16.mxu0 0
        %4174 = vmatmul.mubr.bf16.gmra.mrb[0].mxu0 %v4016
        %v4175 = vpop.f32.mrb[0].mxu0
        %v4176 = vadd.f32 0.0, %v4175
        %v4177 = vpop.f32.mrb[0].mxu0
        %v4178 = vpop.f32.mrb[0].mxu0
        %v4179 = vadd.f32 0.0, %v4178
        %v4180 = vpop.f32.mrb[0].mxu0
        %4181 = vdwg.mxu0
        %v4182 = vadd.f32 %v3856, %v4056
        %v4183 = vadd.f32 %v3857, %v4059
        %v4184 = vadd.f32 %v3858, %v4064
        %v4185 = vadd.f32 %v3859, %v4067
        %v4186 = vadd.f32 %v3860, %v4072
        %v4187 = vadd.f32 %v3861, %v4075
        %v4188 = vadd.f32 %v3862, %v4080
        %v4189 = vadd.f32 %v3863, %v4083
        %v4190 = vadd.f32 %v3864, %v4088
        %v4191 = vadd.f32 %v3865, %v4091
        %v4192 = vadd.f32 %v3866, %v4096
        %v4193 = vadd.f32 %v3867, %v4099
        %v4194 = vadd.f32 %v3868, %v4104
        %v4195 = vadd.f32 %v3869, %v4107
        %v4196 = vadd.f32 %v3870, %v4112
        %v4197 = vadd.f32 %v3871, %v4115
        %v4198 = vadd.f32 %v3872, %v4120
        %v4199 = vadd.f32 %v3873, %v4123
        %v4200 = vadd.f32 %v3874, %v4128
        %v4201 = vadd.f32 %v3875, %v4131
        %v4202 = vadd.f32 %v3876, %v4136
        %v4203 = vadd.f32 %v3877, %v4139
        %v4204 = vadd.f32 %v3878, %v4144
        %v4205 = vadd.f32 %v3879, %v4147
        %v4206 = vadd.f32 %v3880, %v4152
        %v4207 = vadd.f32 %v3881, %v4155
        %v4208 = vadd.f32 %v3882, %v4160
        %v4209 = vadd.f32 %v3883, %v4163
        %v4210 = vadd.f32 %v3884, %v4168
        %v4211 = vadd.f32 %v3885, %v4171
        %v4212 = vadd.f32 %v3886, %v4176
        %v4213 = vadd.f32 %v3887, %v4179
        %4214 = vst [vmem:[#allocation2] sm:$0xff] %v4182
        %4215 = vst [vmem:[#allocation2 + $0x8] sm:$0xff] %v4183
        %4216 = vst [vmem:[#allocation2 + $0x10] sm:$0xff] %v4184
        %4217 = vst [vmem:[#allocation2 + $0x18] sm:$0xff] %v4185
        %4218 = vst [vmem:[#allocation2 + $0x20] sm:$0xff] %v4186
        %4219 = vst [vmem:[#allocation2 + $0x28] sm:$0xff] %v4187
        %4220 = vst [vmem:[#allocation2 + $0x30] sm:$0xff] %v4188
        %4221 = vst [vmem:[#allocation2 + $0x38] sm:$0xff] %v4189
        %4222 = vst [vmem:[#allocation2 + $0x40] sm:$0xff] %v4190
        %4223 = vst [vmem:[#allocation2 + $0x48] sm:$0xff] %v4191
        %4224 = vst [vmem:[#allocation2 + $0x50] sm:$0xff] %v4192
        %4225 = vst [vmem:[#allocation2 + $0x58] sm:$0xff] %v4193
        %4226 = vst [vmem:[#allocation2 + $0x60] sm:$0xff] %v4194
        %4227 = vst [vmem:[#allocation2 + $0x68] sm:$0xff] %v4195
        %4228 = vst [vmem:[#allocation2 + $0x70] sm:$0xff] %v4196
        %4229 = vst [vmem:[#allocation2 + $0x78] sm:$0xff] %v4197
        %4230 = vst [vmem:[#allocation2 + $0x80] sm:$0xff] %v4198
        %4231 = vst [vmem:[#allocation2 + $0x88] sm:$0xff] %v4199
        %4232 = vst [vmem:[#allocation2 + $0x90] sm:$0xff] %v4200
        %4233 = vst [vmem:[#allocation2 + $0x98] sm:$0xff] %v4201
        %4234 = vst [vmem:[#allocation2 + $0xa0] sm:$0xff] %v4202
        %4235 = vst [vmem:[#allocation2 + $0xa8] sm:$0xff] %v4203
        %4236 = vst [vmem:[#allocation2 + $0xb0] sm:$0xff] %v4204
        %4237 = vst [vmem:[#allocation2 + $0xb8] sm:$0xff] %v4205
        %4238 = vst [vmem:[#allocation2 + $0xc0] sm:$0xff] %v4206
        %4239 = vst [vmem:[#allocation2 + $0xc8] sm:$0xff] %v4207
        %4240 = vst [vmem:[#allocation2 + $0xd0] sm:$0xff] %v4208
        %4241 = vst [vmem:[#allocation2 + $0xd8] sm:$0xff] %v4209
        %4242 = vst [vmem:[#allocation2 + $0xe0] sm:$0xff] %v4210
        %4243 = vst [vmem:[#allocation2 + $0xe8] sm:$0xff] %v4211
        %4244 = vst [vmem:[#allocation2 + $0xf0] sm:$0xff] %v4212
        %4245 = vst [vmem:[#allocation2 + $0xf8] sm:$0xff] %v4213
        %v4246 = vld [vmem:[%s263 + $0x10] sm:$0xf]
        %v4247 = vld [vmem:[%s263 + $0x14] sm:$0xf]
        %v4248 = vld [vmem:[%s263 + $0x18] sm:$0xf]
        %v4249 = vld [vmem:[%s263 + $0x1c] sm:$0xf]
        %v4250 = vld [vmem:[%s263 + $0x20] sm:$0xf]
        %v4251 = vld [vmem:[%s263 + $0x24] sm:$0xf]
        %v4252 = vld [vmem:[%s263 + $0x28] sm:$0xf]
        %v4253 = vld [vmem:[%s263 + $0x2c] sm:$0xf]
        %v4254 = vld [vmem:[%s263 + $0x30] sm:$0xf]
        %v4255 = vld [vmem:[%s263 + $0x34] sm:$0xf]
        %v4256 = vld [vmem:[%s263 + $0x38] sm:$0xf]
        %v4257 = vld [vmem:[%s263 + $0x3c] sm:$0xf]
        %v4258 = vld [vmem:[%s263 + $0x40] sm:$0xf]
        %v4259 = vld [vmem:[%s263 + $0x44] sm:$0xf]
        %v4260 = vld [vmem:[%s263 + $0x48] sm:$0xf]
        %v4261 = vld [vmem:[%s263 + $0x4c] sm:$0xf]
        %v4262 = vld [vmem:[%s263 + $0x50] sm:$0xf]
        %v4263 = vld [vmem:[%s263 + $0x54] sm:$0xf]
        %v4264 = vld [vmem:[%s263 + $0x58] sm:$0xf]
        %v4265 = vld [vmem:[%s263 + $0x5c] sm:$0xf]
        %v4266 = vld [vmem:[%s263 + $0x60] sm:$0xf]
        %v4267 = vld [vmem:[%s263 + $0x64] sm:$0xf]
        %v4268 = vld [vmem:[%s263 + $0x68] sm:$0xf]
        %v4269 = vld [vmem:[%s263 + $0x6c] sm:$0xf]
        %v4270 = vld [vmem:[%s263 + $0x70] sm:$0xf]
        %v4271 = vld [vmem:[%s263 + $0x74] sm:$0xf]
        %v4272 = vld [vmem:[%s263 + $0x78] sm:$0xf]
        %v4273 = vld [vmem:[%s263 + $0x7c] sm:$0xf]
        %v4274 = vld [vmem:[%s263 + $0x80] sm:$0xf]
        %v4275 = vld [vmem:[%s263 + $0x84] sm:$0xf]
        %v4276 = vld [vmem:[%s263 + $0x88] sm:$0xf]
        %v4277 = vld [vmem:[%s263 + $0x8c] sm:$0xf]
        %v4278 = vld [vmem:[%s263 + $0x90] sm:$0x1]
        %v4279 = vld [vmem:[#allocation2] sm:$0xff]
        %v4280 = vld [vmem:[#allocation2 + $0x8] sm:$0xff]
        %v4281 = vld [vmem:[#allocation2 + $0x10] sm:$0xff]
        %v4282 = vld [vmem:[#allocation2 + $0x18] sm:$0xff]
        %v4283 = vld [vmem:[#allocation2 + $0x20] sm:$0xff]
        %v4284 = vld [vmem:[#allocation2 + $0x28] sm:$0xff]
        %v4285 = vld [vmem:[#allocation2 + $0x30] sm:$0xff]
        %v4286 = vld [vmem:[#allocation2 + $0x38] sm:$0xff]
        %v4287 = vld [vmem:[#allocation2 + $0x40] sm:$0xff]
        %v4288 = vld [vmem:[#allocation2 + $0x48] sm:$0xff]
        %v4289 = vld [vmem:[#allocation2 + $0x50] sm:$0xff]
        %v4290 = vld [vmem:[#allocation2 + $0x58] sm:$0xff]
        %v4291 = vld [vmem:[#allocation2 + $0x60] sm:$0xff]
        %v4292 = vld [vmem:[#allocation2 + $0x68] sm:$0xff]
        %v4293 = vld [vmem:[#allocation2 + $0x70] sm:$0xff]
        %v4294 = vld [vmem:[#allocation2 + $0x78] sm:$0xff]
        %v4295 = vld [vmem:[#allocation2 + $0x80] sm:$0xff]
        %v4296 = vld [vmem:[#allocation2 + $0x88] sm:$0xff]
        %v4297 = vld [vmem:[#allocation2 + $0x90] sm:$0xff]
        %v4298 = vld [vmem:[#allocation2 + $0x98] sm:$0xff]
        %v4299 = vld [vmem:[#allocation2 + $0xa0] sm:$0xff]
        %v4300 = vld [vmem:[#allocation2 + $0xa8] sm:$0xff]
        %v4301 = vld [vmem:[#allocation2 + $0xb0] sm:$0xff]
        %v4302 = vld [vmem:[#allocation2 + $0xb8] sm:$0xff]
        %v4303 = vld [vmem:[#allocation2 + $0xc0] sm:$0xff]
        %v4304 = vld [vmem:[#allocation2 + $0xc8] sm:$0xff]
        %v4305 = vld [vmem:[#allocation2 + $0xd0] sm:$0xff]
        %v4306 = vld [vmem:[#allocation2 + $0xd8] sm:$0xff]
        %v4307 = vld [vmem:[#allocation2 + $0xe0] sm:$0xff]
        %v4308 = vld [vmem:[#allocation2 + $0xe8] sm:$0xff]
        %v4309 = vld [vmem:[#allocation2 + $0xf0] sm:$0xff]
        %v4310 = vld [vmem:[#allocation2 + $0xf8] sm:$0xff]
        %s4311 = scalar_lea.vmem %s2, 14
        %v4312 = vld [vmem:[%s4311] sm:$0x3]
        %v4346 = vunpack.c.l.b16 %v4246
        %v4347 = vunpack.c.l.b16 %v4247
        %v4348 = vunpack.c.l.b16 %v4248
        %v4349 = vunpack.c.l.b16 %v4249
        %v4350 = vunpack.c.l.b16 %v4250
        %v4351 = vunpack.c.l.b16 %v4251
        %v4352 = vunpack.c.l.b16 %v4252
        %v4353 = vunpack.c.l.b16 %v4253
        %v4354 = vunpack.c.l.b16 %v4254
        %v4355 = vunpack.c.l.b16 %v4255
        %v4356 = vunpack.c.l.b16 %v4256
        %v4357 = vunpack.c.l.b16 %v4257
        %v4358 = vunpack.c.l.b16 %v4258
        %v4359 = vunpack.c.l.b16 %v4259
        %v4360 = vunpack.c.l.b16 %v4260
        %v4361 = vunpack.c.l.b16 %v4261
        %v4362 = vunpack.c.l.b16 %v4262
        %v4363 = vunpack.c.l.b16 %v4263
        %v4364 = vunpack.c.l.b16 %v4264
        %v4365 = vunpack.c.l.b16 %v4265
        %v4366 = vunpack.c.l.b16 %v4266
        %v4367 = vunpack.c.l.b16 %v4267
        %v4368 = vunpack.c.l.b16 %v4268
        %v4369 = vunpack.c.l.b16 %v4269
        %v4370 = vunpack.c.l.b16 %v4270
        %v4371 = vunpack.c.l.b16 %v4271
        %v4372 = vunpack.c.l.b16 %v4272
        %v4373 = vunpack.c.l.b16 %v4273
        %v4374 = vunpack.c.l.b16 %v4274
        %v4375 = vunpack.c.l.b16 %v4275
        %v4376 = vunpack.c.l.b16 %v4276
        %v4377 = vunpack.c.l.b16 %v4277
        %v4378 = vunpack.c.l.b16 %v4278
        %v4379 = vpack.c.b16 %v4347, %v4346
        %v4380 = vpack.c.b16 %v4349, %v4348
        %v4381 = vpack.c.b16 %v4351, %v4350
        %v4382 = vpack.c.b16 %v4353, %v4352
        %v4383 = vpack.c.b16 %v4355, %v4354
        %v4384 = vpack.c.b16 %v4357, %v4356
        %v4385 = vpack.c.b16 %v4359, %v4358
        %v4386 = vpack.c.b16 %v4361, %v4360
        %v4387 = vpack.c.b16 %v4363, %v4362
        %v4388 = vpack.c.b16 %v4365, %v4364
        %v4389 = vpack.c.b16 %v4367, %v4366
        %v4390 = vpack.c.b16 %v4369, %v4368
        %v4391 = vpack.c.b16 %v4371, %v4370
        %v4392 = vpack.c.b16 %v4373, %v4372
        %v4393 = vpack.c.b16 %v4375, %v4374
        %v4394 = vpack.c.b16 %v4377, %v4376
        %v4395 = vpack.c.b16 %v4378, %v4378
        %v4397 = vshrl.u32 %v4379, 16
        %v4399 = vshll.u32 %v4379, 16
        %v4401 = vrot.slane %v4399, 1
        %v4402 = vor.u32 %v4397, %v4401
        %v4404 = vshll.u32 %v4380, 16
        %v4406 = vrot.slane %v4404, 1
        %v4407 = vsel %vm934, %v4402, %v4406
        %v4408 = vshrl.u32 %v4380, 16
        %v4410 = vor.u32 %v4408, %v4406
        %v4412 = vshll.u32 %v4381, 16
        %v4414 = vrot.slane %v4412, 1
        %v4415 = vsel %vm934, %v4410, %v4414
        %v4416 = vshrl.u32 %v4381, 16
        %v4418 = vor.u32 %v4416, %v4414
        %v4420 = vshll.u32 %v4382, 16
        %v4422 = vrot.slane %v4420, 1
        %v4423 = vsel %vm934, %v4418, %v4422
        %v4424 = vshrl.u32 %v4382, 16
        %v4426 = vor.u32 %v4424, %v4422
        %v4428 = vshll.u32 %v4383, 16
        %v4430 = vrot.slane %v4428, 1
        %v4431 = vsel %vm934, %v4426, %v4430
        %v4432 = vshrl.u32 %v4383, 16
        %v4434 = vor.u32 %v4432, %v4430
        %v4436 = vshll.u32 %v4384, 16
        %v4438 = vrot.slane %v4436, 1
        %v4439 = vsel %vm934, %v4434, %v4438
        %v4440 = vshrl.u32 %v4384, 16
        %v4442 = vor.u32 %v4440, %v4438
        %v4444 = vshll.u32 %v4385, 16
        %v4446 = vrot.slane %v4444, 1
        %v4447 = vsel %vm934, %v4442, %v4446
        %v4448 = vshrl.u32 %v4385, 16
        %v4450 = vor.u32 %v4448, %v4446
        %v4452 = vshll.u32 %v4386, 16
        %v4454 = vrot.slane %v4452, 1
        %v4455 = vsel %vm934, %v4450, %v4454
        %v4456 = vshrl.u32 %v4386, 16
        %v4458 = vor.u32 %v4456, %v4454
        %v4460 = vshll.u32 %v4387, 16
        %v4462 = vrot.slane %v4460, 1
        %v4463 = vsel %vm934, %v4458, %v4462
        %v4464 = vshrl.u32 %v4387, 16
        %v4466 = vor.u32 %v4464, %v4462
        %v4468 = vshll.u32 %v4388, 16
        %v4470 = vrot.slane %v4468, 1
        %v4471 = vsel %vm934, %v4466, %v4470
        %v4472 = vshrl.u32 %v4388, 16
        %v4474 = vor.u32 %v4472, %v4470
        %v4476 = vshll.u32 %v4389, 16
        %v4478 = vrot.slane %v4476, 1
        %v4479 = vsel %vm934, %v4474, %v4478
        %v4480 = vshrl.u32 %v4389, 16
        %v4482 = vor.u32 %v4480, %v4478
        %v4484 = vshll.u32 %v4390, 16
        %v4486 = vrot.slane %v4484, 1
        %v4487 = vsel %vm934, %v4482, %v4486
        %v4488 = vshrl.u32 %v4390, 16
        %v4490 = vor.u32 %v4488, %v4486
        %v4492 = vshll.u32 %v4391, 16
        %v4494 = vrot.slane %v4492, 1
        %v4495 = vsel %vm934, %v4490, %v4494
        %v4496 = vshrl.u32 %v4391, 16
        %v4498 = vor.u32 %v4496, %v4494
        %v4500 = vshll.u32 %v4392, 16
        %v4502 = vrot.slane %v4500, 1
        %v4503 = vsel %vm934, %v4498, %v4502
        %v4504 = vshrl.u32 %v4392, 16
        %v4506 = vor.u32 %v4504, %v4502
        %v4508 = vshll.u32 %v4393, 16
        %v4510 = vrot.slane %v4508, 1
        %v4511 = vsel %vm934, %v4506, %v4510
        %v4512 = vshrl.u32 %v4393, 16
        %v4514 = vor.u32 %v4512, %v4510
        %v4516 = vshll.u32 %v4394, 16
        %v4518 = vrot.slane %v4516, 1
        %v4519 = vsel %vm934, %v4514, %v4518
        %v4520 = vshrl.u32 %v4394, 16
        %v4522 = vor.u32 %v4520, %v4518
        %v4524 = vshll.u32 %v4395, 16
        %v4526 = vrot.slane %v4524, 1
        %v4527 = vsel %vm934, %v4522, %v4526
        %v4529 = vsel %vm506, %v4407, 0
        %v4532 = vsel %vm506, %v4415, 0
        %v4535 = vsel %vm506, %v4423, 0
        %v4538 = vsel %vm506, %v4431, 0
        %v4541 = vsel %vm506, %v4439, 0
        %v4544 = vsel %vm506, %v4447, 0
        %v4547 = vsel %vm506, %v4455, 0
        %v4550 = vsel %vm506, %v4463, 0
        %v4553 = vsel %vm506, %v4471, 0
        %v4556 = vsel %vm506, %v4479, 0
        %v4559 = vsel %vm506, %v4487, 0
        %v4562 = vsel %vm506, %v4495, 0
        %v4565 = vsel %vm506, %v4503, 0
        %v4568 = vsel %vm506, %v4511, 0
        %v4571 = vsel %vm506, %v4519, 0
        %v4574 = vsel %vm506, %v4527, 0
        %v4577 = vsel %vm555, %v4312, 0
        %4579 = vmatprep.subr.bf16.mxu0 0
        %4580 = vmatpush1.bf16.msra.mxu0 %v4577
        %4581 = vmatprep.subr.bf16.mxu0 0
        %4582 = vmatpush1.bf16.msra.mxu0 0
        %4583 = vmatprep.subr.bf16.mxu0 0
        %4584 = vmatpush1.bf16.msra.mxu0 0
        %4585 = vmatprep.subr.bf16.mxu0 0
        %4586 = vmatpush1.bf16.msra.mxu0 0
        %4587 = vmatprep.subr.bf16.mxu0 0
        %4588 = vmatpush1.bf16.msra.mxu0 0
        %4589 = vmatprep.subr.bf16.mxu0 0
        %4590 = vmatpush1.bf16.msra.mxu0 0
        %4591 = vmatprep.subr.bf16.mxu0 0
        %4592 = vmatpush1.bf16.msra.mxu0 0
        %4593 = vmatprep.subr.bf16.mxu0 0
        %4594 = vmatpush1.bf16.msra.mxu0 0
        %4595 = vmatprep.subr.bf16.mxu0 0
        %4596 = vmatpush1.bf16.msra.mxu0 0
        %4597 = vmatprep.subr.bf16.mxu0 0
        %4598 = vmatpush1.bf16.msra.mxu0 0
        %4599 = vmatprep.subr.bf16.mxu0 0
        %4600 = vmatpush1.bf16.msra.mxu0 0
        %4601 = vmatprep.subr.bf16.mxu0 0
        %4602 = vmatpush1.bf16.msra.mxu0 0
        %4603 = vmatprep.subr.bf16.mxu0 0
        %4604 = vmatpush1.bf16.msra.mxu0 0
        %4605 = vmatprep.subr.bf16.mxu0 0
        %4606 = vmatpush1.bf16.msra.mxu0 0
        %4607 = vmatprep.subr.bf16.mxu0 0
        %4608 = vmatpush1.bf16.msra.mxu0 0
        %4609 = vmatprep.subr.bf16.mxu0 0
        %4610 = vmatpush1.bf16.msra.mxu0 0
        %4611 = vmatprep.mubr.bf16.mxu0 0
        %4612 = vmatmul.mubr.bf16.gmra.mrb[0].mxu0 %v4529
        %v4613 = vpop.f32.mrb[0].mxu0
        %v4614 = vadd.f32 0.0, %v4613
        %v4615 = vpop.f32.mrb[0].mxu0
        %v4616 = vpop.f32.mrb[0].mxu0
        %v4617 = vadd.f32 0.0, %v4616
        %v4618 = vpop.f32.mrb[0].mxu0
        %4619 = vmatprep.mubr.bf16.mxu0 0
        %4620 = vmatmul.mubr.bf16.gmra.mrb[0].mxu0 %v4532
        %v4621 = vpop.f32.mrb[0].mxu0
        %v4622 = vadd.f32 0.0, %v4621
        %v4623 = vpop.f32.mrb[0].mxu0
        %v4624 = vpop.f32.mrb[0].mxu0
        %v4625 = vadd.f32 0.0, %v4624
        %v4626 = vpop.f32.mrb[0].mxu0
        %4627 = vmatprep.mubr.bf16.mxu0 0
        %4628 = vmatmul.mubr.bf16.gmra.mrb[0].mxu0 %v4535
        %v4629 = vpop.f32.mrb[0].mxu0
        %v4630 = vadd.f32 0.0, %v4629
        %v4631 = vpop.f32.mrb[0].mxu0
        %v4632 = vpop.f32.mrb[0].mxu0
        %v4633 = vadd.f32 0.0, %v4632
        %v4634 = vpop.f32.mrb[0].mxu0
        %4635 = vmatprep.mubr.bf16.mxu0 0
        %4636 = vmatmul.mubr.bf16.gmra.mrb[0].mxu0 %v4538
        %v4637 = vpop.f32.mrb[0].mxu0
        %v4638 = vadd.f32 0.0, %v4637
        %v4639 = vpop.f32.mrb[0].mxu0
        %v4640 = vpop.f32.mrb[0].mxu0
        %v4641 = vadd.f32 0.0, %v4640
        %v4642 = vpop.f32.mrb[0].mxu0
        %4643 = vmatprep.mubr.bf16.mxu0 0
        %4644 = vmatmul.mubr.bf16.gmra.mrb[0].mxu0 %v4541
        %v4645 = vpop.f32.mrb[0].mxu0
        %v4646 = vadd.f32 0.0, %v4645
        %v4647 = vpop.f32.mrb[0].mxu0
        %v4648 = vpop.f32.mrb[0].mxu0
        %v4649 = vadd.f32 0.0, %v4648
        %v4650 = vpop.f32.mrb[0].mxu0
        %4651 = vmatprep.mubr.bf16.mxu0 0
        %4652 = vmatmul.mubr.bf16.gmra.mrb[0].mxu0 %v4544
        %v4653 = vpop.f32.mrb[0].mxu0
        %v4654 = vadd.f32 0.0, %v4653
        %v4655 = vpop.f32.mrb[0].mxu0
        %v4656 = vpop.f32.mrb[0].mxu0
        %v4657 = vadd.f32 0.0, %v4656
        %v4658 = vpop.f32.mrb[0].mxu0
        %4659 = vmatprep.mubr.bf16.mxu0 0
        %4660 = vmatmul.mubr.bf16.gmra.mrb[0].mxu0 %v4547
        %v4661 = vpop.f32.mrb[0].mxu0
        %v4662 = vadd.f32 0.0, %v4661
        %v4663 = vpop.f32.mrb[0].mxu0
        %v4664 = vpop.f32.mrb[0].mxu0
        %v4665 = vadd.f32 0.0, %v4664
        %v4666 = vpop.f32.mrb[0].mxu0
        %4667 = vmatprep.mubr.bf16.mxu0 0
        %4668 = vmatmul.mubr.bf16.gmra.mrb[0].mxu0 %v4550
        %v4669 = vpop.f32.mrb[0].mxu0
        %v4670 = vadd.f32 0.0, %v4669
        %v4671 = vpop.f32.mrb[0].mxu0
        %v4672 = vpop.f32.mrb[0].mxu0
        %v4673 = vadd.f32 0.0, %v4672
        %v4674 = vpop.f32.mrb[0].mxu0
        %4675 = vmatprep.mubr.bf16.mxu0 0
        %4676 = vmatmul.mubr.bf16.gmra.mrb[0].mxu0 %v4553
        %v4677 = vpop.f32.mrb[0].mxu0
        %v4678 = vadd.f32 0.0, %v4677
        %v4679 = vpop.f32.mrb[0].mxu0
        %v4680 = vpop.f32.mrb[0].mxu0
        %v4681 = vadd.f32 0.0, %v4680
        %v4682 = vpop.f32.mrb[0].mxu0
        %4683 = vmatprep.mubr.bf16.mxu0 0
        %4684 = vmatmul.mubr.bf16.gmra.mrb[0].mxu0 %v4556
        %v4685 = vpop.f32.mrb[0].mxu0
        %v4686 = vadd.f32 0.0, %v4685
        %v4687 = vpop.f32.mrb[0].mxu0
        %v4688 = vpop.f32.mrb[0].mxu0
        %v4689 = vadd.f32 0.0, %v4688
        %v4690 = vpop.f32.mrb[0].mxu0
        %4691 = vmatprep.mubr.bf16.mxu0 0
        %4692 = vmatmul.mubr.bf16.gmra.mrb[0].mxu0 %v4559
        %v4693 = vpop.f32.mrb[0].mxu0
        %v4694 = vadd.f32 0.0, %v4693
        %v4695 = vpop.f32.mrb[0].mxu0
        %v4696 = vpop.f32.mrb[0].mxu0
        %v4697 = vadd.f32 0.0, %v4696
        %v4698 = vpop.f32.mrb[0].mxu0
        %4699 = vmatprep.mubr.bf16.mxu0 0
        %4700 = vmatmul.mubr.bf16.gmra.mrb[0].mxu0 %v4562
        %v4701 = vpop.f32.mrb[0].mxu0
        %v4702 = vadd.f32 0.0, %v4701
        %v4703 = vpop.f32.mrb[0].mxu0
        %v4704 = vpop.f32.mrb[0].mxu0
        %v4705 = vadd.f32 0.0, %v4704
        %v4706 = vpop.f32.mrb[0].mxu0
        %4707 = vmatprep.mubr.bf16.mxu0 0
        %4708 = vmatmul.mubr.bf16.gmra.mrb[0].mxu0 %v4565
        %v4709 = vpop.f32.mrb[0].mxu0
        %v4710 = vadd.f32 0.0, %v4709
        %v4711 = vpop.f32.mrb[0].mxu0
        %v4712 = vpop.f32.mrb[0].mxu0
        %v4713 = vadd.f32 0.0, %v4712
        %v4714 = vpop.f32.mrb[0].mxu0
        %4715 = vmatprep.mubr.bf16.mxu0 0
        %4716 = vmatmul.mubr.bf16.gmra.mrb[0].mxu0 %v4568
        %v4717 = vpop.f32.mrb[0].mxu0
        %v4718 = vadd.f32 0.0, %v4717
        %v4719 = vpop.f32.mrb[0].mxu0
        %v4720 = vpop.f32.mrb[0].mxu0
        %v4721 = vadd.f32 0.0, %v4720
        %v4722 = vpop.f32.mrb[0].mxu0
        %4723 = vmatprep.mubr.bf16.mxu0 0
        %4724 = vmatmul.mubr.bf16.gmra.mrb[0].mxu0 %v4571
        %v4725 = vpop.f32.mrb[0].mxu0
        %v4726 = vadd.f32 0.0, %v4725
        %v4727 = vpop.f32.mrb[0].mxu0
        %v4728 = vpop.f32.mrb[0].mxu0
        %v4729 = vadd.f32 0.0, %v4728
        %v4730 = vpop.f32.mrb[0].mxu0
        %4731 = vmatprep.mubr.bf16.mxu0 0
        %4732 = vmatmul.mubr.bf16.gmra.mrb[0].mxu0 %v4574
        %v4733 = vpop.f32.mrb[0].mxu0
        %v4734 = vadd.f32 0.0, %v4733
        %v4735 = vpop.f32.mrb[0].mxu0
        %v4736 = vpop.f32.mrb[0].mxu0
        %v4737 = vadd.f32 0.0, %v4736
        %v4738 = vpop.f32.mrb[0].mxu0
        %4739 = vdwg.mxu0
        %v4740 = vadd.f32 %v4279, %v4614
        %v4741 = vadd.f32 %v4280, %v4617
        %v4742 = vadd.f32 %v4281, %v4622
        %v4743 = vadd.f32 %v4282, %v4625
        %v4744 = vadd.f32 %v4283, %v4630
        %v4745 = vadd.f32 %v4284, %v4633
        %v4746 = vadd.f32 %v4285, %v4638
        %v4747 = vadd.f32 %v4286, %v4641
        %v4748 = vadd.f32 %v4287, %v4646
        %v4749 = vadd.f32 %v4288, %v4649
        %v4750 = vadd.f32 %v4289, %v4654
        %v4751 = vadd.f32 %v4290, %v4657
        %v4752 = vadd.f32 %v4291, %v4662
        %v4753 = vadd.f32 %v4292, %v4665
        %v4754 = vadd.f32 %v4293, %v4670
        %v4755 = vadd.f32 %v4294, %v4673
        %v4756 = vadd.f32 %v4295, %v4678
        %v4757 = vadd.f32 %v4296, %v4681
        %v4758 = vadd.f32 %v4297, %v4686
        %v4759 = vadd.f32 %v4298, %v4689
        %v4760 = vadd.f32 %v4299, %v4694
        %v4761 = vadd.f32 %v4300, %v4697
        %v4762 = vadd.f32 %v4301, %v4702
        %v4763 = vadd.f32 %v4302, %v4705
        %v4764 = vadd.f32 %v4303, %v4710
        %v4765 = vadd.f32 %v4304, %v4713
        %v4766 = vadd.f32 %v4305, %v4718
        %v4767 = vadd.f32 %v4306, %v4721
        %v4768 = vadd.f32 %v4307, %v4726
        %v4769 = vadd.f32 %v4308, %v4729
        %v4770 = vadd.f32 %v4309, %v4734
        %v4771 = vadd.f32 %v4310, %v4737
        %4772 = vst [vmem:[#allocation2] sm:$0xff] %v4740
        %4773 = vst [vmem:[#allocation2 + $0x8] sm:$0xff] %v4741
        %4774 = vst [vmem:[#allocation2 + $0x10] sm:$0xff] %v4742
        %4775 = vst [vmem:[#allocation2 + $0x18] sm:$0xff] %v4743
        %4776 = vst [vmem:[#allocation2 + $0x20] sm:$0xff] %v4744
        %4777 = vst [vmem:[#allocation2 + $0x28] sm:$0xff] %v4745
        %4778 = vst [vmem:[#allocation2 + $0x30] sm:$0xff] %v4746
        %4779 = vst [vmem:[#allocation2 + $0x38] sm:$0xff] %v4747
        %4780 = vst [vmem:[#allocation2 + $0x40] sm:$0xff] %v4748
        %4781 = vst [vmem:[#allocation2 + $0x48] sm:$0xff] %v4749
        %4782 = vst [vmem:[#allocation2 + $0x50] sm:$0xff] %v4750
        %4783 = vst [vmem:[#allocation2 + $0x58] sm:$0xff] %v4751
        %4784 = vst [vmem:[#allocation2 + $0x60] sm:$0xff] %v4752
        %4785 = vst [vmem:[#allocation2 + $0x68] sm:$0xff] %v4753
        %4786 = vst [vmem:[#allocation2 + $0x70] sm:$0xff] %v4754
        %4787 = vst [vmem:[#allocation2 + $0x78] sm:$0xff] %v4755
        %4788 = vst [vmem:[#allocation2 + $0x80] sm:$0xff] %v4756
        %4789 = vst [vmem:[#allocation2 + $0x88] sm:$0xff] %v4757
        %4790 = vst [vmem:[#allocation2 + $0x90] sm:$0xff] %v4758
        %4791 = vst [vmem:[#allocation2 + $0x98] sm:$0xff] %v4759
        %4792 = vst [vmem:[#allocation2 + $0xa0] sm:$0xff] %v4760
        %4793 = vst [vmem:[#allocation2 + $0xa8] sm:$0xff] %v4761
        %4794 = vst [vmem:[#allocation2 + $0xb0] sm:$0xff] %v4762
        %4795 = vst [vmem:[#allocation2 + $0xb8] sm:$0xff] %v4763
        %4796 = vst [vmem:[#allocation2 + $0xc0] sm:$0xff] %v4764
        %4797 = vst [vmem:[#allocation2 + $0xc8] sm:$0xff] %v4765
        %4798 = vst [vmem:[#allocation2 + $0xd0] sm:$0xff] %v4766
        %4799 = vst [vmem:[#allocation2 + $0xd8] sm:$0xff] %v4767
        %4800 = vst [vmem:[#allocation2 + $0xe0] sm:$0xff] %v4768
        %4801 = vst [vmem:[#allocation2 + $0xe8] sm:$0xff] %v4769
        %4802 = vst [vmem:[#allocation2 + $0xf0] sm:$0xff] %v4770
        %4803 = vst [vmem:[#allocation2 + $0xf8] sm:$0xff] %v4771
        %v4804 = vld [vmem:[%s263 + $0x10] sm:$0xe]
        %v4805 = vld [vmem:[%s263 + $0x14] sm:$0xf]
        %v4806 = vld [vmem:[%s263 + $0x18] sm:$0xf]
        %v4807 = vld [vmem:[%s263 + $0x1c] sm:$0xf]
        %v4808 = vld [vmem:[%s263 + $0x20] sm:$0xf]
        %v4809 = vld [vmem:[%s263 + $0x24] sm:$0xf]
        %v4810 = vld [vmem:[%s263 + $0x28] sm:$0xf]
        %v4811 = vld [vmem:[%s263 + $0x2c] sm:$0xf]
        %v4812 = vld [vmem:[%s263 + $0x30] sm:$0xf]
        %v4813 = vld [vmem:[%s263 + $0x34] sm:$0xf]
        %v4814 = vld [vmem:[%s263 + $0x38] sm:$0xf]
        %v4815 = vld [vmem:[%s263 + $0x3c] sm:$0xf]
        %v4816 = vld [vmem:[%s263 + $0x40] sm:$0xf]
        %v4817 = vld [vmem:[%s263 + $0x44] sm:$0xf]
        %v4818 = vld [vmem:[%s263 + $0x48] sm:$0xf]
        %v4819 = vld [vmem:[%s263 + $0x4c] sm:$0xf]
        %v4820 = vld [vmem:[%s263 + $0x50] sm:$0xf]
        %v4821 = vld [vmem:[%s263 + $0x54] sm:$0xf]
        %v4822 = vld [vmem:[%s263 + $0x58] sm:$0xf]
        %v4823 = vld [vmem:[%s263 + $0x5c] sm:$0xf]
        %v4824 = vld [vmem:[%s263 + $0x60] sm:$0xf]
        %v4825 = vld [vmem:[%s263 + $0x64] sm:$0xf]
        %v4826 = vld [vmem:[%s263 + $0x68] sm:$0xf]
        %v4827 = vld [vmem:[%s263 + $0x6c] sm:$0xf]
        %v4828 = vld [vmem:[%s263 + $0x70] sm:$0xf]
        %v4829 = vld [vmem:[%s263 + $0x74] sm:$0xf]
        %v4830 = vld [vmem:[%s263 + $0x78] sm:$0xf]
        %v4831 = vld [vmem:[%s263 + $0x7c] sm:$0xf]
        %v4832 = vld [vmem:[%s263 + $0x80] sm:$0xf]
        %v4833 = vld [vmem:[%s263 + $0x84] sm:$0xf]
        %v4834 = vld [vmem:[%s263 + $0x88] sm:$0xf]
        %v4835 = vld [vmem:[%s263 + $0x8c] sm:$0xf]
        %v4836 = vld [vmem:[%s263 + $0x90] sm:$0x1]
        %v4837 = vld [vmem:[%s1376] sm:$0xf]
        %v4838 = vld [vmem:[%s1376 + $0x4] sm:$0xf]
        %v4839 = vld [vmem:[%s1376 + $0x8] sm:$0xf]
        %v4840 = vld [vmem:[%s1376 + $0xc] sm:$0xf]
        %v4841 = vld [vmem:[%s1376 + $0x10] sm:$0xf]
        %v4842 = vld [vmem:[%s1376 + $0x14] sm:$0xf]
        %v4843 = vld [vmem:[%s1376 + $0x18] sm:$0xf]
        %v4844 = vld [vmem:[%s1376 + $0x1c] sm:$0xf]
        %v4845 = vld [vmem:[%s1376 + $0x20] sm:$0xf]
        %v4846 = vld [vmem:[%s1376 + $0x24] sm:$0xf]
        %v4847 = vld [vmem:[%s1376 + $0x28] sm:$0xf]
        %v4848 = vld [vmem:[%s1376 + $0x2c] sm:$0xf]
        %v4849 = vld [vmem:[%s1376 + $0x30] sm:$0xf]
        %v4850 = vld [vmem:[%s1376 + $0x34] sm:$0xf]
        %v4851 = vld [vmem:[%s1376 + $0x38] sm:$0xf]
        %v4852 = vld [vmem:[%s1376 + $0x3c] sm:$0xf]
        %v4853 = vld [vmem:[%s1376 + $0x40] sm:$0xf]
        %v4854 = vld [vmem:[%s1376 + $0x44] sm:$0xf]
        %v4855 = vld [vmem:[%s1376 + $0x48] sm:$0xf]
        %v4856 = vld [vmem:[%s1376 + $0x4c] sm:$0xf]
        %v4857 = vld [vmem:[%s1376 + $0x50] sm:$0xf]
        %v4858 = vld [vmem:[%s1376 + $0x54] sm:$0xf]
        %v4859 = vld [vmem:[%s1376 + $0x58] sm:$0xf]
        %v4860 = vld [vmem:[%s1376 + $0x5c] sm:$0xf]
        %v4861 = vld [vmem:[%s1376 + $0x60] sm:$0xf]
        %v4862 = vld [vmem:[%s1376 + $0x64] sm:$0xf]
        %v4863 = vld [vmem:[%s1376 + $0x68] sm:$0xf]
        %v4864 = vld [vmem:[%s1376 + $0x6c] sm:$0xf]
        %v4865 = vld [vmem:[%s1376 + $0x70] sm:$0xf]
        %v4866 = vld [vmem:[%s1376 + $0x74] sm:$0xf]
        %v4867 = vld [vmem:[%s1376 + $0x78] sm:$0xf]
        %v4868 = vld [vmem:[%s1376 + $0x7c] sm:$0xf]
        %v4901 = vrot.slane %v4837, 7
        %v4902 = vrot.slane %v4901, 4
        %v4903 = vrot.slane %v4838, 7
        %v4904 = vsel %vm1443, %v4902, %v4903
        %v4905 = vrot.slane %v4903, 4
        %v4906 = vrot.slane %v4839, 7
        %v4907 = vsel %vm1443, %v4905, %v4906
        %v4908 = vrot.slane %v4906, 4
        %v4909 = vrot.slane %v4840, 7
        %v4910 = vsel %vm1443, %v4908, %v4909
        %v4911 = vrot.slane %v4909, 4
        %v4912 = vrot.slane %v4841, 7
        %v4913 = vsel %vm1443, %v4911, %v4912
        %v4914 = vrot.slane %v4912, 4
        %v4915 = vrot.slane %v4842, 7
        %v4916 = vsel %vm1443, %v4914, %v4915
        %v4917 = vrot.slane %v4915, 4
        %v4918 = vrot.slane %v4843, 7
        %v4919 = vsel %vm1443, %v4917, %v4918
        %v4920 = vrot.slane %v4918, 4
        %v4921 = vrot.slane %v4844, 7
        %v4922 = vsel %vm1443, %v4920, %v4921
        %v4923 = vrot.slane %v4921, 4
        %v4924 = vrot.slane %v4845, 7
        %v4925 = vsel %vm1443, %v4923, %v4924
        %v4926 = vrot.slane %v4924, 4
        %v4927 = vrot.slane %v4846, 7
        %v4928 = vsel %vm1443, %v4926, %v4927
        %v4929 = vrot.slane %v4927, 4
        %v4930 = vrot.slane %v4847, 7
        %v4931 = vsel %vm1443, %v4929, %v4930
        %v4932 = vrot.slane %v4930, 4
        %v4933 = vrot.slane %v4848, 7
        %v4934 = vsel %vm1443, %v4932, %v4933
        %v4935 = vrot.slane %v4933, 4
        %v4936 = vrot.slane %v4849, 7
        %v4937 = vsel %vm1443, %v4935, %v4936
        %v4938 = vrot.slane %v4936, 4
        %v4939 = vrot.slane %v4850, 7
        %v4940 = vsel %vm1443, %v4938, %v4939
        %v4941 = vrot.slane %v4939, 4
        %v4942 = vrot.slane %v4851, 7
        %v4943 = vsel %vm1443, %v4941, %v4942
        %v4944 = vrot.slane %v4942, 4
        %v4945 = vrot.slane %v4852, 7
        %v4946 = vsel %vm1443, %v4944, %v4945
        %v4947 = vrot.slane %v4945, 4
        %v4948 = vrot.slane %v4853, 7
        %v4949 = vsel %vm1443, %v4947, %v4948
        %v4950 = vrot.slane %v4948, 4
        %v4951 = vrot.slane %v4854, 7
        %v4952 = vsel %vm1443, %v4950, %v4951
        %v4953 = vrot.slane %v4951, 4
        %v4954 = vrot.slane %v4855, 7
        %v4955 = vsel %vm1443, %v4953, %v4954
        %v4956 = vrot.slane %v4954, 4
        %v4957 = vrot.slane %v4856, 7
        %v4958 = vsel %vm1443, %v4956, %v4957
        %v4959 = vrot.slane %v4957, 4
        %v4960 = vrot.slane %v4857, 7
        %v4961 = vsel %vm1443, %v4959, %v4960
        %v4962 = vrot.slane %v4960, 4
        %v4963 = vrot.slane %v4858, 7
        %v4964 = vsel %vm1443, %v4962, %v4963
        %v4965 = vrot.slane %v4963, 4
        %v4966 = vrot.slane %v4859, 7
        %v4967 = vsel %vm1443, %v4965, %v4966
        %v4968 = vrot.slane %v4966, 4
        %v4969 = vrot.slane %v4860, 7
        %v4970 = vsel %vm1443, %v4968, %v4969
        %v4971 = vrot.slane %v4969, 4
        %v4972 = vrot.slane %v4861, 7
        %v4973 = vsel %vm1443, %v4971, %v4972
        %v4974 = vrot.slane %v4972, 4
        %v4975 = vrot.slane %v4862, 7
        %v4976 = vsel %vm1443, %v4974, %v4975
        %v4977 = vrot.slane %v4975, 4
        %v4978 = vrot.slane %v4863, 7
        %v4979 = vsel %vm1443, %v4977, %v4978
        %v4980 = vrot.slane %v4978, 4
        %v4981 = vrot.slane %v4864, 7
        %v4982 = vsel %vm1443, %v4980, %v4981
        %v4983 = vrot.slane %v4981, 4
        %v4984 = vrot.slane %v4865, 7
        %v4985 = vsel %vm1443, %v4983, %v4984
        %v4986 = vrot.slane %v4984, 4
        %v4987 = vrot.slane %v4866, 7
        %v4988 = vsel %vm1443, %v4986, %v4987
        %v4989 = vrot.slane %v4987, 4
        %v4990 = vrot.slane %v4867, 7
        %v4991 = vsel %vm1443, %v4989, %v4990
        %v4992 = vrot.slane %v4990, 4
        %v4993 = vrot.slane %v4868, 7
        %v4994 = vsel %vm1443, %v4992, %v4993
        %v4995 = vrot.slane %v4993, 4
        %v5029 = vmul.bf16 %v4804, %v4901
        %v5030 = vmul.bf16 %v4805, %v4904
        %v5031 = vmul.bf16 %v4806, %v4907
        %v5032 = vmul.bf16 %v4807, %v4910
        %v5033 = vmul.bf16 %v4808, %v4913
        %v5034 = vmul.bf16 %v4809, %v4916
        %v5035 = vmul.bf16 %v4810, %v4919
        %v5036 = vmul.bf16 %v4811, %v4922
        %v5037 = vmul.bf16 %v4812, %v4925
        %v5038 = vmul.bf16 %v4813, %v4928
        %v5039 = vmul.bf16 %v4814, %v4931
        %v5040 = vmul.bf16 %v4815, %v4934
        %v5041 = vmul.bf16 %v4816, %v4937
        %v5042 = vmul.bf16 %v4817, %v4940
        %v5043 = vmul.bf16 %v4818, %v4943
        %v5044 = vmul.bf16 %v4819, %v4946
        %v5045 = vmul.bf16 %v4820, %v4949
        %v5046 = vmul.bf16 %v4821, %v4952
        %v5047 = vmul.bf16 %v4822, %v4955
        %v5048 = vmul.bf16 %v4823, %v4958
        %v5049 = vmul.bf16 %v4824, %v4961
        %v5050 = vmul.bf16 %v4825, %v4964
        %v5051 = vmul.bf16 %v4826, %v4967
        %v5052 = vmul.bf16 %v4827, %v4970
        %v5053 = vmul.bf16 %v4828, %v4973
        %v5054 = vmul.bf16 %v4829, %v4976
        %v5055 = vmul.bf16 %v4830, %v4979
        %v5056 = vmul.bf16 %v4831, %v4982
        %v5057 = vmul.bf16 %v4832, %v4985
        %v5058 = vmul.bf16 %v4833, %v4988
        %v5059 = vmul.bf16 %v4834, %v4991
        %v5060 = vmul.bf16 %v4835, %v4994
        %v5061 = vmul.bf16 %v4836, %v4995
        %v5062 = vld [vmem:[#allocation2] sm:$0xff]
        %v5063 = vld [vmem:[#allocation2 + $0x8] sm:$0xff]
        %v5064 = vld [vmem:[#allocation2 + $0x10] sm:$0xff]
        %v5065 = vld [vmem:[#allocation2 + $0x18] sm:$0xff]
        %v5066 = vld [vmem:[#allocation2 + $0x20] sm:$0xff]
        %v5067 = vld [vmem:[#allocation2 + $0x28] sm:$0xff]
        %v5068 = vld [vmem:[#allocation2 + $0x30] sm:$0xff]
        %v5069 = vld [vmem:[#allocation2 + $0x38] sm:$0xff]
        %v5070 = vld [vmem:[#allocation2 + $0x40] sm:$0xff]
        %v5071 = vld [vmem:[#allocation2 + $0x48] sm:$0xff]
        %v5072 = vld [vmem:[#allocation2 + $0x50] sm:$0xff]
        %v5073 = vld [vmem:[#allocation2 + $0x58] sm:$0xff]
        %v5074 = vld [vmem:[#allocation2 + $0x60] sm:$0xff]
        %v5075 = vld [vmem:[#allocation2 + $0x68] sm:$0xff]
        %v5076 = vld [vmem:[#allocation2 + $0x70] sm:$0xff]
        %v5077 = vld [vmem:[#allocation2 + $0x78] sm:$0xff]
        %v5078 = vld [vmem:[#allocation2 + $0x80] sm:$0xff]
        %v5079 = vld [vmem:[#allocation2 + $0x88] sm:$0xff]
        %v5080 = vld [vmem:[#allocation2 + $0x90] sm:$0xff]
        %v5081 = vld [vmem:[#allocation2 + $0x98] sm:$0xff]
        %v5082 = vld [vmem:[#allocation2 + $0xa0] sm:$0xff]
        %v5083 = vld [vmem:[#allocation2 + $0xa8] sm:$0xff]
        %v5084 = vld [vmem:[#allocation2 + $0xb0] sm:$0xff]
        %v5085 = vld [vmem:[#allocation2 + $0xb8] sm:$0xff]
        %v5086 = vld [vmem:[#allocation2 + $0xc0] sm:$0xff]
        %v5087 = vld [vmem:[#allocation2 + $0xc8] sm:$0xff]
        %v5088 = vld [vmem:[#allocation2 + $0xd0] sm:$0xff]
        %v5089 = vld [vmem:[#allocation2 + $0xd8] sm:$0xff]
        %v5090 = vld [vmem:[#allocation2 + $0xe0] sm:$0xff]
        %v5091 = vld [vmem:[#allocation2 + $0xe8] sm:$0xff]
        %v5092 = vld [vmem:[#allocation2 + $0xf0] sm:$0xff]
        %v5093 = vld [vmem:[#allocation2 + $0xf8] sm:$0xff]
        %s5094 = scalar_lea.vmem %s2, 16
        %v5095 = vld [vmem:[%s5094] sm:$0x3]
        %v5129 = vunpack.c.l.b16 %v5029
        %v5130 = vunpack.c.l.b16 %v5030
        %v5131 = vunpack.c.l.b16 %v5031
        %v5132 = vunpack.c.l.b16 %v5032
        %v5133 = vunpack.c.l.b16 %v5033
        %v5134 = vunpack.c.l.b16 %v5034
        %v5135 = vunpack.c.l.b16 %v5035
        %v5136 = vunpack.c.l.b16 %v5036
        %v5137 = vunpack.c.l.b16 %v5037
        %v5138 = vunpack.c.l.b16 %v5038
        %v5139 = vunpack.c.l.b16 %v5039
        %v5140 = vunpack.c.l.b16 %v5040
        %v5141 = vunpack.c.l.b16 %v5041
        %v5142 = vunpack.c.l.b16 %v5042
        %v5143 = vunpack.c.l.b16 %v5043
        %v5144 = vunpack.c.l.b16 %v5044
        %v5145 = vunpack.c.l.b16 %v5045
        %v5146 = vunpack.c.l.b16 %v5046
        %v5147 = vunpack.c.l.b16 %v5047
        %v5148 = vunpack.c.l.b16 %v5048
        %v5149 = vunpack.c.l.b16 %v5049
        %v5150 = vunpack.c.l.b16 %v5050
        %v5151 = vunpack.c.l.b16 %v5051
        %v5152 = vunpack.c.l.b16 %v5052
        %v5153 = vunpack.c.l.b16 %v5053
        %v5154 = vunpack.c.l.b16 %v5054
        %v5155 = vunpack.c.l.b16 %v5055
        %v5156 = vunpack.c.l.b16 %v5056
        %v5157 = vunpack.c.l.b16 %v5057
        %v5158 = vunpack.c.l.b16 %v5058
        %v5159 = vunpack.c.l.b16 %v5059
        %v5160 = vunpack.c.l.b16 %v5060
        %v5161 = vunpack.c.l.b16 %v5061
        %v5162 = vpack.c.b16 %v5130, %v5129
        %v5163 = vpack.c.b16 %v5132, %v5131
        %v5164 = vpack.c.b16 %v5134, %v5133
        %v5165 = vpack.c.b16 %v5136, %v5135
        %v5166 = vpack.c.b16 %v5138, %v5137
        %v5167 = vpack.c.b16 %v5140, %v5139
        %v5168 = vpack.c.b16 %v5142, %v5141
        %v5169 = vpack.c.b16 %v5144, %v5143
        %v5170 = vpack.c.b16 %v5146, %v5145
        %v5171 = vpack.c.b16 %v5148, %v5147
        %v5172 = vpack.c.b16 %v5150, %v5149
        %v5173 = vpack.c.b16 %v5152, %v5151
        %v5174 = vpack.c.b16 %v5154, %v5153
        %v5175 = vpack.c.b16 %v5156, %v5155
        %v5176 = vpack.c.b16 %v5158, %v5157
        %v5177 = vpack.c.b16 %v5160, %v5159
        %v5178 = vpack.c.b16 %v5161, %v5161
        %v5179 = vrot.slane %v5162, 1
        %v5180 = vrot.slane %v5163, 1
        %v5181 = vsel %vm1722, %v5179, %v5180
        %v5182 = vrot.slane %v5164, 1
        %v5183 = vsel %vm1722, %v5180, %v5182
        %v5184 = vrot.slane %v5165, 1
        %v5185 = vsel %vm1722, %v5182, %v5184
        %v5186 = vrot.slane %v5166, 1
        %v5187 = vsel %vm1722, %v5184, %v5186
        %v5188 = vrot.slane %v5167, 1
        %v5189 = vsel %vm1722, %v5186, %v5188
        %v5190 = vrot.slane %v5168, 1
        %v5191 = vsel %vm1722, %v5188, %v5190
        %v5192 = vrot.slane %v5169, 1
        %v5193 = vsel %vm1722, %v5190, %v5192
        %v5194 = vrot.slane %v5170, 1
        %v5195 = vsel %vm1722, %v5192, %v5194
        %v5196 = vrot.slane %v5171, 1
        %v5197 = vsel %vm1722, %v5194, %v5196
        %v5198 = vrot.slane %v5172, 1
        %v5199 = vsel %vm1722, %v5196, %v5198
        %v5200 = vrot.slane %v5173, 1
        %v5201 = vsel %vm1722, %v5198, %v5200
        %v5202 = vrot.slane %v5174, 1
        %v5203 = vsel %vm1722, %v5200, %v5202
        %v5204 = vrot.slane %v5175, 1
        %v5205 = vsel %vm1722, %v5202, %v5204
        %v5206 = vrot.slane %v5176, 1
        %v5207 = vsel %vm1722, %v5204, %v5206
        %v5208 = vrot.slane %v5177, 1
        %v5209 = vsel %vm1722, %v5206, %v5208
        %v5210 = vrot.slane %v5178, 1
        %v5211 = vsel %vm1722, %v5208, %v5210
        %v5213 = vsel %vm506, %v5181, 0
        %v5216 = vsel %vm506, %v5183, 0
        %v5219 = vsel %vm506, %v5185, 0
        %v5222 = vsel %vm506, %v5187, 0
        %v5225 = vsel %vm506, %v5189, 0
        %v5228 = vsel %vm506, %v5191, 0
        %v5231 = vsel %vm506, %v5193, 0
        %v5234 = vsel %vm506, %v5195, 0
        %v5237 = vsel %vm506, %v5197, 0
        %v5240 = vsel %vm506, %v5199, 0
        %v5243 = vsel %vm506, %v5201, 0
        %v5246 = vsel %vm506, %v5203, 0
        %v5249 = vsel %vm506, %v5205, 0
        %v5252 = vsel %vm506, %v5207, 0
        %v5255 = vsel %vm506, %v5209, 0
        %v5258 = vsel %vm506, %v5211, 0
        %v5261 = vsel %vm555, %v5095, 0
        %5263 = vmatprep.subr.bf16.mxu0 0
        %5264 = vmatpush1.bf16.msra.mxu0 %v5261
        %5265 = vmatprep.subr.bf16.mxu0 0
        %5266 = vmatpush1.bf16.msra.mxu0 0
        %5267 = vmatprep.subr.bf16.mxu0 0
        %5268 = vmatpush1.bf16.msra.mxu0 0
        %5269 = vmatprep.subr.bf16.mxu0 0
        %5270 = vmatpush1.bf16.msra.mxu0 0
        %5271 = vmatprep.subr.bf16.mxu0 0
        %5272 = vmatpush1.bf16.msra.mxu0 0
        %5273 = vmatprep.subr.bf16.mxu0 0
        %5274 = vmatpush1.bf16.msra.mxu0 0
        %5275 = vmatprep.subr.bf16.mxu0 0
        %5276 = vmatpush1.bf16.msra.mxu0 0
        %5277 = vmatprep.subr.bf16.mxu0 0
        %5278 = vmatpush1.bf16.msra.mxu0 0
        %5279 = vmatprep.subr.bf16.mxu0 0
        %5280 = vmatpush1.bf16.msra.mxu0 0
        %5281 = vmatprep.subr.bf16.mxu0 0
        %5282 = vmatpush1.bf16.msra.mxu0 0
        %5283 = vmatprep.subr.bf16.mxu0 0
        %5284 = vmatpush1.bf16.msra.mxu0 0
        %5285 = vmatprep.subr.bf16.mxu0 0
        %5286 = vmatpush1.bf16.msra.mxu0 0
        %5287 = vmatprep.subr.bf16.mxu0 0
        %5288 = vmatpush1.bf16.msra.mxu0 0
        %5289 = vmatprep.subr.bf16.mxu0 0
        %5290 = vmatpush1.bf16.msra.mxu0 0
        %5291 = vmatprep.subr.bf16.mxu0 0
        %5292 = vmatpush1.bf16.msra.mxu0 0
        %5293 = vmatprep.subr.bf16.mxu0 0
        %5294 = vmatpush1.bf16.msra.mxu0 0
        %5295 = vmatprep.mubr.bf16.mxu0 0
        %5296 = vmatmul.mubr.bf16.gmra.mrb[0].mxu0 %v5213
        %v5297 = vpop.f32.mrb[0].mxu0
        %v5298 = vadd.f32 0.0, %v5297
        %v5299 = vpop.f32.mrb[0].mxu0
        %v5300 = vpop.f32.mrb[0].mxu0
        %v5301 = vadd.f32 0.0, %v5300
        %v5302 = vpop.f32.mrb[0].mxu0
        %5303 = vmatprep.mubr.bf16.mxu0 0
        %5304 = vmatmul.mubr.bf16.gmra.mrb[0].mxu0 %v5216
        %v5305 = vpop.f32.mrb[0].mxu0
        %v5306 = vadd.f32 0.0, %v5305
        %v5307 = vpop.f32.mrb[0].mxu0
        %v5308 = vpop.f32.mrb[0].mxu0
        %v5309 = vadd.f32 0.0, %v5308
        %v5310 = vpop.f32.mrb[0].mxu0
        %5311 = vmatprep.mubr.bf16.mxu0 0
        %5312 = vmatmul.mubr.bf16.gmra.mrb[0].mxu0 %v5219
        %v5313 = vpop.f32.mrb[0].mxu0
        %v5314 = vadd.f32 0.0, %v5313
        %v5315 = vpop.f32.mrb[0].mxu0
        %v5316 = vpop.f32.mrb[0].mxu0
        %v5317 = vadd.f32 0.0, %v5316
        %v5318 = vpop.f32.mrb[0].mxu0
        %5319 = vmatprep.mubr.bf16.mxu0 0
        %5320 = vmatmul.mubr.bf16.gmra.mrb[0].mxu0 %v5222
        %v5321 = vpop.f32.mrb[0].mxu0
        %v5322 = vadd.f32 0.0, %v5321
        %v5323 = vpop.f32.mrb[0].mxu0
        %v5324 = vpop.f32.mrb[0].mxu0
        %v5325 = vadd.f32 0.0, %v5324
        %v5326 = vpop.f32.mrb[0].mxu0
        %5327 = vmatprep.mubr.bf16.mxu0 0
        %5328 = vmatmul.mubr.bf16.gmra.mrb[0].mxu0 %v5225
        %v5329 = vpop.f32.mrb[0].mxu0
        %v5330 = vadd.f32 0.0, %v5329
        %v5331 = vpop.f32.mrb[0].mxu0
        %v5332 = vpop.f32.mrb[0].mxu0
        %v5333 = vadd.f32 0.0, %v5332
        %v5334 = vpop.f32.mrb[0].mxu0
        %5335 = vmatprep.mubr.bf16.mxu0 0
        %5336 = vmatmul.mubr.bf16.gmra.mrb[0].mxu0 %v5228
        %v5337 = vpop.f32.mrb[0].mxu0
        %v5338 = vadd.f32 0.0, %v5337
        %v5339 = vpop.f32.mrb[0].mxu0
        %v5340 = vpop.f32.mrb[0].mxu0
        %v5341 = vadd.f32 0.0, %v5340
        %v5342 = vpop.f32.mrb[0].mxu0
        %5343 = vmatprep.mubr.bf16.mxu0 0
        %5344 = vmatmul.mubr.bf16.gmra.mrb[0].mxu0 %v5231
        %v5345 = vpop.f32.mrb[0].mxu0
        %v5346 = vadd.f32 0.0, %v5345
        %v5347 = vpop.f32.mrb[0].mxu0
        %v5348 = vpop.f32.mrb[0].mxu0
        %v5349 = vadd.f32 0.0, %v5348
        %v5350 = vpop.f32.mrb[0].mxu0
        %5351 = vmatprep.mubr.bf16.mxu0 0
        %5352 = vmatmul.mubr.bf16.gmra.mrb[0].mxu0 %v5234
        %v5353 = vpop.f32.mrb[0].mxu0
        %v5354 = vadd.f32 0.0, %v5353
        %v5355 = vpop.f32.mrb[0].mxu0
        %v5356 = vpop.f32.mrb[0].mxu0
        %v5357 = vadd.f32 0.0, %v5356
        %v5358 = vpop.f32.mrb[0].mxu0
        %5359 = vmatprep.mubr.bf16.mxu0 0
        %5360 = vmatmul.mubr.bf16.gmra.mrb[0].mxu0 %v5237
        %v5361 = vpop.f32.mrb[0].mxu0
        %v5362 = vadd.f32 0.0, %v5361
        %v5363 = vpop.f32.mrb[0].mxu0
        %v5364 = vpop.f32.mrb[0].mxu0
        %v5365 = vadd.f32 0.0, %v5364
        %v5366 = vpop.f32.mrb[0].mxu0
        %5367 = vmatprep.mubr.bf16.mxu0 0
        %5368 = vmatmul.mubr.bf16.gmra.mrb[0].mxu0 %v5240
        %v5369 = vpop.f32.mrb[0].mxu0
        %v5370 = vadd.f32 0.0, %v5369
        %v5371 = vpop.f32.mrb[0].mxu0
        %v5372 = vpop.f32.mrb[0].mxu0
        %v5373 = vadd.f32 0.0, %v5372
        %v5374 = vpop.f32.mrb[0].mxu0
        %5375 = vmatprep.mubr.bf16.mxu0 0
        %5376 = vmatmul.mubr.bf16.gmra.mrb[0].mxu0 %v5243
        %v5377 = vpop.f32.mrb[0].mxu0
        %v5378 = vadd.f32 0.0, %v5377
        %v5379 = vpop.f32.mrb[0].mxu0
        %v5380 = vpop.f32.mrb[0].mxu0
        %v5381 = vadd.f32 0.0, %v5380
        %v5382 = vpop.f32.mrb[0].mxu0
        %5383 = vmatprep.mubr.bf16.mxu0 0
        %5384 = vmatmul.mubr.bf16.gmra.mrb[0].mxu0 %v5246
        %v5385 = vpop.f32.mrb[0].mxu0
        %v5386 = vadd.f32 0.0, %v5385
        %v5387 = vpop.f32.mrb[0].mxu0
        %v5388 = vpop.f32.mrb[0].mxu0
        %v5389 = vadd.f32 0.0, %v5388
        %v5390 = vpop.f32.mrb[0].mxu0
        %5391 = vmatprep.mubr.bf16.mxu0 0
        %5392 = vmatmul.mubr.bf16.gmra.mrb[0].mxu0 %v5249
        %v5393 = vpop.f32.mrb[0].mxu0
        %v5394 = vadd.f32 0.0, %v5393
        %v5395 = vpop.f32.mrb[0].mxu0
        %v5396 = vpop.f32.mrb[0].mxu0
        %v5397 = vadd.f32 0.0, %v5396
        %v5398 = vpop.f32.mrb[0].mxu0
        %5399 = vmatprep.mubr.bf16.mxu0 0
        %5400 = vmatmul.mubr.bf16.gmra.mrb[0].mxu0 %v5252
        %v5401 = vpop.f32.mrb[0].mxu0
        %v5402 = vadd.f32 0.0, %v5401
        %v5403 = vpop.f32.mrb[0].mxu0
        %v5404 = vpop.f32.mrb[0].mxu0
        %v5405 = vadd.f32 0.0, %v5404
        %v5406 = vpop.f32.mrb[0].mxu0
        %5407 = vmatprep.mubr.bf16.mxu0 0
        %5408 = vmatmul.mubr.bf16.gmra.mrb[0].mxu0 %v5255
        %v5409 = vpop.f32.mrb[0].mxu0
        %v5410 = vadd.f32 0.0, %v5409
        %v5411 = vpop.f32.mrb[0].mxu0
        %v5412 = vpop.f32.mrb[0].mxu0
        %v5413 = vadd.f32 0.0, %v5412
        %v5414 = vpop.f32.mrb[0].mxu0
        %5415 = vmatprep.mubr.bf16.mxu0 0
        %5416 = vmatmul.mubr.bf16.gmra.mrb[0].mxu0 %v5258
        %v5417 = vpop.f32.mrb[0].mxu0
        %v5418 = vadd.f32 0.0, %v5417
        %v5419 = vpop.f32.mrb[0].mxu0
        %v5420 = vpop.f32.mrb[0].mxu0
        %v5421 = vadd.f32 0.0, %v5420
        %v5422 = vpop.f32.mrb[0].mxu0
        %5423 = vdwg.mxu0
        %v5424 = vadd.f32 %v5062, %v5298
        %v5425 = vadd.f32 %v5063, %v5301
        %v5426 = vadd.f32 %v5064, %v5306
        %v5427 = vadd.f32 %v5065, %v5309
        %v5428 = vadd.f32 %v5066, %v5314
        %v5429 = vadd.f32 %v5067, %v5317
        %v5430 = vadd.f32 %v5068, %v5322
        %v5431 = vadd.f32 %v5069, %v5325
        %v5432 = vadd.f32 %v5070, %v5330
        %v5433 = vadd.f32 %v5071, %v5333
        %v5434 = vadd.f32 %v5072, %v5338
        %v5435 = vadd.f32 %v5073, %v5341
        %v5436 = vadd.f32 %v5074, %v5346
        %v5437 = vadd.f32 %v5075, %v5349
        %v5438 = vadd.f32 %v5076, %v5354
        %v5439 = vadd.f32 %v5077, %v5357
        %v5440 = vadd.f32 %v5078, %v5362
        %v5441 = vadd.f32 %v5079, %v5365
        %v5442 = vadd.f32 %v5080, %v5370
        %v5443 = vadd.f32 %v5081, %v5373
        %v5444 = vadd.f32 %v5082, %v5378
        %v5445 = vadd.f32 %v5083, %v5381
        %v5446 = vadd.f32 %v5084, %v5386
        %v5447 = vadd.f32 %v5085, %v5389
        %v5448 = vadd.f32 %v5086, %v5394
        %v5449 = vadd.f32 %v5087, %v5397
        %v5450 = vadd.f32 %v5088, %v5402
        %v5451 = vadd.f32 %v5089, %v5405
        %v5452 = vadd.f32 %v5090, %v5410
        %v5453 = vadd.f32 %v5091, %v5413
        %v5454 = vadd.f32 %v5092, %v5418
        %v5455 = vadd.f32 %v5093, %v5421
        %5456 = vst [vmem:[#allocation2] sm:$0xff] %v5424
        %5457 = vst [vmem:[#allocation2 + $0x8] sm:$0xff] %v5425
        %5458 = vst [vmem:[#allocation2 + $0x10] sm:$0xff] %v5426
        %5459 = vst [vmem:[#allocation2 + $0x18] sm:$0xff] %v5427
        %5460 = vst [vmem:[#allocation2 + $0x20] sm:$0xff] %v5428
        %5461 = vst [vmem:[#allocation2 + $0x28] sm:$0xff] %v5429
        %5462 = vst [vmem:[#allocation2 + $0x30] sm:$0xff] %v5430
        %5463 = vst [vmem:[#allocation2 + $0x38] sm:$0xff] %v5431
        %5464 = vst [vmem:[#allocation2 + $0x40] sm:$0xff] %v5432
        %5465 = vst [vmem:[#allocation2 + $0x48] sm:$0xff] %v5433
        %5466 = vst [vmem:[#allocation2 + $0x50] sm:$0xff] %v5434
        %5467 = vst [vmem:[#allocation2 + $0x58] sm:$0xff] %v5435
        %5468 = vst [vmem:[#allocation2 + $0x60] sm:$0xff] %v5436
        %5469 = vst [vmem:[#allocation2 + $0x68] sm:$0xff] %v5437
        %5470 = vst [vmem:[#allocation2 + $0x70] sm:$0xff] %v5438
        %5471 = vst [vmem:[#allocation2 + $0x78] sm:$0xff] %v5439
        %5472 = vst [vmem:[#allocation2 + $0x80] sm:$0xff] %v5440
        %5473 = vst [vmem:[#allocation2 + $0x88] sm:$0xff] %v5441
        %5474 = vst [vmem:[#allocation2 + $0x90] sm:$0xff] %v5442
        %5475 = vst [vmem:[#allocation2 + $0x98] sm:$0xff] %v5443
        %5476 = vst [vmem:[#allocation2 + $0xa0] sm:$0xff] %v5444
        %5477 = vst [vmem:[#allocation2 + $0xa8] sm:$0xff] %v5445
        %5478 = vst [vmem:[#allocation2 + $0xb0] sm:$0xff] %v5446
        %5479 = vst [vmem:[#allocation2 + $0xb8] sm:$0xff] %v5447
        %5480 = vst [vmem:[#allocation2 + $0xc0] sm:$0xff] %v5448
        %5481 = vst [vmem:[#allocation2 + $0xc8] sm:$0xff] %v5449
        %5482 = vst [vmem:[#allocation2 + $0xd0] sm:$0xff] %v5450
        %5483 = vst [vmem:[#allocation2 + $0xd8] sm:$0xff] %v5451
        %5484 = vst [vmem:[#allocation2 + $0xe0] sm:$0xff] %v5452
        %5485 = vst [vmem:[#allocation2 + $0xe8] sm:$0xff] %v5453
        %5486 = vst [vmem:[#allocation2 + $0xf0] sm:$0xff] %v5454
        %5487 = vst [vmem:[#allocation2 + $0xf8] sm:$0xff] %v5455
        %v5488 = vld [vmem:[#allocation2] sm:$0xff]
        %v5489 = vld [vmem:[#allocation2 + $0x8] sm:$0xff]
        %v5490 = vld [vmem:[#allocation2 + $0x10] sm:$0xff]
        %v5491 = vld [vmem:[#allocation2 + $0x18] sm:$0xff]
        %v5492 = vld [vmem:[#allocation2 + $0x20] sm:$0xff]
        %v5493 = vld [vmem:[#allocation2 + $0x28] sm:$0xff]
        %v5494 = vld [vmem:[#allocation2 + $0x30] sm:$0xff]
        %v5495 = vld [vmem:[#allocation2 + $0x38] sm:$0xff]
        %v5496 = vld [vmem:[#allocation2 + $0x40] sm:$0xff]
        %v5497 = vld [vmem:[#allocation2 + $0x48] sm:$0xff]
        %v5498 = vld [vmem:[#allocation2 + $0x50] sm:$0xff]
        %v5499 = vld [vmem:[#allocation2 + $0x58] sm:$0xff]
        %v5500 = vld [vmem:[#allocation2 + $0x60] sm:$0xff]
        %v5501 = vld [vmem:[#allocation2 + $0x68] sm:$0xff]
        %v5502 = vld [vmem:[#allocation2 + $0x70] sm:$0xff]
        %v5503 = vld [vmem:[#allocation2 + $0x78] sm:$0xff]
        %v5504 = vld [vmem:[#allocation2 + $0x80] sm:$0xff]
        %v5505 = vld [vmem:[#allocation2 + $0x88] sm:$0xff]
        %v5506 = vld [vmem:[#allocation2 + $0x90] sm:$0xff]
        %v5507 = vld [vmem:[#allocation2 + $0x98] sm:$0xff]
        %v5508 = vld [vmem:[#allocation2 + $0xa0] sm:$0xff]
        %v5509 = vld [vmem:[#allocation2 + $0xa8] sm:$0xff]
        %v5510 = vld [vmem:[#allocation2 + $0xb0] sm:$0xff]
        %v5511 = vld [vmem:[#allocation2 + $0xb8] sm:$0xff]
        %v5512 = vld [vmem:[#allocation2 + $0xc0] sm:$0xff]
        %v5513 = vld [vmem:[#allocation2 + $0xc8] sm:$0xff]
        %v5514 = vld [vmem:[#allocation2 + $0xd0] sm:$0xff]
        %v5515 = vld [vmem:[#allocation2 + $0xd8] sm:$0xff]
        %v5516 = vld [vmem:[#allocation2 + $0xe0] sm:$0xff]
        %v5517 = vld [vmem:[#allocation2 + $0xe8] sm:$0xff]
        %v5518 = vld [vmem:[#allocation2 + $0xf0] sm:$0xff]
        %v5519 = vld [vmem:[#allocation2 + $0xf8] sm:$0xff]
        %v5520 = vld [vmem:[%s3] sm:$0x1]
        %v5522 = vlaneseq
        %v5523 = vshrl.u32 %v5522, 7
        %v5524 = vsub.s32 0, %v5523
        %v5525 = vrot.slane %v5520, %v5524
        %v5527 = vadd.f32 %v5488, %v5525
        %v5528 = vadd.f32 %v5489, %v5525
        %v5529 = vadd.f32 %v5490, %v5525
        %v5530 = vadd.f32 %v5491, %v5525
        %v5531 = vadd.f32 %v5492, %v5525
        %v5532 = vadd.f32 %v5493, %v5525
        %v5533 = vadd.f32 %v5494, %v5525
        %v5534 = vadd.f32 %v5495, %v5525
        %v5535 = vadd.f32 %v5496, %v5525
        %v5536 = vadd.f32 %v5497, %v5525
        %v5537 = vadd.f32 %v5498, %v5525
        %v5538 = vadd.f32 %v5499, %v5525
        %v5539 = vadd.f32 %v5500, %v5525
        %v5540 = vadd.f32 %v5501, %v5525
        %v5541 = vadd.f32 %v5502, %v5525
        %v5542 = vadd.f32 %v5503, %v5525
        %v5543 = vadd.f32 %v5504, %v5525
        %v5544 = vadd.f32 %v5505, %v5525
        %v5545 = vadd.f32 %v5506, %v5525
        %v5546 = vadd.f32 %v5507, %v5525
        %v5547 = vadd.f32 %v5508, %v5525
        %v5548 = vadd.f32 %v5509, %v5525
        %v5549 = vadd.f32 %v5510, %v5525
        %v5550 = vadd.f32 %v5511, %v5525
        %v5551 = vadd.f32 %v5512, %v5525
        %v5552 = vadd.f32 %v5513, %v5525
        %v5553 = vadd.f32 %v5514, %v5525
        %v5554 = vadd.f32 %v5515, %v5525
        %v5555 = vadd.f32 %v5516, %v5525
        %v5556 = vadd.f32 %v5517, %v5525
        %v5557 = vadd.f32 %v5518, %v5525
        %v5558 = vadd.f32 %v5519, %v5525
        %v5559 = vmax.f32 %v5527, 0.0
        %v5560 = vmax.f32 %v5528, 0.0
        %v5561 = vmax.f32 %v5529, 0.0
        %v5562 = vmax.f32 %v5530, 0.0
        %v5563 = vmax.f32 %v5531, 0.0
        %v5564 = vmax.f32 %v5532, 0.0
        %v5565 = vmax.f32 %v5533, 0.0
        %v5566 = vmax.f32 %v5534, 0.0
        %v5567 = vmax.f32 %v5535, 0.0
        %v5568 = vmax.f32 %v5536, 0.0
        %v5569 = vmax.f32 %v5537, 0.0
        %v5570 = vmax.f32 %v5538, 0.0
        %v5571 = vmax.f32 %v5539, 0.0
        %v5572 = vmax.f32 %v5540, 0.0
        %v5573 = vmax.f32 %v5541, 0.0
        %v5574 = vmax.f32 %v5542, 0.0
        %v5575 = vmax.f32 %v5543, 0.0
        %v5576 = vmax.f32 %v5544, 0.0
        %v5577 = vmax.f32 %v5545, 0.0
        %v5578 = vmax.f32 %v5546, 0.0
        %v5579 = vmax.f32 %v5547, 0.0
        %v5580 = vmax.f32 %v5548, 0.0
        %v5581 = vmax.f32 %v5549, 0.0
        %v5582 = vmax.f32 %v5550, 0.0
        %v5583 = vmax.f32 %v5551, 0.0
        %v5584 = vmax.f32 %v5552, 0.0
        %v5585 = vmax.f32 %v5553, 0.0
        %v5586 = vmax.f32 %v5554, 0.0
        %v5587 = vmax.f32 %v5555, 0.0
        %v5588 = vmax.f32 %v5556, 0.0
        %v5589 = vmax.f32 %v5557, 0.0
        %v5590 = vmax.f32 %v5558, 0.0
        %5591 = vxpose.xlu0.b32.start [1/16] %v5559, 128
        %5592 = vxpose.xlu0.b32.cont [2/16] %v5560, 128
        %5593 = vxpose.xlu0.b32.cont [3/16] %v5561, 128
        %5594 = vxpose.xlu0.b32.cont [4/16] %v5562, 128
        %5595 = vxpose.xlu0.b32.cont [5/16] %v5563, 128
        %5596 = vxpose.xlu0.b32.cont [6/16] %v5564, 128
        %5597 = vxpose.xlu0.b32.cont [7/16] %v5565, 128
        %5598 = vxpose.xlu0.b32.cont [8/16] %v5566, 128
        %5599 = vxpose.xlu0.b32.cont [9/16] %v5567, 128
        %5600 = vxpose.xlu0.b32.cont [10/16] %v5568, 128
        %5601 = vxpose.xlu0.b32.cont [11/16] %v5569, 128
        %5602 = vxpose.xlu0.b32.cont [12/16] %v5570, 128
        %5603 = vxpose.xlu0.b32.cont [13/16] %v5571, 128
        %5604 = vxpose.xlu0.b32.cont [14/16] %v5572, 128
        %5605 = vxpose.xlu0.b32.cont [15/16] %v5573, 128
        %5606 = vxpose.xlu0.b32.end [16/16] %v5574, 128
        %v5607 = vpop.trf.xlu0
        %v5608 = vpop.trf.xlu0
        %v5609 = vpop.trf.xlu0
        %v5610 = vpop.trf.xlu0
        %v5611 = vpop.trf.xlu0
        %v5612 = vpop.trf.xlu0
        %v5613 = vpop.trf.xlu0
        %v5614 = vpop.trf.xlu0
        %v5615 = vpop.trf.xlu0
        %v5616 = vpop.trf.xlu0
        %v5617 = vpop.trf.xlu0
        %v5618 = vpop.trf.xlu0
        %v5619 = vpop.trf.xlu0
        %v5620 = vpop.trf.xlu0
        %v5621 = vpop.trf.xlu0
        %v5622 = vpop.trf.xlu0
        %5623 = vxpose.xlu0.b32.start [1/16] %v5575, 128
        %5624 = vxpose.xlu0.b32.cont [2/16] %v5576, 128
        %5625 = vxpose.xlu0.b32.cont [3/16] %v5577, 128
        %5626 = vxpose.xlu0.b32.cont [4/16] %v5578, 128
        %5627 = vxpose.xlu0.b32.cont [5/16] %v5579, 128
        %5628 = vxpose.xlu0.b32.cont [6/16] %v5580, 128
        %5629 = vxpose.xlu0.b32.cont [7/16] %v5581, 128
        %5630 = vxpose.xlu0.b32.cont [8/16] %v5582, 128
        %5631 = vxpose.xlu0.b32.cont [9/16] %v5583, 128
        %5632 = vxpose.xlu0.b32.cont [10/16] %v5584, 128
        %5633 = vxpose.xlu0.b32.cont [11/16] %v5585, 128
        %5634 = vxpose.xlu0.b32.cont [12/16] %v5586, 128
        %5635 = vxpose.xlu0.b32.cont [13/16] %v5587, 128
        %5636 = vxpose.xlu0.b32.cont [14/16] %v5588, 128
        %5637 = vxpose.xlu0.b32.cont [15/16] %v5589, 128
        %5638 = vxpose.xlu0.b32.end [16/16] %v5590, 128
        %v5639 = vpop.trf.xlu0
        %v5640 = vpop.trf.xlu0
        %v5641 = vpop.trf.xlu0
        %v5642 = vpop.trf.xlu0
        %v5643 = vpop.trf.xlu0
        %v5644 = vpop.trf.xlu0
        %v5645 = vpop.trf.xlu0
        %v5646 = vpop.trf.xlu0
        %v5647 = vpop.trf.xlu0
        %v5648 = vpop.trf.xlu0
        %v5649 = vpop.trf.xlu0
        %v5650 = vpop.trf.xlu0
        %v5651 = vpop.trf.xlu0
        %v5652 = vpop.trf.xlu0
        %v5653 = vpop.trf.xlu0
        %v5654 = vpop.trf.xlu0
        %v5655 = vpack.c.bf16 %v5608, %v5607
        %v5656 = vpack.c.bf16 %v5640, %v5639
        %v5657 = vld [vmem:[%s5] sm:$0x1]
        %v5658 = vld [vmem:[#allocation3] sm:$0xf]
        %v5659 = vld [vmem:[#allocation3 + $0x4] sm:$0xf]
        %v5660 = vld [vmem:[#allocation3 + $0x8] sm:$0xf]
        %v5661 = vld [vmem:[#allocation3 + $0xc] sm:$0xf]
        %v5662 = vld [vmem:[#allocation3 + $0x10] sm:$0xf]
        %v5663 = vld [vmem:[#allocation3 + $0x14] sm:$0xf]
        %v5664 = vld [vmem:[#allocation3 + $0x18] sm:$0xf]
        %v5665 = vld [vmem:[#allocation3 + $0x1c] sm:$0xf]
        %v5666 = vld [vmem:[#allocation3 + $0x20] sm:$0xf]
        %v5667 = vld [vmem:[#allocation3 + $0x24] sm:$0xf]
        %v5668 = vld [vmem:[#allocation3 + $0x28] sm:$0xf]
        %v5669 = vld [vmem:[#allocation3 + $0x2c] sm:$0xf]
        %v5670 = vld [vmem:[#allocation3 + $0x30] sm:$0xf]
        %v5671 = vld [vmem:[#allocation3 + $0x34] sm:$0xf]
        %v5672 = vld [vmem:[#allocation3 + $0x38] sm:$0xf]
        %v5673 = vld [vmem:[#allocation3 + $0x3c] sm:$0xf]
        %v5674 = vld [vmem:[#allocation3 + $0x40] sm:$0xf]
        %v5675 = vld [vmem:[#allocation3 + $0x44] sm:$0xf]
        %v5676 = vld [vmem:[#allocation3 + $0x48] sm:$0xf]
        %v5677 = vld [vmem:[#allocation3 + $0x4c] sm:$0xf]
        %v5678 = vld [vmem:[#allocation3 + $0x50] sm:$0xf]
        %v5679 = vld [vmem:[#allocation3 + $0x54] sm:$0xf]
        %v5680 = vld [vmem:[#allocation3 + $0x58] sm:$0xf]
        %v5681 = vld [vmem:[#allocation3 + $0x5c] sm:$0xf]
        %v5682 = vld [vmem:[#allocation3 + $0x60] sm:$0xf]
        %v5683 = vld [vmem:[#allocation3 + $0x64] sm:$0xf]
        %v5684 = vld [vmem:[#allocation3 + $0x68] sm:$0xf]
        %v5685 = vld [vmem:[#allocation3 + $0x6c] sm:$0xf]
        %v5686 = vld [vmem:[#allocation3 + $0x70] sm:$0xf]
        %v5687 = vld [vmem:[#allocation3 + $0x74] sm:$0xf]
        %v5688 = vld [vmem:[#allocation3 + $0x78] sm:$0xf]
        %v5689 = vld [vmem:[#allocation3 + $0x7c] sm:$0xf]
        %v5722 = vunpack.c.l.b16 %v5658
        %v5723 = vunpack.c.l.b16 %v5659
        %v5724 = vunpack.c.l.b16 %v5660
        %v5725 = vunpack.c.l.b16 %v5661
        %v5726 = vunpack.c.l.b16 %v5662
        %v5727 = vunpack.c.l.b16 %v5663
        %v5728 = vunpack.c.l.b16 %v5664
        %v5729 = vunpack.c.l.b16 %v5665
        %v5730 = vunpack.c.l.b16 %v5666
        %v5731 = vunpack.c.l.b16 %v5667
        %v5732 = vunpack.c.l.b16 %v5668
        %v5733 = vunpack.c.l.b16 %v5669
        %v5734 = vunpack.c.l.b16 %v5670
        %v5735 = vunpack.c.l.b16 %v5671
        %v5736 = vunpack.c.l.b16 %v5672
        %v5737 = vunpack.c.l.b16 %v5673
        %v5738 = vunpack.c.l.b16 %v5674
        %v5739 = vunpack.c.l.b16 %v5675
        %v5740 = vunpack.c.l.b16 %v5676
        %v5741 = vunpack.c.l.b16 %v5677
        %v5742 = vunpack.c.l.b16 %v5678
        %v5743 = vunpack.c.l.b16 %v5679
        %v5744 = vunpack.c.l.b16 %v5680
        %v5745 = vunpack.c.l.b16 %v5681
        %v5746 = vunpack.c.l.b16 %v5682
        %v5747 = vunpack.c.l.b16 %v5683
        %v5748 = vunpack.c.l.b16 %v5684
        %v5749 = vunpack.c.l.b16 %v5685
        %v5750 = vunpack.c.l.b16 %v5686
        %v5751 = vunpack.c.l.b16 %v5687
        %v5752 = vunpack.c.l.b16 %v5688
        %v5753 = vunpack.c.l.b16 %v5689
        %v5754 = vpack.c.b16 %v5723, %v5722
        %v5755 = vpack.c.b16 %v5725, %v5724
        %v5756 = vpack.c.b16 %v5727, %v5726
        %v5757 = vpack.c.b16 %v5729, %v5728
        %v5758 = vpack.c.b16 %v5731, %v5730
        %v5759 = vpack.c.b16 %v5733, %v5732
        %v5760 = vpack.c.b16 %v5735, %v5734
        %v5761 = vpack.c.b16 %v5737, %v5736
        %v5762 = vpack.c.b16 %v5739, %v5738
        %v5763 = vpack.c.b16 %v5741, %v5740
        %v5764 = vpack.c.b16 %v5743, %v5742
        %v5765 = vpack.c.b16 %v5745, %v5744
        %v5766 = vpack.c.b16 %v5747, %v5746
        %v5767 = vpack.c.b16 %v5749, %v5748
        %v5768 = vpack.c.b16 %v5751, %v5750
        %v5769 = vpack.c.b16 %v5753, %v5752
        %5786 = vmatprep.subr.bf16.mxu0 0
        %5787 = vmatpush1.bf16.msra.mxu0 %v5754
        %5788 = vmatprep.subr.bf16.mxu0 0
        %5789 = vmatpush1.bf16.msra.mxu0 %v5755
        %5790 = vmatprep.subr.bf16.mxu0 0
        %5791 = vmatpush1.bf16.msra.mxu0 %v5756
        %5792 = vmatprep.subr.bf16.mxu0 0
        %5793 = vmatpush1.bf16.msra.mxu0 %v5757
        %5794 = vmatprep.subr.bf16.mxu0 0
        %5795 = vmatpush1.bf16.msra.mxu0 %v5758
        %5796 = vmatprep.subr.bf16.mxu0 0
        %5797 = vmatpush1.bf16.msra.mxu0 %v5759
        %5798 = vmatprep.subr.bf16.mxu0 0
        %5799 = vmatpush1.bf16.msra.mxu0 %v5760
        %5800 = vmatprep.subr.bf16.mxu0 0
        %5801 = vmatpush1.bf16.msra.mxu0 %v5761
        %5802 = vmatprep.subr.bf16.mxu0 0
        %5803 = vmatpush1.bf16.msra.mxu0 %v5762
        %5804 = vmatprep.subr.bf16.mxu0 0
        %5805 = vmatpush1.bf16.msra.mxu0 %v5763
        %5806 = vmatprep.subr.bf16.mxu0 0
        %5807 = vmatpush1.bf16.msra.mxu0 %v5764
        %5808 = vmatprep.subr.bf16.mxu0 0
        %5809 = vmatpush1.bf16.msra.mxu0 %v5765
        %5810 = vmatprep.subr.bf16.mxu0 0
        %5811 = vmatpush1.bf16.msra.mxu0 %v5766
        %5812 = vmatprep.subr.bf16.mxu0 0
        %5813 = vmatpush1.bf16.msra.mxu0 %v5767
        %5814 = vmatprep.subr.bf16.mxu0 0
        %5815 = vmatpush1.bf16.msra.mxu0 %v5768
        %5816 = vmatprep.subr.bf16.mxu0 0
        %5817 = vmatpush1.bf16.msra.mxu0 %v5769
        %5818 = vmatprep.mubr.bf16.mxu0 %v5656
        %5819 = vmatmul.mubr.bf16.gmra.mrb[0].mxu0 %v5655
        %v5820 = vpop.f32.mrb[0].mxu0
        %v5821 = vadd.f32 0.0, %v5820
        %v5822 = vpop.f32.mrb[0].mxu0
        %v5823 = vpop.f32.mrb[0].mxu0
        %v5824 = vpop.f32.mrb[0].mxu0
        %5825 = vdwg.mxu0
        %v5826 = vadd.f32 %v5657, %v5821
        %s5827 = scalar_lea.vmem [#allocation3], 128
        %v5828 = vld [vmem:[%s5827] sm:$0xf]
        %v5829 = vld [vmem:[%s5827 + $0x4] sm:$0xf]
        %v5830 = vld [vmem:[%s5827 + $0x8] sm:$0xf]
        %v5831 = vld [vmem:[%s5827 + $0xc] sm:$0xf]
        %v5832 = vld [vmem:[%s5827 + $0x10] sm:$0xf]
        %v5833 = vld [vmem:[%s5827 + $0x14] sm:$0xf]
        %v5834 = vld [vmem:[%s5827 + $0x18] sm:$0xf]
        %v5835 = vld [vmem:[%s5827 + $0x1c] sm:$0xf]
        %v5836 = vld [vmem:[%s5827 + $0x20] sm:$0xf]
        %v5837 = vld [vmem:[%s5827 + $0x24] sm:$0xf]
        %v5838 = vld [vmem:[%s5827 + $0x28] sm:$0xf]
        %v5839 = vld [vmem:[%s5827 + $0x2c] sm:$0xf]
        %v5840 = vld [vmem:[%s5827 + $0x30] sm:$0xf]
        %v5841 = vld [vmem:[%s5827 + $0x34] sm:$0xf]
        %v5842 = vld [vmem:[%s5827 + $0x38] sm:$0xf]
        %v5843 = vld [vmem:[%s5827 + $0x3c] sm:$0xf]
        %v5844 = vld [vmem:[%s5827 + $0x40] sm:$0xf]
        %v5845 = vld [vmem:[%s5827 + $0x44] sm:$0xf]
        %v5846 = vld [vmem:[%s5827 + $0x48] sm:$0xf]
        %v5847 = vld [vmem:[%s5827 + $0x4c] sm:$0xf]
        %v5848 = vld [vmem:[%s5827 + $0x50] sm:$0xf]
        %v5849 = vld [vmem:[%s5827 + $0x54] sm:$0xf]
        %v5850 = vld [vmem:[%s5827 + $0x58] sm:$0xf]
        %v5851 = vld [vmem:[%s5827 + $0x5c] sm:$0xf]
        %v5852 = vld [vmem:[%s5827 + $0x60] sm:$0xf]
        %v5853 = vld [vmem:[%s5827 + $0x64] sm:$0xf]
        %v5854 = vld [vmem:[%s5827 + $0x68] sm:$0xf]
        %v5855 = vld [vmem:[%s5827 + $0x6c] sm:$0xf]
        %v5856 = vld [vmem:[%s5827 + $0x70] sm:$0xf]
        %v5857 = vld [vmem:[%s5827 + $0x74] sm:$0xf]
        %v5858 = vld [vmem:[%s5827 + $0x78] sm:$0xf]
        %v5859 = vld [vmem:[%s5827 + $0x7c] sm:$0xf]
        %v5861 = vshrl.u32 %v5655, 16
        %v5864 = vshrl.u32 %v5656, 16
        %v5900 = vunpack.c.l.b16 %v5828
        %v5901 = vunpack.c.l.b16 %v5829
        %v5902 = vunpack.c.l.b16 %v5830
        %v5903 = vunpack.c.l.b16 %v5831
        %v5904 = vunpack.c.l.b16 %v5832
        %v5905 = vunpack.c.l.b16 %v5833
        %v5906 = vunpack.c.l.b16 %v5834
        %v5907 = vunpack.c.l.b16 %v5835
        %v5908 = vunpack.c.l.b16 %v5836
        %v5909 = vunpack.c.l.b16 %v5837
        %v5910 = vunpack.c.l.b16 %v5838
        %v5911 = vunpack.c.l.b16 %v5839
        %v5912 = vunpack.c.l.b16 %v5840
        %v5913 = vunpack.c.l.b16 %v5841
        %v5914 = vunpack.c.l.b16 %v5842
        %v5915 = vunpack.c.l.b16 %v5843
        %v5916 = vunpack.c.l.b16 %v5844
        %v5917 = vunpack.c.l.b16 %v5845
        %v5918 = vunpack.c.l.b16 %v5846
        %v5919 = vunpack.c.l.b16 %v5847
        %v5920 = vunpack.c.l.b16 %v5848
        %v5921 = vunpack.c.l.b16 %v5849
        %v5922 = vunpack.c.l.b16 %v5850
        %v5923 = vunpack.c.l.b16 %v5851
        %v5924 = vunpack.c.l.b16 %v5852
        %v5925 = vunpack.c.l.b16 %v5853
        %v5926 = vunpack.c.l.b16 %v5854
        %v5927 = vunpack.c.l.b16 %v5855
        %v5928 = vunpack.c.l.b16 %v5856
        %v5929 = vunpack.c.l.b16 %v5857
        %v5930 = vunpack.c.l.b16 %v5858
        %v5931 = vunpack.c.l.b16 %v5859
        %v5932 = vpack.c.b16 %v5901, %v5900
        %v5933 = vpack.c.b16 %v5903, %v5902
        %v5934 = vpack.c.b16 %v5905, %v5904
        %v5935 = vpack.c.b16 %v5907, %v5906
        %v5936 = vpack.c.b16 %v5909, %v5908
        %v5937 = vpack.c.b16 %v5911, %v5910
        %v5938 = vpack.c.b16 %v5913, %v5912
        %v5939 = vpack.c.b16 %v5915, %v5914
        %v5940 = vpack.c.b16 %v5917, %v5916
        %v5941 = vpack.c.b16 %v5919, %v5918
        %v5942 = vpack.c.b16 %v5921, %v5920
        %v5943 = vpack.c.b16 %v5923, %v5922
        %v5944 = vpack.c.b16 %v5925, %v5924
        %v5945 = vpack.c.b16 %v5927, %v5926
        %v5946 = vpack.c.b16 %v5929, %v5928
        %v5947 = vpack.c.b16 %v5931, %v5930
        %5964 = vmatprep.subr.bf16.mxu0 0
        %5965 = vmatpush1.bf16.msra.mxu0 %v5932
        %5966 = vmatprep.subr.bf16.mxu0 0
        %5967 = vmatpush1.bf16.msra.mxu0 %v5933
        %5968 = vmatprep.subr.bf16.mxu0 0
        %5969 = vmatpush1.bf16.msra.mxu0 %v5934
        %5970 = vmatprep.subr.bf16.mxu0 0
        %5971 = vmatpush1.bf16.msra.mxu0 %v5935
        %5972 = vmatprep.subr.bf16.mxu0 0
        %5973 = vmatpush1.bf16.msra.mxu0 %v5936
        %5974 = vmatprep.subr.bf16.mxu0 0
        %5975 = vmatpush1.bf16.msra.mxu0 %v5937
        %5976 = vmatprep.subr.bf16.mxu0 0
        %5977 = vmatpush1.bf16.msra.mxu0 %v5938
        %5978 = vmatprep.subr.bf16.mxu0 0
        %5979 = vmatpush1.bf16.msra.mxu0 %v5939
        %5980 = vmatprep.subr.bf16.mxu0 0
        %5981 = vmatpush1.bf16.msra.mxu0 %v5940
        %5982 = vmatprep.subr.bf16.mxu0 0
        %5983 = vmatpush1.bf16.msra.mxu0 %v5941
        %5984 = vmatprep.subr.bf16.mxu0 0
        %5985 = vmatpush1.bf16.msra.mxu0 %v5942
        %5986 = vmatprep.subr.bf16.mxu0 0
        %5987 = vmatpush1.bf16.msra.mxu0 %v5943
        %5988 = vmatprep.subr.bf16.mxu0 0
        %5989 = vmatpush1.bf16.msra.mxu0 %v5944
        %5990 = vmatprep.subr.bf16.mxu0 0
        %5991 = vmatpush1.bf16.msra.mxu0 %v5945
        %5992 = vmatprep.subr.bf16.mxu0 0
        %5993 = vmatpush1.bf16.msra.mxu0 %v5946
        %5994 = vmatprep.subr.bf16.mxu0 0
        %5995 = vmatpush1.bf16.msra.mxu0 %v5947
        %5996 = vmatprep.mubr.bf16.mxu0 %v5864
        %5997 = vmatmul.mubr.bf16.gmra.mrb[0].mxu0 %v5861
        %v5998 = vpop.f32.mrb[0].mxu0
        %v5999 = vadd.f32 0.0, %v5998
        %v6000 = vpop.f32.mrb[0].mxu0
        %v6001 = vpop.f32.mrb[0].mxu0
        %v6002 = vpop.f32.mrb[0].mxu0
        %6003 = vdwg.mxu0
        %v6004 = vadd.f32 %v5826, %v5999
        %s6005 = scalar_lea.vmem [#allocation3], 256
        %v6006 = vld [vmem:[%s6005] sm:$0xf]
        %v6007 = vld [vmem:[%s6005 + $0x4] sm:$0xf]
        %v6008 = vld [vmem:[%s6005 + $0x8] sm:$0xf]
        %v6009 = vld [vmem:[%s6005 + $0xc] sm:$0xf]
        %v6010 = vld [vmem:[%s6005 + $0x10] sm:$0xf]
        %v6011 = vld [vmem:[%s6005 + $0x14] sm:$0xf]
        %v6012 = vld [vmem:[%s6005 + $0x18] sm:$0xf]
        %v6013 = vld [vmem:[%s6005 + $0x1c] sm:$0xf]
        %v6014 = vld [vmem:[%s6005 + $0x20] sm:$0xf]
        %v6015 = vld [vmem:[%s6005 + $0x24] sm:$0xf]
        %v6016 = vld [vmem:[%s6005 + $0x28] sm:$0xf]
        %v6017 = vld [vmem:[%s6005 + $0x2c] sm:$0xf]
        %v6018 = vld [vmem:[%s6005 + $0x30] sm:$0xf]
        %v6019 = vld [vmem:[%s6005 + $0x34] sm:$0xf]
        %v6020 = vld [vmem:[%s6005 + $0x38] sm:$0xf]
        %v6021 = vld [vmem:[%s6005 + $0x3c] sm:$0xf]
        %v6022 = vld [vmem:[%s6005 + $0x40] sm:$0xf]
        %v6023 = vld [vmem:[%s6005 + $0x44] sm:$0xf]
        %v6024 = vld [vmem:[%s6005 + $0x48] sm:$0xf]
        %v6025 = vld [vmem:[%s6005 + $0x4c] sm:$0xf]
        %v6026 = vld [vmem:[%s6005 + $0x50] sm:$0xf]
        %v6027 = vld [vmem:[%s6005 + $0x54] sm:$0xf]
        %v6028 = vld [vmem:[%s6005 + $0x58] sm:$0xf]
        %v6029 = vld [vmem:[%s6005 + $0x5c] sm:$0xf]
        %v6030 = vld [vmem:[%s6005 + $0x60] sm:$0xf]
        %v6031 = vld [vmem:[%s6005 + $0x64] sm:$0xf]
        %v6032 = vld [vmem:[%s6005 + $0x68] sm:$0xf]
        %v6033 = vld [vmem:[%s6005 + $0x6c] sm:$0xf]
        %v6034 = vld [vmem:[%s6005 + $0x70] sm:$0xf]
        %v6035 = vld [vmem:[%s6005 + $0x74] sm:$0xf]
        %v6036 = vld [vmem:[%s6005 + $0x78] sm:$0xf]
        %v6037 = vld [vmem:[%s6005 + $0x7c] sm:$0xf]
        %v6040 = vrot.slane %v5655, 1
        %v6041 = vrot.slane %v5656, 1
        %v6076 = vunpack.c.l.b16 %v6006
        %v6077 = vunpack.c.l.b16 %v6007
        %v6078 = vunpack.c.l.b16 %v6008
        %v6079 = vunpack.c.l.b16 %v6009
        %v6080 = vunpack.c.l.b16 %v6010
        %v6081 = vunpack.c.l.b16 %v6011
        %v6082 = vunpack.c.l.b16 %v6012
        %v6083 = vunpack.c.l.b16 %v6013
        %v6084 = vunpack.c.l.b16 %v6014
        %v6085 = vunpack.c.l.b16 %v6015
        %v6086 = vunpack.c.l.b16 %v6016
        %v6087 = vunpack.c.l.b16 %v6017
        %v6088 = vunpack.c.l.b16 %v6018
        %v6089 = vunpack.c.l.b16 %v6019
        %v6090 = vunpack.c.l.b16 %v6020
        %v6091 = vunpack.c.l.b16 %v6021
        %v6092 = vunpack.c.l.b16 %v6022
        %v6093 = vunpack.c.l.b16 %v6023
        %v6094 = vunpack.c.l.b16 %v6024
        %v6095 = vunpack.c.l.b16 %v6025
        %v6096 = vunpack.c.l.b16 %v6026
        %v6097 = vunpack.c.l.b16 %v6027
        %v6098 = vunpack.c.l.b16 %v6028
        %v6099 = vunpack.c.l.b16 %v6029
        %v6100 = vunpack.c.l.b16 %v6030
        %v6101 = vunpack.c.l.b16 %v6031
        %v6102 = vunpack.c.l.b16 %v6032
        %v6103 = vunpack.c.l.b16 %v6033
        %v6104 = vunpack.c.l.b16 %v6034
        %v6105 = vunpack.c.l.b16 %v6035
        %v6106 = vunpack.c.l.b16 %v6036
        %v6107 = vunpack.c.l.b16 %v6037
        %v6108 = vpack.c.b16 %v6077, %v6076
        %v6109 = vpack.c.b16 %v6079, %v6078
        %v6110 = vpack.c.b16 %v6081, %v6080
        %v6111 = vpack.c.b16 %v6083, %v6082
        %v6112 = vpack.c.b16 %v6085, %v6084
        %v6113 = vpack.c.b16 %v6087, %v6086
        %v6114 = vpack.c.b16 %v6089, %v6088
        %v6115 = vpack.c.b16 %v6091, %v6090
        %v6116 = vpack.c.b16 %v6093, %v6092
        %v6117 = vpack.c.b16 %v6095, %v6094
        %v6118 = vpack.c.b16 %v6097, %v6096
        %v6119 = vpack.c.b16 %v6099, %v6098
        %v6120 = vpack.c.b16 %v6101, %v6100
        %v6121 = vpack.c.b16 %v6103, %v6102
        %v6122 = vpack.c.b16 %v6105, %v6104
        %v6123 = vpack.c.b16 %v6107, %v6106
        %6140 = vmatprep.subr.bf16.mxu0 0
        %6141 = vmatpush1.bf16.msra.mxu0 %v6108
        %6142 = vmatprep.subr.bf16.mxu0 0
        %6143 = vmatpush1.bf16.msra.mxu0 %v6109
        %6144 = vmatprep.subr.bf16.mxu0 0
        %6145 = vmatpush1.bf16.msra.mxu0 %v6110
        %6146 = vmatprep.subr.bf16.mxu0 0
        %6147 = vmatpush1.bf16.msra.mxu0 %v6111
        %6148 = vmatprep.subr.bf16.mxu0 0
        %6149 = vmatpush1.bf16.msra.mxu0 %v6112
        %6150 = vmatprep.subr.bf16.mxu0 0
        %6151 = vmatpush1.bf16.msra.mxu0 %v6113
        %6152 = vmatprep.subr.bf16.mxu0 0
        %6153 = vmatpush1.bf16.msra.mxu0 %v6114
        %6154 = vmatprep.subr.bf16.mxu0 0
        %6155 = vmatpush1.bf16.msra.mxu0 %v6115
        %6156 = vmatprep.subr.bf16.mxu0 0
        %6157 = vmatpush1.bf16.msra.mxu0 %v6116
        %6158 = vmatprep.subr.bf16.mxu0 0
        %6159 = vmatpush1.bf16.msra.mxu0 %v6117
        %6160 = vmatprep.subr.bf16.mxu0 0
        %6161 = vmatpush1.bf16.msra.mxu0 %v6118
        %6162 = vmatprep.subr.bf16.mxu0 0
        %6163 = vmatpush1.bf16.msra.mxu0 %v6119
        %6164 = vmatprep.subr.bf16.mxu0 0
        %6165 = vmatpush1.bf16.msra.mxu0 %v6120
        %6166 = vmatprep.subr.bf16.mxu0 0
        %6167 = vmatpush1.bf16.msra.mxu0 %v6121
        %6168 = vmatprep.subr.bf16.mxu0 0
        %6169 = vmatpush1.bf16.msra.mxu0 %v6122
        %6170 = vmatprep.subr.bf16.mxu0 0
        %6171 = vmatpush1.bf16.msra.mxu0 %v6123
        %6172 = vmatprep.mubr.bf16.mxu0 %v6041
        %6173 = vmatmul.mubr.bf16.gmra.mrb[0].mxu0 %v6040
        %v6174 = vpop.f32.mrb[0].mxu0
        %v6175 = vadd.f32 0.0, %v6174
        %v6176 = vpop.f32.mrb[0].mxu0
        %v6177 = vpop.f32.mrb[0].mxu0
        %v6178 = vpop.f32.mrb[0].mxu0
        %6179 = vdwg.mxu0
        %v6180 = vadd.f32 %v6004, %v6175
        %s6181 = scalar_lea.vmem [#allocation3], 384
        %v6182 = vld [vmem:[%s6181] sm:$0xf]
        %v6183 = vld [vmem:[%s6181 + $0x4] sm:$0xf]
        %v6184 = vld [vmem:[%s6181 + $0x8] sm:$0xf]
        %v6185 = vld [vmem:[%s6181 + $0xc] sm:$0xf]
        %v6186 = vld [vmem:[%s6181 + $0x10] sm:$0xf]
        %v6187 = vld [vmem:[%s6181 + $0x14] sm:$0xf]
        %v6188 = vld [vmem:[%s6181 + $0x18] sm:$0xf]
        %v6189 = vld [vmem:[%s6181 + $0x1c] sm:$0xf]
        %v6190 = vld [vmem:[%s6181 + $0x20] sm:$0xf]
        %v6191 = vld [vmem:[%s6181 + $0x24] sm:$0xf]
        %v6192 = vld [vmem:[%s6181 + $0x28] sm:$0xf]
        %v6193 = vld [vmem:[%s6181 + $0x2c] sm:$0xf]
        %v6194 = vld [vmem:[%s6181 + $0x30] sm:$0xf]
        %v6195 = vld [vmem:[%s6181 + $0x34] sm:$0xf]
        %v6196 = vld [vmem:[%s6181 + $0x38] sm:$0xf]
        %v6197 = vld [vmem:[%s6181 + $0x3c] sm:$0xf]
        %v6198 = vld [vmem:[%s6181 + $0x40] sm:$0xf]
        %v6199 = vld [vmem:[%s6181 + $0x44] sm:$0xf]
        %v6200 = vld [vmem:[%s6181 + $0x48] sm:$0xf]
        %v6201 = vld [vmem:[%s6181 + $0x4c] sm:$0xf]
        %v6202 = vld [vmem:[%s6181 + $0x50] sm:$0xf]
        %v6203 = vld [vmem:[%s6181 + $0x54] sm:$0xf]
        %v6204 = vld [vmem:[%s6181 + $0x58] sm:$0xf]
        %v6205 = vld [vmem:[%s6181 + $0x5c] sm:$0xf]
        %v6206 = vld [vmem:[%s6181 + $0x60] sm:$0xf]
        %v6207 = vld [vmem:[%s6181 + $0x64] sm:$0xf]
        %v6208 = vld [vmem:[%s6181 + $0x68] sm:$0xf]
        %v6209 = vld [vmem:[%s6181 + $0x6c] sm:$0xf]
        %v6210 = vld [vmem:[%s6181 + $0x70] sm:$0xf]
        %v6211 = vld [vmem:[%s6181 + $0x74] sm:$0xf]
        %v6212 = vld [vmem:[%s6181 + $0x78] sm:$0xf]
        %v6213 = vld [vmem:[%s6181 + $0x7c] sm:$0xf]
        %v6214 = vrot.slane %v5861, 1
        %v6215 = vrot.slane %v5864, 1
        %v6250 = vunpack.c.l.b16 %v6182
        %v6251 = vunpack.c.l.b16 %v6183
        %v6252 = vunpack.c.l.b16 %v6184
        %v6253 = vunpack.c.l.b16 %v6185
        %v6254 = vunpack.c.l.b16 %v6186
        %v6255 = vunpack.c.l.b16 %v6187
        %v6256 = vunpack.c.l.b16 %v6188
        %v6257 = vunpack.c.l.b16 %v6189
        %v6258 = vunpack.c.l.b16 %v6190
        %v6259 = vunpack.c.l.b16 %v6191
        %v6260 = vunpack.c.l.b16 %v6192
        %v6261 = vunpack.c.l.b16 %v6193
        %v6262 = vunpack.c.l.b16 %v6194
        %v6263 = vunpack.c.l.b16 %v6195
        %v6264 = vunpack.c.l.b16 %v6196
        %v6265 = vunpack.c.l.b16 %v6197
        %v6266 = vunpack.c.l.b16 %v6198
        %v6267 = vunpack.c.l.b16 %v6199
        %v6268 = vunpack.c.l.b16 %v6200
        %v6269 = vunpack.c.l.b16 %v6201
        %v6270 = vunpack.c.l.b16 %v6202
        %v6271 = vunpack.c.l.b16 %v6203
        %v6272 = vunpack.c.l.b16 %v6204
        %v6273 = vunpack.c.l.b16 %v6205
        %v6274 = vunpack.c.l.b16 %v6206
        %v6275 = vunpack.c.l.b16 %v6207
        %v6276 = vunpack.c.l.b16 %v6208
        %v6277 = vunpack.c.l.b16 %v6209
        %v6278 = vunpack.c.l.b16 %v6210
        %v6279 = vunpack.c.l.b16 %v6211
        %v6280 = vunpack.c.l.b16 %v6212
        %v6281 = vunpack.c.l.b16 %v6213
        %v6282 = vpack.c.b16 %v6251, %v6250
        %v6283 = vpack.c.b16 %v6253, %v6252
        %v6284 = vpack.c.b16 %v6255, %v6254
        %v6285 = vpack.c.b16 %v6257, %v6256
        %v6286 = vpack.c.b16 %v6259, %v6258
        %v6287 = vpack.c.b16 %v6261, %v6260
        %v6288 = vpack.c.b16 %v6263, %v6262
        %v6289 = vpack.c.b16 %v6265, %v6264
        %v6290 = vpack.c.b16 %v6267, %v6266
        %v6291 = vpack.c.b16 %v6269, %v6268
        %v6292 = vpack.c.b16 %v6271, %v6270
        %v6293 = vpack.c.b16 %v6273, %v6272
        %v6294 = vpack.c.b16 %v6275, %v6274
        %v6295 = vpack.c.b16 %v6277, %v6276
        %v6296 = vpack.c.b16 %v6279, %v6278
        %v6297 = vpack.c.b16 %v6281, %v6280
        %6314 = vmatprep.subr.bf16.mxu0 0
        %6315 = vmatpush1.bf16.msra.mxu0 %v6282
        %6316 = vmatprep.subr.bf16.mxu0 0
        %6317 = vmatpush1.bf16.msra.mxu0 %v6283
        %6318 = vmatprep.subr.bf16.mxu0 0
        %6319 = vmatpush1.bf16.msra.mxu0 %v6284
        %6320 = vmatprep.subr.bf16.mxu0 0
        %6321 = vmatpush1.bf16.msra.mxu0 %v6285
        %6322 = vmatprep.subr.bf16.mxu0 0
        %6323 = vmatpush1.bf16.msra.mxu0 %v6286
        %6324 = vmatprep.subr.bf16.mxu0 0
        %6325 = vmatpush1.bf16.msra.mxu0 %v6287
        %6326 = vmatprep.subr.bf16.mxu0 0
        %6327 = vmatpush1.bf16.msra.mxu0 %v6288
        %6328 = vmatprep.subr.bf16.mxu0 0
        %6329 = vmatpush1.bf16.msra.mxu0 %v6289
        %6330 = vmatprep.subr.bf16.mxu0 0
        %6331 = vmatpush1.bf16.msra.mxu0 %v6290
        %6332 = vmatprep.subr.bf16.mxu0 0
        %6333 = vmatpush1.bf16.msra.mxu0 %v6291
        %6334 = vmatprep.subr.bf16.mxu0 0
        %6335 = vmatpush1.bf16.msra.mxu0 %v6292
        %6336 = vmatprep.subr.bf16.mxu0 0
        %6337 = vmatpush1.bf16.msra.mxu0 %v6293
        %6338 = vmatprep.subr.bf16.mxu0 0
        %6339 = vmatpush1.bf16.msra.mxu0 %v6294
        %6340 = vmatprep.subr.bf16.mxu0 0
        %6341 = vmatpush1.bf16.msra.mxu0 %v6295
        %6342 = vmatprep.subr.bf16.mxu0 0
        %6343 = vmatpush1.bf16.msra.mxu0 %v6296
        %6344 = vmatprep.subr.bf16.mxu0 0
        %6345 = vmatpush1.bf16.msra.mxu0 %v6297
        %6346 = vmatprep.mubr.bf16.mxu0 %v6215
        %6347 = vmatmul.mubr.bf16.gmra.mrb[0].mxu0 %v6214
        %v6348 = vpop.f32.mrb[0].mxu0
        %v6349 = vadd.f32 0.0, %v6348
        %v6350 = vpop.f32.mrb[0].mxu0
        %v6351 = vpop.f32.mrb[0].mxu0
        %v6352 = vpop.f32.mrb[0].mxu0
        %6353 = vdwg.mxu0
        %v6354 = vadd.f32 %v6180, %v6349
        %s6355 = scalar_lea.vmem [#allocation3], 512
        %v6356 = vld [vmem:[%s6355] sm:$0xf]
        %v6357 = vld [vmem:[%s6355 + $0x4] sm:$0xf]
        %v6358 = vld [vmem:[%s6355 + $0x8] sm:$0xf]
        %v6359 = vld [vmem:[%s6355 + $0xc] sm:$0xf]
        %v6360 = vld [vmem:[%s6355 + $0x10] sm:$0xf]
        %v6361 = vld [vmem:[%s6355 + $0x14] sm:$0xf]
        %v6362 = vld [vmem:[%s6355 + $0x18] sm:$0xf]
        %v6363 = vld [vmem:[%s6355 + $0x1c] sm:$0xf]
        %v6364 = vld [vmem:[%s6355 + $0x20] sm:$0xf]
        %v6365 = vld [vmem:[%s6355 + $0x24] sm:$0xf]
        %v6366 = vld [vmem:[%s6355 + $0x28] sm:$0xf]
        %v6367 = vld [vmem:[%s6355 + $0x2c] sm:$0xf]
        %v6368 = vld [vmem:[%s6355 + $0x30] sm:$0xf]
        %v6369 = vld [vmem:[%s6355 + $0x34] sm:$0xf]
        %v6370 = vld [vmem:[%s6355 + $0x38] sm:$0xf]
        %v6371 = vld [vmem:[%s6355 + $0x3c] sm:$0xf]
        %v6372 = vld [vmem:[%s6355 + $0x40] sm:$0xf]
        %v6373 = vld [vmem:[%s6355 + $0x44] sm:$0xf]
        %v6374 = vld [vmem:[%s6355 + $0x48] sm:$0xf]
        %v6375 = vld [vmem:[%s6355 + $0x4c] sm:$0xf]
        %v6376 = vld [vmem:[%s6355 + $0x50] sm:$0xf]
        %v6377 = vld [vmem:[%s6355 + $0x54] sm:$0xf]
        %v6378 = vld [vmem:[%s6355 + $0x58] sm:$0xf]
        %v6379 = vld [vmem:[%s6355 + $0x5c] sm:$0xf]
        %v6380 = vld [vmem:[%s6355 + $0x60] sm:$0xf]
        %v6381 = vld [vmem:[%s6355 + $0x64] sm:$0xf]
        %v6382 = vld [vmem:[%s6355 + $0x68] sm:$0xf]
        %v6383 = vld [vmem:[%s6355 + $0x6c] sm:$0xf]
        %v6384 = vld [vmem:[%s6355 + $0x70] sm:$0xf]
        %v6385 = vld [vmem:[%s6355 + $0x74] sm:$0xf]
        %v6386 = vld [vmem:[%s6355 + $0x78] sm:$0xf]
        %v6387 = vld [vmem:[%s6355 + $0x7c] sm:$0xf]
        %v6388 = vrot.slane %v5655, 2
        %v6389 = vrot.slane %v5656, 2
        %v6424 = vunpack.c.l.b16 %v6356
        %v6425 = vunpack.c.l.b16 %v6357
        %v6426 = vunpack.c.l.b16 %v6358
        %v6427 = vunpack.c.l.b16 %v6359
        %v6428 = vunpack.c.l.b16 %v6360
        %v6429 = vunpack.c.l.b16 %v6361
        %v6430 = vunpack.c.l.b16 %v6362
        %v6431 = vunpack.c.l.b16 %v6363
        %v6432 = vunpack.c.l.b16 %v6364
        %v6433 = vunpack.c.l.b16 %v6365
        %v6434 = vunpack.c.l.b16 %v6366
        %v6435 = vunpack.c.l.b16 %v6367
        %v6436 = vunpack.c.l.b16 %v6368
        %v6437 = vunpack.c.l.b16 %v6369
        %v6438 = vunpack.c.l.b16 %v6370
        %v6439 = vunpack.c.l.b16 %v6371
        %v6440 = vunpack.c.l.b16 %v6372
        %v6441 = vunpack.c.l.b16 %v6373
        %v6442 = vunpack.c.l.b16 %v6374
        %v6443 = vunpack.c.l.b16 %v6375
        %v6444 = vunpack.c.l.b16 %v6376
        %v6445 = vunpack.c.l.b16 %v6377
        %v6446 = vunpack.c.l.b16 %v6378
        %v6447 = vunpack.c.l.b16 %v6379
        %v6448 = vunpack.c.l.b16 %v6380
        %v6449 = vunpack.c.l.b16 %v6381
        %v6450 = vunpack.c.l.b16 %v6382
        %v6451 = vunpack.c.l.b16 %v6383
        %v6452 = vunpack.c.l.b16 %v6384
        %v6453 = vunpack.c.l.b16 %v6385
        %v6454 = vunpack.c.l.b16 %v6386
        %v6455 = vunpack.c.l.b16 %v6387
        %v6456 = vpack.c.b16 %v6425, %v6424
        %v6457 = vpack.c.b16 %v6427, %v6426
        %v6458 = vpack.c.b16 %v6429, %v6428
        %v6459 = vpack.c.b16 %v6431, %v6430
        %v6460 = vpack.c.b16 %v6433, %v6432
        %v6461 = vpack.c.b16 %v6435, %v6434
        %v6462 = vpack.c.b16 %v6437, %v6436
        %v6463 = vpack.c.b16 %v6439, %v6438
        %v6464 = vpack.c.b16 %v6441, %v6440
        %v6465 = vpack.c.b16 %v6443, %v6442
        %v6466 = vpack.c.b16 %v6445, %v6444
        %v6467 = vpack.c.b16 %v6447, %v6446
        %v6468 = vpack.c.b16 %v6449, %v6448
        %v6469 = vpack.c.b16 %v6451, %v6450
        %v6470 = vpack.c.b16 %v6453, %v6452
        %v6471 = vpack.c.b16 %v6455, %v6454
        %6488 = vmatprep.subr.bf16.mxu0 0
        %6489 = vmatpush1.bf16.msra.mxu0 %v6456
        %6490 = vmatprep.subr.bf16.mxu0 0
        %6491 = vmatpush1.bf16.msra.mxu0 %v6457
        %6492 = vmatprep.subr.bf16.mxu0 0
        %6493 = vmatpush1.bf16.msra.mxu0 %v6458
        %6494 = vmatprep.subr.bf16.mxu0 0
        %6495 = vmatpush1.bf16.msra.mxu0 %v6459
        %6496 = vmatprep.subr.bf16.mxu0 0
        %6497 = vmatpush1.bf16.msra.mxu0 %v6460
        %6498 = vmatprep.subr.bf16.mxu0 0
        %6499 = vmatpush1.bf16.msra.mxu0 %v6461
        %6500 = vmatprep.subr.bf16.mxu0 0
        %6501 = vmatpush1.bf16.msra.mxu0 %v6462
        %6502 = vmatprep.subr.bf16.mxu0 0
        %6503 = vmatpush1.bf16.msra.mxu0 %v6463
        %6504 = vmatprep.subr.bf16.mxu0 0
        %6505 = vmatpush1.bf16.msra.mxu0 %v6464
        %6506 = vmatprep.subr.bf16.mxu0 0
        %6507 = vmatpush1.bf16.msra.mxu0 %v6465
        %6508 = vmatprep.subr.bf16.mxu0 0
        %6509 = vmatpush1.bf16.msra.mxu0 %v6466
        %6510 = vmatprep.subr.bf16.mxu0 0
        %6511 = vmatpush1.bf16.msra.mxu0 %v6467
        %6512 = vmatprep.subr.bf16.mxu0 0
        %6513 = vmatpush1.bf16.msra.mxu0 %v6468
        %6514 = vmatprep.subr.bf16.mxu0 0
        %6515 = vmatpush1.bf16.msra.mxu0 %v6469
        %6516 = vmatprep.subr.bf16.mxu0 0
        %6517 = vmatpush1.bf16.msra.mxu0 %v6470
        %6518 = vmatprep.subr.bf16.mxu0 0
        %6519 = vmatpush1.bf16.msra.mxu0 %v6471
        %6520 = vmatprep.mubr.bf16.mxu0 %v6389
        %6521 = vmatmul.mubr.bf16.gmra.mrb[0].mxu0 %v6388
        %v6522 = vpop.f32.mrb[0].mxu0
        %v6523 = vadd.f32 0.0, %v6522
        %v6524 = vpop.f32.mrb[0].mxu0
        %v6525 = vpop.f32.mrb[0].mxu0
        %v6526 = vpop.f32.mrb[0].mxu0
        %6527 = vdwg.mxu0
        %v6528 = vadd.f32 %v6354, %v6523
        %s6529 = scalar_lea.vmem [#allocation3], 640
        %v6530 = vld [vmem:[%s6529] sm:$0xf]
        %v6531 = vld [vmem:[%s6529 + $0x4] sm:$0xf]
        %v6532 = vld [vmem:[%s6529 + $0x8] sm:$0xf]
        %v6533 = vld [vmem:[%s6529 + $0xc] sm:$0xf]
        %v6534 = vld [vmem:[%s6529 + $0x10] sm:$0xf]
        %v6535 = vld [vmem:[%s6529 + $0x14] sm:$0xf]
        %v6536 = vld [vmem:[%s6529 + $0x18] sm:$0xf]
        %v6537 = vld [vmem:[%s6529 + $0x1c] sm:$0xf]
        %v6538 = vld [vmem:[%s6529 + $0x20] sm:$0xf]
        %v6539 = vld [vmem:[%s6529 + $0x24] sm:$0xf]
        %v6540 = vld [vmem:[%s6529 + $0x28] sm:$0xf]
        %v6541 = vld [vmem:[%s6529 + $0x2c] sm:$0xf]
        %v6542 = vld [vmem:[%s6529 + $0x30] sm:$0xf]
        %v6543 = vld [vmem:[%s6529 + $0x34] sm:$0xf]
        %v6544 = vld [vmem:[%s6529 + $0x38] sm:$0xf]
        %v6545 = vld [vmem:[%s6529 + $0x3c] sm:$0xf]
        %v6546 = vld [vmem:[%s6529 + $0x40] sm:$0xf]
        %v6547 = vld [vmem:[%s6529 + $0x44] sm:$0xf]
        %v6548 = vld [vmem:[%s6529 + $0x48] sm:$0xf]
        %v6549 = vld [vmem:[%s6529 + $0x4c] sm:$0xf]
        %v6550 = vld [vmem:[%s6529 + $0x50] sm:$0xf]
        %v6551 = vld [vmem:[%s6529 + $0x54] sm:$0xf]
        %v6552 = vld [vmem:[%s6529 + $0x58] sm:$0xf]
        %v6553 = vld [vmem:[%s6529 + $0x5c] sm:$0xf]
        %v6554 = vld [vmem:[%s6529 + $0x60] sm:$0xf]
        %v6555 = vld [vmem:[%s6529 + $0x64] sm:$0xf]
        %v6556 = vld [vmem:[%s6529 + $0x68] sm:$0xf]
        %v6557 = vld [vmem:[%s6529 + $0x6c] sm:$0xf]
        %v6558 = vld [vmem:[%s6529 + $0x70] sm:$0xf]
        %v6559 = vld [vmem:[%s6529 + $0x74] sm:$0xf]
        %v6560 = vld [vmem:[%s6529 + $0x78] sm:$0xf]
        %v6561 = vld [vmem:[%s6529 + $0x7c] sm:$0xf]
        %v6562 = vrot.slane %v5861, 2
        %v6563 = vrot.slane %v5864, 2
        %v6598 = vunpack.c.l.b16 %v6530
        %v6599 = vunpack.c.l.b16 %v6531
        %v6600 = vunpack.c.l.b16 %v6532
        %v6601 = vunpack.c.l.b16 %v6533
        %v6602 = vunpack.c.l.b16 %v6534
        %v6603 = vunpack.c.l.b16 %v6535
        %v6604 = vunpack.c.l.b16 %v6536
        %v6605 = vunpack.c.l.b16 %v6537
        %v6606 = vunpack.c.l.b16 %v6538
        %v6607 = vunpack.c.l.b16 %v6539
        %v6608 = vunpack.c.l.b16 %v6540
        %v6609 = vunpack.c.l.b16 %v6541
        %v6610 = vunpack.c.l.b16 %v6542
        %v6611 = vunpack.c.l.b16 %v6543
        %v6612 = vunpack.c.l.b16 %v6544
        %v6613 = vunpack.c.l.b16 %v6545
        %v6614 = vunpack.c.l.b16 %v6546
        %v6615 = vunpack.c.l.b16 %v6547
        %v6616 = vunpack.c.l.b16 %v6548
        %v6617 = vunpack.c.l.b16 %v6549
        %v6618 = vunpack.c.l.b16 %v6550
        %v6619 = vunpack.c.l.b16 %v6551
        %v6620 = vunpack.c.l.b16 %v6552
        %v6621 = vunpack.c.l.b16 %v6553
        %v6622 = vunpack.c.l.b16 %v6554
        %v6623 = vunpack.c.l.b16 %v6555
        %v6624 = vunpack.c.l.b16 %v6556
        %v6625 = vunpack.c.l.b16 %v6557
        %v6626 = vunpack.c.l.b16 %v6558
        %v6627 = vunpack.c.l.b16 %v6559
        %v6628 = vunpack.c.l.b16 %v6560
        %v6629 = vunpack.c.l.b16 %v6561
        %v6630 = vpack.c.b16 %v6599, %v6598
        %v6631 = vpack.c.b16 %v6601, %v6600
        %v6632 = vpack.c.b16 %v6603, %v6602
        %v6633 = vpack.c.b16 %v6605, %v6604
        %v6634 = vpack.c.b16 %v6607, %v6606
        %v6635 = vpack.c.b16 %v6609, %v6608
        %v6636 = vpack.c.b16 %v6611, %v6610
        %v6637 = vpack.c.b16 %v6613, %v6612
        %v6638 = vpack.c.b16 %v6615, %v6614
        %v6639 = vpack.c.b16 %v6617, %v6616
        %v6640 = vpack.c.b16 %v6619, %v6618
        %v6641 = vpack.c.b16 %v6621, %v6620
        %v6642 = vpack.c.b16 %v6623, %v6622
        %v6643 = vpack.c.b16 %v6625, %v6624
        %v6644 = vpack.c.b16 %v6627, %v6626
        %v6645 = vpack.c.b16 %v6629, %v6628
        %6662 = vmatprep.subr.bf16.mxu0 0
        %6663 = vmatpush1.bf16.msra.mxu0 %v6630
        %6664 = vmatprep.subr.bf16.mxu0 0
        %6665 = vmatpush1.bf16.msra.mxu0 %v6631
        %6666 = vmatprep.subr.bf16.mxu0 0
        %6667 = vmatpush1.bf16.msra.mxu0 %v6632
        %6668 = vmatprep.subr.bf16.mxu0 0
        %6669 = vmatpush1.bf16.msra.mxu0 %v6633
        %6670 = vmatprep.subr.bf16.mxu0 0
        %6671 = vmatpush1.bf16.msra.mxu0 %v6634
        %6672 = vmatprep.subr.bf16.mxu0 0
        %6673 = vmatpush1.bf16.msra.mxu0 %v6635
        %6674 = vmatprep.subr.bf16.mxu0 0
        %6675 = vmatpush1.bf16.msra.mxu0 %v6636
        %6676 = vmatprep.subr.bf16.mxu0 0
        %6677 = vmatpush1.bf16.msra.mxu0 %v6637
        %6678 = vmatprep.subr.bf16.mxu0 0
        %6679 = vmatpush1.bf16.msra.mxu0 %v6638
        %6680 = vmatprep.subr.bf16.mxu0 0
        %6681 = vmatpush1.bf16.msra.mxu0 %v6639
        %6682 = vmatprep.subr.bf16.mxu0 0
        %6683 = vmatpush1.bf16.msra.mxu0 %v6640
        %6684 = vmatprep.subr.bf16.mxu0 0
        %6685 = vmatpush1.bf16.msra.mxu0 %v6641
        %6686 = vmatprep.subr.bf16.mxu0 0
        %6687 = vmatpush1.bf16.msra.mxu0 %v6642
        %6688 = vmatprep.subr.bf16.mxu0 0
        %6689 = vmatpush1.bf16.msra.mxu0 %v6643
        %6690 = vmatprep.subr.bf16.mxu0 0
        %6691 = vmatpush1.bf16.msra.mxu0 %v6644
        %6692 = vmatprep.subr.bf16.mxu0 0
        %6693 = vmatpush1.bf16.msra.mxu0 %v6645
        %6694 = vmatprep.mubr.bf16.mxu0 %v6563
        %6695 = vmatmul.mubr.bf16.gmra.mrb[0].mxu0 %v6562
        %v6696 = vpop.f32.mrb[0].mxu0
        %v6697 = vadd.f32 0.0, %v6696
        %v6698 = vpop.f32.mrb[0].mxu0
        %v6699 = vpop.f32.mrb[0].mxu0
        %v6700 = vpop.f32.mrb[0].mxu0
        %6701 = vdwg.mxu0
        %v6702 = vadd.f32 %v6528, %v6697
        %s6703 = scalar_lea.vmem [#allocation3], 768
        %v6704 = vld [vmem:[%s6703] sm:$0xf]
        %v6705 = vld [vmem:[%s6703 + $0x4] sm:$0xf]
        %v6706 = vld [vmem:[%s6703 + $0x8] sm:$0xf]
        %v6707 = vld [vmem:[%s6703 + $0xc] sm:$0xf]
        %v6708 = vld [vmem:[%s6703 + $0x10] sm:$0xf]
        %v6709 = vld [vmem:[%s6703 + $0x14] sm:$0xf]
        %v6710 = vld [vmem:[%s6703 + $0x18] sm:$0xf]
        %v6711 = vld [vmem:[%s6703 + $0x1c] sm:$0xf]
        %v6712 = vld [vmem:[%s6703 + $0x20] sm:$0xf]
        %v6713 = vld [vmem:[%s6703 + $0x24] sm:$0xf]
        %v6714 = vld [vmem:[%s6703 + $0x28] sm:$0xf]
        %v6715 = vld [vmem:[%s6703 + $0x2c] sm:$0xf]
        %v6716 = vld [vmem:[%s6703 + $0x30] sm:$0xf]
        %v6717 = vld [vmem:[%s6703 + $0x34] sm:$0xf]
        %v6718 = vld [vmem:[%s6703 + $0x38] sm:$0xf]
        %v6719 = vld [vmem:[%s6703 + $0x3c] sm:$0xf]
        %v6720 = vld [vmem:[%s6703 + $0x40] sm:$0xf]
        %v6721 = vld [vmem:[%s6703 + $0x44] sm:$0xf]
        %v6722 = vld [vmem:[%s6703 + $0x48] sm:$0xf]
        %v6723 = vld [vmem:[%s6703 + $0x4c] sm:$0xf]
        %v6724 = vld [vmem:[%s6703 + $0x50] sm:$0xf]
        %v6725 = vld [vmem:[%s6703 + $0x54] sm:$0xf]
        %v6726 = vld [vmem:[%s6703 + $0x58] sm:$0xf]
        %v6727 = vld [vmem:[%s6703 + $0x5c] sm:$0xf]
        %v6728 = vld [vmem:[%s6703 + $0x60] sm:$0xf]
        %v6729 = vld [vmem:[%s6703 + $0x64] sm:$0xf]
        %v6730 = vld [vmem:[%s6703 + $0x68] sm:$0xf]
        %v6731 = vld [vmem:[%s6703 + $0x6c] sm:$0xf]
        %v6732 = vld [vmem:[%s6703 + $0x70] sm:$0xf]
        %v6733 = vld [vmem:[%s6703 + $0x74] sm:$0xf]
        %v6734 = vld [vmem:[%s6703 + $0x78] sm:$0xf]
        %v6735 = vld [vmem:[%s6703 + $0x7c] sm:$0xf]
        %v6736 = vrot.slane %v5655, 3
        %v6737 = vrot.slane %v5656, 3
        %v6772 = vunpack.c.l.b16 %v6704
        %v6773 = vunpack.c.l.b16 %v6705
        %v6774 = vunpack.c.l.b16 %v6706
        %v6775 = vunpack.c.l.b16 %v6707
        %v6776 = vunpack.c.l.b16 %v6708
        %v6777 = vunpack.c.l.b16 %v6709
        %v6778 = vunpack.c.l.b16 %v6710
        %v6779 = vunpack.c.l.b16 %v6711
        %v6780 = vunpack.c.l.b16 %v6712
        %v6781 = vunpack.c.l.b16 %v6713
        %v6782 = vunpack.c.l.b16 %v6714
        %v6783 = vunpack.c.l.b16 %v6715
        %v6784 = vunpack.c.l.b16 %v6716
        %v6785 = vunpack.c.l.b16 %v6717
        %v6786 = vunpack.c.l.b16 %v6718
        %v6787 = vunpack.c.l.b16 %v6719
        %v6788 = vunpack.c.l.b16 %v6720
        %v6789 = vunpack.c.l.b16 %v6721
        %v6790 = vunpack.c.l.b16 %v6722
        %v6791 = vunpack.c.l.b16 %v6723
        %v6792 = vunpack.c.l.b16 %v6724
        %v6793 = vunpack.c.l.b16 %v6725
        %v6794 = vunpack.c.l.b16 %v6726
        %v6795 = vunpack.c.l.b16 %v6727
        %v6796 = vunpack.c.l.b16 %v6728
        %v6797 = vunpack.c.l.b16 %v6729
        %v6798 = vunpack.c.l.b16 %v6730
        %v6799 = vunpack.c.l.b16 %v6731
        %v6800 = vunpack.c.l.b16 %v6732
        %v6801 = vunpack.c.l.b16 %v6733
        %v6802 = vunpack.c.l.b16 %v6734
        %v6803 = vunpack.c.l.b16 %v6735
        %v6804 = vpack.c.b16 %v6773, %v6772
        %v6805 = vpack.c.b16 %v6775, %v6774
        %v6806 = vpack.c.b16 %v6777, %v6776
        %v6807 = vpack.c.b16 %v6779, %v6778
        %v6808 = vpack.c.b16 %v6781, %v6780
        %v6809 = vpack.c.b16 %v6783, %v6782
        %v6810 = vpack.c.b16 %v6785, %v6784
        %v6811 = vpack.c.b16 %v6787, %v6786
        %v6812 = vpack.c.b16 %v6789, %v6788
        %v6813 = vpack.c.b16 %v6791, %v6790
        %v6814 = vpack.c.b16 %v6793, %v6792
        %v6815 = vpack.c.b16 %v6795, %v6794
        %v6816 = vpack.c.b16 %v6797, %v6796
        %v6817 = vpack.c.b16 %v6799, %v6798
        %v6818 = vpack.c.b16 %v6801, %v6800
        %v6819 = vpack.c.b16 %v6803, %v6802
        %6836 = vmatprep.subr.bf16.mxu0 0
        %6837 = vmatpush1.bf16.msra.mxu0 %v6804
        %6838 = vmatprep.subr.bf16.mxu0 0
        %6839 = vmatpush1.bf16.msra.mxu0 %v6805
        %6840 = vmatprep.subr.bf16.mxu0 0
        %6841 = vmatpush1.bf16.msra.mxu0 %v6806
        %6842 = vmatprep.subr.bf16.mxu0 0
        %6843 = vmatpush1.bf16.msra.mxu0 %v6807
        %6844 = vmatprep.subr.bf16.mxu0 0
        %6845 = vmatpush1.bf16.msra.mxu0 %v6808
        %6846 = vmatprep.subr.bf16.mxu0 0
        %6847 = vmatpush1.bf16.msra.mxu0 %v6809
        %6848 = vmatprep.subr.bf16.mxu0 0
        %6849 = vmatpush1.bf16.msra.mxu0 %v6810
        %6850 = vmatprep.subr.bf16.mxu0 0
        %6851 = vmatpush1.bf16.msra.mxu0 %v6811
        %6852 = vmatprep.subr.bf16.mxu0 0
        %6853 = vmatpush1.bf16.msra.mxu0 %v6812
        %6854 = vmatprep.subr.bf16.mxu0 0
        %6855 = vmatpush1.bf16.msra.mxu0 %v6813
        %6856 = vmatprep.subr.bf16.mxu0 0
        %6857 = vmatpush1.bf16.msra.mxu0 %v6814
        %6858 = vmatprep.subr.bf16.mxu0 0
        %6859 = vmatpush1.bf16.msra.mxu0 %v6815
        %6860 = vmatprep.subr.bf16.mxu0 0
        %6861 = vmatpush1.bf16.msra.mxu0 %v6816
        %6862 = vmatprep.subr.bf16.mxu0 0
        %6863 = vmatpush1.bf16.msra.mxu0 %v6817
        %6864 = vmatprep.subr.bf16.mxu0 0
        %6865 = vmatpush1.bf16.msra.mxu0 %v6818
        %6866 = vmatprep.subr.bf16.mxu0 0
        %6867 = vmatpush1.bf16.msra.mxu0 %v6819
        %6868 = vmatprep.mubr.bf16.mxu0 %v6737
        %6869 = vmatmul.mubr.bf16.gmra.mrb[0].mxu0 %v6736
        %v6870 = vpop.f32.mrb[0].mxu0
        %v6871 = vadd.f32 0.0, %v6870
        %v6872 = vpop.f32.mrb[0].mxu0
        %v6873 = vpop.f32.mrb[0].mxu0
        %v6874 = vpop.f32.mrb[0].mxu0
        %6875 = vdwg.mxu0
        %v6876 = vadd.f32 %v6702, %v6871
        %s6877 = scalar_lea.vmem [#allocation3], 896
        %v6878 = vld [vmem:[%s6877] sm:$0xf]
        %v6879 = vld [vmem:[%s6877 + $0x4] sm:$0xf]
        %v6880 = vld [vmem:[%s6877 + $0x8] sm:$0xf]
        %v6881 = vld [vmem:[%s6877 + $0xc] sm:$0xf]
        %v6882 = vld [vmem:[%s6877 + $0x10] sm:$0xf]
        %v6883 = vld [vmem:[%s6877 + $0x14] sm:$0xf]
        %v6884 = vld [vmem:[%s6877 + $0x18] sm:$0xf]
        %v6885 = vld [vmem:[%s6877 + $0x1c] sm:$0xf]
        %v6886 = vld [vmem:[%s6877 + $0x20] sm:$0xf]
        %v6887 = vld [vmem:[%s6877 + $0x24] sm:$0xf]
        %v6888 = vld [vmem:[%s6877 + $0x28] sm:$0xf]
        %v6889 = vld [vmem:[%s6877 + $0x2c] sm:$0xf]
        %v6890 = vld [vmem:[%s6877 + $0x30] sm:$0xf]
        %v6891 = vld [vmem:[%s6877 + $0x34] sm:$0xf]
        %v6892 = vld [vmem:[%s6877 + $0x38] sm:$0xf]
        %v6893 = vld [vmem:[%s6877 + $0x3c] sm:$0xf]
        %v6894 = vld [vmem:[%s6877 + $0x40] sm:$0xf]
        %v6895 = vld [vmem:[%s6877 + $0x44] sm:$0xf]
        %v6896 = vld [vmem:[%s6877 + $0x48] sm:$0xf]
        %v6897 = vld [vmem:[%s6877 + $0x4c] sm:$0xf]
        %v6898 = vld [vmem:[%s6877 + $0x50] sm:$0xf]
        %v6899 = vld [vmem:[%s6877 + $0x54] sm:$0xf]
        %v6900 = vld [vmem:[%s6877 + $0x58] sm:$0xf]
        %v6901 = vld [vmem:[%s6877 + $0x5c] sm:$0xf]
        %v6902 = vld [vmem:[%s6877 + $0x60] sm:$0xf]
        %v6903 = vld [vmem:[%s6877 + $0x64] sm:$0xf]
        %v6904 = vld [vmem:[%s6877 + $0x68] sm:$0xf]
        %v6905 = vld [vmem:[%s6877 + $0x6c] sm:$0xf]
        %v6906 = vld [vmem:[%s6877 + $0x70] sm:$0xf]
        %v6907 = vld [vmem:[%s6877 + $0x74] sm:$0xf]
        %v6908 = vld [vmem:[%s6877 + $0x78] sm:$0xf]
        %v6909 = vld [vmem:[%s6877 + $0x7c] sm:$0xf]
        %v6910 = vrot.slane %v5861, 3
        %v6911 = vrot.slane %v5864, 3
        %v6946 = vunpack.c.l.b16 %v6878
        %v6947 = vunpack.c.l.b16 %v6879
        %v6948 = vunpack.c.l.b16 %v6880
        %v6949 = vunpack.c.l.b16 %v6881
        %v6950 = vunpack.c.l.b16 %v6882
        %v6951 = vunpack.c.l.b16 %v6883
        %v6952 = vunpack.c.l.b16 %v6884
        %v6953 = vunpack.c.l.b16 %v6885
        %v6954 = vunpack.c.l.b16 %v6886
        %v6955 = vunpack.c.l.b16 %v6887
        %v6956 = vunpack.c.l.b16 %v6888
        %v6957 = vunpack.c.l.b16 %v6889
        %v6958 = vunpack.c.l.b16 %v6890
        %v6959 = vunpack.c.l.b16 %v6891
        %v6960 = vunpack.c.l.b16 %v6892
        %v6961 = vunpack.c.l.b16 %v6893
        %v6962 = vunpack.c.l.b16 %v6894
        %v6963 = vunpack.c.l.b16 %v6895
        %v6964 = vunpack.c.l.b16 %v6896
        %v6965 = vunpack.c.l.b16 %v6897
        %v6966 = vunpack.c.l.b16 %v6898
        %v6967 = vunpack.c.l.b16 %v6899
        %v6968 = vunpack.c.l.b16 %v6900
        %v6969 = vunpack.c.l.b16 %v6901
        %v6970 = vunpack.c.l.b16 %v6902
        %v6971 = vunpack.c.l.b16 %v6903
        %v6972 = vunpack.c.l.b16 %v6904
        %v6973 = vunpack.c.l.b16 %v6905
        %v6974 = vunpack.c.l.b16 %v6906
        %v6975 = vunpack.c.l.b16 %v6907
        %v6976 = vunpack.c.l.b16 %v6908
        %v6977 = vunpack.c.l.b16 %v6909
        %v6978 = vpack.c.b16 %v6947, %v6946
        %v6979 = vpack.c.b16 %v6949, %v6948
        %v6980 = vpack.c.b16 %v6951, %v6950
        %v6981 = vpack.c.b16 %v6953, %v6952
        %v6982 = vpack.c.b16 %v6955, %v6954
        %v6983 = vpack.c.b16 %v6957, %v6956
        %v6984 = vpack.c.b16 %v6959, %v6958
        %v6985 = vpack.c.b16 %v6961, %v6960
        %v6986 = vpack.c.b16 %v6963, %v6962
        %v6987 = vpack.c.b16 %v6965, %v6964
        %v6988 = vpack.c.b16 %v6967, %v6966
        %v6989 = vpack.c.b16 %v6969, %v6968
        %v6990 = vpack.c.b16 %v6971, %v6970
        %v6991 = vpack.c.b16 %v6973, %v6972
        %v6992 = vpack.c.b16 %v6975, %v6974
        %v6993 = vpack.c.b16 %v6977, %v6976
        %7010 = vmatprep.subr.bf16.mxu0 0
        %7011 = vmatpush1.bf16.msra.mxu0 %v6978
        %7012 = vmatprep.subr.bf16.mxu0 0
        %7013 = vmatpush1.bf16.msra.mxu0 %v6979
        %7014 = vmatprep.subr.bf16.mxu0 0
        %7015 = vmatpush1.bf16.msra.mxu0 %v6980
        %7016 = vmatprep.subr.bf16.mxu0 0
        %7017 = vmatpush1.bf16.msra.mxu0 %v6981
        %7018 = vmatprep.subr.bf16.mxu0 0
        %7019 = vmatpush1.bf16.msra.mxu0 %v6982
        %7020 = vmatprep.subr.bf16.mxu0 0
        %7021 = vmatpush1.bf16.msra.mxu0 %v6983
        %7022 = vmatprep.subr.bf16.mxu0 0
        %7023 = vmatpush1.bf16.msra.mxu0 %v6984
        %7024 = vmatprep.subr.bf16.mxu0 0
        %7025 = vmatpush1.bf16.msra.mxu0 %v6985
        %7026 = vmatprep.subr.bf16.mxu0 0
        %7027 = vmatpush1.bf16.msra.mxu0 %v6986
        %7028 = vmatprep.subr.bf16.mxu0 0
        %7029 = vmatpush1.bf16.msra.mxu0 %v6987
        %7030 = vmatprep.subr.bf16.mxu0 0
        %7031 = vmatpush1.bf16.msra.mxu0 %v6988
        %7032 = vmatprep.subr.bf16.mxu0 0
        %7033 = vmatpush1.bf16.msra.mxu0 %v6989
        %7034 = vmatprep.subr.bf16.mxu0 0
        %7035 = vmatpush1.bf16.msra.mxu0 %v6990
        %7036 = vmatprep.subr.bf16.mxu0 0
        %7037 = vmatpush1.bf16.msra.mxu0 %v6991
        %7038 = vmatprep.subr.bf16.mxu0 0
        %7039 = vmatpush1.bf16.msra.mxu0 %v6992
        %7040 = vmatprep.subr.bf16.mxu0 0
        %7041 = vmatpush1.bf16.msra.mxu0 %v6993
        %7042 = vmatprep.mubr.bf16.mxu0 %v6911
        %7043 = vmatmul.mubr.bf16.gmra.mrb[0].mxu0 %v6910
        %v7044 = vpop.f32.mrb[0].mxu0
        %v7045 = vadd.f32 0.0, %v7044
        %v7046 = vpop.f32.mrb[0].mxu0
        %v7047 = vpop.f32.mrb[0].mxu0
        %v7048 = vpop.f32.mrb[0].mxu0
        %7049 = vdwg.mxu0
        %v7050 = vadd.f32 %v6876, %v7045
        %7051 = vst [vmem:[%s258] sm:$0x1] %v7050
        %s7052 = sand.u32 %s160, 1
        %s7053 = scalar_lea.sflag [#allocation5], %s7052
        %s7054 = sand.u32 %s160, 1
        %s7055 = scalar_lea.vmem [#allocation6], %s7054
        // Predicated region
        $region49: #{tpu_custom_call.1} parent=43 // pred_check
          %p7056 = pneg %p170
        $region50: #{tpu_custom_call.1} parent=43 // pred_check_branch
          %7058 = sbr.rel (%p7056) target = $region52
        $region51: #{tpu_custom_call.1} parent=43 // pred_region
          %s7060 = ssub.s32 16, 16
          %7061 = vsyncadd %s7053, %s7060
          %s7062 = smul.addr %s21, 16
          %s7063 = scalar_lea.hbm %s6, %s7062
          %s7065 = sshll.u32 %s7055, 4
          %s7066 = int_to_ptr.vmem [resolvable:$true] %s7065
          %7068 = dma.vmem_to_hbm [thread:$0]  %s7066, 16, %s7063, %s7053
        $region52: #{tpu_custom_call.1} parent=43 // pred_fallthru
          _
      $region44: #{tpu_custom_call.1} parent=5 // pred_fallthru
        _
      %p7069 = scmp.le.s32.totalorder 2, %s16
      // Predicated region
      $region53: #{tpu_custom_call.1} parent=5 // pred_check
        %p7070 = pneg %p7069
      $region54: #{tpu_custom_call.1} parent=5 // pred_check_branch
        %7072 = sbr.rel (%p7070) target = $region56
      $region55: #{tpu_custom_call.1} parent=5 // pred_region
        %s7073 = ssub.s32 %s16, 2
        // Predicated region
        $region57: #{tpu_custom_call.1} parent=55 // pred_check
          %p7074 = pneg %p176
        $region58: #{tpu_custom_call.1} parent=55 // pred_check_branch
          %7076 = sbr.rel (%p7074) target = $region60
        $region59: #{tpu_custom_call.1} parent=55 // pred_region
          %s7077 = sand.u32 %s161, 1
          %s7078 = scalar_lea.sflag [#allocation5], %s7077
          %s7079 = sand.u32 %s161, 1
          %s7080 = scalar_lea.vmem [#allocation6], %s7079
          %7081 = dma.done %s7078, 16
        $region60: #{tpu_custom_call.1} parent=55 // pred_fallthru
          _
      $region56: #{tpu_custom_call.1} parent=5 // pred_fallthru
        _
    $region6: #{tpu_custom_call.1} parent=1 // loop_footer
      %s20 = sadd.s32 1, %s16
    $region7: #{tpu_custom_call.1} parent=1 // loop_footer_branch
      %15 = sbr.rel target = $region3
    $region8: #{tpu_custom_call.1} parent=1 // loop_exit
      _
    %7082 = vsyncpa [#allocation4], 1
    %s7083 = scalar_lea.sflag [#allocation4], 1
    %7084 = vsyncpa %s7083, 1
    %7085 = vsyncpa [#allocation5], 1
    %s7086 = scalar_lea.sflag [#allocation5], 1
    %7087 = vsyncpa %s7086, 1

</llo_original>
